<compile_context>
chip_gen: v6e
topology: v6e:2x2x1
jax: 0.10.0
libtpu: 0.0.40
codegen_flags: <defaults>
</compile_context>

<pallas_src>
import math
from functools import partial

import jax
import jax.numpy as jnp
import numpy as np
from jax.experimental import pallas as pl
from jax.experimental.pallas import tpu as pltpu


PARAM_ORDER = [
    "ln1_g", "ln1_b",
    "wq", "bq", "wk", "bk", "wv", "bv", "wo", "bo",
    "ln2_g", "ln2_b",
    "w1", "b1", "fg1", "fb1", "w2", "b2", "fg2", "fb2", "w3", "b3",
    "ln3_g", "ln3_b",
    "wga", "bga", "wgb", "bgb",
]

# Weights that feed the MXU -> stored/passed as bf16.  Biases and LayerNorm
# affine params stay f32 (added after f32 accumulation).
MXU_WEIGHTS = frozenset(
    ["wq", "wk", "wv", "wo", "w1", "w2", "w3", "wga", "wgb"])


def _layer_norm(x, g, b, eps=1e-5):
    mu = jnp.mean(x, axis=-1, keepdims=True)
    var = jnp.mean((x - mu) ** 2, axis=-1, keepdims=True)
    return (x - mu) * jax.lax.rsqrt(var + eps) * g + b


def _gelu(x):
    # exact (erf-based) GELU, matching PyTorch nn.GELU() default.
    # (Switch to the tanh approximation -> EUP slot only if profiling shows
    #  VALU saturation and the numerical deviation is acceptable.)
    return 0.5 * x * (1.0 + jax.lax.erf(x * (1.0 / math.sqrt(2.0))))


def _block_kernel(x_ref, *refs, nhead):
    *param_refs, o_ref = refs
    refmap = dict(zip(PARAM_ORDER, param_refs))
    g = lambda n: refmap[n][...]          # lazy VMEM load right before use
    cdt = jnp.bfloat16

    x = x_ref[0]                          # (S, D) f32
    S, D = x.shape
    hd = D // nhead

    def mm(a, wname):                     # lane-dense 2D matmul, f32 accumulate
        return jnp.dot(a.astype(cdt), g(wname),
                       preferred_element_type=jnp.float32)

    # ---- pre-norm multi-head self-attention + residual -----------------------
    residual = x
    xn = _layer_norm(x, g("ln1_g"), g("ln1_b"))
    xnb = xn.astype(cdt)                  # cast once, reused for Q/K/V
    # Lane-dense projections (N = D fills the MXU); the 1/sqrt(hd) softmax
    # scale was folded into wq/bq in the wrapper.
    q = (mm(xnb, "wq") + g("bq")).astype(cdt)       # (S, D)
    k = (mm(xnb, "wk") + g("bk")).astype(cdt)
    v = (mm(xnb, "wv") + g("bv")).astype(cdt)

    # Per-head attention core (trace-time unrolled; heads are static lane
    # slices of the lane-dense Q/K/V).
    # TODO(synk): at real S, add a query-tile grid axis and stream K/V
    # flash-style (online softmax with m/l/acc scratch) instead of
    # materializing full (S, S) scores per head.
    ctx_heads = []
    for h in range(nhead):
        sl = slice(h * hd, (h + 1) * hd)
        qh, kh, vh = q[:, sl], k[:, sl], v[:, sl]
        s = jnp.einsum("qd,kd->qk", qh, kh,
                       preferred_element_type=jnp.float32)    # (S, S) f32
        s = s - jnp.max(s, axis=-1, keepdims=True)
        p = jnp.exp(s)
        l = jnp.sum(p, axis=-1, keepdims=True)
        p = p * pl.reciprocal(l, approx=True)                 # EUP slot
        ctx_heads.append(jnp.dot(p.astype(cdt), vh,
                                 preferred_element_type=jnp.float32))
    # Merge heads lane-wise -> (S, D); the head reduction then happens inside
    # the single K = D output-projection matmul (no (H,S,D) intermediate and
    # no cross-vreg VPU sum).
    ctx = jnp.concatenate(ctx_heads, axis=-1)
    attn = mm(ctx, "wo") + g("bo")
    x = residual + attn                   # dropout = identity (eval)

    # ---- enhanced FFN: Lin -> LN -> GELU -> Lin -> LN -> GELU -> Lin ----------
    # TODO(synk): at real dim_feedforward, K-stream the FFxFF matmul over a
    # reduction grid axis with an f32 VMEM accumulator (v7x 64 MiB VMEM).
    residual = x
    xn = _layer_norm(x, g("ln2_g"), g("ln2_b"))
    hmid = mm(xn, "w1") + g("b1")
    hmid = _gelu(_layer_norm(hmid, g("fg1"), g("fb1")))
    hmid = mm(hmid, "w2") + g("b2")
    hmid = _gelu(_layer_norm(hmid, g("fg2"), g("fb2")))
    ffn = mm(hmid, "w3") + g("b3")
    x = residual + ffn

    # ---- GLU branch: a * sigmoid(b) -------------------------------------------
    # TODO(synk): once D % 128 == 0, re-fuse into a single (D, 2D) matmul and
    # split the result at a lane-aligned boundary (one LHS push, not two).
    residual = x
    xn = _layer_norm(x, g("ln3_g"), g("ln3_b"))
    xnb = xn.astype(cdt)                  # cast once, reused for value & gate
    a = mm(xnb, "wga") + g("bga")
    gate = mm(xnb, "wgb") + g("bgb")
    x = residual + a * jax.nn.sigmoid(gate)

    o_ref[0] = x.astype(o_ref.dtype)


def _prepare_params(params, nhead):
    """Kernel-layout params (still f32).

    Q/K/V/O weights stay plain (D, D) so projections are lane-dense; the
    1/sqrt(head_dim) attention scale is folded into wq/bq; the GLU weight is
    split into value/gate halves (the D boundary is not lane-aligned at toy D).
    """
    D = params["wq"].shape[0]
    hd = D // nhead
    scale = 1.0 / math.sqrt(hd)
    p = params
    return {
        "ln1_g": p["ln1_g"], "ln1_b": p["ln1_b"],
        "wq": p["wq"] * scale, "bq": p["bq"] * scale,   # folded softmax scale
        "wk": p["wk"], "bk": p["bk"],
        "wv": p["wv"], "bv": p["bv"],
        "wo": p["wo"], "bo": p["bo"],
        "ln2_g": p["ln2_g"], "ln2_b": p["ln2_b"],
        "w1": p["w1"], "b1": p["b1"], "fg1": p["fg1"], "fb1": p["fb1"],
        "w2": p["w2"], "b2": p["b2"], "fg2": p["fg2"], "fb2": p["fb2"],
        "w3": p["w3"], "b3": p["b3"],
        "ln3_g": p["ln3_g"], "ln3_b": p["ln3_b"],
        "wga": p["wg"][:, :D], "bga": p["bg"][:, :D],
        "wgb": p["wg"][:, D:], "bgb": p["bg"][:, D:],
    }


def enhanced_transformer_block(x, params, nhead):
    B, S, D = x.shape
    prep = _prepare_params(params, nhead)
    # bf16 MXU weights (halves resident weight VMEM); biases / LN params f32.
    plist = [prep[n].astype(jnp.bfloat16) if n in MXU_WEIGHTS else prep[n]
             for n in PARAM_ORDER]

    def weight_spec(p, single_buffer):
        idx = lambda b, nd=p.ndim: (0,) * nd
        if single_buffer:
            # Block index is constant across the (B,) grid -> one resident
            # buffer is enough; double buffering would just burn VMEM.
            return pl.BlockSpec(p.shape, idx, pipeline_mode=pl.Buffered(1))
        return pl.BlockSpec(p.shape, idx)

    def build(single_buffer):
        in_specs = [pl.BlockSpec((1, S, D), lambda b: (b, 0, 0))]
        in_specs += [weight_spec(p, single_buffer) for p in plist]
        return pl.pallas_call(
            partial(_block_kernel, nhead=nhead),
            out_shape=jax.ShapeDtypeStruct((B, S, D), x.dtype),
            # TODO(synk): at real S, use grid=(B, S//tq) (query tiles) so the
            # software pipeline has >B steps and v7x megacore load-balances.
            grid=(B,),
            in_specs=in_specs,
            out_specs=pl.BlockSpec((1, S, D), lambda b: (b, 0, 0)),
            compiler_params=pltpu.CompilerParams(
                dimension_semantics=("parallel",),
                # v7x has only 64 MiB physical VMEM per TensorCore; leave
                # headroom for Mosaic scratch + the pipelined x/out blocks.
                vmem_limit_bytes=48 * 1024 * 1024),
        )

    try:
        return jax.block_until_ready(build(True)(x, *plist))
    except Exception:
        # Compatibility fallback for jax builds where grid-based pallas_call
        # does not honor pipeline_mode=pl.Buffered(1) on constant-index specs.
        return build(False)(x, *plist)


def reference_forward(x, params, nhead):
    """Pure-JAX f32 reference written directly against the PyTorch module
    semantics (weights in (in, out) layout, eval-mode dropout).  It does NOT
    share the kernel's parameter preparation, so the test also validates the
    wrapper's layout transforms (scale folding, GLU split)."""
    D = x.shape[-1]
    hd = D // nhead

    def one(xs):                                            # (S, D)
        S = xs.shape[0]
        # -- self-attention
        res = xs
        xn = _layer_norm(xs, params["ln1_g"], params["ln1_b"])
        q = xn @ params["wq"] + params["bq"]
        k = xn @ params["wk"] + params["bk"]
        v = xn @ params["wv"] + params["bv"]
        q = q.reshape(S, nhead, hd).transpose(1, 0, 2)
        k = k.reshape(S, nhead, hd).transpose(1, 0, 2)
        v = v.reshape(S, nhead, hd).transpose(1, 0, 2)
        s = jnp.einsum("hqd,hkd->hqk", q, k) / math.sqrt(hd)
        p = jax.nn.softmax(s, axis=-1)
        ctx = jnp.einsum("hqk,hkd->hqd", p, v).transpose(1, 0, 2).reshape(S, D)
        xs = res + (ctx @ params["wo"] + params["bo"])
        # -- enhanced FFN
        res = xs
        xn = _layer_norm(xs, params["ln2_g"], params["ln2_b"])
        h = _gelu(_layer_norm(xn @ params["w1"] + params["b1"],
                              params["fg1"], params["fb1"]))
        h = _gelu(_layer_norm(h @ params["w2"] + params["b2"],
                              params["fg2"], params["fb2"]))
        xs = res + (h @ params["w3"] + params["b3"])
        # -- GLU
        res = xs
        xn = _layer_norm(xs, params["ln3_g"], params["ln3_b"])
        gl = xn @ params["wg"] + params["bg"]
        a, gate = gl[:, :D], gl[:, D:]
        return res + a * jax.nn.sigmoid(gate)

    return jax.vmap(one)(x)


def init_params(key, d, ff):
    ks = iter(jax.random.split(key, 16))

    def w(shape, scale=0.02):
        return scale * jax.random.normal(next(ks), shape, jnp.float32)

    ones = lambda n: jnp.ones((1, n), jnp.float32)
    zeros = lambda n: jnp.zeros((1, n), jnp.float32)

    return dict(
        ln1_g=ones(d), ln1_b=zeros(d),
        wq=w((d, d)), bq=w((1, d)),
        wk=w((d, d)), bk=w((1, d)),
        wv=w((d, d)), bv=w((1, d)),
        wo=w((d, d)), bo=w((1, d)),
        ln2_g=ones(d), ln2_b=zeros(d),
        w1=w((d, ff)), b1=w((1, ff)),
        fg1=ones(ff), fb1=zeros(ff),
        w2=w((ff, ff)), b2=w((1, ff)),
        fg2=ones(ff), fb2=zeros(ff),
        w3=w((ff, d)), b3=w((1, d)),
        ln3_g=ones(d), ln3_b=zeros(d),
        wg=w((d, 2 * d)), bg=w((1, 2 * d)),
    )


if __name__ == "__main__":
    # d_model=32, nhead=4, dim_feedforward=64, batch=2, seq=8
    B, S, D, NH, FF = 2, 8, 32, 4, 64

    key = jax.random.PRNGKey(0)
    kx, kp = jax.random.split(key)
    x = jax.random.normal(kx, (B, S, D), jnp.float32)
    params = init_params(kp, D, FF)

    out = jax.block_until_ready(enhanced_transformer_block(x, params, NH))
    ref = jax.block_until_ready(reference_forward(x, params, NH))
    np.testing.assert_allclose(np.asarray(out), np.asarray(ref),
                               rtol=2e-2, atol=2e-2)

    print("KERNEL_OK")
</pallas_src>

<mosaic_0001>
module attributes {stable_mosaic.version = 11 : i64} {
  func.func @_block_kernel(%arg0: i32, %arg1: memref<1x8x32xf32, #tpu.memory_space<vmem>>, %arg2: memref<1x32xf32, #tpu.memory_space<vmem>>, %arg3: memref<1x32xf32, #tpu.memory_space<vmem>>, %arg4: memref<32x32xbf16, #tpu.memory_space<vmem>>, %arg5: memref<1x32xf32, #tpu.memory_space<vmem>>, %arg6: memref<32x32xbf16, #tpu.memory_space<vmem>>, %arg7: memref<1x32xf32, #tpu.memory_space<vmem>>, %arg8: memref<32x32xbf16, #tpu.memory_space<vmem>>, %arg9: memref<1x32xf32, #tpu.memory_space<vmem>>, %arg10: memref<32x32xbf16, #tpu.memory_space<vmem>>, %arg11: memref<1x32xf32, #tpu.memory_space<vmem>>, %arg12: memref<1x32xf32, #tpu.memory_space<vmem>>, %arg13: memref<1x32xf32, #tpu.memory_space<vmem>>, %arg14: memref<32x64xbf16, #tpu.memory_space<vmem>>, %arg15: memref<1x64xf32, #tpu.memory_space<vmem>>, %arg16: memref<1x64xf32, #tpu.memory_space<vmem>>, %arg17: memref<1x64xf32, #tpu.memory_space<vmem>>, %arg18: memref<64x64xbf16, #tpu.memory_space<vmem>>, %arg19: memref<1x64xf32, #tpu.memory_space<vmem>>, %arg20: memref<1x64xf32, #tpu.memory_space<vmem>>, %arg21: memref<1x64xf32, #tpu.memory_space<vmem>>, %arg22: memref<64x32xbf16, #tpu.memory_space<vmem>>, %arg23: memref<1x32xf32, #tpu.memory_space<vmem>>, %arg24: memref<1x32xf32, #tpu.memory_space<vmem>>, %arg25: memref<1x32xf32, #tpu.memory_space<vmem>>, %arg26: memref<32x32xbf16, #tpu.memory_space<vmem>>, %arg27: memref<1x32xf32, #tpu.memory_space<vmem>>, %arg28: memref<32x32xbf16, #tpu.memory_space<vmem>>, %arg29: memref<1x32xf32, #tpu.memory_space<vmem>>, %arg30: memref<1x8x32xf32, #tpu.memory_space<vmem>>) attributes {dimension_semantics = [#tpu.dimension_semantics<parallel>], iteration_bounds = array<i64: 2>, scalar_prefetch = 0 : i64, scratch_operands = 0 : i64, tpu.core_type = #tpu.core_type<tc>, window_params = [{transform_indices = @transform_0, window_bounds = array<i64: 1, 8, 32>}, {pipeline_mode = #tpu.pipeline_mode<synchronous>, transform_indices = @transform_1, window_bounds = array<i64: 1, 32>}, {pipeline_mode = #tpu.pipeline_mode<synchronous>, transform_indices = @transform_2, window_bounds = array<i64: 1, 32>}, {pipeline_mode = #tpu.pipeline_mode<synchronous>, transform_indices = @transform_3, window_bounds = array<i64: 32, 32>}, {pipeline_mode = #tpu.pipeline_mode<synchronous>, transform_indices = @transform_4, window_bounds = array<i64: 1, 32>}, {pipeline_mode = #tpu.pipeline_mode<synchronous>, transform_indices = @transform_5, window_bounds = array<i64: 32, 32>}, {pipeline_mode = #tpu.pipeline_mode<synchronous>, transform_indices = @transform_6, window_bounds = array<i64: 1, 32>}, {pipeline_mode = #tpu.pipeline_mode<synchronous>, transform_indices = @transform_7, window_bounds = array<i64: 32, 32>}, {pipeline_mode = #tpu.pipeline_mode<synchronous>, transform_indices = @transform_8, window_bounds = array<i64: 1, 32>}, {pipeline_mode = #tpu.pipeline_mode<synchronous>, transform_indices = @transform_9, window_bounds = array<i64: 32, 32>}, {pipeline_mode = #tpu.pipeline_mode<synchronous>, transform_indices = @transform_10, window_bounds = array<i64: 1, 32>}, {pipeline_mode = #tpu.pipeline_mode<synchronous>, transform_indices = @transform_11, window_bounds = array<i64: 1, 32>}, {pipeline_mode = #tpu.pipeline_mode<synchronous>, transform_indices = @transform_12, window_bounds = array<i64: 1, 32>}, {pipeline_mode = #tpu.pipeline_mode<synchronous>, transform_indices = @transform_13, window_bounds = array<i64: 32, 64>}, {pipeline_mode = #tpu.pipeline_mode<synchronous>, transform_indices = @transform_14, window_bounds = array<i64: 1, 64>}, {pipeline_mode = #tpu.pipeline_mode<synchronous>, transform_indices = @transform_15, window_bounds = array<i64: 1, 64>}, {pipeline_mode = #tpu.pipeline_mode<synchronous>, transform_indices = @transform_16, window_bounds = array<i64: 1, 64>}, {pipeline_mode = #tpu.pipeline_mode<synchronous>, transform_indices = @transform_17, window_bounds = array<i64: 64, 64>}, {pipeline_mode = #tpu.pipeline_mode<synchronous>, transform_indices = @transform_18, window_bounds = array<i64: 1, 64>}, {pipeline_mode = #tpu.pipeline_mode<synchronous>, transform_indices = @transform_19, window_bounds = array<i64: 1, 64>}, {pipeline_mode = #tpu.pipeline_mode<synchronous>, transform_indices = @transform_20, window_bounds = array<i64: 1, 64>}, {pipeline_mode = #tpu.pipeline_mode<synchronous>, transform_indices = @transform_21, window_bounds = array<i64: 64, 32>}, {pipeline_mode = #tpu.pipeline_mode<synchronous>, transform_indices = @transform_22, window_bounds = array<i64: 1, 32>}, {pipeline_mode = #tpu.pipeline_mode<synchronous>, transform_indices = @transform_23, window_bounds = array<i64: 1, 32>}, {pipeline_mode = #tpu.pipeline_mode<synchronous>, transform_indices = @transform_24, window_bounds = array<i64: 1, 32>}, {pipeline_mode = #tpu.pipeline_mode<synchronous>, transform_indices = @transform_25, window_bounds = array<i64: 32, 32>}, {pipeline_mode = #tpu.pipeline_mode<synchronous>, transform_indices = @transform_26, window_bounds = array<i64: 1, 32>}, {pipeline_mode = #tpu.pipeline_mode<synchronous>, transform_indices = @transform_27, window_bounds = array<i64: 32, 32>}, {pipeline_mode = #tpu.pipeline_mode<synchronous>, transform_indices = @transform_28, window_bounds = array<i64: 1, 32>}, {transform_indices = @transform_29, window_bounds = array<i64: 1, 8, 32>}]} {
    %c0 = arith.constant 0 : index
    %c0_0 = arith.constant 0 : index
    %c0_1 = arith.constant 0 : index
    %0 = vector.load %arg1[%c0, %c0_0, %c0_1] : memref<1x8x32xf32, #tpu.memory_space<vmem>>, vector<1x8x32xf32>
    %1 = vector.shape_cast %0 : vector<1x8x32xf32> to vector<8x32xf32>
    %c0_2 = arith.constant 0 : index
    %c0_3 = arith.constant 0 : index
    %2 = vector.load %arg2[%c0_2, %c0_3] : memref<1x32xf32, #tpu.memory_space<vmem>>, vector<1x32xf32>
    %c0_4 = arith.constant 0 : index
    %c0_5 = arith.constant 0 : index
    %3 = vector.load %arg3[%c0_4, %c0_5] : memref<1x32xf32, #tpu.memory_space<vmem>>, vector<1x32xf32>
    %cst = arith.constant dense<0.000000e+00> : vector<8xf32>
    %4 = vector.multi_reduction <add>, %1, %cst [1] : vector<8x32xf32> to vector<8xf32>
    %5 = vector.shape_cast %4 : vector<8xf32> to vector<8x1xf32>
    %cst_6 = arith.constant 3.200000e+01 : f32
    %6 = vector.broadcast %cst_6 : f32 to vector<8x1xf32>
    %7 = arith.divf %5, %6 : vector<8x1xf32>
    %8 = vector.broadcast %7 : vector<8x1xf32> to vector<8x32xf32>
    %9 = arith.subf %1, %8 : vector<8x32xf32>
    %10 = arith.mulf %9, %9 : vector<8x32xf32>
    %cst_7 = arith.constant dense<0.000000e+00> : vector<8xf32>
    %11 = vector.multi_reduction <add>, %10, %cst_7 [1] : vector<8x32xf32> to vector<8xf32>
    %12 = vector.shape_cast %11 : vector<8xf32> to vector<8x1xf32>
    %cst_8 = arith.constant 3.200000e+01 : f32
    %13 = vector.broadcast %cst_8 : f32 to vector<8x1xf32>
    %14 = arith.divf %12, %13 : vector<8x1xf32>
    %15 = vector.broadcast %7 : vector<8x1xf32> to vector<8x32xf32>
    %16 = arith.subf %1, %15 : vector<8x32xf32>
    %cst_9 = arith.constant 9.99999974E-6 : f32
    %17 = vector.broadcast %cst_9 : f32 to vector<8x1xf32>
    %18 = arith.addf %14, %17 : vector<8x1xf32>
    %19 = math.rsqrt %18 : vector<8x1xf32>
    %20 = vector.broadcast %19 : vector<8x1xf32> to vector<8x32xf32>
    %21 = arith.mulf %16, %20 : vector<8x32xf32>
    %22 = vector.broadcast %2 : vector<1x32xf32> to vector<8x32xf32>
    %23 = arith.mulf %21, %22 : vector<8x32xf32>
    %24 = vector.broadcast %3 : vector<1x32xf32> to vector<8x32xf32>
    %25 = arith.addf %23, %24 : vector<8x32xf32>
    %26 = arith.truncf %25 : vector<8x32xf32> to vector<8x32xbf16>
    %c0_10 = arith.constant 0 : index
    %c0_11 = arith.constant 0 : index
    %27 = vector.load %arg4[%c0_10, %c0_11] : memref<32x32xbf16, #tpu.memory_space<vmem>>, vector<32x32xbf16>
    %cst_12 = arith.constant dense<0.000000e+00> : vector<8x32xf32>
    %28 = tpu.matmul %26, %27, %cst_12 {dimension_numbers = #tpu.dot_dimension_numbers<[1], [0], [0], [1], [0, 0, 1, 1], [], []>} : vector<8x32xbf16>, vector<32x32xbf16>, vector<8x32xf32> -> vector<8x32xf32>
    %c0_13 = arith.constant 0 : index
    %c0_14 = arith.constant 0 : index
    %29 = vector.load %arg5[%c0_13, %c0_14] : memref<1x32xf32, #tpu.memory_space<vmem>>, vector<1x32xf32>
    %30 = vector.broadcast %29 : vector<1x32xf32> to vector<8x32xf32>
    %31 = arith.addf %28, %30 : vector<8x32xf32>
    %32 = arith.truncf %31 : vector<8x32xf32> to vector<8x32xbf16>
    %c0_15 = arith.constant 0 : index
    %c0_16 = arith.constant 0 : index
    %33 = vector.load %arg6[%c0_15, %c0_16] : memref<32x32xbf16, #tpu.memory_space<vmem>>, vector<32x32xbf16>
    %cst_17 = arith.constant dense<0.000000e+00> : vector<8x32xf32>
    %34 = tpu.matmul %26, %33, %cst_17 {dimension_numbers = #tpu.dot_dimension_numbers<[1], [0], [0], [1], [0, 0, 1, 1], [], []>} : vector<8x32xbf16>, vector<32x32xbf16>, vector<8x32xf32> -> vector<8x32xf32>
    %c0_18 = arith.constant 0 : index
    %c0_19 = arith.constant 0 : index
    %35 = vector.load %arg7[%c0_18, %c0_19] : memref<1x32xf32, #tpu.memory_space<vmem>>, vector<1x32xf32>
    %36 = vector.broadcast %35 : vector<1x32xf32> to vector<8x32xf32>
    %37 = arith.addf %34, %36 : vector<8x32xf32>
    %38 = arith.truncf %37 : vector<8x32xf32> to vector<8x32xbf16>
    %c0_20 = arith.constant 0 : index
    %c0_21 = arith.constant 0 : index
    %39 = vector.load %arg8[%c0_20, %c0_21] : memref<32x32xbf16, #tpu.memory_space<vmem>>, vector<32x32xbf16>
    %cst_22 = arith.constant dense<0.000000e+00> : vector<8x32xf32>
    %40 = tpu.matmul %26, %39, %cst_22 {dimension_numbers = #tpu.dot_dimension_numbers<[1], [0], [0], [1], [0, 0, 1, 1], [], []>} : vector<8x32xbf16>, vector<32x32xbf16>, vector<8x32xf32> -> vector<8x32xf32>
    %c0_23 = arith.constant 0 : index
    %c0_24 = arith.constant 0 : index
    %41 = vector.load %arg9[%c0_23, %c0_24] : memref<1x32xf32, #tpu.memory_space<vmem>>, vector<1x32xf32>
    %42 = vector.broadcast %41 : vector<1x32xf32> to vector<8x32xf32>
    %43 = arith.addf %40, %42 : vector<8x32xf32>
    %44 = arith.truncf %43 : vector<8x32xf32> to vector<8x32xbf16>
    %45 = vector.extract_strided_slice %32 {offsets = [0, 0], sizes = [8, 8], strides = [1, 1]} : vector<8x32xbf16> to vector<8x8xbf16>
    %46 = vector.extract_strided_slice %38 {offsets = [0, 0], sizes = [8, 8], strides = [1, 1]} : vector<8x32xbf16> to vector<8x8xbf16>
    %47 = vector.extract_strided_slice %44 {offsets = [0, 0], sizes = [8, 8], strides = [1, 1]} : vector<8x32xbf16> to vector<8x8xbf16>
    "tpu.trace_start"() <{level = 10 : i32, message = "qd,kd->qk"}> : () -> ()
    %cst_25 = arith.constant dense<0.000000e+00> : vector<8x8xf32>
    %48 = tpu.matmul %45, %46, %cst_25 {dimension_numbers = #tpu.dot_dimension_numbers<[1], [1], [0], [0], [0, 0, 1, 0], [], []>} : vector<8x8xbf16>, vector<8x8xbf16>, vector<8x8xf32> -> vector<8x8xf32>
    "tpu.trace_stop"() : () -> ()
    %cst_26 = arith.constant dense<0xFF800000> : vector<8xf32>
    %49 = vector.multi_reduction <maximumf>, %48, %cst_26 [1] : vector<8x8xf32> to vector<8xf32>
    %50 = vector.shape_cast %49 : vector<8xf32> to vector<8x1xf32>
    %51 = vector.broadcast %50 : vector<8x1xf32> to vector<8x8xf32>
    %52 = arith.subf %48, %51 : vector<8x8xf32>
    %53 = math.exp %52 : vector<8x8xf32>
    %cst_27 = arith.constant dense<0.000000e+00> : vector<8xf32>
    %54 = vector.multi_reduction <add>, %53, %cst_27 [1] : vector<8x8xf32> to vector<8xf32>
    %55 = vector.shape_cast %54 : vector<8xf32> to vector<8x1xf32>
    %56 = tpu.reciprocal %55 {approx = true} : vector<8x1xf32> -> vector<8x1xf32>
    %57 = vector.broadcast %56 : vector<8x1xf32> to vector<8x8xf32>
    %58 = arith.mulf %53, %57 : vector<8x8xf32>
    %59 = arith.truncf %58 : vector<8x8xf32> to vector<8x8xbf16>
    %cst_28 = arith.constant dense<0.000000e+00> : vector<8x8xf32>
    %60 = tpu.matmul %59, %47, %cst_28 {dimension_numbers = #tpu.dot_dimension_numbers<[1], [0], [0], [1], [0, 0, 1, 1], [], []>} : vector<8x8xbf16>, vector<8x8xbf16>, vector<8x8xf32> -> vector<8x8xf32>
    %61 = vector.extract_strided_slice %32 {offsets = [0, 8], sizes = [8, 8], strides = [1, 1]} : vector<8x32xbf16> to vector<8x8xbf16>
    %62 = vector.extract_strided_slice %38 {offsets = [0, 8], sizes = [8, 8], strides = [1, 1]} : vector<8x32xbf16> to vector<8x8xbf16>
    %63 = vector.extract_strided_slice %44 {offsets = [0, 8], sizes = [8, 8], strides = [1, 1]} : vector<8x32xbf16> to vector<8x8xbf16>
    "tpu.trace_start"() <{level = 10 : i32, message = "qd,kd->qk"}> : () -> ()
    %cst_29 = arith.constant dense<0.000000e+00> : vector<8x8xf32>
    %64 = tpu.matmul %61, %62, %cst_29 {dimension_numbers = #tpu.dot_dimension_numbers<[1], [1], [0], [0], [0, 0, 1, 0], [], []>} : vector<8x8xbf16>, vector<8x8xbf16>, vector<8x8xf32> -> vector<8x8xf32>
    "tpu.trace_stop"() : () -> ()
    %cst_30 = arith.constant dense<0xFF800000> : vector<8xf32>
    %65 = vector.multi_reduction <maximumf>, %64, %cst_30 [1] : vector<8x8xf32> to vector<8xf32>
    %66 = vector.shape_cast %65 : vector<8xf32> to vector<8x1xf32>
    %67 = vector.broadcast %66 : vector<8x1xf32> to vector<8x8xf32>
    %68 = arith.subf %64, %67 : vector<8x8xf32>
    %69 = math.exp %68 : vector<8x8xf32>
    %cst_31 = arith.constant dense<0.000000e+00> : vector<8xf32>
    %70 = vector.multi_reduction <add>, %69, %cst_31 [1] : vector<8x8xf32> to vector<8xf32>
    %71 = vector.shape_cast %70 : vector<8xf32> to vector<8x1xf32>
    %72 = tpu.reciprocal %71 {approx = true} : vector<8x1xf32> -> vector<8x1xf32>
    %73 = vector.broadcast %72 : vector<8x1xf32> to vector<8x8xf32>
    %74 = arith.mulf %69, %73 : vector<8x8xf32>
    %75 = arith.truncf %74 : vector<8x8xf32> to vector<8x8xbf16>
    %cst_32 = arith.constant dense<0.000000e+00> : vector<8x8xf32>
    %76 = tpu.matmul %75, %63, %cst_32 {dimension_numbers = #tpu.dot_dimension_numbers<[1], [0], [0], [1], [0, 0, 1, 1], [], []>} : vector<8x8xbf16>, vector<8x8xbf16>, vector<8x8xf32> -> vector<8x8xf32>
    %77 = vector.extract_strided_slice %32 {offsets = [0, 16], sizes = [8, 8], strides = [1, 1]} : vector<8x32xbf16> to vector<8x8xbf16>
    %78 = vector.extract_strided_slice %38 {offsets = [0, 16], sizes = [8, 8], strides = [1, 1]} : vector<8x32xbf16> to vector<8x8xbf16>
    %79 = vector.extract_strided_slice %44 {offsets = [0, 16], sizes = [8, 8], strides = [1, 1]} : vector<8x32xbf16> to vector<8x8xbf16>
    "tpu.trace_start"() <{level = 10 : i32, message = "qd,kd->qk"}> : () -> ()
    %cst_33 = arith.constant dense<0.000000e+00> : vector<8x8xf32>
    %80 = tpu.matmul %77, %78, %cst_33 {dimension_numbers = #tpu.dot_dimension_numbers<[1], [1], [0], [0], [0, 0, 1, 0], [], []>} : vector<8x8xbf16>, vector<8x8xbf16>, vector<8x8xf32> -> vector<8x8xf32>
    "tpu.trace_stop"() : () -> ()
    %cst_34 = arith.constant dense<0xFF800000> : vector<8xf32>
    %81 = vector.multi_reduction <maximumf>, %80, %cst_34 [1] : vector<8x8xf32> to vector<8xf32>
    %82 = vector.shape_cast %81 : vector<8xf32> to vector<8x1xf32>
    %83 = vector.broadcast %82 : vector<8x1xf32> to vector<8x8xf32>
    %84 = arith.subf %80, %83 : vector<8x8xf32>
    %85 = math.exp %84 : vector<8x8xf32>
    %cst_35 = arith.constant dense<0.000000e+00> : vector<8xf32>
    %86 = vector.multi_reduction <add>, %85, %cst_35 [1] : vector<8x8xf32> to vector<8xf32>
    %87 = vector.shape_cast %86 : vector<8xf32> to vector<8x1xf32>
    %88 = tpu.reciprocal %87 {approx = true} : vector<8x1xf32> -> vector<8x1xf32>
    %89 = vector.broadcast %88 : vector<8x1xf32> to vector<8x8xf32>
    %90 = arith.mulf %85, %89 : vector<8x8xf32>
    %91 = arith.truncf %90 : vector<8x8xf32> to vector<8x8xbf16>
    %cst_36 = arith.constant dense<0.000000e+00> : vector<8x8xf32>
    %92 = tpu.matmul %91, %79, %cst_36 {dimension_numbers = #tpu.dot_dimension_numbers<[1], [0], [0], [1], [0, 0, 1, 1], [], []>} : vector<8x8xbf16>, vector<8x8xbf16>, vector<8x8xf32> -> vector<8x8xf32>
    %93 = vector.extract_strided_slice %32 {offsets = [0, 24], sizes = [8, 8], strides = [1, 1]} : vector<8x32xbf16> to vector<8x8xbf16>
    %94 = vector.extract_strided_slice %38 {offsets = [0, 24], sizes = [8, 8], strides = [1, 1]} : vector<8x32xbf16> to vector<8x8xbf16>
    %95 = vector.extract_strided_slice %44 {offsets = [0, 24], sizes = [8, 8], strides = [1, 1]} : vector<8x32xbf16> to vector<8x8xbf16>
    "tpu.trace_start"() <{level = 10 : i32, message = "qd,kd->qk"}> : () -> ()
    %cst_37 = arith.constant dense<0.000000e+00> : vector<8x8xf32>
    %96 = tpu.matmul %93, %94, %cst_37 {dimension_numbers = #tpu.dot_dimension_numbers<[1], [1], [0], [0], [0, 0, 1, 0], [], []>} : vector<8x8xbf16>, vector<8x8xbf16>, vector<8x8xf32> -> vector<8x8xf32>
    "tpu.trace_stop"() : () -> ()
    %cst_38 = arith.constant dense<0xFF800000> : vector<8xf32>
    %97 = vector.multi_reduction <maximumf>, %96, %cst_38 [1] : vector<8x8xf32> to vector<8xf32>
    %98 = vector.shape_cast %97 : vector<8xf32> to vector<8x1xf32>
    %99 = vector.broadcast %98 : vector<8x1xf32> to vector<8x8xf32>
    %100 = arith.subf %96, %99 : vector<8x8xf32>
    %101 = math.exp %100 : vector<8x8xf32>
    %cst_39 = arith.constant dense<0.000000e+00> : vector<8xf32>
    %102 = vector.multi_reduction <add>, %101, %cst_39 [1] : vector<8x8xf32> to vector<8xf32>
    %103 = vector.shape_cast %102 : vector<8xf32> to vector<8x1xf32>
    %104 = tpu.reciprocal %103 {approx = true} : vector<8x1xf32> -> vector<8x1xf32>
    %105 = vector.broadcast %104 : vector<8x1xf32> to vector<8x8xf32>
    %106 = arith.mulf %101, %105 : vector<8x8xf32>
    %107 = arith.truncf %106 : vector<8x8xf32> to vector<8x8xbf16>
    %cst_40 = arith.constant dense<0.000000e+00> : vector<8x8xf32>
    %108 = tpu.matmul %107, %95, %cst_40 {dimension_numbers = #tpu.dot_dimension_numbers<[1], [0], [0], [1], [0, 0, 1, 1], [], []>} : vector<8x8xbf16>, vector<8x8xbf16>, vector<8x8xf32> -> vector<8x8xf32>
    %109 = tpu.concatenate %60, %76, %92, %108 in 1 : vector<8x8xf32>, vector<8x8xf32>, vector<8x8xf32>, vector<8x8xf32> -> vector<8x32xf32>
    %110 = arith.truncf %109 : vector<8x32xf32> to vector<8x32xbf16>
    %c0_41 = arith.constant 0 : index
    %c0_42 = arith.constant 0 : index
    %111 = vector.load %arg10[%c0_41, %c0_42] : memref<32x32xbf16, #tpu.memory_space<vmem>>, vector<32x32xbf16>
    %cst_43 = arith.constant dense<0.000000e+00> : vector<8x32xf32>
    %112 = tpu.matmul %110, %111, %cst_43 {dimension_numbers = #tpu.dot_dimension_numbers<[1], [0], [0], [1], [0, 0, 1, 1], [], []>} : vector<8x32xbf16>, vector<32x32xbf16>, vector<8x32xf32> -> vector<8x32xf32>
    %c0_44 = arith.constant 0 : index
    %c0_45 = arith.constant 0 : index
    %113 = vector.load %arg11[%c0_44, %c0_45] : memref<1x32xf32, #tpu.memory_space<vmem>>, vector<1x32xf32>
    %114 = vector.broadcast %113 : vector<1x32xf32> to vector<8x32xf32>
    %115 = arith.addf %112, %114 : vector<8x32xf32>
    %116 = arith.addf %1, %115 : vector<8x32xf32>
    %c0_46 = arith.constant 0 : index
    %c0_47 = arith.constant 0 : index
    %117 = vector.load %arg12[%c0_46, %c0_47] : memref<1x32xf32, #tpu.memory_space<vmem>>, vector<1x32xf32>
    %c0_48 = arith.constant 0 : index
    %c0_49 = arith.constant 0 : index
    %118 = vector.load %arg13[%c0_48, %c0_49] : memref<1x32xf32, #tpu.memory_space<vmem>>, vector<1x32xf32>
    %cst_50 = arith.constant dense<0.000000e+00> : vector<8xf32>
    %119 = vector.multi_reduction <add>, %116, %cst_50 [1] : vector<8x32xf32> to vector<8xf32>
    %120 = vector.shape_cast %119 : vector<8xf32> to vector<8x1xf32>
    %cst_51 = arith.constant 3.200000e+01 : f32
    %121 = vector.broadcast %cst_51 : f32 to vector<8x1xf32>
    %122 = arith.divf %120, %121 : vector<8x1xf32>
    %123 = vector.broadcast %122 : vector<8x1xf32> to vector<8x32xf32>
    %124 = arith.subf %116, %123 : vector<8x32xf32>
    %125 = arith.mulf %124, %124 : vector<8x32xf32>
    %cst_52 = arith.constant dense<0.000000e+00> : vector<8xf32>
    %126 = vector.multi_reduction <add>, %125, %cst_52 [1] : vector<8x32xf32> to vector<8xf32>
    %127 = vector.shape_cast %126 : vector<8xf32> to vector<8x1xf32>
    %cst_53 = arith.constant 3.200000e+01 : f32
    %128 = vector.broadcast %cst_53 : f32 to vector<8x1xf32>
    %129 = arith.divf %127, %128 : vector<8x1xf32>
    %130 = vector.broadcast %122 : vector<8x1xf32> to vector<8x32xf32>
    %131 = arith.subf %116, %130 : vector<8x32xf32>
    %cst_54 = arith.constant 9.99999974E-6 : f32
    %132 = vector.broadcast %cst_54 : f32 to vector<8x1xf32>
    %133 = arith.addf %129, %132 : vector<8x1xf32>
    %134 = math.rsqrt %133 : vector<8x1xf32>
    %135 = vector.broadcast %134 : vector<8x1xf32> to vector<8x32xf32>
    %136 = arith.mulf %131, %135 : vector<8x32xf32>
    %137 = vector.broadcast %117 : vector<1x32xf32> to vector<8x32xf32>
    %138 = arith.mulf %136, %137 : vector<8x32xf32>
    %139 = vector.broadcast %118 : vector<1x32xf32> to vector<8x32xf32>
    %140 = arith.addf %138, %139 : vector<8x32xf32>
    %141 = arith.truncf %140 : vector<8x32xf32> to vector<8x32xbf16>
    %c0_55 = arith.constant 0 : index
    %c0_56 = arith.constant 0 : index
    %142 = vector.load %arg14[%c0_55, %c0_56] : memref<32x64xbf16, #tpu.memory_space<vmem>>, vector<32x64xbf16>
    %cst_57 = arith.constant dense<0.000000e+00> : vector<8x64xf32>
    %143 = tpu.matmul %141, %142, %cst_57 {dimension_numbers = #tpu.dot_dimension_numbers<[1], [0], [0], [1], [0, 0, 1, 1], [], []>} : vector<8x32xbf16>, vector<32x64xbf16>, vector<8x64xf32> -> vector<8x64xf32>
    %c0_58 = arith.constant 0 : index
    %c0_59 = arith.constant 0 : index
    %144 = vector.load %arg15[%c0_58, %c0_59] : memref<1x64xf32, #tpu.memory_space<vmem>>, vector<1x64xf32>
    %145 = vector.broadcast %144 : vector<1x64xf32> to vector<8x64xf32>
    %146 = arith.addf %143, %145 : vector<8x64xf32>
    %c0_60 = arith.constant 0 : index
    %c0_61 = arith.constant 0 : index
    %147 = vector.load %arg16[%c0_60, %c0_61] : memref<1x64xf32, #tpu.memory_space<vmem>>, vector<1x64xf32>
    %c0_62 = arith.constant 0 : index
    %c0_63 = arith.constant 0 : index
    %148 = vector.load %arg17[%c0_62, %c0_63] : memref<1x64xf32, #tpu.memory_space<vmem>>, vector<1x64xf32>
    %cst_64 = arith.constant dense<0.000000e+00> : vector<8xf32>
    %149 = vector.multi_reduction <add>, %146, %cst_64 [1] : vector<8x64xf32> to vector<8xf32>
    %150 = vector.shape_cast %149 : vector<8xf32> to vector<8x1xf32>
    %cst_65 = arith.constant 6.400000e+01 : f32
    %151 = vector.broadcast %cst_65 : f32 to vector<8x1xf32>
    %152 = arith.divf %150, %151 : vector<8x1xf32>
    %153 = vector.broadcast %152 : vector<8x1xf32> to vector<8x64xf32>
    %154 = arith.subf %146, %153 : vector<8x64xf32>
    %155 = arith.mulf %154, %154 : vector<8x64xf32>
    %cst_66 = arith.constant dense<0.000000e+00> : vector<8xf32>
    %156 = vector.multi_reduction <add>, %155, %cst_66 [1] : vector<8x64xf32> to vector<8xf32>
    %157 = vector.shape_cast %156 : vector<8xf32> to vector<8x1xf32>
    %cst_67 = arith.constant 6.400000e+01 : f32
    %158 = vector.broadcast %cst_67 : f32 to vector<8x1xf32>
    %159 = arith.divf %157, %158 : vector<8x1xf32>
    %160 = vector.broadcast %152 : vector<8x1xf32> to vector<8x64xf32>
    %161 = arith.subf %146, %160 : vector<8x64xf32>
    %cst_68 = arith.constant 9.99999974E-6 : f32
    %162 = vector.broadcast %cst_68 : f32 to vector<8x1xf32>
    %163 = arith.addf %159, %162 : vector<8x1xf32>
    %164 = math.rsqrt %163 : vector<8x1xf32>
    %165 = vector.broadcast %164 : vector<8x1xf32> to vector<8x64xf32>
    %166 = arith.mulf %161, %165 : vector<8x64xf32>
    %167 = vector.broadcast %147 : vector<1x64xf32> to vector<8x64xf32>
    %168 = arith.mulf %166, %167 : vector<8x64xf32>
    %169 = vector.broadcast %148 : vector<1x64xf32> to vector<8x64xf32>
    %170 = arith.addf %168, %169 : vector<8x64xf32>
    %cst_69 = arith.constant 5.000000e-01 : f32
    %171 = vector.broadcast %cst_69 : f32 to vector<8x64xf32>
    %172 = arith.mulf %171, %170 : vector<8x64xf32>
    %cst_70 = arith.constant 0.707106769 : f32
    %173 = vector.broadcast %cst_70 : f32 to vector<8x64xf32>
    %174 = arith.mulf %170, %173 : vector<8x64xf32>
    %175 = math.erf %174 : vector<8x64xf32>
    %cst_71 = arith.constant 1.000000e+00 : f32
    %176 = vector.broadcast %cst_71 : f32 to vector<8x64xf32>
    %177 = arith.addf %176, %175 : vector<8x64xf32>
    %178 = arith.mulf %172, %177 : vector<8x64xf32>
    %179 = arith.truncf %178 : vector<8x64xf32> to vector<8x64xbf16>
    %c0_72 = arith.constant 0 : index
    %c0_73 = arith.constant 0 : index
    %180 = vector.load %arg18[%c0_72, %c0_73] : memref<64x64xbf16, #tpu.memory_space<vmem>>, vector<64x64xbf16>
    %cst_74 = arith.constant dense<0.000000e+00> : vector<8x64xf32>
    %181 = tpu.matmul %179, %180, %cst_74 {dimension_numbers = #tpu.dot_dimension_numbers<[1], [0], [0], [1], [0, 0, 1, 1], [], []>} : vector<8x64xbf16>, vector<64x64xbf16>, vector<8x64xf32> -> vector<8x64xf32>
    %c0_75 = arith.constant 0 : index
    %c0_76 = arith.constant 0 : index
    %182 = vector.load %arg19[%c0_75, %c0_76] : memref<1x64xf32, #tpu.memory_space<vmem>>, vector<1x64xf32>
    %183 = vector.broadcast %182 : vector<1x64xf32> to vector<8x64xf32>
    %184 = arith.addf %181, %183 : vector<8x64xf32>
    %c0_77 = arith.constant 0 : index
    %c0_78 = arith.constant 0 : index
    %185 = vector.load %arg20[%c0_77, %c0_78] : memref<1x64xf32, #tpu.memory_space<vmem>>, vector<1x64xf32>
    %c0_79 = arith.constant 0 : index
    %c0_80 = arith.constant 0 : index
    %186 = vector.load %arg21[%c0_79, %c0_80] : memref<1x64xf32, #tpu.memory_space<vmem>>, vector<1x64xf32>
    %cst_81 = arith.constant dense<0.000000e+00> : vector<8xf32>
    %187 = vector.multi_reduction <add>, %184, %cst_81 [1] : vector<8x64xf32> to vector<8xf32>
    %188 = vector.shape_cast %187 : vector<8xf32> to vector<8x1xf32>
    %cst_82 = arith.constant 6.400000e+01 : f32
    %189 = vector.broadcast %cst_82 : f32 to vector<8x1xf32>
    %190 = arith.divf %188, %189 : vector<8x1xf32>
    %191 = vector.broadcast %190 : vector<8x1xf32> to vector<8x64xf32>
    %192 = arith.subf %184, %191 : vector<8x64xf32>
    %193 = arith.mulf %192, %192 : vector<8x64xf32>
    %cst_83 = arith.constant dense<0.000000e+00> : vector<8xf32>
    %194 = vector.multi_reduction <add>, %193, %cst_83 [1] : vector<8x64xf32> to vector<8xf32>
    %195 = vector.shape_cast %194 : vector<8xf32> to vector<8x1xf32>
    %cst_84 = arith.constant 6.400000e+01 : f32
    %196 = vector.broadcast %cst_84 : f32 to vector<8x1xf32>
    %197 = arith.divf %195, %196 : vector<8x1xf32>
    %198 = vector.broadcast %190 : vector<8x1xf32> to vector<8x64xf32>
    %199 = arith.subf %184, %198 : vector<8x64xf32>
    %cst_85 = arith.constant 9.99999974E-6 : f32
    %200 = vector.broadcast %cst_85 : f32 to vector<8x1xf32>
    %201 = arith.addf %197, %200 : vector<8x1xf32>
    %202 = math.rsqrt %201 : vector<8x1xf32>
    %203 = vector.broadcast %202 : vector<8x1xf32> to vector<8x64xf32>
    %204 = arith.mulf %199, %203 : vector<8x64xf32>
    %205 = vector.broadcast %185 : vector<1x64xf32> to vector<8x64xf32>
    %206 = arith.mulf %204, %205 : vector<8x64xf32>
    %207 = vector.broadcast %186 : vector<1x64xf32> to vector<8x64xf32>
    %208 = arith.addf %206, %207 : vector<8x64xf32>
    %cst_86 = arith.constant 5.000000e-01 : f32
    %209 = vector.broadcast %cst_86 : f32 to vector<8x64xf32>
    %210 = arith.mulf %209, %208 : vector<8x64xf32>
    %cst_87 = arith.constant 0.707106769 : f32
    %211 = vector.broadcast %cst_87 : f32 to vector<8x64xf32>
    %212 = arith.mulf %208, %211 : vector<8x64xf32>
    %213 = math.erf %212 : vector<8x64xf32>
    %cst_88 = arith.constant 1.000000e+00 : f32
    %214 = vector.broadcast %cst_88 : f32 to vector<8x64xf32>
    %215 = arith.addf %214, %213 : vector<8x64xf32>
    %216 = arith.mulf %210, %215 : vector<8x64xf32>
    %217 = arith.truncf %216 : vector<8x64xf32> to vector<8x64xbf16>
    %c0_89 = arith.constant 0 : index
    %c0_90 = arith.constant 0 : index
    %218 = vector.load %arg22[%c0_89, %c0_90] : memref<64x32xbf16, #tpu.memory_space<vmem>>, vector<64x32xbf16>
    %cst_91 = arith.constant dense<0.000000e+00> : vector<8x32xf32>
    %219 = tpu.matmul %217, %218, %cst_91 {dimension_numbers = #tpu.dot_dimension_numbers<[1], [0], [0], [1], [0, 0, 1, 1], [], []>} : vector<8x64xbf16>, vector<64x32xbf16>, vector<8x32xf32> -> vector<8x32xf32>
    %c0_92 = arith.constant 0 : index
    %c0_93 = arith.constant 0 : index
    %220 = vector.load %arg23[%c0_92, %c0_93] : memref<1x32xf32, #tpu.memory_space<vmem>>, vector<1x32xf32>
    %221 = vector.broadcast %220 : vector<1x32xf32> to vector<8x32xf32>
    %222 = arith.addf %219, %221 : vector<8x32xf32>
    %223 = arith.addf %116, %222 : vector<8x32xf32>
    %c0_94 = arith.constant 0 : index
    %c0_95 = arith.constant 0 : index
    %224 = vector.load %arg24[%c0_94, %c0_95] : memref<1x32xf32, #tpu.memory_space<vmem>>, vector<1x32xf32>
    %c0_96 = arith.constant 0 : index
    %c0_97 = arith.constant 0 : index
    %225 = vector.load %arg25[%c0_96, %c0_97] : memref<1x32xf32, #tpu.memory_space<vmem>>, vector<1x32xf32>
    %cst_98 = arith.constant dense<0.000000e+00> : vector<8xf32>
    %226 = vector.multi_reduction <add>, %223, %cst_98 [1] : vector<8x32xf32> to vector<8xf32>
    %227 = vector.shape_cast %226 : vector<8xf32> to vector<8x1xf32>
    %cst_99 = arith.constant 3.200000e+01 : f32
    %228 = vector.broadcast %cst_99 : f32 to vector<8x1xf32>
    %229 = arith.divf %227, %228 : vector<8x1xf32>
    %230 = vector.broadcast %229 : vector<8x1xf32> to vector<8x32xf32>
    %231 = arith.subf %223, %230 : vector<8x32xf32>
    %232 = arith.mulf %231, %231 : vector<8x32xf32>
    %cst_100 = arith.constant dense<0.000000e+00> : vector<8xf32>
    %233 = vector.multi_reduction <add>, %232, %cst_100 [1] : vector<8x32xf32> to vector<8xf32>
    %234 = vector.shape_cast %233 : vector<8xf32> to vector<8x1xf32>
    %cst_101 = arith.constant 3.200000e+01 : f32
    %235 = vector.broadcast %cst_101 : f32 to vector<8x1xf32>
    %236 = arith.divf %234, %235 : vector<8x1xf32>
    %237 = vector.broadcast %229 : vector<8x1xf32> to vector<8x32xf32>
    %238 = arith.subf %223, %237 : vector<8x32xf32>
    %cst_102 = arith.constant 9.99999974E-6 : f32
    %239 = vector.broadcast %cst_102 : f32 to vector<8x1xf32>
    %240 = arith.addf %236, %239 : vector<8x1xf32>
    %241 = math.rsqrt %240 : vector<8x1xf32>
    %242 = vector.broadcast %241 : vector<8x1xf32> to vector<8x32xf32>
    %243 = arith.mulf %238, %242 : vector<8x32xf32>
    %244 = vector.broadcast %224 : vector<1x32xf32> to vector<8x32xf32>
    %245 = arith.mulf %243, %244 : vector<8x32xf32>
    %246 = vector.broadcast %225 : vector<1x32xf32> to vector<8x32xf32>
    %247 = arith.addf %245, %246 : vector<8x32xf32>
    %248 = arith.truncf %247 : vector<8x32xf32> to vector<8x32xbf16>
    %c0_103 = arith.constant 0 : index
    %c0_104 = arith.constant 0 : index
    %249 = vector.load %arg26[%c0_103, %c0_104] : memref<32x32xbf16, #tpu.memory_space<vmem>>, vector<32x32xbf16>
    %cst_105 = arith.constant dense<0.000000e+00> : vector<8x32xf32>
    %250 = tpu.matmul %248, %249, %cst_105 {dimension_numbers = #tpu.dot_dimension_numbers<[1], [0], [0], [1], [0, 0, 1, 1], [], []>} : vector<8x32xbf16>, vector<32x32xbf16>, vector<8x32xf32> -> vector<8x32xf32>
    %c0_106 = arith.constant 0 : index
    %c0_107 = arith.constant 0 : index
    %251 = vector.load %arg27[%c0_106, %c0_107] : memref<1x32xf32, #tpu.memory_space<vmem>>, vector<1x32xf32>
    %252 = vector.broadcast %251 : vector<1x32xf32> to vector<8x32xf32>
    %253 = arith.addf %250, %252 : vector<8x32xf32>
    %c0_108 = arith.constant 0 : index
    %c0_109 = arith.constant 0 : index
    %254 = vector.load %arg28[%c0_108, %c0_109] : memref<32x32xbf16, #tpu.memory_space<vmem>>, vector<32x32xbf16>
    %cst_110 = arith.constant dense<0.000000e+00> : vector<8x32xf32>
    %255 = tpu.matmul %248, %254, %cst_110 {dimension_numbers = #tpu.dot_dimension_numbers<[1], [0], [0], [1], [0, 0, 1, 1], [], []>} : vector<8x32xbf16>, vector<32x32xbf16>, vector<8x32xf32> -> vector<8x32xf32>
    %c0_111 = arith.constant 0 : index
    %c0_112 = arith.constant 0 : index
    %256 = vector.load %arg29[%c0_111, %c0_112] : memref<1x32xf32, #tpu.memory_space<vmem>>, vector<1x32xf32>
    %257 = vector.broadcast %256 : vector<1x32xf32> to vector<8x32xf32>
    %258 = arith.addf %255, %257 : vector<8x32xf32>
    %259 = arith.negf %258 : vector<8x32xf32>
    %260 = math.exp %259 : vector<8x32xf32>
    %cst_113 = arith.constant 1.000000e+00 : f32
    %261 = vector.broadcast %cst_113 : f32 to vector<8x32xf32>
    %262 = arith.addf %261, %260 : vector<8x32xf32>
    %263 = arith.divf %261, %262 : vector<8x32xf32>
    %264 = arith.mulf %253, %263 : vector<8x32xf32>
    %265 = arith.addf %223, %264 : vector<8x32xf32>
    %c0_114 = arith.constant 0 : index
    %c0_115 = arith.constant 0 : index
    %c0_116 = arith.constant 0 : index
    %266 = vector.load %arg30[%c0_114, %c0_115, %c0_116] : memref<1x8x32xf32, #tpu.memory_space<vmem>>, vector<1x8x32xf32>
    %267 = vector.shape_cast %266 : vector<1x8x32xf32> to vector<8x32xf32>
    %268 = vector.shape_cast %265 : vector<8x32xf32> to vector<1x8x32xf32>
    tpu.vector_store %arg30[%c0_114, %c0_115, %c0_116], %268 {strides = array<i32>} : memref<1x8x32xf32, #tpu.memory_space<vmem>>, vector<1x8x32xf32>,
    return
  }
  func.func @transform_0(%arg0: i32) -> (i32, i32, i32) {
    %c0_i32 = arith.constant 0 : i32
    %c0_i32_0 = arith.constant 0 : i32
    %c0_i32_1 = arith.constant 0 : i32
    return %arg0, %c0_i32, %c0_i32_0 : i32, i32, i32
  }
  func.func @transform_1(%arg0: i32) -> (i32, i32) {
    %c0_i32 = arith.constant 0 : i32
    %c0_i32_0 = arith.constant 0 : i32
    %c0_i32_1 = arith.constant 0 : i32
    return %c0_i32, %c0_i32_0 : i32, i32
  }
  func.func @transform_2(%arg0: i32) -> (i32, i32) {
    %c0_i32 = arith.constant 0 : i32
    %c0_i32_0 = arith.constant 0 : i32
    %c0_i32_1 = arith.constant 0 : i32
    return %c0_i32, %c0_i32_0 : i32, i32
  }
  func.func @transform_3(%arg0: i32) -> (i32, i32) {
    %c0_i32 = arith.constant 0 : i32
    %c0_i32_0 = arith.constant 0 : i32
    %c0_i32_1 = arith.constant 0 : i32
    return %c0_i32, %c0_i32_0 : i32, i32
  }
  func.func @transform_4(%arg0: i32) -> (i32, i32) {
    %c0_i32 = arith.constant 0 : i32
    %c0_i32_0 = arith.constant 0 : i32
    %c0_i32_1 = arith.constant 0 : i32
    return %c0_i32, %c0_i32_0 : i32, i32
  }
  func.func @transform_5(%arg0: i32) -> (i32, i32) {
    %c0_i32 = arith.constant 0 : i32
    %c0_i32_0 = arith.constant 0 : i32
    %c0_i32_1 = arith.constant 0 : i32
    return %c0_i32, %c0_i32_0 : i32, i32
  }
  func.func @transform_6(%arg0: i32) -> (i32, i32) {
    %c0_i32 = arith.constant 0 : i32
    %c0_i32_0 = arith.constant 0 : i32
    %c0_i32_1 = arith.constant 0 : i32
    return %c0_i32, %c0_i32_0 : i32, i32
  }
  func.func @transform_7(%arg0: i32) -> (i32, i32) {
    %c0_i32 = arith.constant 0 : i32
    %c0_i32_0 = arith.constant 0 : i32
    %c0_i32_1 = arith.constant 0 : i32
    return %c0_i32, %c0_i32_0 : i32, i32
  }
  func.func @transform_8(%arg0: i32) -> (i32, i32) {
    %c0_i32 = arith.constant 0 : i32
    %c0_i32_0 = arith.constant 0 : i32
    %c0_i32_1 = arith.constant 0 : i32
    return %c0_i32, %c0_i32_0 : i32, i32
  }
  func.func @transform_9(%arg0: i32) -> (i32, i32) {
    %c0_i32 = arith.constant 0 : i32
    %c0_i32_0 = arith.constant 0 : i32
    %c0_i32_1 = arith.constant 0 : i32
    return %c0_i32, %c0_i32_0 : i32, i32
  }
  func.func @transform_10(%arg0: i32) -> (i32, i32) {
    %c0_i32 = arith.constant 0 : i32
    %c0_i32_0 = arith.constant 0 : i32
    %c0_i32_1 = arith.constant 0 : i32
    return %c0_i32, %c0_i32_0 : i32, i32
  }
  func.func @transform_11(%arg0: i32) -> (i32, i32) {
    %c0_i32 = arith.constant 0 : i32
    %c0_i32_0 = arith.constant 0 : i32
    %c0_i32_1 = arith.constant 0 : i32
    return %c0_i32, %c0_i32_0 : i32, i32
  }
  func.func @transform_12(%arg0: i32) -> (i32, i32) {
    %c0_i32 = arith.constant 0 : i32
    %c0_i32_0 = arith.constant 0 : i32
    %c0_i32_1 = arith.constant 0 : i32
    return %c0_i32, %c0_i32_0 : i32, i32
  }
  func.func @transform_13(%arg0: i32) -> (i32, i32) {
    %c0_i32 = arith.constant 0 : i32
    %c0_i32_0 = arith.constant 0 : i32
    %c0_i32_1 = arith.constant 0 : i32
    return %c0_i32, %c0_i32_0 : i32, i32
  }
  func.func @transform_14(%arg0: i32) -> (i32, i32) {
    %c0_i32 = arith.constant 0 : i32
    %c0_i32_0 = arith.constant 0 : i32
    %c0_i32_1 = arith.constant 0 : i32
    return %c0_i32, %c0_i32_0 : i32, i32
  }
  func.func @transform_15(%arg0: i32) -> (i32, i32) {
    %c0_i32 = arith.constant 0 : i32
    %c0_i32_0 = arith.constant 0 : i32
    %c0_i32_1 = arith.constant 0 : i32
    return %c0_i32, %c0_i32_0 : i32, i32
  }
  func.func @transform_16(%arg0: i32) -> (i32, i32) {
    %c0_i32 = arith.constant 0 : i32
    %c0_i32_0 = arith.constant 0 : i32
    %c0_i32_1 = arith.constant 0 : i32
    return %c0_i32, %c0_i32_0 : i32, i32
  }
  func.func @transform_17(%arg0: i32) -> (i32, i32) {
    %c0_i32 = arith.constant 0 : i32
    %c0_i32_0 = arith.constant 0 : i32
    %c0_i32_1 = arith.constant 0 : i32
    return %c0_i32, %c0_i32_0 : i32, i32
  }
  func.func @transform_18(%arg0: i32) -> (i32, i32) {
    %c0_i32 = arith.constant 0 : i32
    %c0_i32_0 = arith.constant 0 : i32
    %c0_i32_1 = arith.constant 0 : i32
    return %c0_i32, %c0_i32_0 : i32, i32
  }
  func.func @transform_19(%arg0: i32) -> (i32, i32) {
    %c0_i32 = arith.constant 0 : i32
    %c0_i32_0 = arith.constant 0 : i32
    %c0_i32_1 = arith.constant 0 : i32
    return %c0_i32, %c0_i32_0 : i32, i32
  }
  func.func @transform_20(%arg0: i32) -> (i32, i32) {
    %c0_i32 = arith.constant 0 : i32
    %c0_i32_0 = arith.constant 0 : i32
    %c0_i32_1 = arith.constant 0 : i32
    return %c0_i32, %c0_i32_0 : i32, i32
  }
  func.func @transform_21(%arg0: i32) -> (i32, i32) {
    %c0_i32 = arith.constant 0 : i32
    %c0_i32_0 = arith.constant 0 : i32
    %c0_i32_1 = arith.constant 0 : i32
    return %c0_i32, %c0_i32_0 : i32, i32
  }
  func.func @transform_22(%arg0: i32) -> (i32, i32) {
    %c0_i32 = arith.constant 0 : i32
    %c0_i32_0 = arith.constant 0 : i32
    %c0_i32_1 = arith.constant 0 : i32
    return %c0_i32, %c0_i32_0 : i32, i32
  }
  func.func @transform_23(%arg0: i32) -> (i32, i32) {
    %c0_i32 = arith.constant 0 : i32
    %c0_i32_0 = arith.constant 0 : i32
    %c0_i32_1 = arith.constant 0 : i32
    return %c0_i32, %c0_i32_0 : i32, i32
  }
  func.func @transform_24(%arg0: i32) -> (i32, i32) {
    %c0_i32 = arith.constant 0 : i32
    %c0_i32_0 = arith.constant 0 : i32
    %c0_i32_1 = arith.constant 0 : i32
    return %c0_i32, %c0_i32_0 : i32, i32
  }
  func.func @transform_25(%arg0: i32) -> (i32, i32) {
    %c0_i32 = arith.constant 0 : i32
    %c0_i32_0 = arith.constant 0 : i32
    %c0_i32_1 = arith.constant 0 : i32
    return %c0_i32, %c0_i32_0 : i32, i32
  }
  func.func @transform_26(%arg0: i32) -> (i32, i32) {
    %c0_i32 = arith.constant 0 : i32
    %c0_i32_0 = arith.constant 0 : i32
    %c0_i32_1 = arith.constant 0 : i32
    return %c0_i32, %c0_i32_0 : i32, i32
  }
  func.func @transform_27(%arg0: i32) -> (i32, i32) {
    %c0_i32 = arith.constant 0 : i32
    %c0_i32_0 = arith.constant 0 : i32
    %c0_i32_1 = arith.constant 0 : i32
    return %c0_i32, %c0_i32_0 : i32, i32
  }
  func.func @transform_28(%arg0: i32) -> (i32, i32) {
    %c0_i32 = arith.constant 0 : i32
    %c0_i32_0 = arith.constant 0 : i32
    %c0_i32_1 = arith.constant 0 : i32
    return %c0_i32, %c0_i32_0 : i32, i32
  }
  func.func @transform_29(%arg0: i32) -> (i32, i32, i32) {
    %c0_i32 = arith.constant 0 : i32
    %c0_i32_0 = arith.constant 0 : i32
    %c0_i32_1 = arith.constant 0 : i32
    return %arg0, %c0_i32, %c0_i32_0 : i32, i32, i32
  }
}

module attributes {stable_mosaic.version = 11 : i64} {
  func.func @_block_kernel(%arg0: i32, %arg1: memref<1x8x32xf32, #tpu.memory_space<vmem>>, %arg2: memref<1x32xf32, #tpu.memory_space<vmem>>, %arg3: memref<1x32xf32, #tpu.memory_space<vmem>>, %arg4: memref<32x32xbf16, #tpu.memory_space<vmem>>, %arg5: memref<1x32xf32, #tpu.memory_space<vmem>>, %arg6: memref<32x32xbf16, #tpu.memory_space<vmem>>, %arg7: memref<1x32xf32, #tpu.memory_space<vmem>>, %arg8: memref<32x32xbf16, #tpu.memory_space<vmem>>, %arg9: memref<1x32xf32, #tpu.memory_space<vmem>>, %arg10: memref<32x32xbf16, #tpu.memory_space<vmem>>, %arg11: memref<1x32xf32, #tpu.memory_space<vmem>>, %arg12: memref<1x32xf32, #tpu.memory_space<vmem>>, %arg13: memref<1x32xf32, #tpu.memory_space<vmem>>, %arg14: memref<32x64xbf16, #tpu.memory_space<vmem>>, %arg15: memref<1x64xf32, #tpu.memory_space<vmem>>, %arg16: memref<1x64xf32, #tpu.memory_space<vmem>>, %arg17: memref<1x64xf32, #tpu.memory_space<vmem>>, %arg18: memref<64x64xbf16, #tpu.memory_space<vmem>>, %arg19: memref<1x64xf32, #tpu.memory_space<vmem>>, %arg20: memref<1x64xf32, #tpu.memory_space<vmem>>, %arg21: memref<1x64xf32, #tpu.memory_space<vmem>>, %arg22: memref<64x32xbf16, #tpu.memory_space<vmem>>, %arg23: memref<1x32xf32, #tpu.memory_space<vmem>>, %arg24: memref<1x32xf32, #tpu.memory_space<vmem>>, %arg25: memref<1x32xf32, #tpu.memory_space<vmem>>, %arg26: memref<32x32xbf16, #tpu.memory_space<vmem>>, %arg27: memref<1x32xf32, #tpu.memory_space<vmem>>, %arg28: memref<32x32xbf16, #tpu.memory_space<vmem>>, %arg29: memref<1x32xf32, #tpu.memory_space<vmem>>, %arg30: memref<1x8x32xf32, #tpu.memory_space<vmem>>) attributes {dimension_semantics = [#tpu.dimension_semantics<parallel>], iteration_bounds = array<i64: 2>, scalar_prefetch = 0 : i64, scratch_operands = 0 : i64, tpu.core_type = #tpu.core_type<tc>, window_params = [{transform_indices = @transform_0, window_bounds = array<i64: 1, 8, 32>}, {pipeline_mode = #tpu.pipeline_mode<synchronous>, transform_indices = @transform_1, window_bounds = array<i64: 1, 32>}, {pipeline_mode = #tpu.pipeline_mode<synchronous>, transform_indices = @transform_2, window_bounds = array<i64: 1, 32>}, {pipeline_mode = #tpu.pipeline_mode<synchronous>, transform_indices = @transform_3, window_bounds = array<i64: 32, 32>}, {pipeline_mode = #tpu.pipeline_mode<synchronous>, transform_indices = @transform_4, window_bounds = array<i64: 1, 32>}, {pipeline_mode = #tpu.pipeline_mode<synchronous>, transform_indices = @transform_5, window_bounds = array<i64: 32, 32>}, {pipeline_mode = #tpu.pipeline_mode<synchronous>, transform_indices = @transform_6, window_bounds = array<i64: 1, 32>}, {pipeline_mode = #tpu.pipeline_mode<synchronous>, transform_indices = @transform_7, window_bounds = array<i64: 32, 32>}, {pipeline_mode = #tpu.pipeline_mode<synchronous>, transform_indices = @transform_8, window_bounds = array<i64: 1, 32>}, {pipeline_mode = #tpu.pipeline_mode<synchronous>, transform_indices = @transform_9, window_bounds = array<i64: 32, 32>}, {pipeline_mode = #tpu.pipeline_mode<synchronous>, transform_indices = @transform_10, window_bounds = array<i64: 1, 32>}, {pipeline_mode = #tpu.pipeline_mode<synchronous>, transform_indices = @transform_11, window_bounds = array<i64: 1, 32>}, {pipeline_mode = #tpu.pipeline_mode<synchronous>, transform_indices = @transform_12, window_bounds = array<i64: 1, 32>}, {pipeline_mode = #tpu.pipeline_mode<synchronous>, transform_indices = @transform_13, window_bounds = array<i64: 32, 64>}, {pipeline_mode = #tpu.pipeline_mode<synchronous>, transform_indices = @transform_14, window_bounds = array<i64: 1, 64>}, {pipeline_mode = #tpu.pipeline_mode<synchronous>, transform_indices = @transform_15, window_bounds = array<i64: 1, 64>}, {pipeline_mode = #tpu.pipeline_mode<synchronous>, transform_indices = @transform_16, window_bounds = array<i64: 1, 64>}, {pipeline_mode = #tpu.pipeline_mode<synchronous>, transform_indices = @transform_17, window_bounds = array<i64: 64, 64>}, {pipeline_mode = #tpu.pipeline_mode<synchronous>, transform_indices = @transform_18, window_bounds = array<i64: 1, 64>}, {pipeline_mode = #tpu.pipeline_mode<synchronous>, transform_indices = @transform_19, window_bounds = array<i64: 1, 64>}, {pipeline_mode = #tpu.pipeline_mode<synchronous>, transform_indices = @transform_20, window_bounds = array<i64: 1, 64>}, {pipeline_mode = #tpu.pipeline_mode<synchronous>, transform_indices = @transform_21, window_bounds = array<i64: 64, 32>}, {pipeline_mode = #tpu.pipeline_mode<synchronous>, transform_indices = @transform_22, window_bounds = array<i64: 1, 32>}, {pipeline_mode = #tpu.pipeline_mode<synchronous>, transform_indices = @transform_23, window_bounds = array<i64: 1, 32>}, {pipeline_mode = #tpu.pipeline_mode<synchronous>, transform_indices = @transform_24, window_bounds = array<i64: 1, 32>}, {pipeline_mode = #tpu.pipeline_mode<synchronous>, transform_indices = @transform_25, window_bounds = array<i64: 32, 32>}, {pipeline_mode = #tpu.pipeline_mode<synchronous>, transform_indices = @transform_26, window_bounds = array<i64: 1, 32>}, {pipeline_mode = #tpu.pipeline_mode<synchronous>, transform_indices = @transform_27, window_bounds = array<i64: 32, 32>}, {pipeline_mode = #tpu.pipeline_mode<synchronous>, transform_indices = @transform_28, window_bounds = array<i64: 1, 32>}, {transform_indices = @transform_29, window_bounds = array<i64: 1, 8, 32>}]} {
    %c0 = arith.constant 0 : index
    %c0_0 = arith.constant 0 : index
    %c0_1 = arith.constant 0 : index
    %0 = vector.load %arg1[%c0, %c0_0, %c0_1] : memref<1x8x32xf32, #tpu.memory_space<vmem>>, vector<1x8x32xf32>
    %1 = vector.shape_cast %0 : vector<1x8x32xf32> to vector<8x32xf32>
    %c0_2 = arith.constant 0 : index
    %c0_3 = arith.constant 0 : index
    %2 = vector.load %arg2[%c0_2, %c0_3] : memref<1x32xf32, #tpu.memory_space<vmem>>, vector<1x32xf32>
    %c0_4 = arith.constant 0 : index
    %c0_5 = arith.constant 0 : index
    %3 = vector.load %arg3[%c0_4, %c0_5] : memref<1x32xf32, #tpu.memory_space<vmem>>, vector<1x32xf32>
    %cst = arith.constant dense<0.000000e+00> : vector<8xf32>
    %4 = vector.multi_reduction <add>, %1, %cst [1] : vector<8x32xf32> to vector<8xf32>
    %5 = vector.shape_cast %4 : vector<8xf32> to vector<8x1xf32>
    %cst_6 = arith.constant 3.200000e+01 : f32
    %6 = vector.broadcast %cst_6 : f32 to vector<8x1xf32>
    %7 = arith.divf %5, %6 : vector<8x1xf32>
    %8 = vector.broadcast %7 : vector<8x1xf32> to vector<8x32xf32>
    %9 = arith.subf %1, %8 : vector<8x32xf32>
    %10 = arith.mulf %9, %9 : vector<8x32xf32>
    %cst_7 = arith.constant dense<0.000000e+00> : vector<8xf32>
    %11 = vector.multi_reduction <add>, %10, %cst_7 [1] : vector<8x32xf32> to vector<8xf32>
    %12 = vector.shape_cast %11 : vector<8xf32> to vector<8x1xf32>
    %cst_8 = arith.constant 3.200000e+01 : f32
    %13 = vector.broadcast %cst_8 : f32 to vector<8x1xf32>
    %14 = arith.divf %12, %13 : vector<8x1xf32>
    %15 = vector.broadcast %7 : vector<8x1xf32> to vector<8x32xf32>
    %16 = arith.subf %1, %15 : vector<8x32xf32>
    %cst_9 = arith.constant 9.99999974E-6 : f32
    %17 = vector.broadcast %cst_9 : f32 to vector<8x1xf32>
    %18 = arith.addf %14, %17 : vector<8x1xf32>
    %19 = math.rsqrt %18 : vector<8x1xf32>
    %20 = vector.broadcast %19 : vector<8x1xf32> to vector<8x32xf32>
    %21 = arith.mulf %16, %20 : vector<8x32xf32>
    %22 = vector.broadcast %2 : vector<1x32xf32> to vector<8x32xf32>
    %23 = arith.mulf %21, %22 : vector<8x32xf32>
    %24 = vector.broadcast %3 : vector<1x32xf32> to vector<8x32xf32>
    %25 = arith.addf %23, %24 : vector<8x32xf32>
    %26 = arith.truncf %25 : vector<8x32xf32> to vector<8x32xbf16>
    %c0_10 = arith.constant 0 : index
    %c0_11 = arith.constant 0 : index
    %27 = vector.load %arg4[%c0_10, %c0_11] : memref<32x32xbf16, #tpu.memory_space<vmem>>, vector<32x32xbf16>
    %cst_12 = arith.constant dense<0.000000e+00> : vector<8x32xf32>
    %28 = tpu.matmul %26, %27, %cst_12 {dimension_numbers = #tpu.dot_dimension_numbers<[1], [0], [0], [1], [0, 0, 1, 1], [], []>} : vector<8x32xbf16>, vector<32x32xbf16>, vector<8x32xf32> -> vector<8x32xf32>
    %c0_13 = arith.constant 0 : index
    %c0_14 = arith.constant 0 : index
    %29 = vector.load %arg5[%c0_13, %c0_14] : memref<1x32xf32, #tpu.memory_space<vmem>>, vector<1x32xf32>
    %30 = vector.broadcast %29 : vector<1x32xf32> to vector<8x32xf32>
    %31 = arith.addf %28, %30 : vector<8x32xf32>
    %32 = arith.truncf %31 : vector<8x32xf32> to vector<8x32xbf16>
    %c0_15 = arith.constant 0 : index
    %c0_16 = arith.constant 0 : index
    %33 = vector.load %arg6[%c0_15, %c0_16] : memref<32x32xbf16, #tpu.memory_space<vmem>>, vector<32x32xbf16>
    %cst_17 = arith.constant dense<0.000000e+00> : vector<8x32xf32>
    %34 = tpu.matmul %26, %33, %cst_17 {dimension_numbers = #tpu.dot_dimension_numbers<[1], [0], [0], [1], [0, 0, 1, 1], [], []>} : vector<8x32xbf16>, vector<32x32xbf16>, vector<8x32xf32> -> vector<8x32xf32>
    %c0_18 = arith.constant 0 : index
    %c0_19 = arith.constant 0 : index
    %35 = vector.load %arg7[%c0_18, %c0_19] : memref<1x32xf32, #tpu.memory_space<vmem>>, vector<1x32xf32>
    %36 = vector.broadcast %35 : vector<1x32xf32> to vector<8x32xf32>
    %37 = arith.addf %34, %36 : vector<8x32xf32>
    %38 = arith.truncf %37 : vector<8x32xf32> to vector<8x32xbf16>
    %c0_20 = arith.constant 0 : index
    %c0_21 = arith.constant 0 : index
    %39 = vector.load %arg8[%c0_20, %c0_21] : memref<32x32xbf16, #tpu.memory_space<vmem>>, vector<32x32xbf16>
    %cst_22 = arith.constant dense<0.000000e+00> : vector<8x32xf32>
    %40 = tpu.matmul %26, %39, %cst_22 {dimension_numbers = #tpu.dot_dimension_numbers<[1], [0], [0], [1], [0, 0, 1, 1], [], []>} : vector<8x32xbf16>, vector<32x32xbf16>, vector<8x32xf32> -> vector<8x32xf32>
    %c0_23 = arith.constant 0 : index
    %c0_24 = arith.constant 0 : index
    %41 = vector.load %arg9[%c0_23, %c0_24] : memref<1x32xf32, #tpu.memory_space<vmem>>, vector<1x32xf32>
    %42 = vector.broadcast %41 : vector<1x32xf32> to vector<8x32xf32>
    %43 = arith.addf %40, %42 : vector<8x32xf32>
    %44 = arith.truncf %43 : vector<8x32xf32> to vector<8x32xbf16>
    %45 = vector.extract_strided_slice %32 {offsets = [0, 0], sizes = [8, 8], strides = [1, 1]} : vector<8x32xbf16> to vector<8x8xbf16>
    %46 = vector.extract_strided_slice %38 {offsets = [0, 0], sizes = [8, 8], strides = [1, 1]} : vector<8x32xbf16> to vector<8x8xbf16>
    %47 = vector.extract_strided_slice %44 {offsets = [0, 0], sizes = [8, 8], strides = [1, 1]} : vector<8x32xbf16> to vector<8x8xbf16>
    "tpu.trace_start"() <{level = 10 : i32, message = "qd,kd->qk"}> : () -> ()
    %cst_25 = arith.constant dense<0.000000e+00> : vector<8x8xf32>
    %48 = tpu.matmul %45, %46, %cst_25 {dimension_numbers = #tpu.dot_dimension_numbers<[1], [1], [0], [0], [0, 0, 1, 0], [], []>} : vector<8x8xbf16>, vector<8x8xbf16>, vector<8x8xf32> -> vector<8x8xf32>
    "tpu.trace_stop"() : () -> ()
    %cst_26 = arith.constant dense<0xFF800000> : vector<8xf32>
    %49 = vector.multi_reduction <maximumf>, %48, %cst_26 [1] : vector<8x8xf32> to vector<8xf32>
    %50 = vector.shape_cast %49 : vector<8xf32> to vector<8x1xf32>
    %51 = vector.broadcast %50 : vector<8x1xf32> to vector<8x8xf32>
    %52 = arith.subf %48, %51 : vector<8x8xf32>
    %53 = math.exp %52 : vector<8x8xf32>
    %cst_27 = arith.constant dense<0.000000e+00> : vector<8xf32>
    %54 = vector.multi_reduction <add>, %53, %cst_27 [1] : vector<8x8xf32> to vector<8xf32>
    %55 = vector.shape_cast %54 : vector<8xf32> to vector<8x1xf32>
    %56 = tpu.reciprocal %55 {approx = true} : vector<8x1xf32> -> vector<8x1xf32>
    %57 = vector.broadcast %56 : vector<8x1xf32> to vector<8x8xf32>
    %58 = arith.mulf %53, %57 : vector<8x8xf32>
    %59 = arith.truncf %58 : vector<8x8xf32> to vector<8x8xbf16>
    %cst_28 = arith.constant dense<0.000000e+00> : vector<8x8xf32>
    %60 = tpu.matmul %59, %47, %cst_28 {dimension_numbers = #tpu.dot_dimension_numbers<[1], [0], [0], [1], [0, 0, 1, 1], [], []>} : vector<8x8xbf16>, vector<8x8xbf16>, vector<8x8xf32> -> vector<8x8xf32>
    %61 = vector.extract_strided_slice %32 {offsets = [0, 8], sizes = [8, 8], strides = [1, 1]} : vector<8x32xbf16> to vector<8x8xbf16>
    %62 = vector.extract_strided_slice %38 {offsets = [0, 8], sizes = [8, 8], strides = [1, 1]} : vector<8x32xbf16> to vector<8x8xbf16>
    %63 = vector.extract_strided_slice %44 {offsets = [0, 8], sizes = [8, 8], strides = [1, 1]} : vector<8x32xbf16> to vector<8x8xbf16>
    "tpu.trace_start"() <{level = 10 : i32, message = "qd,kd->qk"}> : () -> ()
    %cst_29 = arith.constant dense<0.000000e+00> : vector<8x8xf32>
    %64 = tpu.matmul %61, %62, %cst_29 {dimension_numbers = #tpu.dot_dimension_numbers<[1], [1], [0], [0], [0, 0, 1, 0], [], []>} : vector<8x8xbf16>, vector<8x8xbf16>, vector<8x8xf32> -> vector<8x8xf32>
    "tpu.trace_stop"() : () -> ()
    %cst_30 = arith.constant dense<0xFF800000> : vector<8xf32>
    %65 = vector.multi_reduction <maximumf>, %64, %cst_30 [1] : vector<8x8xf32> to vector<8xf32>
    %66 = vector.shape_cast %65 : vector<8xf32> to vector<8x1xf32>
    %67 = vector.broadcast %66 : vector<8x1xf32> to vector<8x8xf32>
    %68 = arith.subf %64, %67 : vector<8x8xf32>
    %69 = math.exp %68 : vector<8x8xf32>
    %cst_31 = arith.constant dense<0.000000e+00> : vector<8xf32>
    %70 = vector.multi_reduction <add>, %69, %cst_31 [1] : vector<8x8xf32> to vector<8xf32>
    %71 = vector.shape_cast %70 : vector<8xf32> to vector<8x1xf32>
    %72 = tpu.reciprocal %71 {approx = true} : vector<8x1xf32> -> vector<8x1xf32>
    %73 = vector.broadcast %72 : vector<8x1xf32> to vector<8x8xf32>
    %74 = arith.mulf %69, %73 : vector<8x8xf32>
    %75 = arith.truncf %74 : vector<8x8xf32> to vector<8x8xbf16>
    %cst_32 = arith.constant dense<0.000000e+00> : vector<8x8xf32>
    %76 = tpu.matmul %75, %63, %cst_32 {dimension_numbers = #tpu.dot_dimension_numbers<[1], [0], [0], [1], [0, 0, 1, 1], [], []>} : vector<8x8xbf16>, vector<8x8xbf16>, vector<8x8xf32> -> vector<8x8xf32>
    %77 = vector.extract_strided_slice %32 {offsets = [0, 16], sizes = [8, 8], strides = [1, 1]} : vector<8x32xbf16> to vector<8x8xbf16>
    %78 = vector.extract_strided_slice %38 {offsets = [0, 16], sizes = [8, 8], strides = [1, 1]} : vector<8x32xbf16> to vector<8x8xbf16>
    %79 = vector.extract_strided_slice %44 {offsets = [0, 16], sizes = [8, 8], strides = [1, 1]} : vector<8x32xbf16> to vector<8x8xbf16>
    "tpu.trace_start"() <{level = 10 : i32, message = "qd,kd->qk"}> : () -> ()
    %cst_33 = arith.constant dense<0.000000e+00> : vector<8x8xf32>
    %80 = tpu.matmul %77, %78, %cst_33 {dimension_numbers = #tpu.dot_dimension_numbers<[1], [1], [0], [0], [0, 0, 1, 0], [], []>} : vector<8x8xbf16>, vector<8x8xbf16>, vector<8x8xf32> -> vector<8x8xf32>
    "tpu.trace_stop"() : () -> ()
    %cst_34 = arith.constant dense<0xFF800000> : vector<8xf32>
    %81 = vector.multi_reduction <maximumf>, %80, %cst_34 [1] : vector<8x8xf32> to vector<8xf32>
    %82 = vector.shape_cast %81 : vector<8xf32> to vector<8x1xf32>
    %83 = vector.broadcast %82 : vector<8x1xf32> to vector<8x8xf32>
    %84 = arith.subf %80, %83 : vector<8x8xf32>
    %85 = math.exp %84 : vector<8x8xf32>
    %cst_35 = arith.constant dense<0.000000e+00> : vector<8xf32>
    %86 = vector.multi_reduction <add>, %85, %cst_35 [1] : vector<8x8xf32> to vector<8xf32>
    %87 = vector.shape_cast %86 : vector<8xf32> to vector<8x1xf32>
    %88 = tpu.reciprocal %87 {approx = true} : vector<8x1xf32> -> vector<8x1xf32>
    %89 = vector.broadcast %88 : vector<8x1xf32> to vector<8x8xf32>
    %90 = arith.mulf %85, %89 : vector<8x8xf32>
    %91 = arith.truncf %90 : vector<8x8xf32> to vector<8x8xbf16>
    %cst_36 = arith.constant dense<0.000000e+00> : vector<8x8xf32>
    %92 = tpu.matmul %91, %79, %cst_36 {dimension_numbers = #tpu.dot_dimension_numbers<[1], [0], [0], [1], [0, 0, 1, 1], [], []>} : vector<8x8xbf16>, vector<8x8xbf16>, vector<8x8xf32> -> vector<8x8xf32>
    %93 = vector.extract_strided_slice %32 {offsets = [0, 24], sizes = [8, 8], strides = [1, 1]} : vector<8x32xbf16> to vector<8x8xbf16>
    %94 = vector.extract_strided_slice %38 {offsets = [0, 24], sizes = [8, 8], strides = [1, 1]} : vector<8x32xbf16> to vector<8x8xbf16>
    %95 = vector.extract_strided_slice %44 {offsets = [0, 24], sizes = [8, 8], strides = [1, 1]} : vector<8x32xbf16> to vector<8x8xbf16>
    "tpu.trace_start"() <{level = 10 : i32, message = "qd,kd->qk"}> : () -> ()
    %cst_37 = arith.constant dense<0.000000e+00> : vector<8x8xf32>
    %96 = tpu.matmul %93, %94, %cst_37 {dimension_numbers = #tpu.dot_dimension_numbers<[1], [1], [0], [0], [0, 0, 1, 0], [], []>} : vector<8x8xbf16>, vector<8x8xbf16>, vector<8x8xf32> -> vector<8x8xf32>
    "tpu.trace_stop"() : () -> ()
    %cst_38 = arith.constant dense<0xFF800000> : vector<8xf32>
    %97 = vector.multi_reduction <maximumf>, %96, %cst_38 [1] : vector<8x8xf32> to vector<8xf32>
    %98 = vector.shape_cast %97 : vector<8xf32> to vector<8x1xf32>
    %99 = vector.broadcast %98 : vector<8x1xf32> to vector<8x8xf32>
    %100 = arith.subf %96, %99 : vector<8x8xf32>
    %101 = math.exp %100 : vector<8x8xf32>
    %cst_39 = arith.constant dense<0.000000e+00> : vector<8xf32>
    %102 = vector.multi_reduction <add>, %101, %cst_39 [1] : vector<8x8xf32> to vector<8xf32>
    %103 = vector.shape_cast %102 : vector<8xf32> to vector<8x1xf32>
    %104 = tpu.reciprocal %103 {approx = true} : vector<8x1xf32> -> vector<8x1xf32>
    %105 = vector.broadcast %104 : vector<8x1xf32> to vector<8x8xf32>
    %106 = arith.mulf %101, %105 : vector<8x8xf32>
    %107 = arith.truncf %106 : vector<8x8xf32> to vector<8x8xbf16>
    %cst_40 = arith.constant dense<0.000000e+00> : vector<8x8xf32>
    %108 = tpu.matmul %107, %95, %cst_40 {dimension_numbers = #tpu.dot_dimension_numbers<[1], [0], [0], [1], [0, 0, 1, 1], [], []>} : vector<8x8xbf16>, vector<8x8xbf16>, vector<8x8xf32> -> vector<8x8xf32>
    %109 = tpu.concatenate %60, %76, %92, %108 in 1 : vector<8x8xf32>, vector<8x8xf32>, vector<8x8xf32>, vector<8x8xf32> -> vector<8x32xf32>
    %110 = arith.truncf %109 : vector<8x32xf32> to vector<8x32xbf16>
    %c0_41 = arith.constant 0 : index
    %c0_42 = arith.constant 0 : index
    %111 = vector.load %arg10[%c0_41, %c0_42] : memref<32x32xbf16, #tpu.memory_space<vmem>>, vector<32x32xbf16>
    %cst_43 = arith.constant dense<0.000000e+00> : vector<8x32xf32>
    %112 = tpu.matmul %110, %111, %cst_43 {dimension_numbers = #tpu.dot_dimension_numbers<[1], [0], [0], [1], [0, 0, 1, 1], [], []>} : vector<8x32xbf16>, vector<32x32xbf16>, vector<8x32xf32> -> vector<8x32xf32>
    %c0_44 = arith.constant 0 : index
    %c0_45 = arith.constant 0 : index
    %113 = vector.load %arg11[%c0_44, %c0_45] : memref<1x32xf32, #tpu.memory_space<vmem>>, vector<1x32xf32>
    %114 = vector.broadcast %113 : vector<1x32xf32> to vector<8x32xf32>
    %115 = arith.addf %112, %114 : vector<8x32xf32>
    %116 = arith.addf %1, %115 : vector<8x32xf32>
    %c0_46 = arith.constant 0 : index
    %c0_47 = arith.constant 0 : index
    %117 = vector.load %arg12[%c0_46, %c0_47] : memref<1x32xf32, #tpu.memory_space<vmem>>, vector<1x32xf32>
    %c0_48 = arith.constant 0 : index
    %c0_49 = arith.constant 0 : index
    %118 = vector.load %arg13[%c0_48, %c0_49] : memref<1x32xf32, #tpu.memory_space<vmem>>, vector<1x32xf32>
    %cst_50 = arith.constant dense<0.000000e+00> : vector<8xf32>
    %119 = vector.multi_reduction <add>, %116, %cst_50 [1] : vector<8x32xf32> to vector<8xf32>
    %120 = vector.shape_cast %119 : vector<8xf32> to vector<8x1xf32>
    %cst_51 = arith.constant 3.200000e+01 : f32
    %121 = vector.broadcast %cst_51 : f32 to vector<8x1xf32>
    %122 = arith.divf %120, %121 : vector<8x1xf32>
    %123 = vector.broadcast %122 : vector<8x1xf32> to vector<8x32xf32>
    %124 = arith.subf %116, %123 : vector<8x32xf32>
    %125 = arith.mulf %124, %124 : vector<8x32xf32>
    %cst_52 = arith.constant dense<0.000000e+00> : vector<8xf32>
    %126 = vector.multi_reduction <add>, %125, %cst_52 [1] : vector<8x32xf32> to vector<8xf32>
    %127 = vector.shape_cast %126 : vector<8xf32> to vector<8x1xf32>
    %cst_53 = arith.constant 3.200000e+01 : f32
    %128 = vector.broadcast %cst_53 : f32 to vector<8x1xf32>
    %129 = arith.divf %127, %128 : vector<8x1xf32>
    %130 = vector.broadcast %122 : vector<8x1xf32> to vector<8x32xf32>
    %131 = arith.subf %116, %130 : vector<8x32xf32>
    %cst_54 = arith.constant 9.99999974E-6 : f32
    %132 = vector.broadcast %cst_54 : f32 to vector<8x1xf32>
    %133 = arith.addf %129, %132 : vector<8x1xf32>
    %134 = math.rsqrt %133 : vector<8x1xf32>
    %135 = vector.broadcast %134 : vector<8x1xf32> to vector<8x32xf32>
    %136 = arith.mulf %131, %135 : vector<8x32xf32>
    %137 = vector.broadcast %117 : vector<1x32xf32> to vector<8x32xf32>
    %138 = arith.mulf %136, %137 : vector<8x32xf32>
    %139 = vector.broadcast %118 : vector<1x32xf32> to vector<8x32xf32>
    %140 = arith.addf %138, %139 : vector<8x32xf32>
    %141 = arith.truncf %140 : vector<8x32xf32> to vector<8x32xbf16>
    %c0_55 = arith.constant 0 : index
    %c0_56 = arith.constant 0 : index
    %142 = vector.load %arg14[%c0_55, %c0_56] : memref<32x64xbf16, #tpu.memory_space<vmem>>, vector<32x64xbf16>
    %cst_57 = arith.constant dense<0.000000e+00> : vector<8x64xf32>
    %143 = tpu.matmul %141, %142, %cst_57 {dimension_numbers = #tpu.dot_dimension_numbers<[1], [0], [0], [1], [0, 0, 1, 1], [], []>} : vector<8x32xbf16>, vector<32x64xbf16>, vector<8x64xf32> -> vector<8x64xf32>
    %c0_58 = arith.constant 0 : index
    %c0_59 = arith.constant 0 : index
    %144 = vector.load %arg15[%c0_58, %c0_59] : memref<1x64xf32, #tpu.memory_space<vmem>>, vector<1x64xf32>
    %145 = vector.broadcast %144 : vector<1x64xf32> to vector<8x64xf32>
    %146 = arith.addf %143, %145 : vector<8x64xf32>
    %c0_60 = arith.constant 0 : index
    %c0_61 = arith.constant 0 : index
    %147 = vector.load %arg16[%c0_60, %c0_61] : memref<1x64xf32, #tpu.memory_space<vmem>>, vector<1x64xf32>
    %c0_62 = arith.constant 0 : index
    %c0_63 = arith.constant 0 : index
    %148 = vector.load %arg17[%c0_62, %c0_63] : memref<1x64xf32, #tpu.memory_space<vmem>>, vector<1x64xf32>
    %cst_64 = arith.constant dense<0.000000e+00> : vector<8xf32>
    %149 = vector.multi_reduction <add>, %146, %cst_64 [1] : vector<8x64xf32> to vector<8xf32>
    %150 = vector.shape_cast %149 : vector<8xf32> to vector<8x1xf32>
    %cst_65 = arith.constant 6.400000e+01 : f32
    %151 = vector.broadcast %cst_65 : f32 to vector<8x1xf32>
    %152 = arith.divf %150, %151 : vector<8x1xf32>
    %153 = vector.broadcast %152 : vector<8x1xf32> to vector<8x64xf32>
    %154 = arith.subf %146, %153 : vector<8x64xf32>
    %155 = arith.mulf %154, %154 : vector<8x64xf32>
    %cst_66 = arith.constant dense<0.000000e+00> : vector<8xf32>
    %156 = vector.multi_reduction <add>, %155, %cst_66 [1] : vector<8x64xf32> to vector<8xf32>
    %157 = vector.shape_cast %156 : vector<8xf32> to vector<8x1xf32>
    %cst_67 = arith.constant 6.400000e+01 : f32
    %158 = vector.broadcast %cst_67 : f32 to vector<8x1xf32>
    %159 = arith.divf %157, %158 : vector<8x1xf32>
    %160 = vector.broadcast %152 : vector<8x1xf32> to vector<8x64xf32>
    %161 = arith.subf %146, %160 : vector<8x64xf32>
    %cst_68 = arith.constant 9.99999974E-6 : f32
    %162 = vector.broadcast %cst_68 : f32 to vector<8x1xf32>
    %163 = arith.addf %159, %162 : vector<8x1xf32>
    %164 = math.rsqrt %163 : vector<8x1xf32>
    %165 = vector.broadcast %164 : vector<8x1xf32> to vector<8x64xf32>
    %166 = arith.mulf %161, %165 : vector<8x64xf32>
    %167 = vector.broadcast %147 : vector<1x64xf32> to vector<8x64xf32>
    %168 = arith.mulf %166, %167 : vector<8x64xf32>
    %169 = vector.broadcast %148 : vector<1x64xf32> to vector<8x64xf32>
    %170 = arith.addf %168, %169 : vector<8x64xf32>
    %cst_69 = arith.constant 5.000000e-01 : f32
    %171 = vector.broadcast %cst_69 : f32 to vector<8x64xf32>
    %172 = arith.mulf %171, %170 : vector<8x64xf32>
    %cst_70 = arith.constant 0.707106769 : f32
    %173 = vector.broadcast %cst_70 : f32 to vector<8x64xf32>
    %174 = arith.mulf %170, %173 : vector<8x64xf32>
    %175 = math.erf %174 : vector<8x64xf32>
    %cst_71 = arith.constant 1.000000e+00 : f32
    %176 = vector.broadcast %cst_71 : f32 to vector<8x64xf32>
    %177 = arith.addf %176, %175 : vector<8x64xf32>
    %178 = arith.mulf %172, %177 : vector<8x64xf32>
    %179 = arith.truncf %178 : vector<8x64xf32> to vector<8x64xbf16>
    %c0_72 = arith.constant 0 : index
    %c0_73 = arith.constant 0 : index
    %180 = vector.load %arg18[%c0_72, %c0_73] : memref<64x64xbf16, #tpu.memory_space<vmem>>, vector<64x64xbf16>
    %cst_74 = arith.constant dense<0.000000e+00> : vector<8x64xf32>
    %181 = tpu.matmul %179, %180, %cst_74 {dimension_numbers = #tpu.dot_dimension_numbers<[1], [0], [0], [1], [0, 0, 1, 1], [], []>} : vector<8x64xbf16>, vector<64x64xbf16>, vector<8x64xf32> -> vector<8x64xf32>
    %c0_75 = arith.constant 0 : index
    %c0_76 = arith.constant 0 : index
    %182 = vector.load %arg19[%c0_75, %c0_76] : memref<1x64xf32, #tpu.memory_space<vmem>>, vector<1x64xf32>
    %183 = vector.broadcast %182 : vector<1x64xf32> to vector<8x64xf32>
    %184 = arith.addf %181, %183 : vector<8x64xf32>
    %c0_77 = arith.constant 0 : index
    %c0_78 = arith.constant 0 : index
    %185 = vector.load %arg20[%c0_77, %c0_78] : memref<1x64xf32, #tpu.memory_space<vmem>>, vector<1x64xf32>
    %c0_79 = arith.constant 0 : index
    %c0_80 = arith.constant 0 : index
    %186 = vector.load %arg21[%c0_79, %c0_80] : memref<1x64xf32, #tpu.memory_space<vmem>>, vector<1x64xf32>
    %cst_81 = arith.constant dense<0.000000e+00> : vector<8xf32>
    %187 = vector.multi_reduction <add>, %184, %cst_81 [1] : vector<8x64xf32> to vector<8xf32>
    %188 = vector.shape_cast %187 : vector<8xf32> to vector<8x1xf32>
    %cst_82 = arith.constant 6.400000e+01 : f32
    %189 = vector.broadcast %cst_82 : f32 to vector<8x1xf32>
    %190 = arith.divf %188, %189 : vector<8x1xf32>
    %191 = vector.broadcast %190 : vector<8x1xf32> to vector<8x64xf32>
    %192 = arith.subf %184, %191 : vector<8x64xf32>
    %193 = arith.mulf %192, %192 : vector<8x64xf32>
    %cst_83 = arith.constant dense<0.000000e+00> : vector<8xf32>
    %194 = vector.multi_reduction <add>, %193, %cst_83 [1] : vector<8x64xf32> to vector<8xf32>
    %195 = vector.shape_cast %194 : vector<8xf32> to vector<8x1xf32>
    %cst_84 = arith.constant 6.400000e+01 : f32
    %196 = vector.broadcast %cst_84 : f32 to vector<8x1xf32>
    %197 = arith.divf %195, %196 : vector<8x1xf32>
    %198 = vector.broadcast %190 : vector<8x1xf32> to vector<8x64xf32>
    %199 = arith.subf %184, %198 : vector<8x64xf32>
    %cst_85 = arith.constant 9.99999974E-6 : f32
    %200 = vector.broadcast %cst_85 : f32 to vector<8x1xf32>
    %201 = arith.addf %197, %200 : vector<8x1xf32>
    %202 = math.rsqrt %201 : vector<8x1xf32>
    %203 = vector.broadcast %202 : vector<8x1xf32> to vector<8x64xf32>
    %204 = arith.mulf %199, %203 : vector<8x64xf32>
    %205 = vector.broadcast %185 : vector<1x64xf32> to vector<8x64xf32>
    %206 = arith.mulf %204, %205 : vector<8x64xf32>
    %207 = vector.broadcast %186 : vector<1x64xf32> to vector<8x64xf32>
    %208 = arith.addf %206, %207 : vector<8x64xf32>
    %cst_86 = arith.constant 5.000000e-01 : f32
    %209 = vector.broadcast %cst_86 : f32 to vector<8x64xf32>
    %210 = arith.mulf %209, %208 : vector<8x64xf32>
    %cst_87 = arith.constant 0.707106769 : f32
    %211 = vector.broadcast %cst_87 : f32 to vector<8x64xf32>
    %212 = arith.mulf %208, %211 : vector<8x64xf32>
    %213 = math.erf %212 : vector<8x64xf32>
    %cst_88 = arith.constant 1.000000e+00 : f32
    %214 = vector.broadcast %cst_88 : f32 to vector<8x64xf32>
    %215 = arith.addf %214, %213 : vector<8x64xf32>
    %216 = arith.mulf %210, %215 : vector<8x64xf32>
    %217 = arith.truncf %216 : vector<8x64xf32> to vector<8x64xbf16>
    %c0_89 = arith.constant 0 : index
    %c0_90 = arith.constant 0 : index
    %218 = vector.load %arg22[%c0_89, %c0_90] : memref<64x32xbf16, #tpu.memory_space<vmem>>, vector<64x32xbf16>
    %cst_91 = arith.constant dense<0.000000e+00> : vector<8x32xf32>
    %219 = tpu.matmul %217, %218, %cst_91 {dimension_numbers = #tpu.dot_dimension_numbers<[1], [0], [0], [1], [0, 0, 1, 1], [], []>} : vector<8x64xbf16>, vector<64x32xbf16>, vector<8x32xf32> -> vector<8x32xf32>
    %c0_92 = arith.constant 0 : index
    %c0_93 = arith.constant 0 : index
    %220 = vector.load %arg23[%c0_92, %c0_93] : memref<1x32xf32, #tpu.memory_space<vmem>>, vector<1x32xf32>
    %221 = vector.broadcast %220 : vector<1x32xf32> to vector<8x32xf32>
    %222 = arith.addf %219, %221 : vector<8x32xf32>
    %223 = arith.addf %116, %222 : vector<8x32xf32>
    %c0_94 = arith.constant 0 : index
    %c0_95 = arith.constant 0 : index
    %224 = vector.load %arg24[%c0_94, %c0_95] : memref<1x32xf32, #tpu.memory_space<vmem>>, vector<1x32xf32>
    %c0_96 = arith.constant 0 : index
    %c0_97 = arith.constant 0 : index
    %225 = vector.load %arg25[%c0_96, %c0_97] : memref<1x32xf32, #tpu.memory_space<vmem>>, vector<1x32xf32>
    %cst_98 = arith.constant dense<0.000000e+00> : vector<8xf32>
    %226 = vector.multi_reduction <add>, %223, %cst_98 [1] : vector<8x32xf32> to vector<8xf32>
    %227 = vector.shape_cast %226 : vector<8xf32> to vector<8x1xf32>
    %cst_99 = arith.constant 3.200000e+01 : f32
    %228 = vector.broadcast %cst_99 : f32 to vector<8x1xf32>
    %229 = arith.divf %227, %228 : vector<8x1xf32>
    %230 = vector.broadcast %229 : vector<8x1xf32> to vector<8x32xf32>
    %231 = arith.subf %223, %230 : vector<8x32xf32>
    %232 = arith.mulf %231, %231 : vector<8x32xf32>
    %cst_100 = arith.constant dense<0.000000e+00> : vector<8xf32>
    %233 = vector.multi_reduction <add>, %232, %cst_100 [1] : vector<8x32xf32> to vector<8xf32>
    %234 = vector.shape_cast %233 : vector<8xf32> to vector<8x1xf32>
    %cst_101 = arith.constant 3.200000e+01 : f32
    %235 = vector.broadcast %cst_101 : f32 to vector<8x1xf32>
    %236 = arith.divf %234, %235 : vector<8x1xf32>
    %237 = vector.broadcast %229 : vector<8x1xf32> to vector<8x32xf32>
    %238 = arith.subf %223, %237 : vector<8x32xf32>
    %cst_102 = arith.constant 9.99999974E-6 : f32
    %239 = vector.broadcast %cst_102 : f32 to vector<8x1xf32>
    %240 = arith.addf %236, %239 : vector<8x1xf32>
    %241 = math.rsqrt %240 : vector<8x1xf32>
    %242 = vector.broadcast %241 : vector<8x1xf32> to vector<8x32xf32>
    %243 = arith.mulf %238, %242 : vector<8x32xf32>
    %244 = vector.broadcast %224 : vector<1x32xf32> to vector<8x32xf32>
    %245 = arith.mulf %243, %244 : vector<8x32xf32>
    %246 = vector.broadcast %225 : vector<1x32xf32> to vector<8x32xf32>
    %247 = arith.addf %245, %246 : vector<8x32xf32>
    %248 = arith.truncf %247 : vector<8x32xf32> to vector<8x32xbf16>
    %c0_103 = arith.constant 0 : index
    %c0_104 = arith.constant 0 : index
    %249 = vector.load %arg26[%c0_103, %c0_104] : memref<32x32xbf16, #tpu.memory_space<vmem>>, vector<32x32xbf16>
    %cst_105 = arith.constant dense<0.000000e+00> : vector<8x32xf32>
    %250 = tpu.matmul %248, %249, %cst_105 {dimension_numbers = #tpu.dot_dimension_numbers<[1], [0], [0], [1], [0, 0, 1, 1], [], []>} : vector<8x32xbf16>, vector<32x32xbf16>, vector<8x32xf32> -> vector<8x32xf32>
    %c0_106 = arith.constant 0 : index
    %c0_107 = arith.constant 0 : index
    %251 = vector.load %arg27[%c0_106, %c0_107] : memref<1x32xf32, #tpu.memory_space<vmem>>, vector<1x32xf32>
    %252 = vector.broadcast %251 : vector<1x32xf32> to vector<8x32xf32>
    %253 = arith.addf %250, %252 : vector<8x32xf32>
    %c0_108 = arith.constant 0 : index
    %c0_109 = arith.constant 0 : index
    %254 = vector.load %arg28[%c0_108, %c0_109] : memref<32x32xbf16, #tpu.memory_space<vmem>>, vector<32x32xbf16>
    %cst_110 = arith.constant dense<0.000000e+00> : vector<8x32xf32>
    %255 = tpu.matmul %248, %254, %cst_110 {dimension_numbers = #tpu.dot_dimension_numbers<[1], [0], [0], [1], [0, 0, 1, 1], [], []>} : vector<8x32xbf16>, vector<32x32xbf16>, vector<8x32xf32> -> vector<8x32xf32>
    %c0_111 = arith.constant 0 : index
    %c0_112 = arith.constant 0 : index
    %256 = vector.load %arg29[%c0_111, %c0_112] : memref<1x32xf32, #tpu.memory_space<vmem>>, vector<1x32xf32>
    %257 = vector.broadcast %256 : vector<1x32xf32> to vector<8x32xf32>
    %258 = arith.addf %255, %257 : vector<8x32xf32>
    %259 = arith.negf %258 : vector<8x32xf32>
    %260 = math.exp %259 : vector<8x32xf32>
    %cst_113 = arith.constant 1.000000e+00 : f32
    %261 = vector.broadcast %cst_113 : f32 to vector<8x32xf32>
    %262 = arith.addf %261, %260 : vector<8x32xf32>
    %263 = arith.divf %261, %262 : vector<8x32xf32>
    %264 = arith.mulf %253, %263 : vector<8x32xf32>
    %265 = arith.addf %223, %264 : vector<8x32xf32>
    %c0_114 = arith.constant 0 : index
    %c0_115 = arith.constant 0 : index
    %c0_116 = arith.constant 0 : index
    %266 = vector.load %arg30[%c0_114, %c0_115, %c0_116] : memref<1x8x32xf32, #tpu.memory_space<vmem>>, vector<1x8x32xf32>
    %267 = vector.shape_cast %266 : vector<1x8x32xf32> to vector<8x32xf32>
    %268 = vector.shape_cast %265 : vector<8x32xf32> to vector<1x8x32xf32>
    tpu.vector_store %arg30[%c0_114, %c0_115, %c0_116], %268 {strides = array<i32>} : memref<1x8x32xf32, #tpu.memory_space<vmem>>, vector<1x8x32xf32>,
    return
  }
  func.func @transform_0(%arg0: i32) -> (i32, i32, i32) {
    %c0_i32 = arith.constant 0 : i32
    %c0_i32_0 = arith.constant 0 : i32
    %c0_i32_1 = arith.constant 0 : i32
    return %arg0, %c0_i32, %c0_i32_0 : i32, i32, i32
  }
  func.func @transform_1(%arg0: i32) -> (i32, i32) {
    %c0_i32 = arith.constant 0 : i32
    %c0_i32_0 = arith.constant 0 : i32
    %c0_i32_1 = arith.constant 0 : i32
    return %c0_i32, %c0_i32_0 : i32, i32
  }
  func.func @transform_2(%arg0: i32) -> (i32, i32) {
    %c0_i32 = arith.constant 0 : i32
    %c0_i32_0 = arith.constant 0 : i32
    %c0_i32_1 = arith.constant 0 : i32
    return %c0_i32, %c0_i32_0 : i32, i32
  }
  func.func @transform_3(%arg0: i32) -> (i32, i32) {
    %c0_i32 = arith.constant 0 : i32
    %c0_i32_0 = arith.constant 0 : i32
    %c0_i32_1 = arith.constant 0 : i32
    return %c0_i32, %c0_i32_0 : i32, i32
  }
  func.func @transform_4(%arg0: i32) -> (i32, i32) {
    %c0_i32 = arith.constant 0 : i32
    %c0_i32_0 = arith.constant 0 : i32
    %c0_i32_1 = arith.constant 0 : i32
    return %c0_i32, %c0_i32_0 : i32, i32
  }
  func.func @transform_5(%arg0: i32) -> (i32, i32) {
    %c0_i32 = arith.constant 0 : i32
    %c0_i32_0 = arith.constant 0 : i32
    %c0_i32_1 = arith.constant 0 : i32
    return %c0_i32, %c0_i32_0 : i32, i32
  }
  func.func @transform_6(%arg0: i32) -> (i32, i32) {
    %c0_i32 = arith.constant 0 : i32
    %c0_i32_0 = arith.constant 0 : i32
    %c0_i32_1 = arith.constant 0 : i32
    return %c0_i32, %c0_i32_0 : i32, i32
  }
  func.func @transform_7(%arg0: i32) -> (i32, i32) {
    %c0_i32 = arith.constant 0 : i32
    %c0_i32_0 = arith.constant 0 : i32
    %c0_i32_1 = arith.constant 0 : i32
    return %c0_i32, %c0_i32_0 : i32, i32
  }
  func.func @transform_8(%arg0: i32) -> (i32, i32) {
    %c0_i32 = arith.constant 0 : i32
    %c0_i32_0 = arith.constant 0 : i32
    %c0_i32_1 = arith.constant 0 : i32
    return %c0_i32, %c0_i32_0 : i32, i32
  }
  func.func @transform_9(%arg0: i32) -> (i32, i32) {
    %c0_i32 = arith.constant 0 : i32
    %c0_i32_0 = arith.constant 0 : i32
    %c0_i32_1 = arith.constant 0 : i32
    return %c0_i32, %c0_i32_0 : i32, i32
  }
  func.func @transform_10(%arg0: i32) -> (i32, i32) {
    %c0_i32 = arith.constant 0 : i32
    %c0_i32_0 = arith.constant 0 : i32
    %c0_i32_1 = arith.constant 0 : i32
    return %c0_i32, %c0_i32_0 : i32, i32
  }
  func.func @transform_11(%arg0: i32) -> (i32, i32) {
    %c0_i32 = arith.constant 0 : i32
    %c0_i32_0 = arith.constant 0 : i32
    %c0_i32_1 = arith.constant 0 : i32
    return %c0_i32, %c0_i32_0 : i32, i32
  }
  func.func @transform_12(%arg0: i32) -> (i32, i32) {
    %c0_i32 = arith.constant 0 : i32
    %c0_i32_0 = arith.constant 0 : i32
    %c0_i32_1 = arith.constant 0 : i32
    return %c0_i32, %c0_i32_0 : i32, i32
  }
  func.func @transform_13(%arg0: i32) -> (i32, i32) {
    %c0_i32 = arith.constant 0 : i32
    %c0_i32_0 = arith.constant 0 : i32
    %c0_i32_1 = arith.constant 0 : i32
    return %c0_i32, %c0_i32_0 : i32, i32
  }
  func.func @transform_14(%arg0: i32) -> (i32, i32) {
    %c0_i32 = arith.constant 0 : i32
    %c0_i32_0 = arith.constant 0 : i32
    %c0_i32_1 = arith.constant 0 : i32
    return %c0_i32, %c0_i32_0 : i32, i32
  }
  func.func @transform_15(%arg0: i32) -> (i32, i32) {
    %c0_i32 = arith.constant 0 : i32
    %c0_i32_0 = arith.constant 0 : i32
    %c0_i32_1 = arith.constant 0 : i32
    return %c0_i32, %c0_i32_0 : i32, i32
  }
  func.func @transform_16(%arg0: i32) -> (i32, i32) {
    %c0_i32 = arith.constant 0 : i32
    %c0_i32_0 = arith.constant 0 : i32
    %c0_i32_1 = arith.constant 0 : i32
    return %c0_i32, %c0_i32_0 : i32, i32
  }
  func.func @transform_17(%arg0: i32) -> (i32, i32) {
    %c0_i32 = arith.constant 0 : i32
    %c0_i32_0 = arith.constant 0 : i32
    %c0_i32_1 = arith.constant 0 : i32
    return %c0_i32, %c0_i32_0 : i32, i32
  }
  func.func @transform_18(%arg0: i32) -> (i32, i32) {
    %c0_i32 = arith.constant 0 : i32
    %c0_i32_0 = arith.constant 0 : i32
    %c0_i32_1 = arith.constant 0 : i32
    return %c0_i32, %c0_i32_0 : i32, i32
  }
  func.func @transform_19(%arg0: i32) -> (i32, i32) {
    %c0_i32 = arith.constant 0 : i32
    %c0_i32_0 = arith.constant 0 : i32
    %c0_i32_1 = arith.constant 0 : i32
    return %c0_i32, %c0_i32_0 : i32, i32
  }
  func.func @transform_20(%arg0: i32) -> (i32, i32) {
    %c0_i32 = arith.constant 0 : i32
    %c0_i32_0 = arith.constant 0 : i32
    %c0_i32_1 = arith.constant 0 : i32
    return %c0_i32, %c0_i32_0 : i32, i32
  }
  func.func @transform_21(%arg0: i32) -> (i32, i32) {
    %c0_i32 = arith.constant 0 : i32
    %c0_i32_0 = arith.constant 0 : i32
    %c0_i32_1 = arith.constant 0 : i32
    return %c0_i32, %c0_i32_0 : i32, i32
  }
  func.func @transform_22(%arg0: i32) -> (i32, i32) {
    %c0_i32 = arith.constant 0 : i32
    %c0_i32_0 = arith.constant 0 : i32
    %c0_i32_1 = arith.constant 0 : i32
    return %c0_i32, %c0_i32_0 : i32, i32
  }
  func.func @transform_23(%arg0: i32) -> (i32, i32) {
    %c0_i32 = arith.constant 0 : i32
    %c0_i32_0 = arith.constant 0 : i32
    %c0_i32_1 = arith.constant 0 : i32
    return %c0_i32, %c0_i32_0 : i32, i32
  }
  func.func @transform_24(%arg0: i32) -> (i32, i32) {
    %c0_i32 = arith.constant 0 : i32
    %c0_i32_0 = arith.constant 0 : i32
    %c0_i32_1 = arith.constant 0 : i32
    return %c0_i32, %c0_i32_0 : i32, i32
  }
  func.func @transform_25(%arg0: i32) -> (i32, i32) {
    %c0_i32 = arith.constant 0 : i32
    %c0_i32_0 = arith.constant 0 : i32
    %c0_i32_1 = arith.constant 0 : i32
    return %c0_i32, %c0_i32_0 : i32, i32
  }
  func.func @transform_26(%arg0: i32) -> (i32, i32) {
    %c0_i32 = arith.constant 0 : i32
    %c0_i32_0 = arith.constant 0 : i32
    %c0_i32_1 = arith.constant 0 : i32
    return %c0_i32, %c0_i32_0 : i32, i32
  }
  func.func @transform_27(%arg0: i32) -> (i32, i32) {
    %c0_i32 = arith.constant 0 : i32
    %c0_i32_0 = arith.constant 0 : i32
    %c0_i32_1 = arith.constant 0 : i32
    return %c0_i32, %c0_i32_0 : i32, i32
  }
  func.func @transform_28(%arg0: i32) -> (i32, i32) {
    %c0_i32 = arith.constant 0 : i32
    %c0_i32_0 = arith.constant 0 : i32
    %c0_i32_1 = arith.constant 0 : i32
    return %c0_i32, %c0_i32_0 : i32, i32
  }
  func.func @transform_29(%arg0: i32) -> (i32, i32, i32) {
    %c0_i32 = arith.constant 0 : i32
    %c0_i32_0 = arith.constant 0 : i32
    %c0_i32_1 = arith.constant 0 : i32
    return %arg0, %c0_i32, %c0_i32_0 : i32, i32, i32
  }
}

</mosaic_0001>

<llo_original>
// kernel: tpu_custom_call.1
$region0: #{tpu_custom_call.1}
  #allocation0 [shape = 'u32[]', space=smem, size = 0x4, offset = 0x4, fixed_abs, tag = 'smem constant byte address 0x4 - core index']
  #allocation1 [shape = 'u32[144,128]{1,0:T(1,128)}', space=vmem, size = 0x12000, scoped, tag = 'internal scratch']
  %s0 = inlined_call_operand.smem [shape: u32[30], index: -1, kind: input, shape index: {}]
  %s1 = sld [smem:[%s0]]
  %s2 = scalar_lea.smem %s0, 1
  %s3 = sld [smem:[%s2]]
  %s4 = scalar_lea.smem %s0, 2
  %s5 = sld [smem:[%s4]]
  %s6 = scalar_lea.smem %s0, 3
  %s7 = sld [smem:[%s6]]
  %s8 = scalar_lea.smem %s0, 4
  %s9 = sld [smem:[%s8]]
  %s10 = scalar_lea.smem %s0, 5
  %s11 = sld [smem:[%s10]]
  %s12 = scalar_lea.smem %s0, 6
  %s13 = sld [smem:[%s12]]
  %s14 = scalar_lea.smem %s0, 7
  %s15 = sld [smem:[%s14]]
  %s16 = scalar_lea.smem %s0, 8
  %s17 = sld [smem:[%s16]]
  %s18 = scalar_lea.smem %s0, 9
  %s19 = sld [smem:[%s18]]
  %s20 = scalar_lea.smem %s0, 10
  %s21 = sld [smem:[%s20]]
  %s22 = scalar_lea.smem %s0, 11
  %s23 = sld [smem:[%s22]]
  %s24 = scalar_lea.smem %s0, 12
  %s25 = sld [smem:[%s24]]
  %s26 = scalar_lea.smem %s0, 13
  %s27 = sld [smem:[%s26]]
  %s28 = scalar_lea.smem %s0, 14
  %s29 = sld [smem:[%s28]]
  %s30 = scalar_lea.smem %s0, 15
  %s31 = sld [smem:[%s30]]
  %s32 = scalar_lea.smem %s0, 16
  %s33 = sld [smem:[%s32]]
  %s34 = scalar_lea.smem %s0, 17
  %s35 = sld [smem:[%s34]]
  %s36 = scalar_lea.smem %s0, 18
  %s37 = sld [smem:[%s36]]
  %s38 = scalar_lea.smem %s0, 19
  %s39 = sld [smem:[%s38]]
  %s40 = scalar_lea.smem %s0, 20
  %s41 = sld [smem:[%s40]]
  %s42 = scalar_lea.smem %s0, 21
  %s43 = sld [smem:[%s42]]
  %s44 = scalar_lea.smem %s0, 22
  %s45 = sld [smem:[%s44]]
  %s46 = scalar_lea.smem %s0, 23
  %s47 = sld [smem:[%s46]]
  %s48 = scalar_lea.smem %s0, 24
  %s49 = sld [smem:[%s48]]
  %s50 = scalar_lea.smem %s0, 25
  %s51 = sld [smem:[%s50]]
  %s52 = scalar_lea.smem %s0, 26
  %s53 = sld [smem:[%s52]]
  %s54 = scalar_lea.smem %s0, 27
  %s55 = sld [smem:[%s54]]
  %s56 = scalar_lea.smem %s0, 28
  %s57 = sld [smem:[%s56]]
  %s58 = scalar_lea.smem %s0, 29
  %s59 = sld [smem:[%s58]]
  %s60 = sld [smem:[#allocation0]]
  $region233: #{tpu_custom_call.1} parent=0
    _
  %s62 = ssub.s32 1, %s60
  %s63 = scalar_select 0, %s62, %s60
  $region1: #{tpu_custom_call.1} parent=0
    #allocation2 [shape = 'u8[512]{0}', space=vmem, size = 0x400, scoped, tag = 'input window, operand 1, single buffered']
    #allocation3 [shape = 's32[2]{0}', space=sflag, size = 0x8, scoped, tag = 'scoped memory for tpu_custom_call.1']
    #allocation4 [shape = 's32[2]{0}', space=sflag, size = 0x8, scoped, tag = 'scoped memory for tpu_custom_call.1']
    #allocation5 [shape = 'u8[512]{0}', space=vmem, size = 0x400, scoped, tag = 'input window, operand 2, single buffered']
    #allocation6 [shape = 's32[1]{0}', space=sflag, size = 0x4, scoped, tag = 'scoped memory for tpu_custom_call.1']
    #allocation7 [shape = 'u8[512]{0}', space=vmem, size = 0x400, scoped, tag = 'input window, operand 4, single buffered']
    #allocation8 [shape = 'u8[8192]{0}', space=vmem, size = 0x2000, scoped, tag = 'input window, operand 5, single buffered']
    #allocation9 [shape = 's32[1]{0}', space=sflag, size = 0x4, scoped, tag = 'scoped memory for tpu_custom_call.1']
    #allocation10 [shape = 'u8[512]{0}', space=vmem, size = 0x400, scoped, tag = 'input window, operand 6, single buffered']
    #allocation11 [shape = 'u8[8192]{0}', space=vmem, size = 0x2000, scoped, tag = 'input window, operand 7, single buffered']
    #allocation12 [shape = 's32[1]{0}', space=sflag, size = 0x4, scoped, tag = 'scoped memory for tpu_custom_call.1']
    #allocation13 [shape = 'u8[512]{0}', space=vmem, size = 0x400, scoped, tag = 'input window, operand 8, single buffered']
    #allocation14 [shape = 'u8[8192]{0}', space=vmem, size = 0x2000, scoped, tag = 'input window, operand 9, single buffered']
    #allocation15 [shape = 's32[1]{0}', space=sflag, size = 0x4, scoped, tag = 'scoped memory for tpu_custom_call.1']
    #allocation16 [shape = 'u8[512]{0}', space=vmem, size = 0x400, scoped, tag = 'input window, operand 10, single buffered']
    #allocation17 [shape = 'u8[512]{0}', space=vmem, size = 0x400, scoped, tag = 'input window, operand 11, single buffered']
    #allocation18 [shape = 's32[1]{0}', space=sflag, size = 0x4, scoped, tag = 'scoped memory for tpu_custom_call.1']
    #allocation19 [shape = 'u8[512]{0}', space=vmem, size = 0x400, scoped, tag = 'input window, operand 12, single buffered']
    #allocation20 [shape = 'u8[8192]{0}', space=vmem, size = 0x2000, scoped, tag = 'input window, operand 13, single buffered']
    #allocation21 [shape = 's32[1]{0}', space=sflag, size = 0x4, scoped, tag = 'scoped memory for tpu_custom_call.1']
    #allocation22 [shape = 'u8[512]{0}', space=vmem, size = 0x400, scoped, tag = 'input window, operand 14, single buffered']
    #allocation23 [shape = 'u8[512]{0}', space=vmem, size = 0x400, scoped, tag = 'input window, operand 15, single buffered']
    #allocation24 [shape = 's32[1]{0}', space=sflag, size = 0x4, scoped, tag = 'scoped memory for tpu_custom_call.1']
    #allocation25 [shape = 'u8[512]{0}', space=vmem, size = 0x400, scoped, tag = 'input window, operand 16, single buffered']
    #allocation26 [shape = 'u8[512]{0}', space=vmem, size = 0x400, scoped, tag = 'input window, operand 18, single buffered']
    #allocation27 [shape = 's32[1]{0}', space=sflag, size = 0x4, scoped, tag = 'scoped memory for tpu_custom_call.1']
    #allocation28 [shape = 'u8[512]{0}', space=vmem, size = 0x400, scoped, tag = 'input window, operand 20, single buffered']
    #allocation29 [shape = 'u8[512]{0}', space=vmem, size = 0x400, scoped, tag = 'input window, operand 22, single buffered']
    #allocation30 [shape = 's32[1]{0}', space=sflag, size = 0x4, scoped, tag = 'scoped memory for tpu_custom_call.1']
    #allocation31 [shape = 'u8[512]{0}', space=vmem, size = 0x400, scoped, tag = 'input window, operand 23, single buffered']
    #allocation32 [shape = 'u8[512]{0}', space=vmem, size = 0x400, scoped, tag = 'input window, operand 24, single buffered']
    #allocation33 [shape = 's32[1]{0}', space=sflag, size = 0x4, scoped, tag = 'scoped memory for tpu_custom_call.1']
    #allocation34 [shape = 'u8[512]{0}', space=vmem, size = 0x400, scoped, tag = 'input window, operand 26, single buffered']
    #allocation35 [shape = 'u8[8192]{0}', space=vmem, size = 0x2000, scoped, tag = 'output window, operand 0']
    %64 = vsyncpa [#allocation3], 0
    %65 = vsyncpa [#allocation6], 0
    %66 = vsyncpa [#allocation9], 0
    %67 = vsyncpa [#allocation12], 0
    %68 = vsyncpa [#allocation15], 0
    %69 = vsyncpa [#allocation18], 0
    %70 = vsyncpa [#allocation21], 0
    %71 = vsyncpa [#allocation24], 0
    %72 = vsyncpa [#allocation27], 0
    %73 = vsyncpa [#allocation30], 0
    %74 = vsyncpa [#allocation33], 0
    %75 = vsyncpa [#allocation4], 0
    %s76 = scalar_lea.sflag [#allocation4], 1
    %77 = vsyncpa %s76, 0
    loop: start=0, step=1, limit=4
    $region2: #{tpu_custom_call.1} parent=1 // loop_pre_header
      _
    $region3: #{tpu_custom_call.1} parent=1 // loop_header
      %s79 = sphi 0, %s83
      %p80 = scmp.ge.s32.totalorder %s79, 4
      %s89 = sphi 0, %s91
      %s92 = sphi 0, %s89
      %s93 = sphi 0, %s92
      %s109 = sphi 0, %s93
      %s113 = sphi 0, %s113
      %s115 = sphi 0, %s113
      %s116 = sphi 0, %s115
      %s130 = sphi 0, %s116
      %s134 = sphi 0, %s134
      %s136 = sphi 0, %s134
      %s137 = sphi 0, %s136
      %s151 = sphi 0, %s137
      %s155 = sphi 0, %s155
      %s157 = sphi 0, %s155
      %s158 = sphi 0, %s157
      %s172 = sphi 0, %s158
      %s176 = sphi 0, %s176
      %s178 = sphi 0, %s176
      %s179 = sphi 0, %s178
      %s193 = sphi 0, %s179
      %s197 = sphi 0, %s197
      %s199 = sphi 0, %s197
      %s200 = sphi 0, %s199
      %s214 = sphi 0, %s200
      %s218 = sphi 0, %s218
      %s220 = sphi 0, %s218
      %s221 = sphi 0, %s220
      %s235 = sphi 0, %s221
      %s239 = sphi 0, %s239
      %s241 = sphi 0, %s239
      %s242 = sphi 0, %s241
      %s256 = sphi 0, %s242
      %s260 = sphi 0, %s260
      %s262 = sphi 0, %s260
      %s263 = sphi 0, %s262
      %s277 = sphi 0, %s263
      %s281 = sphi 0, %s281
      %s283 = sphi 0, %s281
      %s284 = sphi 0, %s283
      %s298 = sphi 0, %s284
      %s302 = sphi 0, %s302
      %s304 = sphi 0, %s302
      %s305 = sphi 0, %s304
      %s319 = sphi 0, %s305
      %s323 = sphi 0, %s323
      %s325 = sphi 0, %s323
      %s326 = sphi 0, %s325
      %s340 = sphi 0, %s326
      %s344 = sphi 0, %s344
      %s346 = sphi 0, %s344
      %s347 = sphi 0, %s346
      %s361 = sphi 0, %s347
      %s365 = sphi 0, %s365
      %s367 = sphi 0, %s365
      %s368 = sphi 0, %s367
      %s382 = sphi 0, %s368
      %s386 = sphi 0, %s386
      %s388 = sphi 0, %s386
      %s389 = sphi 0, %s388
      %s403 = sphi 0, %s389
      %s407 = sphi 0, %s407
      %s409 = sphi 0, %s407
      %s410 = sphi 0, %s409
      %s424 = sphi 0, %s410
      %s428 = sphi 0, %s428
      %s430 = sphi 0, %s428
      %s431 = sphi 0, %s430
      %s445 = sphi 0, %s431
      %s449 = sphi 0, %s449
      %s451 = sphi 0, %s449
      %s452 = sphi 0, %s451
      %s466 = sphi 0, %s452
      %s470 = sphi 0, %s470
      %s472 = sphi 0, %s470
      %s473 = sphi 0, %s472
      %s487 = sphi 0, %s473
      %s491 = sphi 0, %s491
      %s493 = sphi 0, %s491
      %s494 = sphi 0, %s493
      %s508 = sphi 0, %s494
      %s512 = sphi 0, %s512
      %s514 = sphi 0, %s512
      %s515 = sphi 0, %s514
      %s529 = sphi 0, %s515
      %s533 = sphi 0, %s533
      %s535 = sphi 0, %s533
      %s536 = sphi 0, %s535
      %s550 = sphi 0, %s536
      %s554 = sphi 0, %s554
      %s556 = sphi 0, %s554
      %s557 = sphi 0, %s556
      %s571 = sphi 0, %s557
      %s575 = sphi 0, %s575
      %s577 = sphi 0, %s575
      %s578 = sphi 0, %s577
      %s592 = sphi 0, %s578
      %s596 = sphi 0, %s596
      %s598 = sphi 0, %s596
      %s599 = sphi 0, %s598
      %s613 = sphi 0, %s599
      %s617 = sphi 0, %s617
      %s619 = sphi 0, %s617
      %s620 = sphi 0, %s619
      %s634 = sphi 0, %s620
      %s638 = sphi 0, %s638
      %s640 = sphi 0, %s638
      %s641 = sphi 0, %s640
      %s655 = sphi 0, %s641
      %s659 = sphi 0, %s659
      %s661 = sphi 0, %s659
      %s662 = sphi 0, %s661
      %s676 = sphi 0, %s662
      %s680 = sphi 0, %s680
      %s682 = sphi 0, %s680
      %s683 = sphi 0, %s682
      %s697 = sphi 0, %s683
      %s703 = sphi 0, %s705
      %s706 = sphi 0, %s703
      %s707 = sphi 0, %s706
      %s723 = sphi 0, %s707
    $region4: #{tpu_custom_call.1} parent=1 // loop_header_branch
      %82 = sbr.rel (%p80) target = $region8
    $region5: #{tpu_custom_call.1} parent=1 // loop_body
      %s84 = ssub.s32 %s79, 1
      %s85 = ssub.s32 %s79, 2
      %s86 = sadd.s32 %s79, 1
      %s87 = ssub.s32 %s79, %s86
      %p88 = scmp.eq.s32.totalorder %s87, 0
      %s90 = sadd.s32 %s89, 1
      %s91 = scalar_select %p88, %s89, %s90
      %p94 = pneg %p88
      %p95 = scmp.eq.s32.totalorder %s79, 1
      %p96 = por %p94, %p95
      %p97 = scmp.ne.s32.totalorder %s89, %s92
      %p98 = scmp.eq.s32.totalorder %s79, 0
      %p99 = por %p97, %p98
      %p100 = scmp.ne.s32.totalorder %s89, %s92
      %p101 = scmp.eq.s32.totalorder %s84, 1
      %p102 = por %p100, %p101
      %p103 = scmp.ne.s32.totalorder %s92, %s93
      %p104 = scmp.eq.s32.totalorder %s84, 0
      %p105 = por %p103, %p104
      %p106 = scmp.ne.s32.totalorder %s92, %s93
      %p107 = scmp.eq.s32.totalorder %s85, 1
      %p108 = por %p106, %p107
      %p110 = scmp.ne.s32.totalorder %s93, %s109
      %p111 = scmp.eq.s32.totalorder %s85, 0
      %p112 = por %p110, %p111
      %s114 = sadd.s32 %s113, 1
      %p117 = scmp.eq.s32.totalorder %s79, 1
      %p118 = scmp.ne.s32.totalorder %s113, %s115
      %p119 = scmp.eq.s32.totalorder %s79, 0
      %p120 = por %p118, %p119
      %p121 = scmp.ne.s32.totalorder %s113, %s115
      %p122 = scmp.eq.s32.totalorder %s84, 1
      %p123 = por %p121, %p122
      %p124 = scmp.ne.s32.totalorder %s115, %s116
      %p125 = scmp.eq.s32.totalorder %s84, 0
      %p126 = por %p124, %p125
      %p127 = scmp.ne.s32.totalorder %s115, %s116
      %p128 = scmp.eq.s32.totalorder %s85, 1
      %p129 = por %p127, %p128
      %p131 = scmp.ne.s32.totalorder %s116, %s130
      %p132 = scmp.eq.s32.totalorder %s85, 0
      %p133 = por %p131, %p132
      %s135 = sadd.s32 %s134, 1
      %p138 = scmp.eq.s32.totalorder %s79, 1
      %p139 = scmp.ne.s32.totalorder %s134, %s136
      %p140 = scmp.eq.s32.totalorder %s79, 0
      %p141 = por %p139, %p140
      %p142 = scmp.ne.s32.totalorder %s134, %s136
      %p143 = scmp.eq.s32.totalorder %s84, 1
      %p144 = por %p142, %p143
      %p145 = scmp.ne.s32.totalorder %s136, %s137
      %p146 = scmp.eq.s32.totalorder %s84, 0
      %p147 = por %p145, %p146
      %p148 = scmp.ne.s32.totalorder %s136, %s137
      %p149 = scmp.eq.s32.totalorder %s85, 1
      %p150 = por %p148, %p149
      %p152 = scmp.ne.s32.totalorder %s137, %s151
      %p153 = scmp.eq.s32.totalorder %s85, 0
      %p154 = por %p152, %p153
      %s156 = sadd.s32 %s155, 1
      %p159 = scmp.eq.s32.totalorder %s79, 1
      %p160 = scmp.ne.s32.totalorder %s155, %s157
      %p161 = scmp.eq.s32.totalorder %s79, 0
      %p162 = por %p160, %p161
      %p163 = scmp.ne.s32.totalorder %s155, %s157
      %p164 = scmp.eq.s32.totalorder %s84, 1
      %p165 = por %p163, %p164
      %p166 = scmp.ne.s32.totalorder %s157, %s158
      %p167 = scmp.eq.s32.totalorder %s84, 0
      %p168 = por %p166, %p167
      %p169 = scmp.ne.s32.totalorder %s157, %s158
      %p170 = scmp.eq.s32.totalorder %s85, 1
      %p171 = por %p169, %p170
      %p173 = scmp.ne.s32.totalorder %s158, %s172
      %p174 = scmp.eq.s32.totalorder %s85, 0
      %p175 = por %p173, %p174
      %s177 = sadd.s32 %s176, 1
      %p180 = scmp.eq.s32.totalorder %s79, 1
      %p181 = scmp.ne.s32.totalorder %s176, %s178
      %p182 = scmp.eq.s32.totalorder %s79, 0
      %p183 = por %p181, %p182
      %p184 = scmp.ne.s32.totalorder %s176, %s178
      %p185 = scmp.eq.s32.totalorder %s84, 1
      %p186 = por %p184, %p185
      %p187 = scmp.ne.s32.totalorder %s178, %s179
      %p188 = scmp.eq.s32.totalorder %s84, 0
      %p189 = por %p187, %p188
      %p190 = scmp.ne.s32.totalorder %s178, %s179
      %p191 = scmp.eq.s32.totalorder %s85, 1
      %p192 = por %p190, %p191
      %p194 = scmp.ne.s32.totalorder %s179, %s193
      %p195 = scmp.eq.s32.totalorder %s85, 0
      %p196 = por %p194, %p195
      %s198 = sadd.s32 %s197, 1
      %p201 = scmp.eq.s32.totalorder %s79, 1
      %p202 = scmp.ne.s32.totalorder %s197, %s199
      %p203 = scmp.eq.s32.totalorder %s79, 0
      %p204 = por %p202, %p203
      %p205 = scmp.ne.s32.totalorder %s197, %s199
      %p206 = scmp.eq.s32.totalorder %s84, 1
      %p207 = por %p205, %p206
      %p208 = scmp.ne.s32.totalorder %s199, %s200
      %p209 = scmp.eq.s32.totalorder %s84, 0
      %p210 = por %p208, %p209
      %p211 = scmp.ne.s32.totalorder %s199, %s200
      %p212 = scmp.eq.s32.totalorder %s85, 1
      %p213 = por %p211, %p212
      %p215 = scmp.ne.s32.totalorder %s200, %s214
      %p216 = scmp.eq.s32.totalorder %s85, 0
      %p217 = por %p215, %p216
      %s219 = sadd.s32 %s218, 1
      %p222 = scmp.eq.s32.totalorder %s79, 1
      %p223 = scmp.ne.s32.totalorder %s218, %s220
      %p224 = scmp.eq.s32.totalorder %s79, 0
      %p225 = por %p223, %p224
      %p226 = scmp.ne.s32.totalorder %s218, %s220
      %p227 = scmp.eq.s32.totalorder %s84, 1
      %p228 = por %p226, %p227
      %p229 = scmp.ne.s32.totalorder %s220, %s221
      %p230 = scmp.eq.s32.totalorder %s84, 0
      %p231 = por %p229, %p230
      %p232 = scmp.ne.s32.totalorder %s220, %s221
      %p233 = scmp.eq.s32.totalorder %s85, 1
      %p234 = por %p232, %p233
      %p236 = scmp.ne.s32.totalorder %s221, %s235
      %p237 = scmp.eq.s32.totalorder %s85, 0
      %p238 = por %p236, %p237
      %s240 = sadd.s32 %s239, 1
      %p243 = scmp.eq.s32.totalorder %s79, 1
      %p244 = scmp.ne.s32.totalorder %s239, %s241
      %p245 = scmp.eq.s32.totalorder %s79, 0
      %p246 = por %p244, %p245
      %p247 = scmp.ne.s32.totalorder %s239, %s241
      %p248 = scmp.eq.s32.totalorder %s84, 1
      %p249 = por %p247, %p248
      %p250 = scmp.ne.s32.totalorder %s241, %s242
      %p251 = scmp.eq.s32.totalorder %s84, 0
      %p252 = por %p250, %p251
      %p253 = scmp.ne.s32.totalorder %s241, %s242
      %p254 = scmp.eq.s32.totalorder %s85, 1
      %p255 = por %p253, %p254
      %p257 = scmp.ne.s32.totalorder %s242, %s256
      %p258 = scmp.eq.s32.totalorder %s85, 0
      %p259 = por %p257, %p258
      %s261 = sadd.s32 %s260, 1
      %p264 = scmp.eq.s32.totalorder %s79, 1
      %p265 = scmp.ne.s32.totalorder %s260, %s262
      %p266 = scmp.eq.s32.totalorder %s79, 0
      %p267 = por %p265, %p266
      %p268 = scmp.ne.s32.totalorder %s260, %s262
      %p269 = scmp.eq.s32.totalorder %s84, 1
      %p270 = por %p268, %p269
      %p271 = scmp.ne.s32.totalorder %s262, %s263
      %p272 = scmp.eq.s32.totalorder %s84, 0
      %p273 = por %p271, %p272
      %p274 = scmp.ne.s32.totalorder %s262, %s263
      %p275 = scmp.eq.s32.totalorder %s85, 1
      %p276 = por %p274, %p275
      %p278 = scmp.ne.s32.totalorder %s263, %s277
      %p279 = scmp.eq.s32.totalorder %s85, 0
      %p280 = por %p278, %p279
      %s282 = sadd.s32 %s281, 1
      %p285 = scmp.eq.s32.totalorder %s79, 1
      %p286 = scmp.ne.s32.totalorder %s281, %s283
      %p287 = scmp.eq.s32.totalorder %s79, 0
      %p288 = por %p286, %p287
      %p289 = scmp.ne.s32.totalorder %s281, %s283
      %p290 = scmp.eq.s32.totalorder %s84, 1
      %p291 = por %p289, %p290
      %p292 = scmp.ne.s32.totalorder %s283, %s284
      %p293 = scmp.eq.s32.totalorder %s84, 0
      %p294 = por %p292, %p293
      %p295 = scmp.ne.s32.totalorder %s283, %s284
      %p296 = scmp.eq.s32.totalorder %s85, 1
      %p297 = por %p295, %p296
      %p299 = scmp.ne.s32.totalorder %s284, %s298
      %p300 = scmp.eq.s32.totalorder %s85, 0
      %p301 = por %p299, %p300
      %s303 = sadd.s32 %s302, 1
      %p306 = scmp.eq.s32.totalorder %s79, 1
      %p307 = scmp.ne.s32.totalorder %s302, %s304
      %p308 = scmp.eq.s32.totalorder %s79, 0
      %p309 = por %p307, %p308
      %p310 = scmp.ne.s32.totalorder %s302, %s304
      %p311 = scmp.eq.s32.totalorder %s84, 1
      %p312 = por %p310, %p311
      %p313 = scmp.ne.s32.totalorder %s304, %s305
      %p314 = scmp.eq.s32.totalorder %s84, 0
      %p315 = por %p313, %p314
      %p316 = scmp.ne.s32.totalorder %s304, %s305
      %p317 = scmp.eq.s32.totalorder %s85, 1
      %p318 = por %p316, %p317
      %p320 = scmp.ne.s32.totalorder %s305, %s319
      %p321 = scmp.eq.s32.totalorder %s85, 0
      %p322 = por %p320, %p321
      %s324 = sadd.s32 %s323, 1
      %p327 = scmp.eq.s32.totalorder %s79, 1
      %p328 = scmp.ne.s32.totalorder %s323, %s325
      %p329 = scmp.eq.s32.totalorder %s79, 0
      %p330 = por %p328, %p329
      %p331 = scmp.ne.s32.totalorder %s323, %s325
      %p332 = scmp.eq.s32.totalorder %s84, 1
      %p333 = por %p331, %p332
      %p334 = scmp.ne.s32.totalorder %s325, %s326
      %p335 = scmp.eq.s32.totalorder %s84, 0
      %p336 = por %p334, %p335
      %p337 = scmp.ne.s32.totalorder %s325, %s326
      %p338 = scmp.eq.s32.totalorder %s85, 1
      %p339 = por %p337, %p338
      %p341 = scmp.ne.s32.totalorder %s326, %s340
      %p342 = scmp.eq.s32.totalorder %s85, 0
      %p343 = por %p341, %p342
      %s345 = sadd.s32 %s344, 1
      %p348 = scmp.eq.s32.totalorder %s79, 1
      %p349 = scmp.ne.s32.totalorder %s344, %s346
      %p350 = scmp.eq.s32.totalorder %s79, 0
      %p351 = por %p349, %p350
      %p352 = scmp.ne.s32.totalorder %s344, %s346
      %p353 = scmp.eq.s32.totalorder %s84, 1
      %p354 = por %p352, %p353
      %p355 = scmp.ne.s32.totalorder %s346, %s347
      %p356 = scmp.eq.s32.totalorder %s84, 0
      %p357 = por %p355, %p356
      %p358 = scmp.ne.s32.totalorder %s346, %s347
      %p359 = scmp.eq.s32.totalorder %s85, 1
      %p360 = por %p358, %p359
      %p362 = scmp.ne.s32.totalorder %s347, %s361
      %p363 = scmp.eq.s32.totalorder %s85, 0
      %p364 = por %p362, %p363
      %s366 = sadd.s32 %s365, 1
      %p369 = scmp.eq.s32.totalorder %s79, 1
      %p370 = scmp.ne.s32.totalorder %s365, %s367
      %p371 = scmp.eq.s32.totalorder %s79, 0
      %p372 = por %p370, %p371
      %p373 = scmp.ne.s32.totalorder %s365, %s367
      %p374 = scmp.eq.s32.totalorder %s84, 1
      %p375 = por %p373, %p374
      %p376 = scmp.ne.s32.totalorder %s367, %s368
      %p377 = scmp.eq.s32.totalorder %s84, 0
      %p378 = por %p376, %p377
      %p379 = scmp.ne.s32.totalorder %s367, %s368
      %p380 = scmp.eq.s32.totalorder %s85, 1
      %p381 = por %p379, %p380
      %p383 = scmp.ne.s32.totalorder %s368, %s382
      %p384 = scmp.eq.s32.totalorder %s85, 0
      %p385 = por %p383, %p384
      %s387 = sadd.s32 %s386, 1
      %p390 = scmp.eq.s32.totalorder %s79, 1
      %p391 = scmp.ne.s32.totalorder %s386, %s388
      %p392 = scmp.eq.s32.totalorder %s79, 0
      %p393 = por %p391, %p392
      %p394 = scmp.ne.s32.totalorder %s386, %s388
      %p395 = scmp.eq.s32.totalorder %s84, 1
      %p396 = por %p394, %p395
      %p397 = scmp.ne.s32.totalorder %s388, %s389
      %p398 = scmp.eq.s32.totalorder %s84, 0
      %p399 = por %p397, %p398
      %p400 = scmp.ne.s32.totalorder %s388, %s389
      %p401 = scmp.eq.s32.totalorder %s85, 1
      %p402 = por %p400, %p401
      %p404 = scmp.ne.s32.totalorder %s389, %s403
      %p405 = scmp.eq.s32.totalorder %s85, 0
      %p406 = por %p404, %p405
      %s408 = sadd.s32 %s407, 1
      %p411 = scmp.eq.s32.totalorder %s79, 1
      %p412 = scmp.ne.s32.totalorder %s407, %s409
      %p413 = scmp.eq.s32.totalorder %s79, 0
      %p414 = por %p412, %p413
      %p415 = scmp.ne.s32.totalorder %s407, %s409
      %p416 = scmp.eq.s32.totalorder %s84, 1
      %p417 = por %p415, %p416
      %p418 = scmp.ne.s32.totalorder %s409, %s410
      %p419 = scmp.eq.s32.totalorder %s84, 0
      %p420 = por %p418, %p419
      %p421 = scmp.ne.s32.totalorder %s409, %s410
      %p422 = scmp.eq.s32.totalorder %s85, 1
      %p423 = por %p421, %p422
      %p425 = scmp.ne.s32.totalorder %s410, %s424
      %p426 = scmp.eq.s32.totalorder %s85, 0
      %p427 = por %p425, %p426
      %s429 = sadd.s32 %s428, 1
      %p432 = scmp.eq.s32.totalorder %s79, 1
      %p433 = scmp.ne.s32.totalorder %s428, %s430
      %p434 = scmp.eq.s32.totalorder %s79, 0
      %p435 = por %p433, %p434
      %p436 = scmp.ne.s32.totalorder %s428, %s430
      %p437 = scmp.eq.s32.totalorder %s84, 1
      %p438 = por %p436, %p437
      %p439 = scmp.ne.s32.totalorder %s430, %s431
      %p440 = scmp.eq.s32.totalorder %s84, 0
      %p441 = por %p439, %p440
      %p442 = scmp.ne.s32.totalorder %s430, %s431
      %p443 = scmp.eq.s32.totalorder %s85, 1
      %p444 = por %p442, %p443
      %p446 = scmp.ne.s32.totalorder %s431, %s445
      %p447 = scmp.eq.s32.totalorder %s85, 0
      %p448 = por %p446, %p447
      %s450 = sadd.s32 %s449, 1
      %p453 = scmp.eq.s32.totalorder %s79, 1
      %p454 = scmp.ne.s32.totalorder %s449, %s451
      %p455 = scmp.eq.s32.totalorder %s79, 0
      %p456 = por %p454, %p455
      %p457 = scmp.ne.s32.totalorder %s449, %s451
      %p458 = scmp.eq.s32.totalorder %s84, 1
      %p459 = por %p457, %p458
      %p460 = scmp.ne.s32.totalorder %s451, %s452
      %p461 = scmp.eq.s32.totalorder %s84, 0
      %p462 = por %p460, %p461
      %p463 = scmp.ne.s32.totalorder %s451, %s452
      %p464 = scmp.eq.s32.totalorder %s85, 1
      %p465 = por %p463, %p464
      %p467 = scmp.ne.s32.totalorder %s452, %s466
      %p468 = scmp.eq.s32.totalorder %s85, 0
      %p469 = por %p467, %p468
      %s471 = sadd.s32 %s470, 1
      %p474 = scmp.eq.s32.totalorder %s79, 1
      %p475 = scmp.ne.s32.totalorder %s470, %s472
      %p476 = scmp.eq.s32.totalorder %s79, 0
      %p477 = por %p475, %p476
      %p478 = scmp.ne.s32.totalorder %s470, %s472
      %p479 = scmp.eq.s32.totalorder %s84, 1
      %p480 = por %p478, %p479
      %p481 = scmp.ne.s32.totalorder %s472, %s473
      %p482 = scmp.eq.s32.totalorder %s84, 0
      %p483 = por %p481, %p482
      %p484 = scmp.ne.s32.totalorder %s472, %s473
      %p485 = scmp.eq.s32.totalorder %s85, 1
      %p486 = por %p484, %p485
      %p488 = scmp.ne.s32.totalorder %s473, %s487
      %p489 = scmp.eq.s32.totalorder %s85, 0
      %p490 = por %p488, %p489
      %s492 = sadd.s32 %s491, 1
      %p495 = scmp.eq.s32.totalorder %s79, 1
      %p496 = scmp.ne.s32.totalorder %s491, %s493
      %p497 = scmp.eq.s32.totalorder %s79, 0
      %p498 = por %p496, %p497
      %p499 = scmp.ne.s32.totalorder %s491, %s493
      %p500 = scmp.eq.s32.totalorder %s84, 1
      %p501 = por %p499, %p500
      %p502 = scmp.ne.s32.totalorder %s493, %s494
      %p503 = scmp.eq.s32.totalorder %s84, 0
      %p504 = por %p502, %p503
      %p505 = scmp.ne.s32.totalorder %s493, %s494
      %p506 = scmp.eq.s32.totalorder %s85, 1
      %p507 = por %p505, %p506
      %p509 = scmp.ne.s32.totalorder %s494, %s508
      %p510 = scmp.eq.s32.totalorder %s85, 0
      %p511 = por %p509, %p510
      %s513 = sadd.s32 %s512, 1
      %p516 = scmp.eq.s32.totalorder %s79, 1
      %p517 = scmp.ne.s32.totalorder %s512, %s514
      %p518 = scmp.eq.s32.totalorder %s79, 0
      %p519 = por %p517, %p518
      %p520 = scmp.ne.s32.totalorder %s512, %s514
      %p521 = scmp.eq.s32.totalorder %s84, 1
      %p522 = por %p520, %p521
      %p523 = scmp.ne.s32.totalorder %s514, %s515
      %p524 = scmp.eq.s32.totalorder %s84, 0
      %p525 = por %p523, %p524
      %p526 = scmp.ne.s32.totalorder %s514, %s515
      %p527 = scmp.eq.s32.totalorder %s85, 1
      %p528 = por %p526, %p527
      %p530 = scmp.ne.s32.totalorder %s515, %s529
      %p531 = scmp.eq.s32.totalorder %s85, 0
      %p532 = por %p530, %p531
      %s534 = sadd.s32 %s533, 1
      %p537 = scmp.eq.s32.totalorder %s79, 1
      %p538 = scmp.ne.s32.totalorder %s533, %s535
      %p539 = scmp.eq.s32.totalorder %s79, 0
      %p540 = por %p538, %p539
      %p541 = scmp.ne.s32.totalorder %s533, %s535
      %p542 = scmp.eq.s32.totalorder %s84, 1
      %p543 = por %p541, %p542
      %p544 = scmp.ne.s32.totalorder %s535, %s536
      %p545 = scmp.eq.s32.totalorder %s84, 0
      %p546 = por %p544, %p545
      %p547 = scmp.ne.s32.totalorder %s535, %s536
      %p548 = scmp.eq.s32.totalorder %s85, 1
      %p549 = por %p547, %p548
      %p551 = scmp.ne.s32.totalorder %s536, %s550
      %p552 = scmp.eq.s32.totalorder %s85, 0
      %p553 = por %p551, %p552
      %s555 = sadd.s32 %s554, 1
      %p558 = scmp.eq.s32.totalorder %s79, 1
      %p559 = scmp.ne.s32.totalorder %s554, %s556
      %p560 = scmp.eq.s32.totalorder %s79, 0
      %p561 = por %p559, %p560
      %p562 = scmp.ne.s32.totalorder %s554, %s556
      %p563 = scmp.eq.s32.totalorder %s84, 1
      %p564 = por %p562, %p563
      %p565 = scmp.ne.s32.totalorder %s556, %s557
      %p566 = scmp.eq.s32.totalorder %s84, 0
      %p567 = por %p565, %p566
      %p568 = scmp.ne.s32.totalorder %s556, %s557
      %p569 = scmp.eq.s32.totalorder %s85, 1
      %p570 = por %p568, %p569
      %p572 = scmp.ne.s32.totalorder %s557, %s571
      %p573 = scmp.eq.s32.totalorder %s85, 0
      %p574 = por %p572, %p573
      %s576 = sadd.s32 %s575, 1
      %p579 = scmp.eq.s32.totalorder %s79, 1
      %p580 = scmp.ne.s32.totalorder %s575, %s577
      %p581 = scmp.eq.s32.totalorder %s79, 0
      %p582 = por %p580, %p581
      %p583 = scmp.ne.s32.totalorder %s575, %s577
      %p584 = scmp.eq.s32.totalorder %s84, 1
      %p585 = por %p583, %p584
      %p586 = scmp.ne.s32.totalorder %s577, %s578
      %p587 = scmp.eq.s32.totalorder %s84, 0
      %p588 = por %p586, %p587
      %p589 = scmp.ne.s32.totalorder %s577, %s578
      %p590 = scmp.eq.s32.totalorder %s85, 1
      %p591 = por %p589, %p590
      %p593 = scmp.ne.s32.totalorder %s578, %s592
      %p594 = scmp.eq.s32.totalorder %s85, 0
      %p595 = por %p593, %p594
      %s597 = sadd.s32 %s596, 1
      %p600 = scmp.eq.s32.totalorder %s79, 1
      %p601 = scmp.ne.s32.totalorder %s596, %s598
      %p602 = scmp.eq.s32.totalorder %s79, 0
      %p603 = por %p601, %p602
      %p604 = scmp.ne.s32.totalorder %s596, %s598
      %p605 = scmp.eq.s32.totalorder %s84, 1
      %p606 = por %p604, %p605
      %p607 = scmp.ne.s32.totalorder %s598, %s599
      %p608 = scmp.eq.s32.totalorder %s84, 0
      %p609 = por %p607, %p608
      %p610 = scmp.ne.s32.totalorder %s598, %s599
      %p611 = scmp.eq.s32.totalorder %s85, 1
      %p612 = por %p610, %p611
      %p614 = scmp.ne.s32.totalorder %s599, %s613
      %p615 = scmp.eq.s32.totalorder %s85, 0
      %p616 = por %p614, %p615
      %s618 = sadd.s32 %s617, 1
      %p621 = scmp.eq.s32.totalorder %s79, 1
      %p622 = scmp.ne.s32.totalorder %s617, %s619
      %p623 = scmp.eq.s32.totalorder %s79, 0
      %p624 = por %p622, %p623
      %p625 = scmp.ne.s32.totalorder %s617, %s619
      %p626 = scmp.eq.s32.totalorder %s84, 1
      %p627 = por %p625, %p626
      %p628 = scmp.ne.s32.totalorder %s619, %s620
      %p629 = scmp.eq.s32.totalorder %s84, 0
      %p630 = por %p628, %p629
      %p631 = scmp.ne.s32.totalorder %s619, %s620
      %p632 = scmp.eq.s32.totalorder %s85, 1
      %p633 = por %p631, %p632
      %p635 = scmp.ne.s32.totalorder %s620, %s634
      %p636 = scmp.eq.s32.totalorder %s85, 0
      %p637 = por %p635, %p636
      %s639 = sadd.s32 %s638, 1
      %p642 = scmp.eq.s32.totalorder %s79, 1
      %p643 = scmp.ne.s32.totalorder %s638, %s640
      %p644 = scmp.eq.s32.totalorder %s79, 0
      %p645 = por %p643, %p644
      %p646 = scmp.ne.s32.totalorder %s638, %s640
      %p647 = scmp.eq.s32.totalorder %s84, 1
      %p648 = por %p646, %p647
      %p649 = scmp.ne.s32.totalorder %s640, %s641
      %p650 = scmp.eq.s32.totalorder %s84, 0
      %p651 = por %p649, %p650
      %p652 = scmp.ne.s32.totalorder %s640, %s641
      %p653 = scmp.eq.s32.totalorder %s85, 1
      %p654 = por %p652, %p653
      %p656 = scmp.ne.s32.totalorder %s641, %s655
      %p657 = scmp.eq.s32.totalorder %s85, 0
      %p658 = por %p656, %p657
      %s660 = sadd.s32 %s659, 1
      %p663 = scmp.eq.s32.totalorder %s79, 1
      %p664 = scmp.ne.s32.totalorder %s659, %s661
      %p665 = scmp.eq.s32.totalorder %s79, 0
      %p666 = por %p664, %p665
      %p667 = scmp.ne.s32.totalorder %s659, %s661
      %p668 = scmp.eq.s32.totalorder %s84, 1
      %p669 = por %p667, %p668
      %p670 = scmp.ne.s32.totalorder %s661, %s662
      %p671 = scmp.eq.s32.totalorder %s84, 0
      %p672 = por %p670, %p671
      %p673 = scmp.ne.s32.totalorder %s661, %s662
      %p674 = scmp.eq.s32.totalorder %s85, 1
      %p675 = por %p673, %p674
      %p677 = scmp.ne.s32.totalorder %s662, %s676
      %p678 = scmp.eq.s32.totalorder %s85, 0
      %p679 = por %p677, %p678
      %s681 = sadd.s32 %s680, 1
      %p684 = scmp.eq.s32.totalorder %s79, 1
      %p685 = scmp.ne.s32.totalorder %s680, %s682
      %p686 = scmp.eq.s32.totalorder %s79, 0
      %p687 = por %p685, %p686
      %p688 = scmp.ne.s32.totalorder %s680, %s682
      %p689 = scmp.eq.s32.totalorder %s84, 1
      %p690 = por %p688, %p689
      %p691 = scmp.ne.s32.totalorder %s682, %s683
      %p692 = scmp.eq.s32.totalorder %s84, 0
      %p693 = por %p691, %p692
      %p694 = scmp.ne.s32.totalorder %s682, %s683
      %p695 = scmp.eq.s32.totalorder %s85, 1
      %p696 = por %p694, %p695
      %p698 = scmp.ne.s32.totalorder %s683, %s697
      %p699 = scmp.eq.s32.totalorder %s85, 0
      %p700 = por %p698, %p699
      %s701 = ssub.s32 %s79, %s86
      %p702 = scmp.eq.s32.totalorder %s701, 0
      %s704 = sadd.s32 %s703, 1
      %s705 = scalar_select %p702, %s703, %s704
      %p708 = pneg %p702
      %p709 = scmp.eq.s32.totalorder %s79, 1
      %p710 = por %p708, %p709
      %p711 = scmp.ne.s32.totalorder %s703, %s706
      %p712 = scmp.eq.s32.totalorder %s79, 0
      %p713 = por %p711, %p712
      %p714 = scmp.ne.s32.totalorder %s703, %s706
      %p715 = scmp.eq.s32.totalorder %s84, 1
      %p716 = por %p714, %p715
      %p717 = scmp.ne.s32.totalorder %s706, %s707
      %p718 = scmp.eq.s32.totalorder %s84, 0
      %p719 = por %p717, %p718
      %p720 = scmp.ne.s32.totalorder %s706, %s707
      %p721 = scmp.eq.s32.totalorder %s85, 1
      %p722 = por %p720, %p721
      %p724 = scmp.ne.s32.totalorder %s707, %s723
      %p725 = scmp.eq.s32.totalorder %s85, 0
      %p726 = por %p724, %p725
      %p727 = scmp.le.s32.totalorder 1, %s79
      %p728 = scmp.lt.s32.totalorder %s79, 3
      %p729 = pnand %p727, %p728
      %p730 = pneg %p729
      // Predicated region
      $region9: #{tpu_custom_call.1} parent=5 // pred_check
        _
      $region10: #{tpu_custom_call.1} parent=5 // pred_check_branch
        %732 = sbr.rel (%p729) target = $region12
      $region11: #{tpu_custom_call.1} parent=5 // pred_region
        %s733 = ssub.s32 %s79, 1
        // Predicated region
        $region13: #{tpu_custom_call.1} parent=11 // pred_check
          %p734 = pneg %p126
        $region14: #{tpu_custom_call.1} parent=11 // pred_check_branch
          %736 = sbr.rel (%p734) target = $region16
        $region15: #{tpu_custom_call.1} parent=11 // pred_region
          %s738 = ssub.s32 16, 16
          %739 = vsyncadd [#allocation3], %s738
          %s741 = sshll.u32 [#allocation2], 4
          %s742 = int_to_ptr.vmem [resolvable:$true] %s741
          %744 = dma.hbm_to_vmem [thread:$0]  %s3, 16, %s742, [#allocation3]
        $region16: #{tpu_custom_call.1} parent=11 // pred_fallthru
          _
        // Predicated region
        $region17: #{tpu_custom_call.1} parent=11 // pred_check
          %p745 = pneg %p147
        $region18: #{tpu_custom_call.1} parent=11 // pred_check_branch
          %747 = sbr.rel (%p745) target = $region20
        $region19: #{tpu_custom_call.1} parent=11 // pred_region
          %s749 = ssub.s32 16, 16
          %750 = vsyncadd [#allocation6], %s749
          %s752 = sshll.u32 [#allocation5], 4
          %s753 = int_to_ptr.vmem [resolvable:$true] %s752
          %755 = dma.hbm_to_vmem [thread:$0]  %s5, 16, %s753, [#allocation6]
        $region20: #{tpu_custom_call.1} parent=11 // pred_fallthru
          _
        // Predicated region
        $region21: #{tpu_custom_call.1} parent=11 // pred_check
          %p756 = pneg %p168
        $region22: #{tpu_custom_call.1} parent=11 // pred_check_branch
          %758 = sbr.rel (%p756) target = $region24
        $region23: #{tpu_custom_call.1} parent=11 // pred_region
          _
        $region24: #{tpu_custom_call.1} parent=11 // pred_fallthru
          _
        // Predicated region
        $region25: #{tpu_custom_call.1} parent=11 // pred_check
          %p759 = pneg %p189
        $region26: #{tpu_custom_call.1} parent=11 // pred_check_branch
          %761 = sbr.rel (%p759) target = $region28
        $region27: #{tpu_custom_call.1} parent=11 // pred_region
          %s763 = ssub.s32 16, 16
          %764 = vsyncadd [#allocation6], %s763
          %s766 = sshll.u32 [#allocation7], 4
          %s767 = int_to_ptr.vmem [resolvable:$true] %s766
          %769 = dma.hbm_to_vmem [thread:$0]  %s9, 16, %s767, [#allocation6]
        $region28: #{tpu_custom_call.1} parent=11 // pred_fallthru
          _
        // Predicated region
        $region29: #{tpu_custom_call.1} parent=11 // pred_check
          %p770 = pneg %p210
        $region30: #{tpu_custom_call.1} parent=11 // pred_check_branch
          %772 = sbr.rel (%p770) target = $region32
        $region31: #{tpu_custom_call.1} parent=11 // pred_region
          %s774 = ssub.s32 256, 256
          %775 = vsyncadd [#allocation9], %s774
          %s776 = sshll.u32 [#allocation8], 4
          %s777 = int_to_ptr.vmem [resolvable:$true] %s776
          %782 = dma.hbm_to_vmem [thread:$0]  %s11, 256, %s777, [#allocation9], 64, 64, 4
        $region32: #{tpu_custom_call.1} parent=11 // pred_fallthru
          _
        // Predicated region
        $region33: #{tpu_custom_call.1} parent=11 // pred_check
          %p783 = pneg %p231
        $region34: #{tpu_custom_call.1} parent=11 // pred_check_branch
          %785 = sbr.rel (%p783) target = $region36
        $region35: #{tpu_custom_call.1} parent=11 // pred_region
          %s787 = ssub.s32 16, 16
          %788 = vsyncadd [#allocation9], %s787
          %s790 = sshll.u32 [#allocation10], 4
          %s791 = int_to_ptr.vmem [resolvable:$true] %s790
          %793 = dma.hbm_to_vmem [thread:$0]  %s13, 16, %s791, [#allocation9]
        $region36: #{tpu_custom_call.1} parent=11 // pred_fallthru
          _
        // Predicated region
        $region37: #{tpu_custom_call.1} parent=11 // pred_check
          %p794 = pneg %p252
        $region38: #{tpu_custom_call.1} parent=11 // pred_check_branch
          %796 = sbr.rel (%p794) target = $region40
        $region39: #{tpu_custom_call.1} parent=11 // pred_region
          %s798 = ssub.s32 256, 256
          %799 = vsyncadd [#allocation12], %s798
          %s800 = sshll.u32 [#allocation11], 4
          %s801 = int_to_ptr.vmem [resolvable:$true] %s800
          %806 = dma.hbm_to_vmem [thread:$0]  %s15, 256, %s801, [#allocation12], 64, 64, 4
        $region40: #{tpu_custom_call.1} parent=11 // pred_fallthru
          _
        // Predicated region
        $region41: #{tpu_custom_call.1} parent=11 // pred_check
          %p807 = pneg %p273
        $region42: #{tpu_custom_call.1} parent=11 // pred_check_branch
          %809 = sbr.rel (%p807) target = $region44
        $region43: #{tpu_custom_call.1} parent=11 // pred_region
          %s811 = ssub.s32 16, 16
          %812 = vsyncadd [#allocation12], %s811
          %s814 = sshll.u32 [#allocation13], 4
          %s815 = int_to_ptr.vmem [resolvable:$true] %s814
          %817 = dma.hbm_to_vmem [thread:$0]  %s17, 16, %s815, [#allocation12]
        $region44: #{tpu_custom_call.1} parent=11 // pred_fallthru
          _
        // Predicated region
        $region45: #{tpu_custom_call.1} parent=11 // pred_check
          %p818 = pneg %p294
        $region46: #{tpu_custom_call.1} parent=11 // pred_check_branch
          %820 = sbr.rel (%p818) target = $region48
        $region47: #{tpu_custom_call.1} parent=11 // pred_region
          %s822 = ssub.s32 256, 256
          %823 = vsyncadd [#allocation15], %s822
          %s824 = sshll.u32 [#allocation14], 4
          %s825 = int_to_ptr.vmem [resolvable:$true] %s824
          %830 = dma.hbm_to_vmem [thread:$0]  %s19, 256, %s825, [#allocation15], 64, 64, 4
        $region48: #{tpu_custom_call.1} parent=11 // pred_fallthru
          _
        // Predicated region
        $region49: #{tpu_custom_call.1} parent=11 // pred_check
          %p831 = pneg %p315
        $region50: #{tpu_custom_call.1} parent=11 // pred_check_branch
          %833 = sbr.rel (%p831) target = $region52
        $region51: #{tpu_custom_call.1} parent=11 // pred_region
          %s835 = ssub.s32 16, 16
          %836 = vsyncadd [#allocation15], %s835
          %s838 = sshll.u32 [#allocation16], 4
          %s839 = int_to_ptr.vmem [resolvable:$true] %s838
          %841 = dma.hbm_to_vmem [thread:$0]  %s21, 16, %s839, [#allocation15]
        $region52: #{tpu_custom_call.1} parent=11 // pred_fallthru
          _
        // Predicated region
        $region53: #{tpu_custom_call.1} parent=11 // pred_check
          %p842 = pneg %p336
        $region54: #{tpu_custom_call.1} parent=11 // pred_check_branch
          %844 = sbr.rel (%p842) target = $region56
        $region55: #{tpu_custom_call.1} parent=11 // pred_region
          %s846 = ssub.s32 16, 16
          %847 = vsyncadd [#allocation18], %s846
          %s849 = sshll.u32 [#allocation17], 4
          %s850 = int_to_ptr.vmem [resolvable:$true] %s849
          %852 = dma.hbm_to_vmem [thread:$0]  %s23, 16, %s850, [#allocation18]
        $region56: #{tpu_custom_call.1} parent=11 // pred_fallthru
          _
        // Predicated region
        $region57: #{tpu_custom_call.1} parent=11 // pred_check
          %p853 = pneg %p357
        $region58: #{tpu_custom_call.1} parent=11 // pred_check_branch
          %855 = sbr.rel (%p853) target = $region60
        $region59: #{tpu_custom_call.1} parent=11 // pred_region
          %s857 = ssub.s32 16, 16
          %858 = vsyncadd [#allocation18], %s857
          %s860 = sshll.u32 [#allocation19], 4
          %s861 = int_to_ptr.vmem [resolvable:$true] %s860
          %863 = dma.hbm_to_vmem [thread:$0]  %s25, 16, %s861, [#allocation18]
        $region60: #{tpu_custom_call.1} parent=11 // pred_fallthru
          _
        // Predicated region
        $region61: #{tpu_custom_call.1} parent=11 // pred_check
          %p864 = pneg %p378
        $region62: #{tpu_custom_call.1} parent=11 // pred_check_branch
          %866 = sbr.rel (%p864) target = $region64
        $region63: #{tpu_custom_call.1} parent=11 // pred_region
          %s868 = ssub.s32 256, 256
          %869 = vsyncadd [#allocation21], %s868
          %s870 = sshll.u32 [#allocation20], 4
          %s871 = int_to_ptr.vmem [resolvable:$true] %s870
          %876 = dma.hbm_to_vmem [thread:$0]  %s27, 256, %s871, [#allocation21], 64, 64, 4
        $region64: #{tpu_custom_call.1} parent=11 // pred_fallthru
          _
        // Predicated region
        $region65: #{tpu_custom_call.1} parent=11 // pred_check
          %p877 = pneg %p399
        $region66: #{tpu_custom_call.1} parent=11 // pred_check_branch
          %879 = sbr.rel (%p877) target = $region68
        $region67: #{tpu_custom_call.1} parent=11 // pred_region
          %s881 = ssub.s32 16, 16
          %882 = vsyncadd [#allocation21], %s881
          %s884 = sshll.u32 [#allocation22], 4
          %s885 = int_to_ptr.vmem [resolvable:$true] %s884
          %887 = dma.hbm_to_vmem [thread:$0]  %s29, 16, %s885, [#allocation21]
        $region68: #{tpu_custom_call.1} parent=11 // pred_fallthru
          _
        // Predicated region
        $region69: #{tpu_custom_call.1} parent=11 // pred_check
          %p888 = pneg %p420
        $region70: #{tpu_custom_call.1} parent=11 // pred_check_branch
          %890 = sbr.rel (%p888) target = $region72
        $region71: #{tpu_custom_call.1} parent=11 // pred_region
          %s892 = ssub.s32 16, 16
          %893 = vsyncadd [#allocation24], %s892
          %s895 = sshll.u32 [#allocation23], 4
          %s896 = int_to_ptr.vmem [resolvable:$true] %s895
          %898 = dma.hbm_to_vmem [thread:$0]  %s31, 16, %s896, [#allocation24]
        $region72: #{tpu_custom_call.1} parent=11 // pred_fallthru
          _
        // Predicated region
        $region73: #{tpu_custom_call.1} parent=11 // pred_check
          %p899 = pneg %p441
        $region74: #{tpu_custom_call.1} parent=11 // pred_check_branch
          %901 = sbr.rel (%p899) target = $region76
        $region75: #{tpu_custom_call.1} parent=11 // pred_region
          %s903 = ssub.s32 16, 16
          %904 = vsyncadd [#allocation24], %s903
          %s906 = sshll.u32 [#allocation25], 4
          %s907 = int_to_ptr.vmem [resolvable:$true] %s906
          %909 = dma.hbm_to_vmem [thread:$0]  %s33, 16, %s907, [#allocation24]
        $region76: #{tpu_custom_call.1} parent=11 // pred_fallthru
          _
        // Predicated region
        $region77: #{tpu_custom_call.1} parent=11 // pred_check
          %p910 = pneg %p462
        $region78: #{tpu_custom_call.1} parent=11 // pred_check_branch
          %912 = sbr.rel (%p910) target = $region80
        $region79: #{tpu_custom_call.1} parent=11 // pred_region
          _
        $region80: #{tpu_custom_call.1} parent=11 // pred_fallthru
          _
        // Predicated region
        $region81: #{tpu_custom_call.1} parent=11 // pred_check
          %p913 = pneg %p483
        $region82: #{tpu_custom_call.1} parent=11 // pred_check_branch
          %915 = sbr.rel (%p913) target = $region84
        $region83: #{tpu_custom_call.1} parent=11 // pred_region
          %s917 = ssub.s32 16, 16
          %918 = vsyncadd [#allocation27], %s917
          %s920 = sshll.u32 [#allocation26], 4
          %s921 = int_to_ptr.vmem [resolvable:$true] %s920
          %923 = dma.hbm_to_vmem [thread:$0]  %s37, 16, %s921, [#allocation27]
        $region84: #{tpu_custom_call.1} parent=11 // pred_fallthru
          _
        // Predicated region
        $region85: #{tpu_custom_call.1} parent=11 // pred_check
          %p924 = pneg %p504
        $region86: #{tpu_custom_call.1} parent=11 // pred_check_branch
          %926 = sbr.rel (%p924) target = $region88
        $region87: #{tpu_custom_call.1} parent=11 // pred_region
          _
        $region88: #{tpu_custom_call.1} parent=11 // pred_fallthru
          _
        // Predicated region
        $region89: #{tpu_custom_call.1} parent=11 // pred_check
          %p927 = pneg %p525
        $region90: #{tpu_custom_call.1} parent=11 // pred_check_branch
          %929 = sbr.rel (%p927) target = $region92
        $region91: #{tpu_custom_call.1} parent=11 // pred_region
          %s931 = ssub.s32 16, 16
          %932 = vsyncadd [#allocation27], %s931
          %s934 = sshll.u32 [#allocation28], 4
          %s935 = int_to_ptr.vmem [resolvable:$true] %s934
          %937 = dma.hbm_to_vmem [thread:$0]  %s41, 16, %s935, [#allocation27]
        $region92: #{tpu_custom_call.1} parent=11 // pred_fallthru
          _
        // Predicated region
        $region93: #{tpu_custom_call.1} parent=11 // pred_check
          %p938 = pneg %p546
        $region94: #{tpu_custom_call.1} parent=11 // pred_check_branch
          %940 = sbr.rel (%p938) target = $region96
        $region95: #{tpu_custom_call.1} parent=11 // pred_region
          _
        $region96: #{tpu_custom_call.1} parent=11 // pred_fallthru
          _
        // Predicated region
        $region97: #{tpu_custom_call.1} parent=11 // pred_check
          %p941 = pneg %p567
        $region98: #{tpu_custom_call.1} parent=11 // pred_check_branch
          %943 = sbr.rel (%p941) target = $region100
        $region99: #{tpu_custom_call.1} parent=11 // pred_region
          %s945 = ssub.s32 16, 16
          %946 = vsyncadd [#allocation30], %s945
          %s948 = sshll.u32 [#allocation29], 4
          %s949 = int_to_ptr.vmem [resolvable:$true] %s948
          %951 = dma.hbm_to_vmem [thread:$0]  %s45, 16, %s949, [#allocation30]
        $region100: #{tpu_custom_call.1} parent=11 // pred_fallthru
          _
        // Predicated region
        $region101: #{tpu_custom_call.1} parent=11 // pred_check
          %p952 = pneg %p588
        $region102: #{tpu_custom_call.1} parent=11 // pred_check_branch
          %954 = sbr.rel (%p952) target = $region104
        $region103: #{tpu_custom_call.1} parent=11 // pred_region
          %s956 = ssub.s32 16, 16
          %957 = vsyncadd [#allocation30], %s956
          %s959 = sshll.u32 [#allocation31], 4
          %s960 = int_to_ptr.vmem [resolvable:$true] %s959
          %962 = dma.hbm_to_vmem [thread:$0]  %s47, 16, %s960, [#allocation30]
        $region104: #{tpu_custom_call.1} parent=11 // pred_fallthru
          _
        // Predicated region
        $region105: #{tpu_custom_call.1} parent=11 // pred_check
          %p963 = pneg %p609
        $region106: #{tpu_custom_call.1} parent=11 // pred_check_branch
          %965 = sbr.rel (%p963) target = $region108
        $region107: #{tpu_custom_call.1} parent=11 // pred_region
          %s967 = ssub.s32 16, 16
          %968 = vsyncadd [#allocation33], %s967
          %s970 = sshll.u32 [#allocation32], 4
          %s971 = int_to_ptr.vmem [resolvable:$true] %s970
          %973 = dma.hbm_to_vmem [thread:$0]  %s49, 16, %s971, [#allocation33]
        $region108: #{tpu_custom_call.1} parent=11 // pred_fallthru
          _
        // Predicated region
        $region109: #{tpu_custom_call.1} parent=11 // pred_check
          %p974 = pneg %p630
        $region110: #{tpu_custom_call.1} parent=11 // pred_check_branch
          %976 = sbr.rel (%p974) target = $region112
        $region111: #{tpu_custom_call.1} parent=11 // pred_region
          _
        $region112: #{tpu_custom_call.1} parent=11 // pred_fallthru
          _
        // Predicated region
        $region113: #{tpu_custom_call.1} parent=11 // pred_check
          %p977 = pneg %p651
        $region114: #{tpu_custom_call.1} parent=11 // pred_check_branch
          %979 = sbr.rel (%p977) target = $region116
        $region115: #{tpu_custom_call.1} parent=11 // pred_region
          %s981 = ssub.s32 16, 16
          %982 = vsyncadd [#allocation33], %s981
          %s984 = sshll.u32 [#allocation34], 4
          %s985 = int_to_ptr.vmem [resolvable:$true] %s984
          %987 = dma.hbm_to_vmem [thread:$0]  %s53, 16, %s985, [#allocation33]
        $region116: #{tpu_custom_call.1} parent=11 // pred_fallthru
          _
        // Predicated region
        $region117: #{tpu_custom_call.1} parent=11 // pred_check
          %p988 = pneg %p672
        $region118: #{tpu_custom_call.1} parent=11 // pred_check_branch
          %990 = sbr.rel (%p988) target = $region120
        $region119: #{tpu_custom_call.1} parent=11 // pred_region
          _
        $region120: #{tpu_custom_call.1} parent=11 // pred_fallthru
          _
        // Predicated region
        $region121: #{tpu_custom_call.1} parent=11 // pred_check
          %p991 = pneg %p693
        $region122: #{tpu_custom_call.1} parent=11 // pred_check_branch
          %993 = sbr.rel (%p991) target = $region124
        $region123: #{tpu_custom_call.1} parent=11 // pred_region
          _
        $region124: #{tpu_custom_call.1} parent=11 // pred_fallthru
          _
      $region12: #{tpu_custom_call.1} parent=5 // pred_fallthru
        _
      %p994 = scmp.lt.s32.totalorder %s79, 2
      // Predicated region
      $region125: #{tpu_custom_call.1} parent=5 // pred_check
        %p995 = pneg %p994
      $region126: #{tpu_custom_call.1} parent=5 // pred_check_branch
        %997 = sbr.rel (%p995) target = $region128
      $region127: #{tpu_custom_call.1} parent=5 // pred_region
        // Predicated region
        $region129: #{tpu_custom_call.1} parent=127 // pred_check
          %p998 = pneg %p99
        $region130: #{tpu_custom_call.1} parent=127 // pred_check_branch
          %1000 = sbr.rel (%p998) target = $region132
        $region131: #{tpu_custom_call.1} parent=127 // pred_region
          %p1001 = scmp.lt.s32.totalorder %s79, 1
          %s1002 = scalar_select %p1001, %s79, 1
          %s1003 = smul.addr %s1002, 8
          %s1004 = scalar_lea.vmem %s1, %s1003
        $region132: #{tpu_custom_call.1} parent=127 // pred_fallthru
          _
      $region128: #{tpu_custom_call.1} parent=5 // pred_fallthru
        _
      %p1005 = scmp.le.s32.totalorder 1, %s79
      %p1006 = scmp.lt.s32.totalorder %s79, 3
      %p1007 = pnand %p1005, %p1006
      %p1008 = pneg %p1007
      // Predicated region
      $region133: #{tpu_custom_call.1} parent=5 // pred_check
        _
      $region134: #{tpu_custom_call.1} parent=5 // pred_check_branch
        %1010 = sbr.rel (%p1007) target = $region136
      $region135: #{tpu_custom_call.1} parent=5 // pred_region
        %s1011 = ssub.s32 %s79, 1
        // Predicated region
        $region137: #{tpu_custom_call.1} parent=135 // pred_check
          %p1012 = pneg %p126
        $region138: #{tpu_custom_call.1} parent=135 // pred_check_branch
          %1014 = sbr.rel (%p1012) target = $region140
        $region139: #{tpu_custom_call.1} parent=135 // pred_region
          %1015 = dma.done [#allocation3], 16
        $region140: #{tpu_custom_call.1} parent=135 // pred_fallthru
          _
        // Predicated region
        $region141: #{tpu_custom_call.1} parent=135 // pred_check
          %p1016 = pneg %p147
        $region142: #{tpu_custom_call.1} parent=135 // pred_check_branch
          %1018 = sbr.rel (%p1016) target = $region144
        $region143: #{tpu_custom_call.1} parent=135 // pred_region
          %1019 = dma.done [#allocation6], 16
        $region144: #{tpu_custom_call.1} parent=135 // pred_fallthru
          _
        // Predicated region
        $region145: #{tpu_custom_call.1} parent=135 // pred_check
          %p1020 = pneg %p189
        $region146: #{tpu_custom_call.1} parent=135 // pred_check_branch
          %1022 = sbr.rel (%p1020) target = $region148
        $region147: #{tpu_custom_call.1} parent=135 // pred_region
          %1023 = dma.done [#allocation6], 16
        $region148: #{tpu_custom_call.1} parent=135 // pred_fallthru
          _
        // Predicated region
        $region149: #{tpu_custom_call.1} parent=135 // pred_check
          %p1024 = pneg %p210
        $region150: #{tpu_custom_call.1} parent=135 // pred_check_branch
          %1026 = sbr.rel (%p1024) target = $region152
        $region151: #{tpu_custom_call.1} parent=135 // pred_region
          %1027 = dma.done [#allocation9], 256
        $region152: #{tpu_custom_call.1} parent=135 // pred_fallthru
          _
        // Predicated region
        $region153: #{tpu_custom_call.1} parent=135 // pred_check
          %p1028 = pneg %p231
        $region154: #{tpu_custom_call.1} parent=135 // pred_check_branch
          %1030 = sbr.rel (%p1028) target = $region156
        $region155: #{tpu_custom_call.1} parent=135 // pred_region
          %1031 = dma.done [#allocation9], 16
        $region156: #{tpu_custom_call.1} parent=135 // pred_fallthru
          _
        // Predicated region
        $region157: #{tpu_custom_call.1} parent=135 // pred_check
          %p1032 = pneg %p252
        $region158: #{tpu_custom_call.1} parent=135 // pred_check_branch
          %1034 = sbr.rel (%p1032) target = $region160
        $region159: #{tpu_custom_call.1} parent=135 // pred_region
          %1035 = dma.done [#allocation12], 256
        $region160: #{tpu_custom_call.1} parent=135 // pred_fallthru
          _
        // Predicated region
        $region161: #{tpu_custom_call.1} parent=135 // pred_check
          %p1036 = pneg %p273
        $region162: #{tpu_custom_call.1} parent=135 // pred_check_branch
          %1038 = sbr.rel (%p1036) target = $region164
        $region163: #{tpu_custom_call.1} parent=135 // pred_region
          %1039 = dma.done [#allocation12], 16
        $region164: #{tpu_custom_call.1} parent=135 // pred_fallthru
          _
        // Predicated region
        $region165: #{tpu_custom_call.1} parent=135 // pred_check
          %p1040 = pneg %p294
        $region166: #{tpu_custom_call.1} parent=135 // pred_check_branch
          %1042 = sbr.rel (%p1040) target = $region168
        $region167: #{tpu_custom_call.1} parent=135 // pred_region
          %1043 = dma.done [#allocation15], 256
        $region168: #{tpu_custom_call.1} parent=135 // pred_fallthru
          _
        // Predicated region
        $region169: #{tpu_custom_call.1} parent=135 // pred_check
          %p1044 = pneg %p315
        $region170: #{tpu_custom_call.1} parent=135 // pred_check_branch
          %1046 = sbr.rel (%p1044) target = $region172
        $region171: #{tpu_custom_call.1} parent=135 // pred_region
          %1047 = dma.done [#allocation15], 16
        $region172: #{tpu_custom_call.1} parent=135 // pred_fallthru
          _
        // Predicated region
        $region173: #{tpu_custom_call.1} parent=135 // pred_check
          %p1048 = pneg %p336
        $region174: #{tpu_custom_call.1} parent=135 // pred_check_branch
          %1050 = sbr.rel (%p1048) target = $region176
        $region175: #{tpu_custom_call.1} parent=135 // pred_region
          %1051 = dma.done [#allocation18], 16
        $region176: #{tpu_custom_call.1} parent=135 // pred_fallthru
          _
        // Predicated region
        $region177: #{tpu_custom_call.1} parent=135 // pred_check
          %p1052 = pneg %p357
        $region178: #{tpu_custom_call.1} parent=135 // pred_check_branch
          %1054 = sbr.rel (%p1052) target = $region180
        $region179: #{tpu_custom_call.1} parent=135 // pred_region
          %1055 = dma.done [#allocation18], 16
        $region180: #{tpu_custom_call.1} parent=135 // pred_fallthru
          _
        // Predicated region
        $region181: #{tpu_custom_call.1} parent=135 // pred_check
          %p1056 = pneg %p378
        $region182: #{tpu_custom_call.1} parent=135 // pred_check_branch
          %1058 = sbr.rel (%p1056) target = $region184
        $region183: #{tpu_custom_call.1} parent=135 // pred_region
          %1059 = dma.done [#allocation21], 256
        $region184: #{tpu_custom_call.1} parent=135 // pred_fallthru
          _
        // Predicated region
        $region185: #{tpu_custom_call.1} parent=135 // pred_check
          %p1060 = pneg %p399
        $region186: #{tpu_custom_call.1} parent=135 // pred_check_branch
          %1062 = sbr.rel (%p1060) target = $region188
        $region187: #{tpu_custom_call.1} parent=135 // pred_region
          %1063 = dma.done [#allocation21], 16
        $region188: #{tpu_custom_call.1} parent=135 // pred_fallthru
          _
        // Predicated region
        $region189: #{tpu_custom_call.1} parent=135 // pred_check
          %p1064 = pneg %p420
        $region190: #{tpu_custom_call.1} parent=135 // pred_check_branch
          %1066 = sbr.rel (%p1064) target = $region192
        $region191: #{tpu_custom_call.1} parent=135 // pred_region
          %1067 = dma.done [#allocation24], 16
        $region192: #{tpu_custom_call.1} parent=135 // pred_fallthru
          _
        // Predicated region
        $region193: #{tpu_custom_call.1} parent=135 // pred_check
          %p1068 = pneg %p441
        $region194: #{tpu_custom_call.1} parent=135 // pred_check_branch
          %1070 = sbr.rel (%p1068) target = $region196
        $region195: #{tpu_custom_call.1} parent=135 // pred_region
          %1071 = dma.done [#allocation24], 16
        $region196: #{tpu_custom_call.1} parent=135 // pred_fallthru
          _
        // Predicated region
        $region197: #{tpu_custom_call.1} parent=135 // pred_check
          %p1072 = pneg %p483
        $region198: #{tpu_custom_call.1} parent=135 // pred_check_branch
          %1074 = sbr.rel (%p1072) target = $region200
        $region199: #{tpu_custom_call.1} parent=135 // pred_region
          %1075 = dma.done [#allocation27], 16
        $region200: #{tpu_custom_call.1} parent=135 // pred_fallthru
          _
        // Predicated region
        $region201: #{tpu_custom_call.1} parent=135 // pred_check
          %p1076 = pneg %p525
        $region202: #{tpu_custom_call.1} parent=135 // pred_check_branch
          %1078 = sbr.rel (%p1076) target = $region204
        $region203: #{tpu_custom_call.1} parent=135 // pred_region
          %1079 = dma.done [#allocation27], 16
        $region204: #{tpu_custom_call.1} parent=135 // pred_fallthru
          _
        // Predicated region
        $region205: #{tpu_custom_call.1} parent=135 // pred_check
          %p1080 = pneg %p567
        $region206: #{tpu_custom_call.1} parent=135 // pred_check_branch
          %1082 = sbr.rel (%p1080) target = $region208
        $region207: #{tpu_custom_call.1} parent=135 // pred_region
          %1083 = dma.done [#allocation30], 16
        $region208: #{tpu_custom_call.1} parent=135 // pred_fallthru
          _
        // Predicated region
        $region209: #{tpu_custom_call.1} parent=135 // pred_check
          %p1084 = pneg %p588
        $region210: #{tpu_custom_call.1} parent=135 // pred_check_branch
          %1086 = sbr.rel (%p1084) target = $region212
        $region211: #{tpu_custom_call.1} parent=135 // pred_region
          %1087 = dma.done [#allocation30], 16
        $region212: #{tpu_custom_call.1} parent=135 // pred_fallthru
          _
        // Predicated region
        $region213: #{tpu_custom_call.1} parent=135 // pred_check
          %p1088 = pneg %p609
        $region214: #{tpu_custom_call.1} parent=135 // pred_check_branch
          %1090 = sbr.rel (%p1088) target = $region216
        $region215: #{tpu_custom_call.1} parent=135 // pred_region
          %1091 = dma.done [#allocation33], 16
        $region216: #{tpu_custom_call.1} parent=135 // pred_fallthru
          _
        // Predicated region
        $region217: #{tpu_custom_call.1} parent=135 // pred_check
          %p1092 = pneg %p651
        $region218: #{tpu_custom_call.1} parent=135 // pred_check_branch
          %1094 = sbr.rel (%p1092) target = $region220
        $region219: #{tpu_custom_call.1} parent=135 // pred_region
          %1095 = dma.done [#allocation33], 16
        $region220: #{tpu_custom_call.1} parent=135 // pred_fallthru
          _
        %p1096 = scmp.lt.s32.totalorder %s84, 1
        %s1097 = scalar_select %p1096, %s84, 1
        %s1098 = smul.addr %s1097, 8
        %s1099 = scalar_lea.vmem %s1, %s1098
        %p1100 = pneg %p105
        %p1101 = pneg %p102
        %p1102 = pneg %p126
        %p1103 = pneg %p123
        %p1104 = pneg %p147
        %p1105 = pneg %p144
        %p1106 = pneg %p168
        %p1107 = pneg %p165
        %p1108 = pneg %p189
        %p1109 = pneg %p186
        %p1110 = pneg %p210
        %p1111 = pneg %p207
        %p1112 = pneg %p231
        %p1113 = pneg %p228
        %p1114 = pneg %p252
        %p1115 = pneg %p249
        %p1116 = pneg %p273
        %p1117 = pneg %p270
        %p1118 = pneg %p294
        %p1119 = pneg %p291
        %p1120 = pneg %p315
        %p1121 = pneg %p312
        %p1122 = pneg %p336
        %p1123 = pneg %p333
        %p1124 = pneg %p357
        %p1125 = pneg %p354
        %p1126 = pneg %p378
        %p1127 = pneg %p375
        %p1128 = pneg %p399
        %p1129 = pneg %p396
        %p1130 = pneg %p420
        %p1131 = pneg %p417
        %p1132 = pneg %p441
        %p1133 = pneg %p438
        %p1134 = pneg %p462
        %p1135 = pneg %p459
        %p1136 = pneg %p483
        %p1137 = pneg %p480
        %p1138 = pneg %p504
        %p1139 = pneg %p501
        %p1140 = pneg %p525
        %p1141 = pneg %p522
        %p1142 = pneg %p546
        %p1143 = pneg %p543
        %p1144 = pneg %p567
        %p1145 = pneg %p564
        %p1146 = pneg %p588
        %p1147 = pneg %p585
        %p1148 = pneg %p609
        %p1149 = pneg %p606
        %p1150 = pneg %p630
        %p1151 = pneg %p627
        %p1152 = pneg %p651
        %p1153 = pneg %p648
        %p1154 = pneg %p672
        %p1155 = pneg %p669
        %p1156 = pneg %p693
        %p1157 = pneg %p690
        %p1158 = pneg %p719
        %p1159 = pneg %p716
        %s1160 = sand.u32 %s706, 1
        %s1161 = scalar_lea.sflag [#allocation4], %s1160
        %s1162 = sand.u32 %s706, 1
        %s1163 = smul.addr %s1162, 8
        %s1164 = scalar_lea.vmem [#allocation35], %s1163
        %p1165 = scmp.lt.s32.totalorder %s84, 1
        %s1166 = scalar_select %p1165, %s84, 1
        %s1167 = smul.addr %s1166, 8
        %s1168 = scalar_lea.vmem %s1, %s1167
        %v1170 = vld [vmem:[%s1168] sm:$0xff]
        %v1171 = vld [vmem:[#allocation2] sm:$0x1]
        %v1172 = vld [vmem:[#allocation5] sm:$0x1]
        %vm1173 = vcmask 261120
        %v1174 = vsel %vm1173, %v1170, 0.0
        %1175 = vadd.xlane.f32.xlu0 %v1174
        %v1176 = vpop.xlane.xlu0 %1175
        %v1177 = vrcp.pop 32.0
        %v1178 = vmul.f32 %v1176, %v1177
        %v1179 = vsub.f32 %v1170, %v1178
        %v1180 = vmul.f32 %v1179, %v1179
        %v1181 = vsel %vm1173, %v1180, 0.0
        %1182 = vadd.xlane.f32.xlu0 %v1181
        %v1183 = vpop.xlane.xlu0 %1182
        %v1184 = vmul.f32 %v1183, %v1177
        %v1185 = vadd.f32 %v1184, 1e-05
        %v1186 = vrsqrt.pop %v1185
        %v1187 = vmul.f32 %v1179, %v1186
        %v1189 = vlaneseq
        %v1190 = vshrl.u32 %v1189, 7
        %v1191 = vsub.s32 0, %v1190
        %v1192 = vrot.slane %v1171, %v1191
        %v1194 = vmul.f32 %v1187, %v1192
        %v1196 = vlaneseq
        %v1197 = vshrl.u32 %v1196, 7
        %v1198 = vsub.s32 0, %v1197
        %v1199 = vrot.slane %v1172, %v1198
        %v1201 = vadd.f32 %v1194, %v1199
        %v1202 = vpack.c.bf16 %v1201, %v1201
        %v1203 = vld [vmem:[%s7] sm:$0xf]
        %v1204 = vld [vmem:[%s7 + $0x4] sm:$0xf]
        %v1205 = vld [vmem:[%s7 + $0x8] sm:$0xf]
        %v1206 = vld [vmem:[%s7 + $0xc] sm:$0xf]
        %v1207 = vld [vmem:[#allocation7] sm:$0x1]
        %v1209 = vlaneseq
        %v1210 = vshrl.u32 %v1209, 7
        %v1211 = vsub.s32 0, %v1210
        %v1212 = vrot.slane %v1207, %v1211
        %v1218 = vunpack.c.l.b16 %v1203
        %v1219 = vunpack.c.l.b16 %v1204
        %v1220 = vunpack.c.l.b16 %v1205
        %v1221 = vunpack.c.l.b16 %v1206
        %v1222 = vpack.c.b16 %v1219, %v1218
        %v1223 = vpack.c.b16 %v1221, %v1220
        %v1227 = vsel %vm1173, %v1202, 0
        %1229 = vmatprep.subr.bf16.mxu0 0
        %1230 = vmatpush1.bf16.msra.mxu0 0
        %1231 = vmatprep.subr.bf16.mxu0 0
        %1232 = vmatpush1.bf16.msra.mxu0 0
        %1233 = vmatprep.subr.bf16.mxu0 0
        %1234 = vmatpush1.bf16.msra.mxu0 0
        %1235 = vmatprep.subr.bf16.mxu0 0
        %1236 = vmatpush1.bf16.msra.mxu0 0
        %1237 = vmatprep.subr.bf16.mxu0 0
        %1238 = vmatpush1.bf16.msra.mxu0 0
        %1239 = vmatprep.subr.bf16.mxu0 0
        %1240 = vmatpush1.bf16.msra.mxu0 0
        %1241 = vmatprep.subr.bf16.mxu0 0
        %1242 = vmatpush1.bf16.msra.mxu0 %v1223
        %1243 = vmatprep.subr.bf16.mxu0 0
        %1244 = vmatpush1.bf16.msra.mxu0 %v1222
        %1245 = vmatprep.subr.bf16.mxu0 0
        %1246 = vmatpush2.bf16.msra.mxu0 0
        %1247 = vmatprep.subr.bf16.mxu0 0
        %1248 = vmatpush2.bf16.msra.mxu0 0
        %1249 = vmatprep.subr.bf16.mxu0 0
        %1250 = vmatpush2.bf16.msra.mxu0 0
        %1251 = vmatprep.subr.bf16.mxu0 0
        %1252 = vmatpush2.bf16.msra.mxu0 0
        %1253 = vmatprep.subr.bf16.mxu0 0
        %1254 = vmatpush2.bf16.msra.mxu0 0
        %1255 = vmatprep.subr.bf16.mxu0 0
        %1256 = vmatpush2.bf16.msra.mxu0 0
        %1257 = vmatprep.subr.bf16.mxu0 0
        %1258 = vmatpush2.bf16.msra.mxu0 0
        %1259 = vmatprep.subr.bf16.mxu0 0
        %1260 = vmatpush2.bf16.msra.mxu0 0
        %1261 = vmatprep.mubr.bf16.mxu0 0
        %1262 = vmatmul.mubr.bf16.gmra.mxu0 %v1227
        %v1263 = vpop.f32.mrf.mxu0
        %v1264 = vadd.f32 %v1212, %v1263
        %v1265 = vpop.f32.mrf.mxu0
        %v1266 = vpop.f32.mrf.mxu0
        %v1267 = vpop.f32.mrf.mxu0
        %1268 = vdwg.mxu0
        %v1269 = vpack.c.bf16 %v1264, %v1264
        %v1270 = vld [vmem:[#allocation8] sm:$0xf]
        %v1271 = vld [vmem:[#allocation8 + $0x4] sm:$0xf]
        %v1272 = vld [vmem:[#allocation8 + $0x8] sm:$0xf]
        %v1273 = vld [vmem:[#allocation8 + $0xc] sm:$0xf]
        %v1274 = vld [vmem:[#allocation10] sm:$0x1]
        %v1276 = vlaneseq
        %v1277 = vshrl.u32 %v1276, 7
        %v1278 = vsub.s32 0, %v1277
        %v1279 = vrot.slane %v1274, %v1278
        %v1285 = vunpack.c.l.b16 %v1270
        %v1286 = vunpack.c.l.b16 %v1271
        %v1287 = vunpack.c.l.b16 %v1272
        %v1288 = vunpack.c.l.b16 %v1273
        %v1289 = vpack.c.b16 %v1286, %v1285
        %v1290 = vpack.c.b16 %v1288, %v1287
        %1293 = vmatprep.subr.bf16.mxu0 0
        %1294 = vmatpush1.bf16.msra.mxu0 0
        %1295 = vmatprep.subr.bf16.mxu0 0
        %1296 = vmatpush1.bf16.msra.mxu0 0
        %1297 = vmatprep.subr.bf16.mxu0 0
        %1298 = vmatpush1.bf16.msra.mxu0 0
        %1299 = vmatprep.subr.bf16.mxu0 0
        %1300 = vmatpush1.bf16.msra.mxu0 0
        %1301 = vmatprep.subr.bf16.mxu0 0
        %1302 = vmatpush1.bf16.msra.mxu0 0
        %1303 = vmatprep.subr.bf16.mxu0 0
        %1304 = vmatpush1.bf16.msra.mxu0 0
        %1305 = vmatprep.subr.bf16.mxu0 0
        %1306 = vmatpush1.bf16.msra.mxu0 %v1290
        %1307 = vmatprep.subr.bf16.mxu0 0
        %1308 = vmatpush1.bf16.msra.mxu0 %v1289
        %1309 = vmatprep.subr.bf16.mxu0 0
        %1310 = vmatpush2.bf16.msra.mxu0 0
        %1311 = vmatprep.subr.bf16.mxu0 0
        %1312 = vmatpush2.bf16.msra.mxu0 0
        %1313 = vmatprep.subr.bf16.mxu0 0
        %1314 = vmatpush2.bf16.msra.mxu0 0
        %1315 = vmatprep.subr.bf16.mxu0 0
        %1316 = vmatpush2.bf16.msra.mxu0 0
        %1317 = vmatprep.subr.bf16.mxu0 0
        %1318 = vmatpush2.bf16.msra.mxu0 0
        %1319 = vmatprep.subr.bf16.mxu0 0
        %1320 = vmatpush2.bf16.msra.mxu0 0
        %1321 = vmatprep.subr.bf16.mxu0 0
        %1322 = vmatpush2.bf16.msra.mxu0 0
        %1323 = vmatprep.subr.bf16.mxu0 0
        %1324 = vmatpush2.bf16.msra.mxu0 0
        %1325 = vmatprep.mubr.bf16.mxu0 0
        %1326 = vmatmul.mubr.bf16.gmra.mxu0 %v1227
        %v1327 = vpop.f32.mrf.mxu0
        %v1328 = vadd.f32 %v1279, %v1327
        %v1329 = vpop.f32.mrf.mxu0
        %v1330 = vpop.f32.mrf.mxu0
        %v1331 = vpop.f32.mrf.mxu0
        %1332 = vdwg.mxu0
        %v1333 = vpack.c.bf16 %v1328, %v1328
        %v1334 = vld [vmem:[#allocation11] sm:$0xf]
        %v1335 = vld [vmem:[#allocation11 + $0x4] sm:$0xf]
        %v1336 = vld [vmem:[#allocation11 + $0x8] sm:$0xf]
        %v1337 = vld [vmem:[#allocation11 + $0xc] sm:$0xf]
        %v1338 = vld [vmem:[#allocation13] sm:$0x1]
        %v1340 = vlaneseq
        %v1341 = vshrl.u32 %v1340, 7
        %v1342 = vsub.s32 0, %v1341
        %v1343 = vrot.slane %v1338, %v1342
        %v1349 = vunpack.c.l.b16 %v1334
        %v1350 = vunpack.c.l.b16 %v1335
        %v1351 = vunpack.c.l.b16 %v1336
        %v1352 = vunpack.c.l.b16 %v1337
        %v1353 = vpack.c.b16 %v1350, %v1349
        %v1354 = vpack.c.b16 %v1352, %v1351
        %1357 = vmatprep.subr.bf16.mxu0 0
        %1358 = vmatpush1.bf16.msra.mxu0 0
        %1359 = vmatprep.subr.bf16.mxu0 0
        %1360 = vmatpush1.bf16.msra.mxu0 0
        %1361 = vmatprep.subr.bf16.mxu0 0
        %1362 = vmatpush1.bf16.msra.mxu0 0
        %1363 = vmatprep.subr.bf16.mxu0 0
        %1364 = vmatpush1.bf16.msra.mxu0 0
        %1365 = vmatprep.subr.bf16.mxu0 0
        %1366 = vmatpush1.bf16.msra.mxu0 0
        %1367 = vmatprep.subr.bf16.mxu0 0
        %1368 = vmatpush1.bf16.msra.mxu0 0
        %1369 = vmatprep.subr.bf16.mxu0 0
        %1370 = vmatpush1.bf16.msra.mxu0 %v1354
        %1371 = vmatprep.subr.bf16.mxu0 0
        %1372 = vmatpush1.bf16.msra.mxu0 %v1353
        %1373 = vmatprep.subr.bf16.mxu0 0
        %1374 = vmatpush2.bf16.msra.mxu0 0
        %1375 = vmatprep.subr.bf16.mxu0 0
        %1376 = vmatpush2.bf16.msra.mxu0 0
        %1377 = vmatprep.subr.bf16.mxu0 0
        %1378 = vmatpush2.bf16.msra.mxu0 0
        %1379 = vmatprep.subr.bf16.mxu0 0
        %1380 = vmatpush2.bf16.msra.mxu0 0
        %1381 = vmatprep.subr.bf16.mxu0 0
        %1382 = vmatpush2.bf16.msra.mxu0 0
        %1383 = vmatprep.subr.bf16.mxu0 0
        %1384 = vmatpush2.bf16.msra.mxu0 0
        %1385 = vmatprep.subr.bf16.mxu0 0
        %1386 = vmatpush2.bf16.msra.mxu0 0
        %1387 = vmatprep.subr.bf16.mxu0 0
        %1388 = vmatpush2.bf16.msra.mxu0 0
        %1389 = vmatprep.mubr.bf16.mxu0 0
        %1390 = vmatmul.mubr.bf16.gmra.mxu0 %v1227
        %v1391 = vpop.f32.mrf.mxu0
        %v1392 = vadd.f32 %v1343, %v1391
        %v1393 = vpop.f32.mrf.mxu0
        %v1394 = vpop.f32.mrf.mxu0
        %v1395 = vpop.f32.mrf.mxu0
        %1396 = vdwg.mxu0
        %v1397 = vpack.c.bf16 %v1392, %v1392
        %vm1398 = vcmask 64512
        %v1400 = vsel %vm1398, %v1269, 0
        %v1403 = vsel %vm1398, %v1333, 0
        %1405 = vmatprep.subr.bf16.mxu0 0
        %1406 = vmatpush1.bf16.xpose.msra.mxu0 0
        %1407 = vmatprep.subr.bf16.mxu0 0
        %1408 = vmatpush1.bf16.xpose.msra.mxu0 0
        %1409 = vmatprep.subr.bf16.mxu0 0
        %1410 = vmatpush1.bf16.xpose.msra.mxu0 0
        %1411 = vmatprep.subr.bf16.mxu0 0
        %1412 = vmatpush1.bf16.xpose.msra.mxu0 0
        %1413 = vmatprep.subr.bf16.mxu0 0
        %1414 = vmatpush1.bf16.xpose.msra.mxu0 0
        %1415 = vmatprep.subr.bf16.mxu0 0
        %1416 = vmatpush1.bf16.xpose.msra.mxu0 0
        %1417 = vmatprep.subr.bf16.mxu0 0
        %1418 = vmatpush1.bf16.xpose.msra.mxu0 0
        %1419 = vmatprep.subr.bf16.mxu0 0
        %1420 = vmatpush1.bf16.xpose.msra.mxu0 %v1403
        %1421 = vmatprep.subr.bf16.mxu0 0
        %1422 = vmatpush2.bf16.xpose.msra.mxu0 0
        %1423 = vmatprep.subr.bf16.mxu0 0
        %1424 = vmatpush2.bf16.xpose.msra.mxu0 0
        %1425 = vmatprep.subr.bf16.mxu0 0
        %1426 = vmatpush2.bf16.xpose.msra.mxu0 0
        %1427 = vmatprep.subr.bf16.mxu0 0
        %1428 = vmatpush2.bf16.xpose.msra.mxu0 0
        %1429 = vmatprep.subr.bf16.mxu0 0
        %1430 = vmatpush2.bf16.xpose.msra.mxu0 0
        %1431 = vmatprep.subr.bf16.mxu0 0
        %1432 = vmatpush2.bf16.xpose.msra.mxu0 0
        %1433 = vmatprep.subr.bf16.mxu0 0
        %1434 = vmatpush2.bf16.xpose.msra.mxu0 0
        %1435 = vmatprep.subr.bf16.mxu0 0
        %1436 = vmatpush2.bf16.xpose.msra.mxu0 0
        %1437 = vmatprep.mubr.bf16.mxu0 0
        %1438 = vmatmul.mubr.bf16.gmra.mxu0 %v1400
        %v1439 = vpop.f32.mrf.mxu0
        %v1440 = vadd.f32 0.0, %v1439
        %v1441 = vpop.f32.mrf.mxu0
        %v1442 = vpop.f32.mrf.mxu0
        %v1443 = vpop.f32.mrf.mxu0
        %1444 = vdwg.mxu0
        %v1445 = vsel %vm1398, %v1440, -inf
        %1446 = vmax.xlane.f32.xlu0 %v1445
        %v1447 = vpop.xlane.xlu0 %1446
        %v1448 = vsub.f32 %v1440, %v1447
        %v1449 = vmul.f32 %v1448, 1.442695
        %v1450 = vpow.pop %v1449
        %v1451 = vsel %vm1398, %v1450, 0.0
        %1452 = vadd.xlane.f32.xlu0 %v1451
        %v1453 = vpop.xlane.xlu0 %1452
        %v1454 = vrcp.pop %v1453
        %v1455 = vmul.f32 %v1450, %v1454
        %v1456 = vpack.c.bf16 %v1455, %v1455
        %v1458 = vsel %vm1398, %v1456, 0
        %vm1460 = vcmask 1043456
        %v1462 = vsel %vm1460, %v1397, 0
        %1464 = vmatprep.subr.bf16.mxu0 0
        %1465 = vmatpush1.bf16.msra.mxu0 0
        %1466 = vmatprep.subr.bf16.mxu0 0
        %1467 = vmatpush1.bf16.msra.mxu0 0
        %1468 = vmatprep.subr.bf16.mxu0 0
        %1469 = vmatpush1.bf16.msra.mxu0 0
        %1470 = vmatprep.subr.bf16.mxu0 0
        %1471 = vmatpush1.bf16.msra.mxu0 0
        %1472 = vmatprep.subr.bf16.mxu0 0
        %1473 = vmatpush1.bf16.msra.mxu0 0
        %1474 = vmatprep.subr.bf16.mxu0 0
        %1475 = vmatpush1.bf16.msra.mxu0 0
        %1476 = vmatprep.subr.bf16.mxu0 0
        %1477 = vmatpush1.bf16.msra.mxu0 0
        %1478 = vmatprep.subr.bf16.mxu0 0
        %1479 = vmatpush1.bf16.msra.mxu0 %v1462
        %1480 = vmatprep.subr.bf16.mxu0 0
        %1481 = vmatpush2.bf16.msra.mxu0 0
        %1482 = vmatprep.subr.bf16.mxu0 0
        %1483 = vmatpush2.bf16.msra.mxu0 0
        %1484 = vmatprep.subr.bf16.mxu0 0
        %1485 = vmatpush2.bf16.msra.mxu0 0
        %1486 = vmatprep.subr.bf16.mxu0 0
        %1487 = vmatpush2.bf16.msra.mxu0 0
        %1488 = vmatprep.subr.bf16.mxu0 0
        %1489 = vmatpush2.bf16.msra.mxu0 0
        %1490 = vmatprep.subr.bf16.mxu0 0
        %1491 = vmatpush2.bf16.msra.mxu0 0
        %1492 = vmatprep.subr.bf16.mxu0 0
        %1493 = vmatpush2.bf16.msra.mxu0 0
        %1494 = vmatprep.subr.bf16.mxu0 0
        %1495 = vmatpush2.bf16.msra.mxu0 0
        %1496 = vmatprep.mubr.bf16.mxu0 0
        %1497 = vmatmul.mubr.bf16.gmra.mxu0 %v1458
        %v1498 = vpop.f32.mrf.mxu0
        %v1499 = vadd.f32 0.0, %v1498
        %v1500 = vpop.f32.mrf.mxu0
        %v1501 = vpop.f32.mrf.mxu0
        %v1502 = vpop.f32.mrf.mxu0
        %1503 = vdwg.mxu0
        %1505 = vrot.lane.b32.xlu0 %v1269, 120
        %v1506 = vpop.permute.xlu0 %1505
        %1508 = vrot.lane.b32.xlu0 %v1333, 120
        %v1509 = vpop.permute.xlu0 %1508
        %v1511 = vsel %vm1398, %v1506, 0
        %v1514 = vsel %vm1398, %v1509, 0
        %1516 = vmatprep.subr.bf16.mxu0 0
        %1517 = vmatpush1.bf16.xpose.msra.mxu0 0
        %1518 = vmatprep.subr.bf16.mxu0 0
        %1519 = vmatpush1.bf16.xpose.msra.mxu0 0
        %1520 = vmatprep.subr.bf16.mxu0 0
        %1521 = vmatpush1.bf16.xpose.msra.mxu0 0
        %1522 = vmatprep.subr.bf16.mxu0 0
        %1523 = vmatpush1.bf16.xpose.msra.mxu0 0
        %1524 = vmatprep.subr.bf16.mxu0 0
        %1525 = vmatpush1.bf16.xpose.msra.mxu0 0
        %1526 = vmatprep.subr.bf16.mxu0 0
        %1527 = vmatpush1.bf16.xpose.msra.mxu0 0
        %1528 = vmatprep.subr.bf16.mxu0 0
        %1529 = vmatpush1.bf16.xpose.msra.mxu0 0
        %1530 = vmatprep.subr.bf16.mxu0 0
        %1531 = vmatpush1.bf16.xpose.msra.mxu0 %v1514
        %1532 = vmatprep.subr.bf16.mxu0 0
        %1533 = vmatpush2.bf16.xpose.msra.mxu0 0
        %1534 = vmatprep.subr.bf16.mxu0 0
        %1535 = vmatpush2.bf16.xpose.msra.mxu0 0
        %1536 = vmatprep.subr.bf16.mxu0 0
        %1537 = vmatpush2.bf16.xpose.msra.mxu0 0
        %1538 = vmatprep.subr.bf16.mxu0 0
        %1539 = vmatpush2.bf16.xpose.msra.mxu0 0
        %1540 = vmatprep.subr.bf16.mxu0 0
        %1541 = vmatpush2.bf16.xpose.msra.mxu0 0
        %1542 = vmatprep.subr.bf16.mxu0 0
        %1543 = vmatpush2.bf16.xpose.msra.mxu0 0
        %1544 = vmatprep.subr.bf16.mxu0 0
        %1545 = vmatpush2.bf16.xpose.msra.mxu0 0
        %1546 = vmatprep.subr.bf16.mxu0 0
        %1547 = vmatpush2.bf16.xpose.msra.mxu0 0
        %1548 = vmatprep.mubr.bf16.mxu0 0
        %1549 = vmatmul.mubr.bf16.gmra.mxu0 %v1511
        %v1550 = vpop.f32.mrf.mxu0
        %v1551 = vadd.f32 0.0, %v1550
        %v1552 = vpop.f32.mrf.mxu0
        %v1553 = vpop.f32.mrf.mxu0
        %v1554 = vpop.f32.mrf.mxu0
        %1555 = vdwg.mxu0
        %v1556 = vsel %vm1398, %v1551, -inf
        %1557 = vmax.xlane.f32.xlu0 %v1556
        %v1558 = vpop.xlane.xlu0 %1557
        %v1559 = vsub.f32 %v1551, %v1558
        %v1560 = vmul.f32 %v1559, 1.442695
        %v1561 = vpow.pop %v1560
        %v1562 = vsel %vm1398, %v1561, 0.0
        %1563 = vadd.xlane.f32.xlu0 %v1562
        %v1564 = vpop.xlane.xlu0 %1563
        %v1565 = vrcp.pop %v1564
        %v1566 = vmul.f32 %v1561, %v1565
        %v1567 = vpack.c.bf16 %v1566, %v1566
        %1569 = vrot.lane.b32.xlu0 %v1397, 120
        %v1570 = vpop.permute.xlu0 %1569
        %v1572 = vsel %vm1398, %v1567, 0
        %v1575 = vsel %vm1460, %v1570, 0
        %1577 = vmatprep.subr.bf16.mxu0 0
        %1578 = vmatpush1.bf16.msra.mxu0 0
        %1579 = vmatprep.subr.bf16.mxu0 0
        %1580 = vmatpush1.bf16.msra.mxu0 0
        %1581 = vmatprep.subr.bf16.mxu0 0
        %1582 = vmatpush1.bf16.msra.mxu0 0
        %1583 = vmatprep.subr.bf16.mxu0 0
        %1584 = vmatpush1.bf16.msra.mxu0 0
        %1585 = vmatprep.subr.bf16.mxu0 0
        %1586 = vmatpush1.bf16.msra.mxu0 0
        %1587 = vmatprep.subr.bf16.mxu0 0
        %1588 = vmatpush1.bf16.msra.mxu0 0
        %1589 = vmatprep.subr.bf16.mxu0 0
        %1590 = vmatpush1.bf16.msra.mxu0 0
        %1591 = vmatprep.subr.bf16.mxu0 0
        %1592 = vmatpush1.bf16.msra.mxu0 %v1575
        %1593 = vmatprep.subr.bf16.mxu0 0
        %1594 = vmatpush2.bf16.msra.mxu0 0
        %1595 = vmatprep.subr.bf16.mxu0 0
        %1596 = vmatpush2.bf16.msra.mxu0 0
        %1597 = vmatprep.subr.bf16.mxu0 0
        %1598 = vmatpush2.bf16.msra.mxu0 0
        %1599 = vmatprep.subr.bf16.mxu0 0
        %1600 = vmatpush2.bf16.msra.mxu0 0
        %1601 = vmatprep.subr.bf16.mxu0 0
        %1602 = vmatpush2.bf16.msra.mxu0 0
        %1603 = vmatprep.subr.bf16.mxu0 0
        %1604 = vmatpush2.bf16.msra.mxu0 0
        %1605 = vmatprep.subr.bf16.mxu0 0
        %1606 = vmatpush2.bf16.msra.mxu0 0
        %1607 = vmatprep.subr.bf16.mxu0 0
        %1608 = vmatpush2.bf16.msra.mxu0 0
        %1609 = vmatprep.mubr.bf16.mxu0 0
        %1610 = vmatmul.mubr.bf16.gmra.mxu0 %v1572
        %v1611 = vpop.f32.mrf.mxu0
        %v1612 = vadd.f32 0.0, %v1611
        %v1613 = vpop.f32.mrf.mxu0
        %v1614 = vpop.f32.mrf.mxu0
        %v1615 = vpop.f32.mrf.mxu0
        %1616 = vdwg.mxu0
        %1617 = vrot.lane.b32.xlu0 %v1269, 112
        %v1618 = vpop.permute.xlu0 %1617
        %1619 = vrot.lane.b32.xlu0 %v1333, 112
        %v1620 = vpop.permute.xlu0 %1619
        %v1622 = vsel %vm1398, %v1618, 0
        %v1625 = vsel %vm1398, %v1620, 0
        %1627 = vmatprep.subr.bf16.mxu0 0
        %1628 = vmatpush1.bf16.xpose.msra.mxu0 0
        %1629 = vmatprep.subr.bf16.mxu0 0
        %1630 = vmatpush1.bf16.xpose.msra.mxu0 0
        %1631 = vmatprep.subr.bf16.mxu0 0
        %1632 = vmatpush1.bf16.xpose.msra.mxu0 0
        %1633 = vmatprep.subr.bf16.mxu0 0
        %1634 = vmatpush1.bf16.xpose.msra.mxu0 0
        %1635 = vmatprep.subr.bf16.mxu0 0
        %1636 = vmatpush1.bf16.xpose.msra.mxu0 0
        %1637 = vmatprep.subr.bf16.mxu0 0
        %1638 = vmatpush1.bf16.xpose.msra.mxu0 0
        %1639 = vmatprep.subr.bf16.mxu0 0
        %1640 = vmatpush1.bf16.xpose.msra.mxu0 0
        %1641 = vmatprep.subr.bf16.mxu0 0
        %1642 = vmatpush1.bf16.xpose.msra.mxu0 %v1625
        %1643 = vmatprep.subr.bf16.mxu0 0
        %1644 = vmatpush2.bf16.xpose.msra.mxu0 0
        %1645 = vmatprep.subr.bf16.mxu0 0
        %1646 = vmatpush2.bf16.xpose.msra.mxu0 0
        %1647 = vmatprep.subr.bf16.mxu0 0
        %1648 = vmatpush2.bf16.xpose.msra.mxu0 0
        %1649 = vmatprep.subr.bf16.mxu0 0
        %1650 = vmatpush2.bf16.xpose.msra.mxu0 0
        %1651 = vmatprep.subr.bf16.mxu0 0
        %1652 = vmatpush2.bf16.xpose.msra.mxu0 0
        %1653 = vmatprep.subr.bf16.mxu0 0
        %1654 = vmatpush2.bf16.xpose.msra.mxu0 0
        %1655 = vmatprep.subr.bf16.mxu0 0
        %1656 = vmatpush2.bf16.xpose.msra.mxu0 0
        %1657 = vmatprep.subr.bf16.mxu0 0
        %1658 = vmatpush2.bf16.xpose.msra.mxu0 0
        %1659 = vmatprep.mubr.bf16.mxu0 0
        %1660 = vmatmul.mubr.bf16.gmra.mxu0 %v1622
        %v1661 = vpop.f32.mrf.mxu0
        %v1662 = vadd.f32 0.0, %v1661
        %v1663 = vpop.f32.mrf.mxu0
        %v1664 = vpop.f32.mrf.mxu0
        %v1665 = vpop.f32.mrf.mxu0
        %1666 = vdwg.mxu0
        %v1667 = vsel %vm1398, %v1662, -inf
        %1668 = vmax.xlane.f32.xlu0 %v1667
        %v1669 = vpop.xlane.xlu0 %1668
        %v1670 = vsub.f32 %v1662, %v1669
        %v1671 = vmul.f32 %v1670, 1.442695
        %v1672 = vpow.pop %v1671
        %v1673 = vsel %vm1398, %v1672, 0.0
        %1674 = vadd.xlane.f32.xlu0 %v1673
        %v1675 = vpop.xlane.xlu0 %1674
        %v1676 = vrcp.pop %v1675
        %v1677 = vmul.f32 %v1672, %v1676
        %v1678 = vpack.c.bf16 %v1677, %v1677
        %1679 = vrot.lane.b32.xlu0 %v1397, 112
        %v1680 = vpop.permute.xlu0 %1679
        %v1682 = vsel %vm1398, %v1678, 0
        %v1685 = vsel %vm1460, %v1680, 0
        %1687 = vmatprep.subr.bf16.mxu0 0
        %1688 = vmatpush1.bf16.msra.mxu0 0
        %1689 = vmatprep.subr.bf16.mxu0 0
        %1690 = vmatpush1.bf16.msra.mxu0 0
        %1691 = vmatprep.subr.bf16.mxu0 0
        %1692 = vmatpush1.bf16.msra.mxu0 0
        %1693 = vmatprep.subr.bf16.mxu0 0
        %1694 = vmatpush1.bf16.msra.mxu0 0
        %1695 = vmatprep.subr.bf16.mxu0 0
        %1696 = vmatpush1.bf16.msra.mxu0 0
        %1697 = vmatprep.subr.bf16.mxu0 0
        %1698 = vmatpush1.bf16.msra.mxu0 0
        %1699 = vmatprep.subr.bf16.mxu0 0
        %1700 = vmatpush1.bf16.msra.mxu0 0
        %1701 = vmatprep.subr.bf16.mxu0 0
        %1702 = vmatpush1.bf16.msra.mxu0 %v1685
        %1703 = vmatprep.subr.bf16.mxu0 0
        %1704 = vmatpush2.bf16.msra.mxu0 0
        %1705 = vmatprep.subr.bf16.mxu0 0
        %1706 = vmatpush2.bf16.msra.mxu0 0
        %1707 = vmatprep.subr.bf16.mxu0 0
        %1708 = vmatpush2.bf16.msra.mxu0 0
        %1709 = vmatprep.subr.bf16.mxu0 0
        %1710 = vmatpush2.bf16.msra.mxu0 0
        %1711 = vmatprep.subr.bf16.mxu0 0
        %1712 = vmatpush2.bf16.msra.mxu0 0
        %1713 = vmatprep.subr.bf16.mxu0 0
        %1714 = vmatpush2.bf16.msra.mxu0 0
        %1715 = vmatprep.subr.bf16.mxu0 0
        %1716 = vmatpush2.bf16.msra.mxu0 0
        %1717 = vmatprep.subr.bf16.mxu0 0
        %1718 = vmatpush2.bf16.msra.mxu0 0
        %1719 = vmatprep.mubr.bf16.mxu0 0
        %1720 = vmatmul.mubr.bf16.gmra.mxu0 %v1682
        %v1721 = vpop.f32.mrf.mxu0
        %v1722 = vadd.f32 0.0, %v1721
        %v1723 = vpop.f32.mrf.mxu0
        %v1724 = vpop.f32.mrf.mxu0
        %v1725 = vpop.f32.mrf.mxu0
        %1726 = vdwg.mxu0
        %1727 = vrot.lane.b32.xlu0 %v1269, 104
        %v1728 = vpop.permute.xlu0 %1727
        %1729 = vrot.lane.b32.xlu0 %v1333, 104
        %v1730 = vpop.permute.xlu0 %1729
        %v1732 = vsel %vm1398, %v1728, 0
        %v1735 = vsel %vm1398, %v1730, 0
        %1737 = vmatprep.subr.bf16.mxu0 0
        %1738 = vmatpush1.bf16.xpose.msra.mxu0 0
        %1739 = vmatprep.subr.bf16.mxu0 0
        %1740 = vmatpush1.bf16.xpose.msra.mxu0 0
        %1741 = vmatprep.subr.bf16.mxu0 0
        %1742 = vmatpush1.bf16.xpose.msra.mxu0 0
        %1743 = vmatprep.subr.bf16.mxu0 0
        %1744 = vmatpush1.bf16.xpose.msra.mxu0 0
        %1745 = vmatprep.subr.bf16.mxu0 0
        %1746 = vmatpush1.bf16.xpose.msra.mxu0 0
        %1747 = vmatprep.subr.bf16.mxu0 0
        %1748 = vmatpush1.bf16.xpose.msra.mxu0 0
        %1749 = vmatprep.subr.bf16.mxu0 0
        %1750 = vmatpush1.bf16.xpose.msra.mxu0 0
        %1751 = vmatprep.subr.bf16.mxu0 0
        %1752 = vmatpush1.bf16.xpose.msra.mxu0 %v1735
        %1753 = vmatprep.subr.bf16.mxu0 0
        %1754 = vmatpush2.bf16.xpose.msra.mxu0 0
        %1755 = vmatprep.subr.bf16.mxu0 0
        %1756 = vmatpush2.bf16.xpose.msra.mxu0 0
        %1757 = vmatprep.subr.bf16.mxu0 0
        %1758 = vmatpush2.bf16.xpose.msra.mxu0 0
        %1759 = vmatprep.subr.bf16.mxu0 0
        %1760 = vmatpush2.bf16.xpose.msra.mxu0 0
        %1761 = vmatprep.subr.bf16.mxu0 0
        %1762 = vmatpush2.bf16.xpose.msra.mxu0 0
        %1763 = vmatprep.subr.bf16.mxu0 0
        %1764 = vmatpush2.bf16.xpose.msra.mxu0 0
        %1765 = vmatprep.subr.bf16.mxu0 0
        %1766 = vmatpush2.bf16.xpose.msra.mxu0 0
        %1767 = vmatprep.subr.bf16.mxu0 0
        %1768 = vmatpush2.bf16.xpose.msra.mxu0 0
        %1769 = vmatprep.mubr.bf16.mxu0 0
        %1770 = vmatmul.mubr.bf16.gmra.mxu0 %v1732
        %v1771 = vpop.f32.mrf.mxu0
        %v1772 = vadd.f32 0.0, %v1771
        %v1773 = vpop.f32.mrf.mxu0
        %v1774 = vpop.f32.mrf.mxu0
        %v1775 = vpop.f32.mrf.mxu0
        %1776 = vdwg.mxu0
        %v1777 = vsel %vm1398, %v1772, -inf
        %1778 = vmax.xlane.f32.xlu0 %v1777
        %v1779 = vpop.xlane.xlu0 %1778
        %v1780 = vsub.f32 %v1772, %v1779
        %v1781 = vmul.f32 %v1780, 1.442695
        %v1782 = vpow.pop %v1781
        %v1783 = vsel %vm1398, %v1782, 0.0
        %1784 = vadd.xlane.f32.xlu0 %v1783
        %v1785 = vpop.xlane.xlu0 %1784
        %v1786 = vrcp.pop %v1785
        %v1787 = vmul.f32 %v1782, %v1786
        %v1788 = vpack.c.bf16 %v1787, %v1787
        %1789 = vrot.lane.b32.xlu0 %v1397, 104
        %v1790 = vpop.permute.xlu0 %1789
        %v1792 = vsel %vm1398, %v1788, 0
        %v1795 = vsel %vm1460, %v1790, 0
        %1797 = vmatprep.subr.bf16.mxu0 0
        %1798 = vmatpush1.bf16.msra.mxu0 0
        %1799 = vmatprep.subr.bf16.mxu0 0
        %1800 = vmatpush1.bf16.msra.mxu0 0
        %1801 = vmatprep.subr.bf16.mxu0 0
        %1802 = vmatpush1.bf16.msra.mxu0 0
        %1803 = vmatprep.subr.bf16.mxu0 0
        %1804 = vmatpush1.bf16.msra.mxu0 0
        %1805 = vmatprep.subr.bf16.mxu0 0
        %1806 = vmatpush1.bf16.msra.mxu0 0
        %1807 = vmatprep.subr.bf16.mxu0 0
        %1808 = vmatpush1.bf16.msra.mxu0 0
        %1809 = vmatprep.subr.bf16.mxu0 0
        %1810 = vmatpush1.bf16.msra.mxu0 0
        %1811 = vmatprep.subr.bf16.mxu0 0
        %1812 = vmatpush1.bf16.msra.mxu0 %v1795
        %1813 = vmatprep.subr.bf16.mxu0 0
        %1814 = vmatpush2.bf16.msra.mxu0 0
        %1815 = vmatprep.subr.bf16.mxu0 0
        %1816 = vmatpush2.bf16.msra.mxu0 0
        %1817 = vmatprep.subr.bf16.mxu0 0
        %1818 = vmatpush2.bf16.msra.mxu0 0
        %1819 = vmatprep.subr.bf16.mxu0 0
        %1820 = vmatpush2.bf16.msra.mxu0 0
        %1821 = vmatprep.subr.bf16.mxu0 0
        %1822 = vmatpush2.bf16.msra.mxu0 0
        %1823 = vmatprep.subr.bf16.mxu0 0
        %1824 = vmatpush2.bf16.msra.mxu0 0
        %1825 = vmatprep.subr.bf16.mxu0 0
        %1826 = vmatpush2.bf16.msra.mxu0 0
        %1827 = vmatprep.subr.bf16.mxu0 0
        %1828 = vmatpush2.bf16.msra.mxu0 0
        %1829 = vmatprep.mubr.bf16.mxu0 0
        %1830 = vmatmul.mubr.bf16.gmra.mxu0 %v1792
        %v1831 = vpop.f32.mrf.mxu0
        %v1832 = vadd.f32 0.0, %v1831
        %v1833 = vpop.f32.mrf.mxu0
        %v1834 = vpop.f32.mrf.mxu0
        %v1835 = vpop.f32.mrf.mxu0
        %1836 = vdwg.mxu0
        %1838 = vrot.lane.b32.xlu0 %v1612, 8
        %v1839 = vpop.permute.xlu0 %1838
        %1842 = vrot.lane.b32.xlu0 %v1722, 16
        %v1843 = vpop.permute.xlu0 %1842
        %1846 = vrot.lane.b32.xlu0 %v1832, 24
        %v1847 = vpop.permute.xlu0 %1846
        %v1849 = vsel %vm1398, %v1499, %v1839
        %vm1850 = vcmask 130048
        %v1851 = vsel %vm1850, %v1849, %v1843
        %vm1852 = vcmask 195584
        %v1853 = vsel %vm1852, %v1851, %v1847
        %v1854 = vpack.c.bf16 %v1853, %v1853
        %v1855 = vld [vmem:[#allocation14] sm:$0xf]
        %v1856 = vld [vmem:[#allocation14 + $0x4] sm:$0xf]
        %v1857 = vld [vmem:[#allocation14 + $0x8] sm:$0xf]
        %v1858 = vld [vmem:[#allocation14 + $0xc] sm:$0xf]
        %v1859 = vld [vmem:[#allocation16] sm:$0x1]
        %v1861 = vlaneseq
        %v1862 = vshrl.u32 %v1861, 7
        %v1863 = vsub.s32 0, %v1862
        %v1864 = vrot.slane %v1859, %v1863
        %v1870 = vunpack.c.l.b16 %v1855
        %v1871 = vunpack.c.l.b16 %v1856
        %v1872 = vunpack.c.l.b16 %v1857
        %v1873 = vunpack.c.l.b16 %v1858
        %v1874 = vpack.c.b16 %v1871, %v1870
        %v1875 = vpack.c.b16 %v1873, %v1872
        %v1879 = vsel %vm1173, %v1854, 0
        %1881 = vmatprep.subr.bf16.mxu0 0
        %1882 = vmatpush1.bf16.msra.mxu0 0
        %1883 = vmatprep.subr.bf16.mxu0 0
        %1884 = vmatpush1.bf16.msra.mxu0 0
        %1885 = vmatprep.subr.bf16.mxu0 0
        %1886 = vmatpush1.bf16.msra.mxu0 0
        %1887 = vmatprep.subr.bf16.mxu0 0
        %1888 = vmatpush1.bf16.msra.mxu0 0
        %1889 = vmatprep.subr.bf16.mxu0 0
        %1890 = vmatpush1.bf16.msra.mxu0 0
        %1891 = vmatprep.subr.bf16.mxu0 0
        %1892 = vmatpush1.bf16.msra.mxu0 0
        %1893 = vmatprep.subr.bf16.mxu0 0
        %1894 = vmatpush1.bf16.msra.mxu0 %v1875
        %1895 = vmatprep.subr.bf16.mxu0 0
        %1896 = vmatpush1.bf16.msra.mxu0 %v1874
        %1897 = vmatprep.subr.bf16.mxu0 0
        %1898 = vmatpush2.bf16.msra.mxu0 0
        %1899 = vmatprep.subr.bf16.mxu0 0
        %1900 = vmatpush2.bf16.msra.mxu0 0
        %1901 = vmatprep.subr.bf16.mxu0 0
        %1902 = vmatpush2.bf16.msra.mxu0 0
        %1903 = vmatprep.subr.bf16.mxu0 0
        %1904 = vmatpush2.bf16.msra.mxu0 0
        %1905 = vmatprep.subr.bf16.mxu0 0
        %1906 = vmatpush2.bf16.msra.mxu0 0
        %1907 = vmatprep.subr.bf16.mxu0 0
        %1908 = vmatpush2.bf16.msra.mxu0 0
        %1909 = vmatprep.subr.bf16.mxu0 0
        %1910 = vmatpush2.bf16.msra.mxu0 0
        %1911 = vmatprep.subr.bf16.mxu0 0
        %1912 = vmatpush2.bf16.msra.mxu0 0
        %1913 = vmatprep.mubr.bf16.mxu0 0
        %1914 = vmatmul.mubr.bf16.gmra.mxu0 %v1879
        %v1915 = vpop.f32.mrf.mxu0
        %v1916 = vadd.f32 %v1864, %v1915
        %v1917 = vpop.f32.mrf.mxu0
        %v1918 = vpop.f32.mrf.mxu0
        %v1919 = vpop.f32.mrf.mxu0
        %1920 = vdwg.mxu0
        %v1921 = vadd.f32 %v1170, %v1916
        %v1922 = vld [vmem:[#allocation17] sm:$0x1]
        %v1923 = vld [vmem:[#allocation19] sm:$0x1]
        %v1924 = vsel %vm1173, %v1921, 0.0
        %1925 = vadd.xlane.f32.xlu0 %v1924
        %v1926 = vpop.xlane.xlu0 %1925
        %v1927 = vmul.f32 %v1926, %v1177
        %v1928 = vsub.f32 %v1921, %v1927
        %v1929 = vmul.f32 %v1928, %v1928
        %v1930 = vsel %vm1173, %v1929, 0.0
        %1931 = vadd.xlane.f32.xlu0 %v1930
        %v1932 = vpop.xlane.xlu0 %1931
        %v1933 = vmul.f32 %v1932, %v1177
        %v1934 = vadd.f32 %v1933, 1e-05
        %v1935 = vrsqrt.pop %v1934
        %v1936 = vmul.f32 %v1928, %v1935
        %v1938 = vlaneseq
        %v1939 = vshrl.u32 %v1938, 7
        %v1940 = vsub.s32 0, %v1939
        %v1941 = vrot.slane %v1922, %v1940
        %v1943 = vmul.f32 %v1936, %v1941
        %v1945 = vlaneseq
        %v1946 = vshrl.u32 %v1945, 7
        %v1947 = vsub.s32 0, %v1946
        %v1948 = vrot.slane %v1923, %v1947
        %v1950 = vadd.f32 %v1943, %v1948
        %v1951 = vpack.c.bf16 %v1950, %v1950
        %v1952 = vld [vmem:[#allocation20] sm:$0xf]
        %v1953 = vld [vmem:[#allocation20 + $0x4] sm:$0xf]
        %v1954 = vld [vmem:[#allocation20 + $0x8] sm:$0xf]
        %v1955 = vld [vmem:[#allocation20 + $0xc] sm:$0xf]
        %v1956 = vld [vmem:[#allocation22] sm:$0x1]
        %v1958 = vlaneseq
        %v1959 = vshrl.u32 %v1958, 7
        %v1960 = vsub.s32 0, %v1959
        %v1961 = vrot.slane %v1956, %v1960
        %v1967 = vunpack.c.l.b16 %v1952
        %v1968 = vunpack.c.l.b16 %v1953
        %v1969 = vunpack.c.l.b16 %v1954
        %v1970 = vunpack.c.l.b16 %v1955
        %v1971 = vpack.c.b16 %v1968, %v1967
        %v1972 = vpack.c.b16 %v1970, %v1969
        %v1976 = vsel %vm1173, %v1951, 0
        %1978 = vmatprep.subr.bf16.mxu0 0
        %1979 = vmatpush1.bf16.msra.mxu0 0
        %1980 = vmatprep.subr.bf16.mxu0 0
        %1981 = vmatpush1.bf16.msra.mxu0 0
        %1982 = vmatprep.subr.bf16.mxu0 0
        %1983 = vmatpush1.bf16.msra.mxu0 0
        %1984 = vmatprep.subr.bf16.mxu0 0
        %1985 = vmatpush1.bf16.msra.mxu0 0
        %1986 = vmatprep.subr.bf16.mxu0 0
        %1987 = vmatpush1.bf16.msra.mxu0 0
        %1988 = vmatprep.subr.bf16.mxu0 0
        %1989 = vmatpush1.bf16.msra.mxu0 0
        %1990 = vmatprep.subr.bf16.mxu0 0
        %1991 = vmatpush1.bf16.msra.mxu0 %v1972
        %1992 = vmatprep.subr.bf16.mxu0 0
        %1993 = vmatpush1.bf16.msra.mxu0 %v1971
        %1994 = vmatprep.subr.bf16.mxu0 0
        %1995 = vmatpush2.bf16.msra.mxu0 0
        %1996 = vmatprep.subr.bf16.mxu0 0
        %1997 = vmatpush2.bf16.msra.mxu0 0
        %1998 = vmatprep.subr.bf16.mxu0 0
        %1999 = vmatpush2.bf16.msra.mxu0 0
        %2000 = vmatprep.subr.bf16.mxu0 0
        %2001 = vmatpush2.bf16.msra.mxu0 0
        %2002 = vmatprep.subr.bf16.mxu0 0
        %2003 = vmatpush2.bf16.msra.mxu0 0
        %2004 = vmatprep.subr.bf16.mxu0 0
        %2005 = vmatpush2.bf16.msra.mxu0 0
        %2006 = vmatprep.subr.bf16.mxu0 0
        %2007 = vmatpush2.bf16.msra.mxu0 0
        %2008 = vmatprep.subr.bf16.mxu0 0
        %2009 = vmatpush2.bf16.msra.mxu0 0
        %2010 = vmatprep.mubr.bf16.mxu0 0
        %2011 = vmatmul.mubr.bf16.gmra.mxu0 %v1976
        %v2012 = vpop.f32.mrf.mxu0
        %v2013 = vadd.f32 %v1961, %v2012
        %v2014 = vpop.f32.mrf.mxu0
        %v2015 = vpop.f32.mrf.mxu0
        %v2016 = vpop.f32.mrf.mxu0
        %2017 = vdwg.mxu0
        %v2018 = vld [vmem:[#allocation23] sm:$0x1]
        %v2019 = vld [vmem:[#allocation25] sm:$0x1]
        %vm2020 = vcmask 523264
        %v2021 = vsel %vm2020, %v2013, 0.0
        %2022 = vadd.xlane.f32.xlu0 %v2021
        %v2023 = vpop.xlane.xlu0 %2022
        %v2024 = vrcp.pop 64.0
        %v2025 = vmul.f32 %v2023, %v2024
        %v2026 = vsub.f32 %v2013, %v2025
        %v2027 = vmul.f32 %v2026, %v2026
        %v2028 = vsel %vm2020, %v2027, 0.0
        %2029 = vadd.xlane.f32.xlu0 %v2028
        %v2030 = vpop.xlane.xlu0 %2029
        %v2031 = vmul.f32 %v2030, %v2024
        %v2032 = vadd.f32 %v2031, 1e-05
        %v2033 = vrsqrt.pop %v2032
        %v2034 = vmul.f32 %v2026, %v2033
        %v2036 = vlaneseq
        %v2037 = vshrl.u32 %v2036, 7
        %v2038 = vsub.s32 0, %v2037
        %v2039 = vrot.slane %v2018, %v2038
        %v2041 = vmul.f32 %v2034, %v2039
        %v2043 = vlaneseq
        %v2044 = vshrl.u32 %v2043, 7
        %v2045 = vsub.s32 0, %v2044
        %v2046 = vrot.slane %v2019, %v2045
        %v2048 = vadd.f32 %v2041, %v2046
        %v2049 = vmul.f32 %v2048, 0.5
        %v2050 = vmul.f32 %v2048, 0.70710677
        %v2051 = verf.f32.pop %v2050
        %v2052 = vadd.f32 %v2051, 1.0
        %v2053 = vmul.f32 %v2049, %v2052
        %v2054 = vpack.c.bf16 %v2053, %v2053
        %v2055 = vld [vmem:[%s35] sm:$0xf]
        %v2056 = vld [vmem:[%s35 + $0x4] sm:$0xf]
        %v2057 = vld [vmem:[%s35 + $0x8] sm:$0xf]
        %v2058 = vld [vmem:[%s35 + $0xc] sm:$0xf]
        %v2059 = vld [vmem:[%s35 + $0x10] sm:$0xf]
        %v2060 = vld [vmem:[%s35 + $0x14] sm:$0xf]
        %v2061 = vld [vmem:[%s35 + $0x18] sm:$0xf]
        %v2062 = vld [vmem:[%s35 + $0x1c] sm:$0xf]
        %v2063 = vld [vmem:[#allocation26] sm:$0x1]
        %v2065 = vlaneseq
        %v2066 = vshrl.u32 %v2065, 7
        %v2067 = vsub.s32 0, %v2066
        %v2068 = vrot.slane %v2063, %v2067
        %v2078 = vunpack.c.l.b16 %v2055
        %v2079 = vunpack.c.l.b16 %v2056
        %v2080 = vunpack.c.l.b16 %v2057
        %v2081 = vunpack.c.l.b16 %v2058
        %v2082 = vunpack.c.l.b16 %v2059
        %v2083 = vunpack.c.l.b16 %v2060
        %v2084 = vunpack.c.l.b16 %v2061
        %v2085 = vunpack.c.l.b16 %v2062
        %v2086 = vpack.c.b16 %v2079, %v2078
        %v2087 = vpack.c.b16 %v2081, %v2080
        %v2088 = vpack.c.b16 %v2083, %v2082
        %v2089 = vpack.c.b16 %v2085, %v2084
        %v2095 = vsel %vm2020, %v2054, 0
        %2097 = vmatprep.subr.bf16.mxu0 0
        %2098 = vmatpush1.bf16.msra.mxu0 0
        %2099 = vmatprep.subr.bf16.mxu0 0
        %2100 = vmatpush1.bf16.msra.mxu0 0
        %2101 = vmatprep.subr.bf16.mxu0 0
        %2102 = vmatpush1.bf16.msra.mxu0 0
        %2103 = vmatprep.subr.bf16.mxu0 0
        %2104 = vmatpush1.bf16.msra.mxu0 0
        %2105 = vmatprep.subr.bf16.mxu0 0
        %2106 = vmatpush1.bf16.msra.mxu0 %v2089
        %2107 = vmatprep.subr.bf16.mxu0 0
        %2108 = vmatpush1.bf16.msra.mxu0 %v2088
        %2109 = vmatprep.subr.bf16.mxu0 0
        %2110 = vmatpush1.bf16.msra.mxu0 %v2087
        %2111 = vmatprep.subr.bf16.mxu0 0
        %2112 = vmatpush1.bf16.msra.mxu0 %v2086
        %2113 = vmatprep.subr.bf16.mxu0 0
        %2114 = vmatpush2.bf16.msra.mxu0 0
        %2115 = vmatprep.subr.bf16.mxu0 0
        %2116 = vmatpush2.bf16.msra.mxu0 0
        %2117 = vmatprep.subr.bf16.mxu0 0
        %2118 = vmatpush2.bf16.msra.mxu0 0
        %2119 = vmatprep.subr.bf16.mxu0 0
        %2120 = vmatpush2.bf16.msra.mxu0 0
        %2121 = vmatprep.subr.bf16.mxu0 0
        %2122 = vmatpush2.bf16.msra.mxu0 0
        %2123 = vmatprep.subr.bf16.mxu0 0
        %2124 = vmatpush2.bf16.msra.mxu0 0
        %2125 = vmatprep.subr.bf16.mxu0 0
        %2126 = vmatpush2.bf16.msra.mxu0 0
        %2127 = vmatprep.subr.bf16.mxu0 0
        %2128 = vmatpush2.bf16.msra.mxu0 0
        %2129 = vmatprep.mubr.bf16.mxu0 0
        %2130 = vmatmul.mubr.bf16.gmra.mxu0 %v2095
        %v2131 = vpop.f32.mrf.mxu0
        %v2132 = vadd.f32 %v2068, %v2131
        %v2133 = vpop.f32.mrf.mxu0
        %v2134 = vpop.f32.mrf.mxu0
        %v2135 = vpop.f32.mrf.mxu0
        %2136 = vdwg.mxu0
        %v2137 = vld [vmem:[%s39] sm:$0x1]
        %v2138 = vld [vmem:[#allocation28] sm:$0x1]
        %v2139 = vsel %vm2020, %v2132, 0.0
        %2140 = vadd.xlane.f32.xlu0 %v2139
        %v2141 = vpop.xlane.xlu0 %2140
        %v2142 = vmul.f32 %v2141, %v2024
        %v2143 = vsub.f32 %v2132, %v2142
        %v2144 = vmul.f32 %v2143, %v2143
        %v2145 = vsel %vm2020, %v2144, 0.0
        %2146 = vadd.xlane.f32.xlu0 %v2145
        %v2147 = vpop.xlane.xlu0 %2146
        %v2148 = vmul.f32 %v2147, %v2024
        %v2149 = vadd.f32 %v2148, 1e-05
        %v2150 = vrsqrt.pop %v2149
        %v2151 = vmul.f32 %v2143, %v2150
        %v2153 = vlaneseq
        %v2154 = vshrl.u32 %v2153, 7
        %v2155 = vsub.s32 0, %v2154
        %v2156 = vrot.slane %v2137, %v2155
        %v2158 = vmul.f32 %v2151, %v2156
        %v2160 = vlaneseq
        %v2161 = vshrl.u32 %v2160, 7
        %v2162 = vsub.s32 0, %v2161
        %v2163 = vrot.slane %v2138, %v2162
        %v2165 = vadd.f32 %v2158, %v2163
        %v2166 = vmul.f32 %v2165, 0.5
        %v2167 = vmul.f32 %v2165, 0.70710677
        %v2168 = verf.f32.pop %v2167
        %v2169 = vadd.f32 %v2168, 1.0
        %v2170 = vmul.f32 %v2166, %v2169
        %v2171 = vpack.c.bf16 %v2170, %v2170
        %v2172 = vld [vmem:[%s43] sm:$0xf]
        %v2173 = vld [vmem:[%s43 + $0x4] sm:$0xf]
        %v2174 = vld [vmem:[%s43 + $0x8] sm:$0xf]
        %v2175 = vld [vmem:[%s43 + $0xc] sm:$0xf]
        %v2176 = vld [vmem:[%s43 + $0x10] sm:$0xf]
        %v2177 = vld [vmem:[%s43 + $0x14] sm:$0xf]
        %v2178 = vld [vmem:[%s43 + $0x18] sm:$0xf]
        %v2179 = vld [vmem:[%s43 + $0x1c] sm:$0xf]
        %v2180 = vld [vmem:[#allocation29] sm:$0x1]
        %v2182 = vlaneseq
        %v2183 = vshrl.u32 %v2182, 7
        %v2184 = vsub.s32 0, %v2183
        %v2185 = vrot.slane %v2180, %v2184
        %v2195 = vunpack.c.l.b16 %v2172
        %v2196 = vunpack.c.l.b16 %v2173
        %v2197 = vunpack.c.l.b16 %v2174
        %v2198 = vunpack.c.l.b16 %v2175
        %v2199 = vunpack.c.l.b16 %v2176
        %v2200 = vunpack.c.l.b16 %v2177
        %v2201 = vunpack.c.l.b16 %v2178
        %v2202 = vunpack.c.l.b16 %v2179
        %v2203 = vpack.c.b16 %v2196, %v2195
        %v2204 = vpack.c.b16 %v2198, %v2197
        %v2205 = vpack.c.b16 %v2200, %v2199
        %v2206 = vpack.c.b16 %v2202, %v2201
        %v2212 = vsel %vm2020, %v2171, 0
        %2214 = vmatprep.subr.bf16.mxu0 0
        %2215 = vmatpush1.bf16.msra.mxu0 0
        %2216 = vmatprep.subr.bf16.mxu0 0
        %2217 = vmatpush1.bf16.msra.mxu0 0
        %2218 = vmatprep.subr.bf16.mxu0 0
        %2219 = vmatpush1.bf16.msra.mxu0 0
        %2220 = vmatprep.subr.bf16.mxu0 0
        %2221 = vmatpush1.bf16.msra.mxu0 0
        %2222 = vmatprep.subr.bf16.mxu0 0
        %2223 = vmatpush1.bf16.msra.mxu0 %v2206
        %2224 = vmatprep.subr.bf16.mxu0 0
        %2225 = vmatpush1.bf16.msra.mxu0 %v2205
        %2226 = vmatprep.subr.bf16.mxu0 0
        %2227 = vmatpush1.bf16.msra.mxu0 %v2204
        %2228 = vmatprep.subr.bf16.mxu0 0
        %2229 = vmatpush1.bf16.msra.mxu0 %v2203
        %2230 = vmatprep.subr.bf16.mxu0 0
        %2231 = vmatpush2.bf16.msra.mxu0 0
        %2232 = vmatprep.subr.bf16.mxu0 0
        %2233 = vmatpush2.bf16.msra.mxu0 0
        %2234 = vmatprep.subr.bf16.mxu0 0
        %2235 = vmatpush2.bf16.msra.mxu0 0
        %2236 = vmatprep.subr.bf16.mxu0 0
        %2237 = vmatpush2.bf16.msra.mxu0 0
        %2238 = vmatprep.subr.bf16.mxu0 0
        %2239 = vmatpush2.bf16.msra.mxu0 0
        %2240 = vmatprep.subr.bf16.mxu0 0
        %2241 = vmatpush2.bf16.msra.mxu0 0
        %2242 = vmatprep.subr.bf16.mxu0 0
        %2243 = vmatpush2.bf16.msra.mxu0 0
        %2244 = vmatprep.subr.bf16.mxu0 0
        %2245 = vmatpush2.bf16.msra.mxu0 0
        %2246 = vmatprep.mubr.bf16.mxu0 0
        %2247 = vmatmul.mubr.bf16.gmra.mxu0 %v2212
        %v2248 = vpop.f32.mrf.mxu0
        %v2249 = vadd.f32 %v2185, %v2248
        %v2250 = vpop.f32.mrf.mxu0
        %v2251 = vpop.f32.mrf.mxu0
        %v2252 = vpop.f32.mrf.mxu0
        %2253 = vdwg.mxu0
        %v2254 = vadd.f32 %v1921, %v2249
        %v2255 = vld [vmem:[#allocation31] sm:$0x1]
        %v2256 = vld [vmem:[#allocation32] sm:$0x1]
        %v2257 = vsel %vm1173, %v2254, 0.0
        %2258 = vadd.xlane.f32.xlu0 %v2257
        %v2259 = vpop.xlane.xlu0 %2258
        %v2260 = vmul.f32 %v2259, %v1177
        %v2261 = vsub.f32 %v2254, %v2260
        %v2262 = vmul.f32 %v2261, %v2261
        %v2263 = vsel %vm1173, %v2262, 0.0
        %2264 = vadd.xlane.f32.xlu0 %v2263
        %v2265 = vpop.xlane.xlu0 %2264
        %v2266 = vmul.f32 %v2265, %v1177
        %v2267 = vadd.f32 %v2266, 1e-05
        %v2268 = vrsqrt.pop %v2267
        %v2269 = vmul.f32 %v2261, %v2268
        %v2271 = vlaneseq
        %v2272 = vshrl.u32 %v2271, 7
        %v2273 = vsub.s32 0, %v2272
        %v2274 = vrot.slane %v2255, %v2273
        %v2276 = vmul.f32 %v2269, %v2274
        %v2278 = vlaneseq
        %v2279 = vshrl.u32 %v2278, 7
        %v2280 = vsub.s32 0, %v2279
        %v2281 = vrot.slane %v2256, %v2280
        %v2283 = vadd.f32 %v2276, %v2281
        %v2284 = vpack.c.bf16 %v2283, %v2283
        %v2285 = vld [vmem:[%s51] sm:$0xf]
        %v2286 = vld [vmem:[%s51 + $0x4] sm:$0xf]
        %v2287 = vld [vmem:[%s51 + $0x8] sm:$0xf]
        %v2288 = vld [vmem:[%s51 + $0xc] sm:$0xf]
        %v2289 = vld [vmem:[#allocation34] sm:$0x1]
        %v2291 = vlaneseq
        %v2292 = vshrl.u32 %v2291, 7
        %v2293 = vsub.s32 0, %v2292
        %v2294 = vrot.slane %v2289, %v2293
        %v2300 = vunpack.c.l.b16 %v2285
        %v2301 = vunpack.c.l.b16 %v2286
        %v2302 = vunpack.c.l.b16 %v2287
        %v2303 = vunpack.c.l.b16 %v2288
        %v2304 = vpack.c.b16 %v2301, %v2300
        %v2305 = vpack.c.b16 %v2303, %v2302
        %v2309 = vsel %vm1173, %v2284, 0
        %2311 = vmatprep.subr.bf16.mxu0 0
        %2312 = vmatpush1.bf16.msra.mxu0 0
        %2313 = vmatprep.subr.bf16.mxu0 0
        %2314 = vmatpush1.bf16.msra.mxu0 0
        %2315 = vmatprep.subr.bf16.mxu0 0
        %2316 = vmatpush1.bf16.msra.mxu0 0
        %2317 = vmatprep.subr.bf16.mxu0 0
        %2318 = vmatpush1.bf16.msra.mxu0 0
        %2319 = vmatprep.subr.bf16.mxu0 0
        %2320 = vmatpush1.bf16.msra.mxu0 0
        %2321 = vmatprep.subr.bf16.mxu0 0
        %2322 = vmatpush1.bf16.msra.mxu0 0
        %2323 = vmatprep.subr.bf16.mxu0 0
        %2324 = vmatpush1.bf16.msra.mxu0 %v2305
        %2325 = vmatprep.subr.bf16.mxu0 0
        %2326 = vmatpush1.bf16.msra.mxu0 %v2304
        %2327 = vmatprep.subr.bf16.mxu0 0
        %2328 = vmatpush2.bf16.msra.mxu0 0
        %2329 = vmatprep.subr.bf16.mxu0 0
        %2330 = vmatpush2.bf16.msra.mxu0 0
        %2331 = vmatprep.subr.bf16.mxu0 0
        %2332 = vmatpush2.bf16.msra.mxu0 0
        %2333 = vmatprep.subr.bf16.mxu0 0
        %2334 = vmatpush2.bf16.msra.mxu0 0
        %2335 = vmatprep.subr.bf16.mxu0 0
        %2336 = vmatpush2.bf16.msra.mxu0 0
        %2337 = vmatprep.subr.bf16.mxu0 0
        %2338 = vmatpush2.bf16.msra.mxu0 0
        %2339 = vmatprep.subr.bf16.mxu0 0
        %2340 = vmatpush2.bf16.msra.mxu0 0
        %2341 = vmatprep.subr.bf16.mxu0 0
        %2342 = vmatpush2.bf16.msra.mxu0 0
        %2343 = vmatprep.mubr.bf16.mxu0 0
        %2344 = vmatmul.mubr.bf16.gmra.mxu0 %v2309
        %v2345 = vpop.f32.mrf.mxu0
        %v2346 = vadd.f32 %v2294, %v2345
        %v2347 = vpop.f32.mrf.mxu0
        %v2348 = vpop.f32.mrf.mxu0
        %v2349 = vpop.f32.mrf.mxu0
        %2350 = vdwg.mxu0
        %v2351 = vld [vmem:[%s55] sm:$0xf]
        %v2352 = vld [vmem:[%s55 + $0x4] sm:$0xf]
        %v2353 = vld [vmem:[%s55 + $0x8] sm:$0xf]
        %v2354 = vld [vmem:[%s55 + $0xc] sm:$0xf]
        %v2355 = vld [vmem:[%s57] sm:$0x1]
        %v2357 = vlaneseq
        %v2358 = vshrl.u32 %v2357, 7
        %v2359 = vsub.s32 0, %v2358
        %v2360 = vrot.slane %v2355, %v2359
        %v2366 = vunpack.c.l.b16 %v2351
        %v2367 = vunpack.c.l.b16 %v2352
        %v2368 = vunpack.c.l.b16 %v2353
        %v2369 = vunpack.c.l.b16 %v2354
        %v2370 = vpack.c.b16 %v2367, %v2366
        %v2371 = vpack.c.b16 %v2369, %v2368
        %2374 = vmatprep.subr.bf16.mxu0 0
        %2375 = vmatpush1.bf16.msra.mxu0 0
        %2376 = vmatprep.subr.bf16.mxu0 0
        %2377 = vmatpush1.bf16.msra.mxu0 0
        %2378 = vmatprep.subr.bf16.mxu0 0
        %2379 = vmatpush1.bf16.msra.mxu0 0
        %2380 = vmatprep.subr.bf16.mxu0 0
        %2381 = vmatpush1.bf16.msra.mxu0 0
        %2382 = vmatprep.subr.bf16.mxu0 0
        %2383 = vmatpush1.bf16.msra.mxu0 0
        %2384 = vmatprep.subr.bf16.mxu0 0
        %2385 = vmatpush1.bf16.msra.mxu0 0
        %2386 = vmatprep.subr.bf16.mxu0 0
        %2387 = vmatpush1.bf16.msra.mxu0 %v2371
        %2388 = vmatprep.subr.bf16.mxu0 0
        %2389 = vmatpush1.bf16.msra.mxu0 %v2370
        %2390 = vmatprep.subr.bf16.mxu0 0
        %2391 = vmatpush2.bf16.msra.mxu0 0
        %2392 = vmatprep.subr.bf16.mxu0 0
        %2393 = vmatpush2.bf16.msra.mxu0 0
        %2394 = vmatprep.subr.bf16.mxu0 0
        %2395 = vmatpush2.bf16.msra.mxu0 0
        %2396 = vmatprep.subr.bf16.mxu0 0
        %2397 = vmatpush2.bf16.msra.mxu0 0
        %2398 = vmatprep.subr.bf16.mxu0 0
        %2399 = vmatpush2.bf16.msra.mxu0 0
        %2400 = vmatprep.subr.bf16.mxu0 0
        %2401 = vmatpush2.bf16.msra.mxu0 0
        %2402 = vmatprep.subr.bf16.mxu0 0
        %2403 = vmatpush2.bf16.msra.mxu0 0
        %2404 = vmatprep.subr.bf16.mxu0 0
        %2405 = vmatpush2.bf16.msra.mxu0 0
        %2406 = vmatprep.mubr.bf16.mxu0 0
        %2407 = vmatmul.mubr.bf16.gmra.mxu0 %v2309
        %v2408 = vpop.f32.mrf.mxu0
        %v2409 = vadd.f32 %v2360, %v2408
        %v2410 = vpop.f32.mrf.mxu0
        %v2411 = vpop.f32.mrf.mxu0
        %v2412 = vpop.f32.mrf.mxu0
        %2413 = vdwg.mxu0
        %v2414 = vxor.u32 %v2409, 2147483648
        %v2415 = vmul.f32 %v2414, 1.442695
        %v2416 = vpow.pop %v2415
        %v2417 = vadd.f32 %v2416, 1.0
        %v2418 = vrcp.pop %v2417
        %v2419 = vmul.f32 1.0, %v2418
        %v2420 = vmul.f32 %v2346, %v2419
        %v2421 = vadd.f32 %v2254, %v2420
        %2422 = vst.msk [vmem:[%s1164] sm:$0xff] %vm1173, %v2421
        %s2423 = sand.u32 %s706, 1
        %s2424 = scalar_lea.sflag [#allocation4], %s2423
        %s2425 = sand.u32 %s706, 1
        %s2426 = smul.addr %s2425, 8
        %s2427 = scalar_lea.vmem [#allocation35], %s2426
        // Predicated region
        $region221: #{tpu_custom_call.1} parent=135 // pred_check
          %p2428 = pneg %p716
        $region222: #{tpu_custom_call.1} parent=135 // pred_check_branch
          %2430 = sbr.rel (%p2428) target = $region224
        $region223: #{tpu_custom_call.1} parent=135 // pred_region
          %s2432 = ssub.s32 128, 128
          %2433 = vsyncadd %s2424, %s2432
          %s2434 = smul.addr %s84, 128
          %s2435 = scalar_lea.hbm %s59, %s2434
          %s2437 = sshll.u32 %s2427, 4
          %s2438 = int_to_ptr.vmem [resolvable:$true] %s2437
          %2440 = dma.vmem_to_hbm [thread:$0]  %s2438, 128, %s2435, %s2424
        $region224: #{tpu_custom_call.1} parent=135 // pred_fallthru
          _
      $region136: #{tpu_custom_call.1} parent=5 // pred_fallthru
        _
      %p2441 = scmp.le.s32.totalorder 2, %s79
      // Predicated region
      $region225: #{tpu_custom_call.1} parent=5 // pred_check
        %p2442 = pneg %p2441
      $region226: #{tpu_custom_call.1} parent=5 // pred_check_branch
        %2444 = sbr.rel (%p2442) target = $region228
      $region227: #{tpu_custom_call.1} parent=5 // pred_region
        %s2445 = ssub.s32 %s79, 2
        // Predicated region
        $region229: #{tpu_custom_call.1} parent=227 // pred_check
          %p2446 = pneg %p722
        $region230: #{tpu_custom_call.1} parent=227 // pred_check_branch
          %2448 = sbr.rel (%p2446) target = $region232
        $region231: #{tpu_custom_call.1} parent=227 // pred_region
          %s2449 = sand.u32 %s707, 1
          %s2450 = scalar_lea.sflag [#allocation4], %s2449
          %s2451 = sand.u32 %s707, 1
          %s2452 = smul.addr %s2451, 8
          %s2453 = scalar_lea.vmem [#allocation35], %s2452
          %2454 = dma.done %s2450, 128
        $region232: #{tpu_custom_call.1} parent=227 // pred_fallthru
          _
      $region228: #{tpu_custom_call.1} parent=5 // pred_fallthru
        _
    $region6: #{tpu_custom_call.1} parent=1 // loop_footer
      %s83 = sadd.s32 1, %s79
    $region7: #{tpu_custom_call.1} parent=1 // loop_footer_branch
      %78 = sbr.rel target = $region3
    $region8: #{tpu_custom_call.1} parent=1 // loop_exit
      _
    %2455 = vsyncpa [#allocation3], 1
    %s2456 = scalar_lea.sflag [#allocation3], 1
    %2457 = vsyncpa %s2456, 1
    %2458 = vsyncpa [#allocation6], 1
    %2459 = vsyncpa [#allocation9], 1
    %2460 = vsyncpa [#allocation12], 1
    %2461 = vsyncpa [#allocation15], 1
    %2462 = vsyncpa [#allocation18], 1
    %2463 = vsyncpa [#allocation21], 1
    %2464 = vsyncpa [#allocation24], 1
    %2465 = vsyncpa [#allocation27], 1
    %2466 = vsyncpa [#allocation30], 1
    %2467 = vsyncpa [#allocation33], 1
    %2468 = vsyncpa [#allocation4], 1
    %s2469 = scalar_lea.sflag [#allocation4], 1
    %2470 = vsyncpa %s2469, 1

// kernel: tpu_custom_call.1
$region0: #{tpu_custom_call.1}
  #allocation0 [shape = 'u32[]', space=smem, size = 0x4, offset = 0x4, fixed_abs, tag = 'smem constant byte address 0x4 - core index']
  #allocation1 [shape = 'u32[144,128]{1,0:T(1,128)}', space=vmem, size = 0x12000, scoped, tag = 'internal scratch']
  %s0 = inlined_call_operand.smem [shape: u32[30], index: -1, kind: input, shape index: {}]
  %s1 = sld [smem:[%s0]]
  %s2 = scalar_lea.smem %s0, 1
  %s3 = sld [smem:[%s2]]
  %s4 = scalar_lea.smem %s0, 2
  %s5 = sld [smem:[%s4]]
  %s6 = scalar_lea.smem %s0, 3
  %s7 = sld [smem:[%s6]]
  %s8 = scalar_lea.smem %s0, 4
  %s9 = sld [smem:[%s8]]
  %s10 = scalar_lea.smem %s0, 5
  %s11 = sld [smem:[%s10]]
  %s12 = scalar_lea.smem %s0, 6
  %s13 = sld [smem:[%s12]]
  %s14 = scalar_lea.smem %s0, 7
  %s15 = sld [smem:[%s14]]
  %s16 = scalar_lea.smem %s0, 8
  %s17 = sld [smem:[%s16]]
  %s18 = scalar_lea.smem %s0, 9
  %s19 = sld [smem:[%s18]]
  %s20 = scalar_lea.smem %s0, 10
  %s21 = sld [smem:[%s20]]
  %s22 = scalar_lea.smem %s0, 11
  %s23 = sld [smem:[%s22]]
  %s24 = scalar_lea.smem %s0, 12
  %s25 = sld [smem:[%s24]]
  %s26 = scalar_lea.smem %s0, 13
  %s27 = sld [smem:[%s26]]
  %s28 = scalar_lea.smem %s0, 14
  %s29 = sld [smem:[%s28]]
  %s30 = scalar_lea.smem %s0, 15
  %s31 = sld [smem:[%s30]]
  %s32 = scalar_lea.smem %s0, 16
  %s33 = sld [smem:[%s32]]
  %s34 = scalar_lea.smem %s0, 17
  %s35 = sld [smem:[%s34]]
  %s36 = scalar_lea.smem %s0, 18
  %s37 = sld [smem:[%s36]]
  %s38 = scalar_lea.smem %s0, 19
  %s39 = sld [smem:[%s38]]
  %s40 = scalar_lea.smem %s0, 20
  %s41 = sld [smem:[%s40]]
  %s42 = scalar_lea.smem %s0, 21
  %s43 = sld [smem:[%s42]]
  %s44 = scalar_lea.smem %s0, 22
  %s45 = sld [smem:[%s44]]
  %s46 = scalar_lea.smem %s0, 23
  %s47 = sld [smem:[%s46]]
  %s48 = scalar_lea.smem %s0, 24
  %s49 = sld [smem:[%s48]]
  %s50 = scalar_lea.smem %s0, 25
  %s51 = sld [smem:[%s50]]
  %s52 = scalar_lea.smem %s0, 26
  %s53 = sld [smem:[%s52]]
  %s54 = scalar_lea.smem %s0, 27
  %s55 = sld [smem:[%s54]]
  %s56 = scalar_lea.smem %s0, 28
  %s57 = sld [smem:[%s56]]
  %s58 = scalar_lea.smem %s0, 29
  %s59 = sld [smem:[%s58]]
  %s60 = sld [smem:[#allocation0]]
  $region233: #{tpu_custom_call.1} parent=0
    _
  %s62 = ssub.s32 1, %s60
  %s63 = scalar_select 0, %s62, %s60
  $region1: #{tpu_custom_call.1} parent=0
    #allocation2 [shape = 'u8[512]{0}', space=vmem, size = 0x400, scoped, tag = 'input window, operand 1, single buffered']
    #allocation3 [shape = 's32[2]{0}', space=sflag, size = 0x8, scoped, tag = 'scoped memory for tpu_custom_call.1']
    #allocation4 [shape = 's32[2]{0}', space=sflag, size = 0x8, scoped, tag = 'scoped memory for tpu_custom_call.1']
    #allocation5 [shape = 'u8[512]{0}', space=vmem, size = 0x400, scoped, tag = 'input window, operand 2, single buffered']
    #allocation6 [shape = 's32[1]{0}', space=sflag, size = 0x4, scoped, tag = 'scoped memory for tpu_custom_call.1']
    #allocation7 [shape = 'u8[512]{0}', space=vmem, size = 0x400, scoped, tag = 'input window, operand 4, single buffered']
    #allocation8 [shape = 'u8[8192]{0}', space=vmem, size = 0x2000, scoped, tag = 'input window, operand 5, single buffered']
    #allocation9 [shape = 's32[1]{0}', space=sflag, size = 0x4, scoped, tag = 'scoped memory for tpu_custom_call.1']
    #allocation10 [shape = 'u8[512]{0}', space=vmem, size = 0x400, scoped, tag = 'input window, operand 6, single buffered']
    #allocation11 [shape = 'u8[8192]{0}', space=vmem, size = 0x2000, scoped, tag = 'input window, operand 7, single buffered']
    #allocation12 [shape = 's32[1]{0}', space=sflag, size = 0x4, scoped, tag = 'scoped memory for tpu_custom_call.1']
    #allocation13 [shape = 'u8[512]{0}', space=vmem, size = 0x400, scoped, tag = 'input window, operand 8, single buffered']
    #allocation14 [shape = 'u8[8192]{0}', space=vmem, size = 0x2000, scoped, tag = 'input window, operand 9, single buffered']
    #allocation15 [shape = 's32[1]{0}', space=sflag, size = 0x4, scoped, tag = 'scoped memory for tpu_custom_call.1']
    #allocation16 [shape = 'u8[512]{0}', space=vmem, size = 0x400, scoped, tag = 'input window, operand 10, single buffered']
    #allocation17 [shape = 'u8[512]{0}', space=vmem, size = 0x400, scoped, tag = 'input window, operand 11, single buffered']
    #allocation18 [shape = 's32[1]{0}', space=sflag, size = 0x4, scoped, tag = 'scoped memory for tpu_custom_call.1']
    #allocation19 [shape = 'u8[512]{0}', space=vmem, size = 0x400, scoped, tag = 'input window, operand 12, single buffered']
    #allocation20 [shape = 'u8[8192]{0}', space=vmem, size = 0x2000, scoped, tag = 'input window, operand 13, single buffered']
    #allocation21 [shape = 's32[1]{0}', space=sflag, size = 0x4, scoped, tag = 'scoped memory for tpu_custom_call.1']
    #allocation22 [shape = 'u8[512]{0}', space=vmem, size = 0x400, scoped, tag = 'input window, operand 14, single buffered']
    #allocation23 [shape = 'u8[512]{0}', space=vmem, size = 0x400, scoped, tag = 'input window, operand 15, single buffered']
    #allocation24 [shape = 's32[1]{0}', space=sflag, size = 0x4, scoped, tag = 'scoped memory for tpu_custom_call.1']
    #allocation25 [shape = 'u8[512]{0}', space=vmem, size = 0x400, scoped, tag = 'input window, operand 16, single buffered']
    #allocation26 [shape = 'u8[512]{0}', space=vmem, size = 0x400, scoped, tag = 'input window, operand 18, single buffered']
    #allocation27 [shape = 's32[1]{0}', space=sflag, size = 0x4, scoped, tag = 'scoped memory for tpu_custom_call.1']
    #allocation28 [shape = 'u8[512]{0}', space=vmem, size = 0x400, scoped, tag = 'input window, operand 20, single buffered']
    #allocation29 [shape = 'u8[512]{0}', space=vmem, size = 0x400, scoped, tag = 'input window, operand 22, single buffered']
    #allocation30 [shape = 's32[1]{0}', space=sflag, size = 0x4, scoped, tag = 'scoped memory for tpu_custom_call.1']
    #allocation31 [shape = 'u8[512]{0}', space=vmem, size = 0x400, scoped, tag = 'input window, operand 23, single buffered']
    #allocation32 [shape = 'u8[512]{0}', space=vmem, size = 0x400, scoped, tag = 'input window, operand 24, single buffered']
    #allocation33 [shape = 's32[1]{0}', space=sflag, size = 0x4, scoped, tag = 'scoped memory for tpu_custom_call.1']
    #allocation34 [shape = 'u8[512]{0}', space=vmem, size = 0x400, scoped, tag = 'input window, operand 26, single buffered']
    #allocation35 [shape = 'u8[8192]{0}', space=vmem, size = 0x2000, scoped, tag = 'output window, operand 0']
    %64 = vsyncpa [#allocation3], 0
    %65 = vsyncpa [#allocation6], 0
    %66 = vsyncpa [#allocation9], 0
    %67 = vsyncpa [#allocation12], 0
    %68 = vsyncpa [#allocation15], 0
    %69 = vsyncpa [#allocation18], 0
    %70 = vsyncpa [#allocation21], 0
    %71 = vsyncpa [#allocation24], 0
    %72 = vsyncpa [#allocation27], 0
    %73 = vsyncpa [#allocation30], 0
    %74 = vsyncpa [#allocation33], 0
    %75 = vsyncpa [#allocation4], 0
    %s76 = scalar_lea.sflag [#allocation4], 1
    %77 = vsyncpa %s76, 0
    loop: start=0, step=1, limit=4
    $region2: #{tpu_custom_call.1} parent=1 // loop_pre_header
      _
    $region3: #{tpu_custom_call.1} parent=1 // loop_header
      %s79 = sphi 0, %s83
      %p80 = scmp.ge.s32.totalorder %s79, 4
      %s89 = sphi 0, %s91
      %s92 = sphi 0, %s89
      %s93 = sphi 0, %s92
      %s109 = sphi 0, %s93
      %s113 = sphi 0, %s113
      %s115 = sphi 0, %s113
      %s116 = sphi 0, %s115
      %s130 = sphi 0, %s116
      %s134 = sphi 0, %s134
      %s136 = sphi 0, %s134
      %s137 = sphi 0, %s136
      %s151 = sphi 0, %s137
      %s155 = sphi 0, %s155
      %s157 = sphi 0, %s155
      %s158 = sphi 0, %s157
      %s172 = sphi 0, %s158
      %s176 = sphi 0, %s176
      %s178 = sphi 0, %s176
      %s179 = sphi 0, %s178
      %s193 = sphi 0, %s179
      %s197 = sphi 0, %s197
      %s199 = sphi 0, %s197
      %s200 = sphi 0, %s199
      %s214 = sphi 0, %s200
      %s218 = sphi 0, %s218
      %s220 = sphi 0, %s218
      %s221 = sphi 0, %s220
      %s235 = sphi 0, %s221
      %s239 = sphi 0, %s239
      %s241 = sphi 0, %s239
      %s242 = sphi 0, %s241
      %s256 = sphi 0, %s242
      %s260 = sphi 0, %s260
      %s262 = sphi 0, %s260
      %s263 = sphi 0, %s262
      %s277 = sphi 0, %s263
      %s281 = sphi 0, %s281
      %s283 = sphi 0, %s281
      %s284 = sphi 0, %s283
      %s298 = sphi 0, %s284
      %s302 = sphi 0, %s302
      %s304 = sphi 0, %s302
      %s305 = sphi 0, %s304
      %s319 = sphi 0, %s305
      %s323 = sphi 0, %s323
      %s325 = sphi 0, %s323
      %s326 = sphi 0, %s325
      %s340 = sphi 0, %s326
      %s344 = sphi 0, %s344
      %s346 = sphi 0, %s344
      %s347 = sphi 0, %s346
      %s361 = sphi 0, %s347
      %s365 = sphi 0, %s365
      %s367 = sphi 0, %s365
      %s368 = sphi 0, %s367
      %s382 = sphi 0, %s368
      %s386 = sphi 0, %s386
      %s388 = sphi 0, %s386
      %s389 = sphi 0, %s388
      %s403 = sphi 0, %s389
      %s407 = sphi 0, %s407
      %s409 = sphi 0, %s407
      %s410 = sphi 0, %s409
      %s424 = sphi 0, %s410
      %s428 = sphi 0, %s428
      %s430 = sphi 0, %s428
      %s431 = sphi 0, %s430
      %s445 = sphi 0, %s431
      %s449 = sphi 0, %s449
      %s451 = sphi 0, %s449
      %s452 = sphi 0, %s451
      %s466 = sphi 0, %s452
      %s470 = sphi 0, %s470
      %s472 = sphi 0, %s470
      %s473 = sphi 0, %s472
      %s487 = sphi 0, %s473
      %s491 = sphi 0, %s491
      %s493 = sphi 0, %s491
      %s494 = sphi 0, %s493
      %s508 = sphi 0, %s494
      %s512 = sphi 0, %s512
      %s514 = sphi 0, %s512
      %s515 = sphi 0, %s514
      %s529 = sphi 0, %s515
      %s533 = sphi 0, %s533
      %s535 = sphi 0, %s533
      %s536 = sphi 0, %s535
      %s550 = sphi 0, %s536
      %s554 = sphi 0, %s554
      %s556 = sphi 0, %s554
      %s557 = sphi 0, %s556
      %s571 = sphi 0, %s557
      %s575 = sphi 0, %s575
      %s577 = sphi 0, %s575
      %s578 = sphi 0, %s577
      %s592 = sphi 0, %s578
      %s596 = sphi 0, %s596
      %s598 = sphi 0, %s596
      %s599 = sphi 0, %s598
      %s613 = sphi 0, %s599
      %s617 = sphi 0, %s617
      %s619 = sphi 0, %s617
      %s620 = sphi 0, %s619
      %s634 = sphi 0, %s620
      %s638 = sphi 0, %s638
      %s640 = sphi 0, %s638
      %s641 = sphi 0, %s640
      %s655 = sphi 0, %s641
      %s659 = sphi 0, %s659
      %s661 = sphi 0, %s659
      %s662 = sphi 0, %s661
      %s676 = sphi 0, %s662
      %s680 = sphi 0, %s680
      %s682 = sphi 0, %s680
      %s683 = sphi 0, %s682
      %s697 = sphi 0, %s683
      %s703 = sphi 0, %s705
      %s706 = sphi 0, %s703
      %s707 = sphi 0, %s706
      %s723 = sphi 0, %s707
    $region4: #{tpu_custom_call.1} parent=1 // loop_header_branch
      %82 = sbr.rel (%p80) target = $region8
    $region5: #{tpu_custom_call.1} parent=1 // loop_body
      %s84 = ssub.s32 %s79, 1
      %s85 = ssub.s32 %s79, 2
      %s86 = sadd.s32 %s79, 1
      %s87 = ssub.s32 %s79, %s86
      %p88 = scmp.eq.s32.totalorder %s87, 0
      %s90 = sadd.s32 %s89, 1
      %s91 = scalar_select %p88, %s89, %s90
      %p94 = pneg %p88
      %p95 = scmp.eq.s32.totalorder %s79, 1
      %p96 = por %p94, %p95
      %p97 = scmp.ne.s32.totalorder %s89, %s92
      %p98 = scmp.eq.s32.totalorder %s79, 0
      %p99 = por %p97, %p98
      %p100 = scmp.ne.s32.totalorder %s89, %s92
      %p101 = scmp.eq.s32.totalorder %s84, 1
      %p102 = por %p100, %p101
      %p103 = scmp.ne.s32.totalorder %s92, %s93
      %p104 = scmp.eq.s32.totalorder %s84, 0
      %p105 = por %p103, %p104
      %p106 = scmp.ne.s32.totalorder %s92, %s93
      %p107 = scmp.eq.s32.totalorder %s85, 1
      %p108 = por %p106, %p107
      %p110 = scmp.ne.s32.totalorder %s93, %s109
      %p111 = scmp.eq.s32.totalorder %s85, 0
      %p112 = por %p110, %p111
      %s114 = sadd.s32 %s113, 1
      %p117 = scmp.eq.s32.totalorder %s79, 1
      %p118 = scmp.ne.s32.totalorder %s113, %s115
      %p119 = scmp.eq.s32.totalorder %s79, 0
      %p120 = por %p118, %p119
      %p121 = scmp.ne.s32.totalorder %s113, %s115
      %p122 = scmp.eq.s32.totalorder %s84, 1
      %p123 = por %p121, %p122
      %p124 = scmp.ne.s32.totalorder %s115, %s116
      %p125 = scmp.eq.s32.totalorder %s84, 0
      %p126 = por %p124, %p125
      %p127 = scmp.ne.s32.totalorder %s115, %s116
      %p128 = scmp.eq.s32.totalorder %s85, 1
      %p129 = por %p127, %p128
      %p131 = scmp.ne.s32.totalorder %s116, %s130
      %p132 = scmp.eq.s32.totalorder %s85, 0
      %p133 = por %p131, %p132
      %s135 = sadd.s32 %s134, 1
      %p138 = scmp.eq.s32.totalorder %s79, 1
      %p139 = scmp.ne.s32.totalorder %s134, %s136
      %p140 = scmp.eq.s32.totalorder %s79, 0
      %p141 = por %p139, %p140
      %p142 = scmp.ne.s32.totalorder %s134, %s136
      %p143 = scmp.eq.s32.totalorder %s84, 1
      %p144 = por %p142, %p143
      %p145 = scmp.ne.s32.totalorder %s136, %s137
      %p146 = scmp.eq.s32.totalorder %s84, 0
      %p147 = por %p145, %p146
      %p148 = scmp.ne.s32.totalorder %s136, %s137
      %p149 = scmp.eq.s32.totalorder %s85, 1
      %p150 = por %p148, %p149
      %p152 = scmp.ne.s32.totalorder %s137, %s151
      %p153 = scmp.eq.s32.totalorder %s85, 0
      %p154 = por %p152, %p153
      %s156 = sadd.s32 %s155, 1
      %p159 = scmp.eq.s32.totalorder %s79, 1
      %p160 = scmp.ne.s32.totalorder %s155, %s157
      %p161 = scmp.eq.s32.totalorder %s79, 0
      %p162 = por %p160, %p161
      %p163 = scmp.ne.s32.totalorder %s155, %s157
      %p164 = scmp.eq.s32.totalorder %s84, 1
      %p165 = por %p163, %p164
      %p166 = scmp.ne.s32.totalorder %s157, %s158
      %p167 = scmp.eq.s32.totalorder %s84, 0
      %p168 = por %p166, %p167
      %p169 = scmp.ne.s32.totalorder %s157, %s158
      %p170 = scmp.eq.s32.totalorder %s85, 1
      %p171 = por %p169, %p170
      %p173 = scmp.ne.s32.totalorder %s158, %s172
      %p174 = scmp.eq.s32.totalorder %s85, 0
      %p175 = por %p173, %p174
      %s177 = sadd.s32 %s176, 1
      %p180 = scmp.eq.s32.totalorder %s79, 1
      %p181 = scmp.ne.s32.totalorder %s176, %s178
      %p182 = scmp.eq.s32.totalorder %s79, 0
      %p183 = por %p181, %p182
      %p184 = scmp.ne.s32.totalorder %s176, %s178
      %p185 = scmp.eq.s32.totalorder %s84, 1
      %p186 = por %p184, %p185
      %p187 = scmp.ne.s32.totalorder %s178, %s179
      %p188 = scmp.eq.s32.totalorder %s84, 0
      %p189 = por %p187, %p188
      %p190 = scmp.ne.s32.totalorder %s178, %s179
      %p191 = scmp.eq.s32.totalorder %s85, 1
      %p192 = por %p190, %p191
      %p194 = scmp.ne.s32.totalorder %s179, %s193
      %p195 = scmp.eq.s32.totalorder %s85, 0
      %p196 = por %p194, %p195
      %s198 = sadd.s32 %s197, 1
      %p201 = scmp.eq.s32.totalorder %s79, 1
      %p202 = scmp.ne.s32.totalorder %s197, %s199
      %p203 = scmp.eq.s32.totalorder %s79, 0
      %p204 = por %p202, %p203
      %p205 = scmp.ne.s32.totalorder %s197, %s199
      %p206 = scmp.eq.s32.totalorder %s84, 1
      %p207 = por %p205, %p206
      %p208 = scmp.ne.s32.totalorder %s199, %s200
      %p209 = scmp.eq.s32.totalorder %s84, 0
      %p210 = por %p208, %p209
      %p211 = scmp.ne.s32.totalorder %s199, %s200
      %p212 = scmp.eq.s32.totalorder %s85, 1
      %p213 = por %p211, %p212
      %p215 = scmp.ne.s32.totalorder %s200, %s214
      %p216 = scmp.eq.s32.totalorder %s85, 0
      %p217 = por %p215, %p216
      %s219 = sadd.s32 %s218, 1
      %p222 = scmp.eq.s32.totalorder %s79, 1
      %p223 = scmp.ne.s32.totalorder %s218, %s220
      %p224 = scmp.eq.s32.totalorder %s79, 0
      %p225 = por %p223, %p224
      %p226 = scmp.ne.s32.totalorder %s218, %s220
      %p227 = scmp.eq.s32.totalorder %s84, 1
      %p228 = por %p226, %p227
      %p229 = scmp.ne.s32.totalorder %s220, %s221
      %p230 = scmp.eq.s32.totalorder %s84, 0
      %p231 = por %p229, %p230
      %p232 = scmp.ne.s32.totalorder %s220, %s221
      %p233 = scmp.eq.s32.totalorder %s85, 1
      %p234 = por %p232, %p233
      %p236 = scmp.ne.s32.totalorder %s221, %s235
      %p237 = scmp.eq.s32.totalorder %s85, 0
      %p238 = por %p236, %p237
      %s240 = sadd.s32 %s239, 1
      %p243 = scmp.eq.s32.totalorder %s79, 1
      %p244 = scmp.ne.s32.totalorder %s239, %s241
      %p245 = scmp.eq.s32.totalorder %s79, 0
      %p246 = por %p244, %p245
      %p247 = scmp.ne.s32.totalorder %s239, %s241
      %p248 = scmp.eq.s32.totalorder %s84, 1
      %p249 = por %p247, %p248
      %p250 = scmp.ne.s32.totalorder %s241, %s242
      %p251 = scmp.eq.s32.totalorder %s84, 0
      %p252 = por %p250, %p251
      %p253 = scmp.ne.s32.totalorder %s241, %s242
      %p254 = scmp.eq.s32.totalorder %s85, 1
      %p255 = por %p253, %p254
      %p257 = scmp.ne.s32.totalorder %s242, %s256
      %p258 = scmp.eq.s32.totalorder %s85, 0
      %p259 = por %p257, %p258
      %s261 = sadd.s32 %s260, 1
      %p264 = scmp.eq.s32.totalorder %s79, 1
      %p265 = scmp.ne.s32.totalorder %s260, %s262
      %p266 = scmp.eq.s32.totalorder %s79, 0
      %p267 = por %p265, %p266
      %p268 = scmp.ne.s32.totalorder %s260, %s262
      %p269 = scmp.eq.s32.totalorder %s84, 1
      %p270 = por %p268, %p269
      %p271 = scmp.ne.s32.totalorder %s262, %s263
      %p272 = scmp.eq.s32.totalorder %s84, 0
      %p273 = por %p271, %p272
      %p274 = scmp.ne.s32.totalorder %s262, %s263
      %p275 = scmp.eq.s32.totalorder %s85, 1
      %p276 = por %p274, %p275
      %p278 = scmp.ne.s32.totalorder %s263, %s277
      %p279 = scmp.eq.s32.totalorder %s85, 0
      %p280 = por %p278, %p279
      %s282 = sadd.s32 %s281, 1
      %p285 = scmp.eq.s32.totalorder %s79, 1
      %p286 = scmp.ne.s32.totalorder %s281, %s283
      %p287 = scmp.eq.s32.totalorder %s79, 0
      %p288 = por %p286, %p287
      %p289 = scmp.ne.s32.totalorder %s281, %s283
      %p290 = scmp.eq.s32.totalorder %s84, 1
      %p291 = por %p289, %p290
      %p292 = scmp.ne.s32.totalorder %s283, %s284
      %p293 = scmp.eq.s32.totalorder %s84, 0
      %p294 = por %p292, %p293
      %p295 = scmp.ne.s32.totalorder %s283, %s284
      %p296 = scmp.eq.s32.totalorder %s85, 1
      %p297 = por %p295, %p296
      %p299 = scmp.ne.s32.totalorder %s284, %s298
      %p300 = scmp.eq.s32.totalorder %s85, 0
      %p301 = por %p299, %p300
      %s303 = sadd.s32 %s302, 1
      %p306 = scmp.eq.s32.totalorder %s79, 1
      %p307 = scmp.ne.s32.totalorder %s302, %s304
      %p308 = scmp.eq.s32.totalorder %s79, 0
      %p309 = por %p307, %p308
      %p310 = scmp.ne.s32.totalorder %s302, %s304
      %p311 = scmp.eq.s32.totalorder %s84, 1
      %p312 = por %p310, %p311
      %p313 = scmp.ne.s32.totalorder %s304, %s305
      %p314 = scmp.eq.s32.totalorder %s84, 0
      %p315 = por %p313, %p314
      %p316 = scmp.ne.s32.totalorder %s304, %s305
      %p317 = scmp.eq.s32.totalorder %s85, 1
      %p318 = por %p316, %p317
      %p320 = scmp.ne.s32.totalorder %s305, %s319
      %p321 = scmp.eq.s32.totalorder %s85, 0
      %p322 = por %p320, %p321
      %s324 = sadd.s32 %s323, 1
      %p327 = scmp.eq.s32.totalorder %s79, 1
      %p328 = scmp.ne.s32.totalorder %s323, %s325
      %p329 = scmp.eq.s32.totalorder %s79, 0
      %p330 = por %p328, %p329
      %p331 = scmp.ne.s32.totalorder %s323, %s325
      %p332 = scmp.eq.s32.totalorder %s84, 1
      %p333 = por %p331, %p332
      %p334 = scmp.ne.s32.totalorder %s325, %s326
      %p335 = scmp.eq.s32.totalorder %s84, 0
      %p336 = por %p334, %p335
      %p337 = scmp.ne.s32.totalorder %s325, %s326
      %p338 = scmp.eq.s32.totalorder %s85, 1
      %p339 = por %p337, %p338
      %p341 = scmp.ne.s32.totalorder %s326, %s340
      %p342 = scmp.eq.s32.totalorder %s85, 0
      %p343 = por %p341, %p342
      %s345 = sadd.s32 %s344, 1
      %p348 = scmp.eq.s32.totalorder %s79, 1
      %p349 = scmp.ne.s32.totalorder %s344, %s346
      %p350 = scmp.eq.s32.totalorder %s79, 0
      %p351 = por %p349, %p350
      %p352 = scmp.ne.s32.totalorder %s344, %s346
      %p353 = scmp.eq.s32.totalorder %s84, 1
      %p354 = por %p352, %p353
      %p355 = scmp.ne.s32.totalorder %s346, %s347
      %p356 = scmp.eq.s32.totalorder %s84, 0
      %p357 = por %p355, %p356
      %p358 = scmp.ne.s32.totalorder %s346, %s347
      %p359 = scmp.eq.s32.totalorder %s85, 1
      %p360 = por %p358, %p359
      %p362 = scmp.ne.s32.totalorder %s347, %s361
      %p363 = scmp.eq.s32.totalorder %s85, 0
      %p364 = por %p362, %p363
      %s366 = sadd.s32 %s365, 1
      %p369 = scmp.eq.s32.totalorder %s79, 1
      %p370 = scmp.ne.s32.totalorder %s365, %s367
      %p371 = scmp.eq.s32.totalorder %s79, 0
      %p372 = por %p370, %p371
      %p373 = scmp.ne.s32.totalorder %s365, %s367
      %p374 = scmp.eq.s32.totalorder %s84, 1
      %p375 = por %p373, %p374
      %p376 = scmp.ne.s32.totalorder %s367, %s368
      %p377 = scmp.eq.s32.totalorder %s84, 0
      %p378 = por %p376, %p377
      %p379 = scmp.ne.s32.totalorder %s367, %s368
      %p380 = scmp.eq.s32.totalorder %s85, 1
      %p381 = por %p379, %p380
      %p383 = scmp.ne.s32.totalorder %s368, %s382
      %p384 = scmp.eq.s32.totalorder %s85, 0
      %p385 = por %p383, %p384
      %s387 = sadd.s32 %s386, 1
      %p390 = scmp.eq.s32.totalorder %s79, 1
      %p391 = scmp.ne.s32.totalorder %s386, %s388
      %p392 = scmp.eq.s32.totalorder %s79, 0
      %p393 = por %p391, %p392
      %p394 = scmp.ne.s32.totalorder %s386, %s388
      %p395 = scmp.eq.s32.totalorder %s84, 1
      %p396 = por %p394, %p395
      %p397 = scmp.ne.s32.totalorder %s388, %s389
      %p398 = scmp.eq.s32.totalorder %s84, 0
      %p399 = por %p397, %p398
      %p400 = scmp.ne.s32.totalorder %s388, %s389
      %p401 = scmp.eq.s32.totalorder %s85, 1
      %p402 = por %p400, %p401
      %p404 = scmp.ne.s32.totalorder %s389, %s403
      %p405 = scmp.eq.s32.totalorder %s85, 0
      %p406 = por %p404, %p405
      %s408 = sadd.s32 %s407, 1
      %p411 = scmp.eq.s32.totalorder %s79, 1
      %p412 = scmp.ne.s32.totalorder %s407, %s409
      %p413 = scmp.eq.s32.totalorder %s79, 0
      %p414 = por %p412, %p413
      %p415 = scmp.ne.s32.totalorder %s407, %s409
      %p416 = scmp.eq.s32.totalorder %s84, 1
      %p417 = por %p415, %p416
      %p418 = scmp.ne.s32.totalorder %s409, %s410
      %p419 = scmp.eq.s32.totalorder %s84, 0
      %p420 = por %p418, %p419
      %p421 = scmp.ne.s32.totalorder %s409, %s410
      %p422 = scmp.eq.s32.totalorder %s85, 1
      %p423 = por %p421, %p422
      %p425 = scmp.ne.s32.totalorder %s410, %s424
      %p426 = scmp.eq.s32.totalorder %s85, 0
      %p427 = por %p425, %p426
      %s429 = sadd.s32 %s428, 1
      %p432 = scmp.eq.s32.totalorder %s79, 1
      %p433 = scmp.ne.s32.totalorder %s428, %s430
      %p434 = scmp.eq.s32.totalorder %s79, 0
      %p435 = por %p433, %p434
      %p436 = scmp.ne.s32.totalorder %s428, %s430
      %p437 = scmp.eq.s32.totalorder %s84, 1
      %p438 = por %p436, %p437
      %p439 = scmp.ne.s32.totalorder %s430, %s431
      %p440 = scmp.eq.s32.totalorder %s84, 0
      %p441 = por %p439, %p440
      %p442 = scmp.ne.s32.totalorder %s430, %s431
      %p443 = scmp.eq.s32.totalorder %s85, 1
      %p444 = por %p442, %p443
      %p446 = scmp.ne.s32.totalorder %s431, %s445
      %p447 = scmp.eq.s32.totalorder %s85, 0
      %p448 = por %p446, %p447
      %s450 = sadd.s32 %s449, 1
      %p453 = scmp.eq.s32.totalorder %s79, 1
      %p454 = scmp.ne.s32.totalorder %s449, %s451
      %p455 = scmp.eq.s32.totalorder %s79, 0
      %p456 = por %p454, %p455
      %p457 = scmp.ne.s32.totalorder %s449, %s451
      %p458 = scmp.eq.s32.totalorder %s84, 1
      %p459 = por %p457, %p458
      %p460 = scmp.ne.s32.totalorder %s451, %s452
      %p461 = scmp.eq.s32.totalorder %s84, 0
      %p462 = por %p460, %p461
      %p463 = scmp.ne.s32.totalorder %s451, %s452
      %p464 = scmp.eq.s32.totalorder %s85, 1
      %p465 = por %p463, %p464
      %p467 = scmp.ne.s32.totalorder %s452, %s466
      %p468 = scmp.eq.s32.totalorder %s85, 0
      %p469 = por %p467, %p468
      %s471 = sadd.s32 %s470, 1
      %p474 = scmp.eq.s32.totalorder %s79, 1
      %p475 = scmp.ne.s32.totalorder %s470, %s472
      %p476 = scmp.eq.s32.totalorder %s79, 0
      %p477 = por %p475, %p476
      %p478 = scmp.ne.s32.totalorder %s470, %s472
      %p479 = scmp.eq.s32.totalorder %s84, 1
      %p480 = por %p478, %p479
      %p481 = scmp.ne.s32.totalorder %s472, %s473
      %p482 = scmp.eq.s32.totalorder %s84, 0
      %p483 = por %p481, %p482
      %p484 = scmp.ne.s32.totalorder %s472, %s473
      %p485 = scmp.eq.s32.totalorder %s85, 1
      %p486 = por %p484, %p485
      %p488 = scmp.ne.s32.totalorder %s473, %s487
      %p489 = scmp.eq.s32.totalorder %s85, 0
      %p490 = por %p488, %p489
      %s492 = sadd.s32 %s491, 1
      %p495 = scmp.eq.s32.totalorder %s79, 1
      %p496 = scmp.ne.s32.totalorder %s491, %s493
      %p497 = scmp.eq.s32.totalorder %s79, 0
      %p498 = por %p496, %p497
      %p499 = scmp.ne.s32.totalorder %s491, %s493
      %p500 = scmp.eq.s32.totalorder %s84, 1
      %p501 = por %p499, %p500
      %p502 = scmp.ne.s32.totalorder %s493, %s494
      %p503 = scmp.eq.s32.totalorder %s84, 0
      %p504 = por %p502, %p503
      %p505 = scmp.ne.s32.totalorder %s493, %s494
      %p506 = scmp.eq.s32.totalorder %s85, 1
      %p507 = por %p505, %p506
      %p509 = scmp.ne.s32.totalorder %s494, %s508
      %p510 = scmp.eq.s32.totalorder %s85, 0
      %p511 = por %p509, %p510
      %s513 = sadd.s32 %s512, 1
      %p516 = scmp.eq.s32.totalorder %s79, 1
      %p517 = scmp.ne.s32.totalorder %s512, %s514
      %p518 = scmp.eq.s32.totalorder %s79, 0
      %p519 = por %p517, %p518
      %p520 = scmp.ne.s32.totalorder %s512, %s514
      %p521 = scmp.eq.s32.totalorder %s84, 1
      %p522 = por %p520, %p521
      %p523 = scmp.ne.s32.totalorder %s514, %s515
      %p524 = scmp.eq.s32.totalorder %s84, 0
      %p525 = por %p523, %p524
      %p526 = scmp.ne.s32.totalorder %s514, %s515
      %p527 = scmp.eq.s32.totalorder %s85, 1
      %p528 = por %p526, %p527
      %p530 = scmp.ne.s32.totalorder %s515, %s529
      %p531 = scmp.eq.s32.totalorder %s85, 0
      %p532 = por %p530, %p531
      %s534 = sadd.s32 %s533, 1
      %p537 = scmp.eq.s32.totalorder %s79, 1
      %p538 = scmp.ne.s32.totalorder %s533, %s535
      %p539 = scmp.eq.s32.totalorder %s79, 0
      %p540 = por %p538, %p539
      %p541 = scmp.ne.s32.totalorder %s533, %s535
      %p542 = scmp.eq.s32.totalorder %s84, 1
      %p543 = por %p541, %p542
      %p544 = scmp.ne.s32.totalorder %s535, %s536
      %p545 = scmp.eq.s32.totalorder %s84, 0
      %p546 = por %p544, %p545
      %p547 = scmp.ne.s32.totalorder %s535, %s536
      %p548 = scmp.eq.s32.totalorder %s85, 1
      %p549 = por %p547, %p548
      %p551 = scmp.ne.s32.totalorder %s536, %s550
      %p552 = scmp.eq.s32.totalorder %s85, 0
      %p553 = por %p551, %p552
      %s555 = sadd.s32 %s554, 1
      %p558 = scmp.eq.s32.totalorder %s79, 1
      %p559 = scmp.ne.s32.totalorder %s554, %s556
      %p560 = scmp.eq.s32.totalorder %s79, 0
      %p561 = por %p559, %p560
      %p562 = scmp.ne.s32.totalorder %s554, %s556
      %p563 = scmp.eq.s32.totalorder %s84, 1
      %p564 = por %p562, %p563
      %p565 = scmp.ne.s32.totalorder %s556, %s557
      %p566 = scmp.eq.s32.totalorder %s84, 0
      %p567 = por %p565, %p566
      %p568 = scmp.ne.s32.totalorder %s556, %s557
      %p569 = scmp.eq.s32.totalorder %s85, 1
      %p570 = por %p568, %p569
      %p572 = scmp.ne.s32.totalorder %s557, %s571
      %p573 = scmp.eq.s32.totalorder %s85, 0
      %p574 = por %p572, %p573
      %s576 = sadd.s32 %s575, 1
      %p579 = scmp.eq.s32.totalorder %s79, 1
      %p580 = scmp.ne.s32.totalorder %s575, %s577
      %p581 = scmp.eq.s32.totalorder %s79, 0
      %p582 = por %p580, %p581
      %p583 = scmp.ne.s32.totalorder %s575, %s577
      %p584 = scmp.eq.s32.totalorder %s84, 1
      %p585 = por %p583, %p584
      %p586 = scmp.ne.s32.totalorder %s577, %s578
      %p587 = scmp.eq.s32.totalorder %s84, 0
      %p588 = por %p586, %p587
      %p589 = scmp.ne.s32.totalorder %s577, %s578
      %p590 = scmp.eq.s32.totalorder %s85, 1
      %p591 = por %p589, %p590
      %p593 = scmp.ne.s32.totalorder %s578, %s592
      %p594 = scmp.eq.s32.totalorder %s85, 0
      %p595 = por %p593, %p594
      %s597 = sadd.s32 %s596, 1
      %p600 = scmp.eq.s32.totalorder %s79, 1
      %p601 = scmp.ne.s32.totalorder %s596, %s598
      %p602 = scmp.eq.s32.totalorder %s79, 0
      %p603 = por %p601, %p602
      %p604 = scmp.ne.s32.totalorder %s596, %s598
      %p605 = scmp.eq.s32.totalorder %s84, 1
      %p606 = por %p604, %p605
      %p607 = scmp.ne.s32.totalorder %s598, %s599
      %p608 = scmp.eq.s32.totalorder %s84, 0
      %p609 = por %p607, %p608
      %p610 = scmp.ne.s32.totalorder %s598, %s599
      %p611 = scmp.eq.s32.totalorder %s85, 1
      %p612 = por %p610, %p611
      %p614 = scmp.ne.s32.totalorder %s599, %s613
      %p615 = scmp.eq.s32.totalorder %s85, 0
      %p616 = por %p614, %p615
      %s618 = sadd.s32 %s617, 1
      %p621 = scmp.eq.s32.totalorder %s79, 1
      %p622 = scmp.ne.s32.totalorder %s617, %s619
      %p623 = scmp.eq.s32.totalorder %s79, 0
      %p624 = por %p622, %p623
      %p625 = scmp.ne.s32.totalorder %s617, %s619
      %p626 = scmp.eq.s32.totalorder %s84, 1
      %p627 = por %p625, %p626
      %p628 = scmp.ne.s32.totalorder %s619, %s620
      %p629 = scmp.eq.s32.totalorder %s84, 0
      %p630 = por %p628, %p629
      %p631 = scmp.ne.s32.totalorder %s619, %s620
      %p632 = scmp.eq.s32.totalorder %s85, 1
      %p633 = por %p631, %p632
      %p635 = scmp.ne.s32.totalorder %s620, %s634
      %p636 = scmp.eq.s32.totalorder %s85, 0
      %p637 = por %p635, %p636
      %s639 = sadd.s32 %s638, 1
      %p642 = scmp.eq.s32.totalorder %s79, 1
      %p643 = scmp.ne.s32.totalorder %s638, %s640
      %p644 = scmp.eq.s32.totalorder %s79, 0
      %p645 = por %p643, %p644
      %p646 = scmp.ne.s32.totalorder %s638, %s640
      %p647 = scmp.eq.s32.totalorder %s84, 1
      %p648 = por %p646, %p647
      %p649 = scmp.ne.s32.totalorder %s640, %s641
      %p650 = scmp.eq.s32.totalorder %s84, 0
      %p651 = por %p649, %p650
      %p652 = scmp.ne.s32.totalorder %s640, %s641
      %p653 = scmp.eq.s32.totalorder %s85, 1
      %p654 = por %p652, %p653
      %p656 = scmp.ne.s32.totalorder %s641, %s655
      %p657 = scmp.eq.s32.totalorder %s85, 0
      %p658 = por %p656, %p657
      %s660 = sadd.s32 %s659, 1
      %p663 = scmp.eq.s32.totalorder %s79, 1
      %p664 = scmp.ne.s32.totalorder %s659, %s661
      %p665 = scmp.eq.s32.totalorder %s79, 0
      %p666 = por %p664, %p665
      %p667 = scmp.ne.s32.totalorder %s659, %s661
      %p668 = scmp.eq.s32.totalorder %s84, 1
      %p669 = por %p667, %p668
      %p670 = scmp.ne.s32.totalorder %s661, %s662
      %p671 = scmp.eq.s32.totalorder %s84, 0
      %p672 = por %p670, %p671
      %p673 = scmp.ne.s32.totalorder %s661, %s662
      %p674 = scmp.eq.s32.totalorder %s85, 1
      %p675 = por %p673, %p674
      %p677 = scmp.ne.s32.totalorder %s662, %s676
      %p678 = scmp.eq.s32.totalorder %s85, 0
      %p679 = por %p677, %p678
      %s681 = sadd.s32 %s680, 1
      %p684 = scmp.eq.s32.totalorder %s79, 1
      %p685 = scmp.ne.s32.totalorder %s680, %s682
      %p686 = scmp.eq.s32.totalorder %s79, 0
      %p687 = por %p685, %p686
      %p688 = scmp.ne.s32.totalorder %s680, %s682
      %p689 = scmp.eq.s32.totalorder %s84, 1
      %p690 = por %p688, %p689
      %p691 = scmp.ne.s32.totalorder %s682, %s683
      %p692 = scmp.eq.s32.totalorder %s84, 0
      %p693 = por %p691, %p692
      %p694 = scmp.ne.s32.totalorder %s682, %s683
      %p695 = scmp.eq.s32.totalorder %s85, 1
      %p696 = por %p694, %p695
      %p698 = scmp.ne.s32.totalorder %s683, %s697
      %p699 = scmp.eq.s32.totalorder %s85, 0
      %p700 = por %p698, %p699
      %s701 = ssub.s32 %s79, %s86
      %p702 = scmp.eq.s32.totalorder %s701, 0
      %s704 = sadd.s32 %s703, 1
      %s705 = scalar_select %p702, %s703, %s704
      %p708 = pneg %p702
      %p709 = scmp.eq.s32.totalorder %s79, 1
      %p710 = por %p708, %p709
      %p711 = scmp.ne.s32.totalorder %s703, %s706
      %p712 = scmp.eq.s32.totalorder %s79, 0
      %p713 = por %p711, %p712
      %p714 = scmp.ne.s32.totalorder %s703, %s706
      %p715 = scmp.eq.s32.totalorder %s84, 1
      %p716 = por %p714, %p715
      %p717 = scmp.ne.s32.totalorder %s706, %s707
      %p718 = scmp.eq.s32.totalorder %s84, 0
      %p719 = por %p717, %p718
      %p720 = scmp.ne.s32.totalorder %s706, %s707
      %p721 = scmp.eq.s32.totalorder %s85, 1
      %p722 = por %p720, %p721
      %p724 = scmp.ne.s32.totalorder %s707, %s723
      %p725 = scmp.eq.s32.totalorder %s85, 0
      %p726 = por %p724, %p725
      %p727 = scmp.le.s32.totalorder 1, %s79
      %p728 = scmp.lt.s32.totalorder %s79, 3
      %p729 = pnand %p727, %p728
      %p730 = pneg %p729
      // Predicated region
      $region9: #{tpu_custom_call.1} parent=5 // pred_check
        _
      $region10: #{tpu_custom_call.1} parent=5 // pred_check_branch
        %732 = sbr.rel (%p729) target = $region12
      $region11: #{tpu_custom_call.1} parent=5 // pred_region
        %s733 = ssub.s32 %s79, 1
        // Predicated region
        $region13: #{tpu_custom_call.1} parent=11 // pred_check
          %p734 = pneg %p126
        $region14: #{tpu_custom_call.1} parent=11 // pred_check_branch
          %736 = sbr.rel (%p734) target = $region16
        $region15: #{tpu_custom_call.1} parent=11 // pred_region
          %s738 = ssub.s32 16, 16
          %739 = vsyncadd [#allocation3], %s738
          %s741 = sshll.u32 [#allocation2], 4
          %s742 = int_to_ptr.vmem [resolvable:$true] %s741
          %744 = dma.hbm_to_vmem [thread:$0]  %s3, 16, %s742, [#allocation3]
        $region16: #{tpu_custom_call.1} parent=11 // pred_fallthru
          _
        // Predicated region
        $region17: #{tpu_custom_call.1} parent=11 // pred_check
          %p745 = pneg %p147
        $region18: #{tpu_custom_call.1} parent=11 // pred_check_branch
          %747 = sbr.rel (%p745) target = $region20
        $region19: #{tpu_custom_call.1} parent=11 // pred_region
          %s749 = ssub.s32 16, 16
          %750 = vsyncadd [#allocation6], %s749
          %s752 = sshll.u32 [#allocation5], 4
          %s753 = int_to_ptr.vmem [resolvable:$true] %s752
          %755 = dma.hbm_to_vmem [thread:$0]  %s5, 16, %s753, [#allocation6]
        $region20: #{tpu_custom_call.1} parent=11 // pred_fallthru
          _
        // Predicated region
        $region21: #{tpu_custom_call.1} parent=11 // pred_check
          %p756 = pneg %p168
        $region22: #{tpu_custom_call.1} parent=11 // pred_check_branch
          %758 = sbr.rel (%p756) target = $region24
        $region23: #{tpu_custom_call.1} parent=11 // pred_region
          _
        $region24: #{tpu_custom_call.1} parent=11 // pred_fallthru
          _
        // Predicated region
        $region25: #{tpu_custom_call.1} parent=11 // pred_check
          %p759 = pneg %p189
        $region26: #{tpu_custom_call.1} parent=11 // pred_check_branch
          %761 = sbr.rel (%p759) target = $region28
        $region27: #{tpu_custom_call.1} parent=11 // pred_region
          %s763 = ssub.s32 16, 16
          %764 = vsyncadd [#allocation6], %s763
          %s766 = sshll.u32 [#allocation7], 4
          %s767 = int_to_ptr.vmem [resolvable:$true] %s766
          %769 = dma.hbm_to_vmem [thread:$0]  %s9, 16, %s767, [#allocation6]
        $region28: #{tpu_custom_call.1} parent=11 // pred_fallthru
          _
        // Predicated region
        $region29: #{tpu_custom_call.1} parent=11 // pred_check
          %p770 = pneg %p210
        $region30: #{tpu_custom_call.1} parent=11 // pred_check_branch
          %772 = sbr.rel (%p770) target = $region32
        $region31: #{tpu_custom_call.1} parent=11 // pred_region
          %s774 = ssub.s32 256, 256
          %775 = vsyncadd [#allocation9], %s774
          %s776 = sshll.u32 [#allocation8], 4
          %s777 = int_to_ptr.vmem [resolvable:$true] %s776
          %782 = dma.hbm_to_vmem [thread:$0]  %s11, 256, %s777, [#allocation9], 64, 64, 4
        $region32: #{tpu_custom_call.1} parent=11 // pred_fallthru
          _
        // Predicated region
        $region33: #{tpu_custom_call.1} parent=11 // pred_check
          %p783 = pneg %p231
        $region34: #{tpu_custom_call.1} parent=11 // pred_check_branch
          %785 = sbr.rel (%p783) target = $region36
        $region35: #{tpu_custom_call.1} parent=11 // pred_region
          %s787 = ssub.s32 16, 16
          %788 = vsyncadd [#allocation9], %s787
          %s790 = sshll.u32 [#allocation10], 4
          %s791 = int_to_ptr.vmem [resolvable:$true] %s790
          %793 = dma.hbm_to_vmem [thread:$0]  %s13, 16, %s791, [#allocation9]
        $region36: #{tpu_custom_call.1} parent=11 // pred_fallthru
          _
        // Predicated region
        $region37: #{tpu_custom_call.1} parent=11 // pred_check
          %p794 = pneg %p252
        $region38: #{tpu_custom_call.1} parent=11 // pred_check_branch
          %796 = sbr.rel (%p794) target = $region40
        $region39: #{tpu_custom_call.1} parent=11 // pred_region
          %s798 = ssub.s32 256, 256
          %799 = vsyncadd [#allocation12], %s798
          %s800 = sshll.u32 [#allocation11], 4
          %s801 = int_to_ptr.vmem [resolvable:$true] %s800
          %806 = dma.hbm_to_vmem [thread:$0]  %s15, 256, %s801, [#allocation12], 64, 64, 4
        $region40: #{tpu_custom_call.1} parent=11 // pred_fallthru
          _
        // Predicated region
        $region41: #{tpu_custom_call.1} parent=11 // pred_check
          %p807 = pneg %p273
        $region42: #{tpu_custom_call.1} parent=11 // pred_check_branch
          %809 = sbr.rel (%p807) target = $region44
        $region43: #{tpu_custom_call.1} parent=11 // pred_region
          %s811 = ssub.s32 16, 16
          %812 = vsyncadd [#allocation12], %s811
          %s814 = sshll.u32 [#allocation13], 4
          %s815 = int_to_ptr.vmem [resolvable:$true] %s814
          %817 = dma.hbm_to_vmem [thread:$0]  %s17, 16, %s815, [#allocation12]
        $region44: #{tpu_custom_call.1} parent=11 // pred_fallthru
          _
        // Predicated region
        $region45: #{tpu_custom_call.1} parent=11 // pred_check
          %p818 = pneg %p294
        $region46: #{tpu_custom_call.1} parent=11 // pred_check_branch
          %820 = sbr.rel (%p818) target = $region48
        $region47: #{tpu_custom_call.1} parent=11 // pred_region
          %s822 = ssub.s32 256, 256
          %823 = vsyncadd [#allocation15], %s822
          %s824 = sshll.u32 [#allocation14], 4
          %s825 = int_to_ptr.vmem [resolvable:$true] %s824
          %830 = dma.hbm_to_vmem [thread:$0]  %s19, 256, %s825, [#allocation15], 64, 64, 4
        $region48: #{tpu_custom_call.1} parent=11 // pred_fallthru
          _
        // Predicated region
        $region49: #{tpu_custom_call.1} parent=11 // pred_check
          %p831 = pneg %p315
        $region50: #{tpu_custom_call.1} parent=11 // pred_check_branch
          %833 = sbr.rel (%p831) target = $region52
        $region51: #{tpu_custom_call.1} parent=11 // pred_region
          %s835 = ssub.s32 16, 16
          %836 = vsyncadd [#allocation15], %s835
          %s838 = sshll.u32 [#allocation16], 4
          %s839 = int_to_ptr.vmem [resolvable:$true] %s838
          %841 = dma.hbm_to_vmem [thread:$0]  %s21, 16, %s839, [#allocation15]
        $region52: #{tpu_custom_call.1} parent=11 // pred_fallthru
          _
        // Predicated region
        $region53: #{tpu_custom_call.1} parent=11 // pred_check
          %p842 = pneg %p336
        $region54: #{tpu_custom_call.1} parent=11 // pred_check_branch
          %844 = sbr.rel (%p842) target = $region56
        $region55: #{tpu_custom_call.1} parent=11 // pred_region
          %s846 = ssub.s32 16, 16
          %847 = vsyncadd [#allocation18], %s846
          %s849 = sshll.u32 [#allocation17], 4
          %s850 = int_to_ptr.vmem [resolvable:$true] %s849
          %852 = dma.hbm_to_vmem [thread:$0]  %s23, 16, %s850, [#allocation18]
        $region56: #{tpu_custom_call.1} parent=11 // pred_fallthru
          _
        // Predicated region
        $region57: #{tpu_custom_call.1} parent=11 // pred_check
          %p853 = pneg %p357
        $region58: #{tpu_custom_call.1} parent=11 // pred_check_branch
          %855 = sbr.rel (%p853) target = $region60
        $region59: #{tpu_custom_call.1} parent=11 // pred_region
          %s857 = ssub.s32 16, 16
          %858 = vsyncadd [#allocation18], %s857
          %s860 = sshll.u32 [#allocation19], 4
          %s861 = int_to_ptr.vmem [resolvable:$true] %s860
          %863 = dma.hbm_to_vmem [thread:$0]  %s25, 16, %s861, [#allocation18]
        $region60: #{tpu_custom_call.1} parent=11 // pred_fallthru
          _
        // Predicated region
        $region61: #{tpu_custom_call.1} parent=11 // pred_check
          %p864 = pneg %p378
        $region62: #{tpu_custom_call.1} parent=11 // pred_check_branch
          %866 = sbr.rel (%p864) target = $region64
        $region63: #{tpu_custom_call.1} parent=11 // pred_region
          %s868 = ssub.s32 256, 256
          %869 = vsyncadd [#allocation21], %s868
          %s870 = sshll.u32 [#allocation20], 4
          %s871 = int_to_ptr.vmem [resolvable:$true] %s870
          %876 = dma.hbm_to_vmem [thread:$0]  %s27, 256, %s871, [#allocation21], 64, 64, 4
        $region64: #{tpu_custom_call.1} parent=11 // pred_fallthru
          _
        // Predicated region
        $region65: #{tpu_custom_call.1} parent=11 // pred_check
          %p877 = pneg %p399
        $region66: #{tpu_custom_call.1} parent=11 // pred_check_branch
          %879 = sbr.rel (%p877) target = $region68
        $region67: #{tpu_custom_call.1} parent=11 // pred_region
          %s881 = ssub.s32 16, 16
          %882 = vsyncadd [#allocation21], %s881
          %s884 = sshll.u32 [#allocation22], 4
          %s885 = int_to_ptr.vmem [resolvable:$true] %s884
          %887 = dma.hbm_to_vmem [thread:$0]  %s29, 16, %s885, [#allocation21]
        $region68: #{tpu_custom_call.1} parent=11 // pred_fallthru
          _
        // Predicated region
        $region69: #{tpu_custom_call.1} parent=11 // pred_check
          %p888 = pneg %p420
        $region70: #{tpu_custom_call.1} parent=11 // pred_check_branch
          %890 = sbr.rel (%p888) target = $region72
        $region71: #{tpu_custom_call.1} parent=11 // pred_region
          %s892 = ssub.s32 16, 16
          %893 = vsyncadd [#allocation24], %s892
          %s895 = sshll.u32 [#allocation23], 4
          %s896 = int_to_ptr.vmem [resolvable:$true] %s895
          %898 = dma.hbm_to_vmem [thread:$0]  %s31, 16, %s896, [#allocation24]
        $region72: #{tpu_custom_call.1} parent=11 // pred_fallthru
          _
        // Predicated region
        $region73: #{tpu_custom_call.1} parent=11 // pred_check
          %p899 = pneg %p441
        $region74: #{tpu_custom_call.1} parent=11 // pred_check_branch
          %901 = sbr.rel (%p899) target = $region76
        $region75: #{tpu_custom_call.1} parent=11 // pred_region
          %s903 = ssub.s32 16, 16
          %904 = vsyncadd [#allocation24], %s903
          %s906 = sshll.u32 [#allocation25], 4
          %s907 = int_to_ptr.vmem [resolvable:$true] %s906
          %909 = dma.hbm_to_vmem [thread:$0]  %s33, 16, %s907, [#allocation24]
        $region76: #{tpu_custom_call.1} parent=11 // pred_fallthru
          _
        // Predicated region
        $region77: #{tpu_custom_call.1} parent=11 // pred_check
          %p910 = pneg %p462
        $region78: #{tpu_custom_call.1} parent=11 // pred_check_branch
          %912 = sbr.rel (%p910) target = $region80
        $region79: #{tpu_custom_call.1} parent=11 // pred_region
          _
        $region80: #{tpu_custom_call.1} parent=11 // pred_fallthru
          _
        // Predicated region
        $region81: #{tpu_custom_call.1} parent=11 // pred_check
          %p913 = pneg %p483
        $region82: #{tpu_custom_call.1} parent=11 // pred_check_branch
          %915 = sbr.rel (%p913) target = $region84
        $region83: #{tpu_custom_call.1} parent=11 // pred_region
          %s917 = ssub.s32 16, 16
          %918 = vsyncadd [#allocation27], %s917
          %s920 = sshll.u32 [#allocation26], 4
          %s921 = int_to_ptr.vmem [resolvable:$true] %s920
          %923 = dma.hbm_to_vmem [thread:$0]  %s37, 16, %s921, [#allocation27]
        $region84: #{tpu_custom_call.1} parent=11 // pred_fallthru
          _
        // Predicated region
        $region85: #{tpu_custom_call.1} parent=11 // pred_check
          %p924 = pneg %p504
        $region86: #{tpu_custom_call.1} parent=11 // pred_check_branch
          %926 = sbr.rel (%p924) target = $region88
        $region87: #{tpu_custom_call.1} parent=11 // pred_region
          _
        $region88: #{tpu_custom_call.1} parent=11 // pred_fallthru
          _
        // Predicated region
        $region89: #{tpu_custom_call.1} parent=11 // pred_check
          %p927 = pneg %p525
        $region90: #{tpu_custom_call.1} parent=11 // pred_check_branch
          %929 = sbr.rel (%p927) target = $region92
        $region91: #{tpu_custom_call.1} parent=11 // pred_region
          %s931 = ssub.s32 16, 16
          %932 = vsyncadd [#allocation27], %s931
          %s934 = sshll.u32 [#allocation28], 4
          %s935 = int_to_ptr.vmem [resolvable:$true] %s934
          %937 = dma.hbm_to_vmem [thread:$0]  %s41, 16, %s935, [#allocation27]
        $region92: #{tpu_custom_call.1} parent=11 // pred_fallthru
          _
        // Predicated region
        $region93: #{tpu_custom_call.1} parent=11 // pred_check
          %p938 = pneg %p546
        $region94: #{tpu_custom_call.1} parent=11 // pred_check_branch
          %940 = sbr.rel (%p938) target = $region96
        $region95: #{tpu_custom_call.1} parent=11 // pred_region
          _
        $region96: #{tpu_custom_call.1} parent=11 // pred_fallthru
          _
        // Predicated region
        $region97: #{tpu_custom_call.1} parent=11 // pred_check
          %p941 = pneg %p567
        $region98: #{tpu_custom_call.1} parent=11 // pred_check_branch
          %943 = sbr.rel (%p941) target = $region100
        $region99: #{tpu_custom_call.1} parent=11 // pred_region
          %s945 = ssub.s32 16, 16
          %946 = vsyncadd [#allocation30], %s945
          %s948 = sshll.u32 [#allocation29], 4
          %s949 = int_to_ptr.vmem [resolvable:$true] %s948
          %951 = dma.hbm_to_vmem [thread:$0]  %s45, 16, %s949, [#allocation30]
        $region100: #{tpu_custom_call.1} parent=11 // pred_fallthru
          _
        // Predicated region
        $region101: #{tpu_custom_call.1} parent=11 // pred_check
          %p952 = pneg %p588
        $region102: #{tpu_custom_call.1} parent=11 // pred_check_branch
          %954 = sbr.rel (%p952) target = $region104
        $region103: #{tpu_custom_call.1} parent=11 // pred_region
          %s956 = ssub.s32 16, 16
          %957 = vsyncadd [#allocation30], %s956
          %s959 = sshll.u32 [#allocation31], 4
          %s960 = int_to_ptr.vmem [resolvable:$true] %s959
          %962 = dma.hbm_to_vmem [thread:$0]  %s47, 16, %s960, [#allocation30]
        $region104: #{tpu_custom_call.1} parent=11 // pred_fallthru
          _
        // Predicated region
        $region105: #{tpu_custom_call.1} parent=11 // pred_check
          %p963 = pneg %p609
        $region106: #{tpu_custom_call.1} parent=11 // pred_check_branch
          %965 = sbr.rel (%p963) target = $region108
        $region107: #{tpu_custom_call.1} parent=11 // pred_region
          %s967 = ssub.s32 16, 16
          %968 = vsyncadd [#allocation33], %s967
          %s970 = sshll.u32 [#allocation32], 4
          %s971 = int_to_ptr.vmem [resolvable:$true] %s970
          %973 = dma.hbm_to_vmem [thread:$0]  %s49, 16, %s971, [#allocation33]
        $region108: #{tpu_custom_call.1} parent=11 // pred_fallthru
          _
        // Predicated region
        $region109: #{tpu_custom_call.1} parent=11 // pred_check
          %p974 = pneg %p630
        $region110: #{tpu_custom_call.1} parent=11 // pred_check_branch
          %976 = sbr.rel (%p974) target = $region112
        $region111: #{tpu_custom_call.1} parent=11 // pred_region
          _
        $region112: #{tpu_custom_call.1} parent=11 // pred_fallthru
          _
        // Predicated region
        $region113: #{tpu_custom_call.1} parent=11 // pred_check
          %p977 = pneg %p651
        $region114: #{tpu_custom_call.1} parent=11 // pred_check_branch
          %979 = sbr.rel (%p977) target = $region116
        $region115: #{tpu_custom_call.1} parent=11 // pred_region
          %s981 = ssub.s32 16, 16
          %982 = vsyncadd [#allocation33], %s981
          %s984 = sshll.u32 [#allocation34], 4
          %s985 = int_to_ptr.vmem [resolvable:$true] %s984
          %987 = dma.hbm_to_vmem [thread:$0]  %s53, 16, %s985, [#allocation33]
        $region116: #{tpu_custom_call.1} parent=11 // pred_fallthru
          _
        // Predicated region
        $region117: #{tpu_custom_call.1} parent=11 // pred_check
          %p988 = pneg %p672
        $region118: #{tpu_custom_call.1} parent=11 // pred_check_branch
          %990 = sbr.rel (%p988) target = $region120
        $region119: #{tpu_custom_call.1} parent=11 // pred_region
          _
        $region120: #{tpu_custom_call.1} parent=11 // pred_fallthru
          _
        // Predicated region
        $region121: #{tpu_custom_call.1} parent=11 // pred_check
          %p991 = pneg %p693
        $region122: #{tpu_custom_call.1} parent=11 // pred_check_branch
          %993 = sbr.rel (%p991) target = $region124
        $region123: #{tpu_custom_call.1} parent=11 // pred_region
          _
        $region124: #{tpu_custom_call.1} parent=11 // pred_fallthru
          _
      $region12: #{tpu_custom_call.1} parent=5 // pred_fallthru
        _
      %p994 = scmp.lt.s32.totalorder %s79, 2
      // Predicated region
      $region125: #{tpu_custom_call.1} parent=5 // pred_check
        %p995 = pneg %p994
      $region126: #{tpu_custom_call.1} parent=5 // pred_check_branch
        %997 = sbr.rel (%p995) target = $region128
      $region127: #{tpu_custom_call.1} parent=5 // pred_region
        // Predicated region
        $region129: #{tpu_custom_call.1} parent=127 // pred_check
          %p998 = pneg %p99
        $region130: #{tpu_custom_call.1} parent=127 // pred_check_branch
          %1000 = sbr.rel (%p998) target = $region132
        $region131: #{tpu_custom_call.1} parent=127 // pred_region
          %p1001 = scmp.lt.s32.totalorder %s79, 1
          %s1002 = scalar_select %p1001, %s79, 1
          %s1003 = smul.addr %s1002, 8
          %s1004 = scalar_lea.vmem %s1, %s1003
        $region132: #{tpu_custom_call.1} parent=127 // pred_fallthru
          _
      $region128: #{tpu_custom_call.1} parent=5 // pred_fallthru
        _
      %p1005 = scmp.le.s32.totalorder 1, %s79
      %p1006 = scmp.lt.s32.totalorder %s79, 3
      %p1007 = pnand %p1005, %p1006
      %p1008 = pneg %p1007
      // Predicated region
      $region133: #{tpu_custom_call.1} parent=5 // pred_check
        _
      $region134: #{tpu_custom_call.1} parent=5 // pred_check_branch
        %1010 = sbr.rel (%p1007) target = $region136
      $region135: #{tpu_custom_call.1} parent=5 // pred_region
        %s1011 = ssub.s32 %s79, 1
        // Predicated region
        $region137: #{tpu_custom_call.1} parent=135 // pred_check
          %p1012 = pneg %p126
        $region138: #{tpu_custom_call.1} parent=135 // pred_check_branch
          %1014 = sbr.rel (%p1012) target = $region140
        $region139: #{tpu_custom_call.1} parent=135 // pred_region
          %1015 = dma.done [#allocation3], 16
        $region140: #{tpu_custom_call.1} parent=135 // pred_fallthru
          _
        // Predicated region
        $region141: #{tpu_custom_call.1} parent=135 // pred_check
          %p1016 = pneg %p147
        $region142: #{tpu_custom_call.1} parent=135 // pred_check_branch
          %1018 = sbr.rel (%p1016) target = $region144
        $region143: #{tpu_custom_call.1} parent=135 // pred_region
          %1019 = dma.done [#allocation6], 16
        $region144: #{tpu_custom_call.1} parent=135 // pred_fallthru
          _
        // Predicated region
        $region145: #{tpu_custom_call.1} parent=135 // pred_check
          %p1020 = pneg %p189
        $region146: #{tpu_custom_call.1} parent=135 // pred_check_branch
          %1022 = sbr.rel (%p1020) target = $region148
        $region147: #{tpu_custom_call.1} parent=135 // pred_region
          %1023 = dma.done [#allocation6], 16
        $region148: #{tpu_custom_call.1} parent=135 // pred_fallthru
          _
        // Predicated region
        $region149: #{tpu_custom_call.1} parent=135 // pred_check
          %p1024 = pneg %p210
        $region150: #{tpu_custom_call.1} parent=135 // pred_check_branch
          %1026 = sbr.rel (%p1024) target = $region152
        $region151: #{tpu_custom_call.1} parent=135 // pred_region
          %1027 = dma.done [#allocation9], 256
        $region152: #{tpu_custom_call.1} parent=135 // pred_fallthru
          _
        // Predicated region
        $region153: #{tpu_custom_call.1} parent=135 // pred_check
          %p1028 = pneg %p231
        $region154: #{tpu_custom_call.1} parent=135 // pred_check_branch
          %1030 = sbr.rel (%p1028) target = $region156
        $region155: #{tpu_custom_call.1} parent=135 // pred_region
          %1031 = dma.done [#allocation9], 16
        $region156: #{tpu_custom_call.1} parent=135 // pred_fallthru
          _
        // Predicated region
        $region157: #{tpu_custom_call.1} parent=135 // pred_check
          %p1032 = pneg %p252
        $region158: #{tpu_custom_call.1} parent=135 // pred_check_branch
          %1034 = sbr.rel (%p1032) target = $region160
        $region159: #{tpu_custom_call.1} parent=135 // pred_region
          %1035 = dma.done [#allocation12], 256
        $region160: #{tpu_custom_call.1} parent=135 // pred_fallthru
          _
        // Predicated region
        $region161: #{tpu_custom_call.1} parent=135 // pred_check
          %p1036 = pneg %p273
        $region162: #{tpu_custom_call.1} parent=135 // pred_check_branch
          %1038 = sbr.rel (%p1036) target = $region164
        $region163: #{tpu_custom_call.1} parent=135 // pred_region
          %1039 = dma.done [#allocation12], 16
        $region164: #{tpu_custom_call.1} parent=135 // pred_fallthru
          _
        // Predicated region
        $region165: #{tpu_custom_call.1} parent=135 // pred_check
          %p1040 = pneg %p294
        $region166: #{tpu_custom_call.1} parent=135 // pred_check_branch
          %1042 = sbr.rel (%p1040) target = $region168
        $region167: #{tpu_custom_call.1} parent=135 // pred_region
          %1043 = dma.done [#allocation15], 256
        $region168: #{tpu_custom_call.1} parent=135 // pred_fallthru
          _
        // Predicated region
        $region169: #{tpu_custom_call.1} parent=135 // pred_check
          %p1044 = pneg %p315
        $region170: #{tpu_custom_call.1} parent=135 // pred_check_branch
          %1046 = sbr.rel (%p1044) target = $region172
        $region171: #{tpu_custom_call.1} parent=135 // pred_region
          %1047 = dma.done [#allocation15], 16
        $region172: #{tpu_custom_call.1} parent=135 // pred_fallthru
          _
        // Predicated region
        $region173: #{tpu_custom_call.1} parent=135 // pred_check
          %p1048 = pneg %p336
        $region174: #{tpu_custom_call.1} parent=135 // pred_check_branch
          %1050 = sbr.rel (%p1048) target = $region176
        $region175: #{tpu_custom_call.1} parent=135 // pred_region
          %1051 = dma.done [#allocation18], 16
        $region176: #{tpu_custom_call.1} parent=135 // pred_fallthru
          _
        // Predicated region
        $region177: #{tpu_custom_call.1} parent=135 // pred_check
          %p1052 = pneg %p357
        $region178: #{tpu_custom_call.1} parent=135 // pred_check_branch
          %1054 = sbr.rel (%p1052) target = $region180
        $region179: #{tpu_custom_call.1} parent=135 // pred_region
          %1055 = dma.done [#allocation18], 16
        $region180: #{tpu_custom_call.1} parent=135 // pred_fallthru
          _
        // Predicated region
        $region181: #{tpu_custom_call.1} parent=135 // pred_check
          %p1056 = pneg %p378
        $region182: #{tpu_custom_call.1} parent=135 // pred_check_branch
          %1058 = sbr.rel (%p1056) target = $region184
        $region183: #{tpu_custom_call.1} parent=135 // pred_region
          %1059 = dma.done [#allocation21], 256
        $region184: #{tpu_custom_call.1} parent=135 // pred_fallthru
          _
        // Predicated region
        $region185: #{tpu_custom_call.1} parent=135 // pred_check
          %p1060 = pneg %p399
        $region186: #{tpu_custom_call.1} parent=135 // pred_check_branch
          %1062 = sbr.rel (%p1060) target = $region188
        $region187: #{tpu_custom_call.1} parent=135 // pred_region
          %1063 = dma.done [#allocation21], 16
        $region188: #{tpu_custom_call.1} parent=135 // pred_fallthru
          _
        // Predicated region
        $region189: #{tpu_custom_call.1} parent=135 // pred_check
          %p1064 = pneg %p420
        $region190: #{tpu_custom_call.1} parent=135 // pred_check_branch
          %1066 = sbr.rel (%p1064) target = $region192
        $region191: #{tpu_custom_call.1} parent=135 // pred_region
          %1067 = dma.done [#allocation24], 16
        $region192: #{tpu_custom_call.1} parent=135 // pred_fallthru
          _
        // Predicated region
        $region193: #{tpu_custom_call.1} parent=135 // pred_check
          %p1068 = pneg %p441
        $region194: #{tpu_custom_call.1} parent=135 // pred_check_branch
          %1070 = sbr.rel (%p1068) target = $region196
        $region195: #{tpu_custom_call.1} parent=135 // pred_region
          %1071 = dma.done [#allocation24], 16
        $region196: #{tpu_custom_call.1} parent=135 // pred_fallthru
          _
        // Predicated region
        $region197: #{tpu_custom_call.1} parent=135 // pred_check
          %p1072 = pneg %p483
        $region198: #{tpu_custom_call.1} parent=135 // pred_check_branch
          %1074 = sbr.rel (%p1072) target = $region200
        $region199: #{tpu_custom_call.1} parent=135 // pred_region
          %1075 = dma.done [#allocation27], 16
        $region200: #{tpu_custom_call.1} parent=135 // pred_fallthru
          _
        // Predicated region
        $region201: #{tpu_custom_call.1} parent=135 // pred_check
          %p1076 = pneg %p525
        $region202: #{tpu_custom_call.1} parent=135 // pred_check_branch
          %1078 = sbr.rel (%p1076) target = $region204
        $region203: #{tpu_custom_call.1} parent=135 // pred_region
          %1079 = dma.done [#allocation27], 16
        $region204: #{tpu_custom_call.1} parent=135 // pred_fallthru
          _
        // Predicated region
        $region205: #{tpu_custom_call.1} parent=135 // pred_check
          %p1080 = pneg %p567
        $region206: #{tpu_custom_call.1} parent=135 // pred_check_branch
          %1082 = sbr.rel (%p1080) target = $region208
        $region207: #{tpu_custom_call.1} parent=135 // pred_region
          %1083 = dma.done [#allocation30], 16
        $region208: #{tpu_custom_call.1} parent=135 // pred_fallthru
          _
        // Predicated region
        $region209: #{tpu_custom_call.1} parent=135 // pred_check
          %p1084 = pneg %p588
        $region210: #{tpu_custom_call.1} parent=135 // pred_check_branch
          %1086 = sbr.rel (%p1084) target = $region212
        $region211: #{tpu_custom_call.1} parent=135 // pred_region
          %1087 = dma.done [#allocation30], 16
        $region212: #{tpu_custom_call.1} parent=135 // pred_fallthru
          _
        // Predicated region
        $region213: #{tpu_custom_call.1} parent=135 // pred_check
          %p1088 = pneg %p609
        $region214: #{tpu_custom_call.1} parent=135 // pred_check_branch
          %1090 = sbr.rel (%p1088) target = $region216
        $region215: #{tpu_custom_call.1} parent=135 // pred_region
          %1091 = dma.done [#allocation33], 16
        $region216: #{tpu_custom_call.1} parent=135 // pred_fallthru
          _
        // Predicated region
        $region217: #{tpu_custom_call.1} parent=135 // pred_check
          %p1092 = pneg %p651
        $region218: #{tpu_custom_call.1} parent=135 // pred_check_branch
          %1094 = sbr.rel (%p1092) target = $region220
        $region219: #{tpu_custom_call.1} parent=135 // pred_region
          %1095 = dma.done [#allocation33], 16
        $region220: #{tpu_custom_call.1} parent=135 // pred_fallthru
          _
        %p1096 = scmp.lt.s32.totalorder %s84, 1
        %s1097 = scalar_select %p1096, %s84, 1
        %s1098 = smul.addr %s1097, 8
        %s1099 = scalar_lea.vmem %s1, %s1098
        %p1100 = pneg %p105
        %p1101 = pneg %p102
        %p1102 = pneg %p126
        %p1103 = pneg %p123
        %p1104 = pneg %p147
        %p1105 = pneg %p144
        %p1106 = pneg %p168
        %p1107 = pneg %p165
        %p1108 = pneg %p189
        %p1109 = pneg %p186
        %p1110 = pneg %p210
        %p1111 = pneg %p207
        %p1112 = pneg %p231
        %p1113 = pneg %p228
        %p1114 = pneg %p252
        %p1115 = pneg %p249
        %p1116 = pneg %p273
        %p1117 = pneg %p270
        %p1118 = pneg %p294
        %p1119 = pneg %p291
        %p1120 = pneg %p315
        %p1121 = pneg %p312
        %p1122 = pneg %p336
        %p1123 = pneg %p333
        %p1124 = pneg %p357
        %p1125 = pneg %p354
        %p1126 = pneg %p378
        %p1127 = pneg %p375
        %p1128 = pneg %p399
        %p1129 = pneg %p396
        %p1130 = pneg %p420
        %p1131 = pneg %p417
        %p1132 = pneg %p441
        %p1133 = pneg %p438
        %p1134 = pneg %p462
        %p1135 = pneg %p459
        %p1136 = pneg %p483
        %p1137 = pneg %p480
        %p1138 = pneg %p504
        %p1139 = pneg %p501
        %p1140 = pneg %p525
        %p1141 = pneg %p522
        %p1142 = pneg %p546
        %p1143 = pneg %p543
        %p1144 = pneg %p567
        %p1145 = pneg %p564
        %p1146 = pneg %p588
        %p1147 = pneg %p585
        %p1148 = pneg %p609
        %p1149 = pneg %p606
        %p1150 = pneg %p630
        %p1151 = pneg %p627
        %p1152 = pneg %p651
        %p1153 = pneg %p648
        %p1154 = pneg %p672
        %p1155 = pneg %p669
        %p1156 = pneg %p693
        %p1157 = pneg %p690
        %p1158 = pneg %p719
        %p1159 = pneg %p716
        %s1160 = sand.u32 %s706, 1
        %s1161 = scalar_lea.sflag [#allocation4], %s1160
        %s1162 = sand.u32 %s706, 1
        %s1163 = smul.addr %s1162, 8
        %s1164 = scalar_lea.vmem [#allocation35], %s1163
        %p1165 = scmp.lt.s32.totalorder %s84, 1
        %s1166 = scalar_select %p1165, %s84, 1
        %s1167 = smul.addr %s1166, 8
        %s1168 = scalar_lea.vmem %s1, %s1167
        %v1170 = vld [vmem:[%s1168] sm:$0xff]
        %v1171 = vld [vmem:[#allocation2] sm:$0x1]
        %v1172 = vld [vmem:[#allocation5] sm:$0x1]
        %vm1173 = vcmask 261120
        %v1174 = vsel %vm1173, %v1170, 0.0
        %1175 = vadd.xlane.f32.xlu0 %v1174
        %v1176 = vpop.xlane.xlu0 %1175
        %v1177 = vrcp.pop 32.0
        %v1178 = vmul.f32 %v1176, %v1177
        %v1179 = vsub.f32 %v1170, %v1178
        %v1180 = vmul.f32 %v1179, %v1179
        %v1181 = vsel %vm1173, %v1180, 0.0
        %1182 = vadd.xlane.f32.xlu0 %v1181
        %v1183 = vpop.xlane.xlu0 %1182
        %v1184 = vmul.f32 %v1183, %v1177
        %v1185 = vadd.f32 %v1184, 1e-05
        %v1186 = vrsqrt.pop %v1185
        %v1187 = vmul.f32 %v1179, %v1186
        %v1189 = vlaneseq
        %v1190 = vshrl.u32 %v1189, 7
        %v1191 = vsub.s32 0, %v1190
        %v1192 = vrot.slane %v1171, %v1191
        %v1194 = vmul.f32 %v1187, %v1192
        %v1196 = vlaneseq
        %v1197 = vshrl.u32 %v1196, 7
        %v1198 = vsub.s32 0, %v1197
        %v1199 = vrot.slane %v1172, %v1198
        %v1201 = vadd.f32 %v1194, %v1199
        %v1202 = vpack.c.bf16 %v1201, %v1201
        %v1203 = vld [vmem:[%s7] sm:$0xf]
        %v1204 = vld [vmem:[%s7 + $0x4] sm:$0xf]
        %v1205 = vld [vmem:[%s7 + $0x8] sm:$0xf]
        %v1206 = vld [vmem:[%s7 + $0xc] sm:$0xf]
        %v1207 = vld [vmem:[#allocation7] sm:$0x1]
        %v1209 = vlaneseq
        %v1210 = vshrl.u32 %v1209, 7
        %v1211 = vsub.s32 0, %v1210
        %v1212 = vrot.slane %v1207, %v1211
        %v1218 = vunpack.c.l.b16 %v1203
        %v1219 = vunpack.c.l.b16 %v1204
        %v1220 = vunpack.c.l.b16 %v1205
        %v1221 = vunpack.c.l.b16 %v1206
        %v1222 = vpack.c.b16 %v1219, %v1218
        %v1223 = vpack.c.b16 %v1221, %v1220
        %v1227 = vsel %vm1173, %v1202, 0
        %1229 = vmatprep.subr.bf16.mxu0 0
        %1230 = vmatpush1.bf16.msra.mxu0 0
        %1231 = vmatprep.subr.bf16.mxu0 0
        %1232 = vmatpush1.bf16.msra.mxu0 0
        %1233 = vmatprep.subr.bf16.mxu0 0
        %1234 = vmatpush1.bf16.msra.mxu0 0
        %1235 = vmatprep.subr.bf16.mxu0 0
        %1236 = vmatpush1.bf16.msra.mxu0 0
        %1237 = vmatprep.subr.bf16.mxu0 0
        %1238 = vmatpush1.bf16.msra.mxu0 0
        %1239 = vmatprep.subr.bf16.mxu0 0
        %1240 = vmatpush1.bf16.msra.mxu0 0
        %1241 = vmatprep.subr.bf16.mxu0 0
        %1242 = vmatpush1.bf16.msra.mxu0 %v1223
        %1243 = vmatprep.subr.bf16.mxu0 0
        %1244 = vmatpush1.bf16.msra.mxu0 %v1222
        %1245 = vmatprep.subr.bf16.mxu0 0
        %1246 = vmatpush2.bf16.msra.mxu0 0
        %1247 = vmatprep.subr.bf16.mxu0 0
        %1248 = vmatpush2.bf16.msra.mxu0 0
        %1249 = vmatprep.subr.bf16.mxu0 0
        %1250 = vmatpush2.bf16.msra.mxu0 0
        %1251 = vmatprep.subr.bf16.mxu0 0
        %1252 = vmatpush2.bf16.msra.mxu0 0
        %1253 = vmatprep.subr.bf16.mxu0 0
        %1254 = vmatpush2.bf16.msra.mxu0 0
        %1255 = vmatprep.subr.bf16.mxu0 0
        %1256 = vmatpush2.bf16.msra.mxu0 0
        %1257 = vmatprep.subr.bf16.mxu0 0
        %1258 = vmatpush2.bf16.msra.mxu0 0
        %1259 = vmatprep.subr.bf16.mxu0 0
        %1260 = vmatpush2.bf16.msra.mxu0 0
        %1261 = vmatprep.mubr.bf16.mxu0 0
        %1262 = vmatmul.mubr.bf16.gmra.mxu0 %v1227
        %v1263 = vpop.f32.mrf.mxu0
        %v1264 = vadd.f32 %v1212, %v1263
        %v1265 = vpop.f32.mrf.mxu0
        %v1266 = vpop.f32.mrf.mxu0
        %v1267 = vpop.f32.mrf.mxu0
        %1268 = vdwg.mxu0
        %v1269 = vpack.c.bf16 %v1264, %v1264
        %v1270 = vld [vmem:[#allocation8] sm:$0xf]
        %v1271 = vld [vmem:[#allocation8 + $0x4] sm:$0xf]
        %v1272 = vld [vmem:[#allocation8 + $0x8] sm:$0xf]
        %v1273 = vld [vmem:[#allocation8 + $0xc] sm:$0xf]
        %v1274 = vld [vmem:[#allocation10] sm:$0x1]
        %v1276 = vlaneseq
        %v1277 = vshrl.u32 %v1276, 7
        %v1278 = vsub.s32 0, %v1277
        %v1279 = vrot.slane %v1274, %v1278
        %v1285 = vunpack.c.l.b16 %v1270
        %v1286 = vunpack.c.l.b16 %v1271
        %v1287 = vunpack.c.l.b16 %v1272
        %v1288 = vunpack.c.l.b16 %v1273
        %v1289 = vpack.c.b16 %v1286, %v1285
        %v1290 = vpack.c.b16 %v1288, %v1287
        %1293 = vmatprep.subr.bf16.mxu0 0
        %1294 = vmatpush1.bf16.msra.mxu0 0
        %1295 = vmatprep.subr.bf16.mxu0 0
        %1296 = vmatpush1.bf16.msra.mxu0 0
        %1297 = vmatprep.subr.bf16.mxu0 0
        %1298 = vmatpush1.bf16.msra.mxu0 0
        %1299 = vmatprep.subr.bf16.mxu0 0
        %1300 = vmatpush1.bf16.msra.mxu0 0
        %1301 = vmatprep.subr.bf16.mxu0 0
        %1302 = vmatpush1.bf16.msra.mxu0 0
        %1303 = vmatprep.subr.bf16.mxu0 0
        %1304 = vmatpush1.bf16.msra.mxu0 0
        %1305 = vmatprep.subr.bf16.mxu0 0
        %1306 = vmatpush1.bf16.msra.mxu0 %v1290
        %1307 = vmatprep.subr.bf16.mxu0 0
        %1308 = vmatpush1.bf16.msra.mxu0 %v1289
        %1309 = vmatprep.subr.bf16.mxu0 0
        %1310 = vmatpush2.bf16.msra.mxu0 0
        %1311 = vmatprep.subr.bf16.mxu0 0
        %1312 = vmatpush2.bf16.msra.mxu0 0
        %1313 = vmatprep.subr.bf16.mxu0 0
        %1314 = vmatpush2.bf16.msra.mxu0 0
        %1315 = vmatprep.subr.bf16.mxu0 0
        %1316 = vmatpush2.bf16.msra.mxu0 0
        %1317 = vmatprep.subr.bf16.mxu0 0
        %1318 = vmatpush2.bf16.msra.mxu0 0
        %1319 = vmatprep.subr.bf16.mxu0 0
        %1320 = vmatpush2.bf16.msra.mxu0 0
        %1321 = vmatprep.subr.bf16.mxu0 0
        %1322 = vmatpush2.bf16.msra.mxu0 0
        %1323 = vmatprep.subr.bf16.mxu0 0
        %1324 = vmatpush2.bf16.msra.mxu0 0
        %1325 = vmatprep.mubr.bf16.mxu0 0
        %1326 = vmatmul.mubr.bf16.gmra.mxu0 %v1227
        %v1327 = vpop.f32.mrf.mxu0
        %v1328 = vadd.f32 %v1279, %v1327
        %v1329 = vpop.f32.mrf.mxu0
        %v1330 = vpop.f32.mrf.mxu0
        %v1331 = vpop.f32.mrf.mxu0
        %1332 = vdwg.mxu0
        %v1333 = vpack.c.bf16 %v1328, %v1328
        %v1334 = vld [vmem:[#allocation11] sm:$0xf]
        %v1335 = vld [vmem:[#allocation11 + $0x4] sm:$0xf]
        %v1336 = vld [vmem:[#allocation11 + $0x8] sm:$0xf]
        %v1337 = vld [vmem:[#allocation11 + $0xc] sm:$0xf]
        %v1338 = vld [vmem:[#allocation13] sm:$0x1]
        %v1340 = vlaneseq
        %v1341 = vshrl.u32 %v1340, 7
        %v1342 = vsub.s32 0, %v1341
        %v1343 = vrot.slane %v1338, %v1342
        %v1349 = vunpack.c.l.b16 %v1334
        %v1350 = vunpack.c.l.b16 %v1335
        %v1351 = vunpack.c.l.b16 %v1336
        %v1352 = vunpack.c.l.b16 %v1337
        %v1353 = vpack.c.b16 %v1350, %v1349
        %v1354 = vpack.c.b16 %v1352, %v1351
        %1357 = vmatprep.subr.bf16.mxu0 0
        %1358 = vmatpush1.bf16.msra.mxu0 0
        %1359 = vmatprep.subr.bf16.mxu0 0
        %1360 = vmatpush1.bf16.msra.mxu0 0
        %1361 = vmatprep.subr.bf16.mxu0 0
        %1362 = vmatpush1.bf16.msra.mxu0 0
        %1363 = vmatprep.subr.bf16.mxu0 0
        %1364 = vmatpush1.bf16.msra.mxu0 0
        %1365 = vmatprep.subr.bf16.mxu0 0
        %1366 = vmatpush1.bf16.msra.mxu0 0
        %1367 = vmatprep.subr.bf16.mxu0 0
        %1368 = vmatpush1.bf16.msra.mxu0 0
        %1369 = vmatprep.subr.bf16.mxu0 0
        %1370 = vmatpush1.bf16.msra.mxu0 %v1354
        %1371 = vmatprep.subr.bf16.mxu0 0
        %1372 = vmatpush1.bf16.msra.mxu0 %v1353
        %1373 = vmatprep.subr.bf16.mxu0 0
        %1374 = vmatpush2.bf16.msra.mxu0 0
        %1375 = vmatprep.subr.bf16.mxu0 0
        %1376 = vmatpush2.bf16.msra.mxu0 0
        %1377 = vmatprep.subr.bf16.mxu0 0
        %1378 = vmatpush2.bf16.msra.mxu0 0
        %1379 = vmatprep.subr.bf16.mxu0 0
        %1380 = vmatpush2.bf16.msra.mxu0 0
        %1381 = vmatprep.subr.bf16.mxu0 0
        %1382 = vmatpush2.bf16.msra.mxu0 0
        %1383 = vmatprep.subr.bf16.mxu0 0
        %1384 = vmatpush2.bf16.msra.mxu0 0
        %1385 = vmatprep.subr.bf16.mxu0 0
        %1386 = vmatpush2.bf16.msra.mxu0 0
        %1387 = vmatprep.subr.bf16.mxu0 0
        %1388 = vmatpush2.bf16.msra.mxu0 0
        %1389 = vmatprep.mubr.bf16.mxu0 0
        %1390 = vmatmul.mubr.bf16.gmra.mxu0 %v1227
        %v1391 = vpop.f32.mrf.mxu0
        %v1392 = vadd.f32 %v1343, %v1391
        %v1393 = vpop.f32.mrf.mxu0
        %v1394 = vpop.f32.mrf.mxu0
        %v1395 = vpop.f32.mrf.mxu0
        %1396 = vdwg.mxu0
        %v1397 = vpack.c.bf16 %v1392, %v1392
        %vm1398 = vcmask 64512
        %v1400 = vsel %vm1398, %v1269, 0
        %v1403 = vsel %vm1398, %v1333, 0
        %1405 = vmatprep.subr.bf16.mxu0 0
        %1406 = vmatpush1.bf16.xpose.msra.mxu0 0
        %1407 = vmatprep.subr.bf16.mxu0 0
        %1408 = vmatpush1.bf16.xpose.msra.mxu0 0
        %1409 = vmatprep.subr.bf16.mxu0 0
        %1410 = vmatpush1.bf16.xpose.msra.mxu0 0
        %1411 = vmatprep.subr.bf16.mxu0 0
        %1412 = vmatpush1.bf16.xpose.msra.mxu0 0
        %1413 = vmatprep.subr.bf16.mxu0 0
        %1414 = vmatpush1.bf16.xpose.msra.mxu0 0
        %1415 = vmatprep.subr.bf16.mxu0 0
        %1416 = vmatpush1.bf16.xpose.msra.mxu0 0
        %1417 = vmatprep.subr.bf16.mxu0 0
        %1418 = vmatpush1.bf16.xpose.msra.mxu0 0
        %1419 = vmatprep.subr.bf16.mxu0 0
        %1420 = vmatpush1.bf16.xpose.msra.mxu0 %v1403
        %1421 = vmatprep.subr.bf16.mxu0 0
        %1422 = vmatpush2.bf16.xpose.msra.mxu0 0
        %1423 = vmatprep.subr.bf16.mxu0 0
        %1424 = vmatpush2.bf16.xpose.msra.mxu0 0
        %1425 = vmatprep.subr.bf16.mxu0 0
        %1426 = vmatpush2.bf16.xpose.msra.mxu0 0
        %1427 = vmatprep.subr.bf16.mxu0 0
        %1428 = vmatpush2.bf16.xpose.msra.mxu0 0
        %1429 = vmatprep.subr.bf16.mxu0 0
        %1430 = vmatpush2.bf16.xpose.msra.mxu0 0
        %1431 = vmatprep.subr.bf16.mxu0 0
        %1432 = vmatpush2.bf16.xpose.msra.mxu0 0
        %1433 = vmatprep.subr.bf16.mxu0 0
        %1434 = vmatpush2.bf16.xpose.msra.mxu0 0
        %1435 = vmatprep.subr.bf16.mxu0 0
        %1436 = vmatpush2.bf16.xpose.msra.mxu0 0
        %1437 = vmatprep.mubr.bf16.mxu0 0
        %1438 = vmatmul.mubr.bf16.gmra.mxu0 %v1400
        %v1439 = vpop.f32.mrf.mxu0
        %v1440 = vadd.f32 0.0, %v1439
        %v1441 = vpop.f32.mrf.mxu0
        %v1442 = vpop.f32.mrf.mxu0
        %v1443 = vpop.f32.mrf.mxu0
        %1444 = vdwg.mxu0
        %v1445 = vsel %vm1398, %v1440, -inf
        %1446 = vmax.xlane.f32.xlu0 %v1445
        %v1447 = vpop.xlane.xlu0 %1446
        %v1448 = vsub.f32 %v1440, %v1447
        %v1449 = vmul.f32 %v1448, 1.442695
        %v1450 = vpow.pop %v1449
        %v1451 = vsel %vm1398, %v1450, 0.0
        %1452 = vadd.xlane.f32.xlu0 %v1451
        %v1453 = vpop.xlane.xlu0 %1452
        %v1454 = vrcp.pop %v1453
        %v1455 = vmul.f32 %v1450, %v1454
        %v1456 = vpack.c.bf16 %v1455, %v1455
        %v1458 = vsel %vm1398, %v1456, 0
        %vm1460 = vcmask 1043456
        %v1462 = vsel %vm1460, %v1397, 0
        %1464 = vmatprep.subr.bf16.mxu0 0
        %1465 = vmatpush1.bf16.msra.mxu0 0
        %1466 = vmatprep.subr.bf16.mxu0 0
        %1467 = vmatpush1.bf16.msra.mxu0 0
        %1468 = vmatprep.subr.bf16.mxu0 0
        %1469 = vmatpush1.bf16.msra.mxu0 0
        %1470 = vmatprep.subr.bf16.mxu0 0
        %1471 = vmatpush1.bf16.msra.mxu0 0
        %1472 = vmatprep.subr.bf16.mxu0 0
        %1473 = vmatpush1.bf16.msra.mxu0 0
        %1474 = vmatprep.subr.bf16.mxu0 0
        %1475 = vmatpush1.bf16.msra.mxu0 0
        %1476 = vmatprep.subr.bf16.mxu0 0
        %1477 = vmatpush1.bf16.msra.mxu0 0
        %1478 = vmatprep.subr.bf16.mxu0 0
        %1479 = vmatpush1.bf16.msra.mxu0 %v1462
        %1480 = vmatprep.subr.bf16.mxu0 0
        %1481 = vmatpush2.bf16.msra.mxu0 0
        %1482 = vmatprep.subr.bf16.mxu0 0
        %1483 = vmatpush2.bf16.msra.mxu0 0
        %1484 = vmatprep.subr.bf16.mxu0 0
        %1485 = vmatpush2.bf16.msra.mxu0 0
        %1486 = vmatprep.subr.bf16.mxu0 0
        %1487 = vmatpush2.bf16.msra.mxu0 0
        %1488 = vmatprep.subr.bf16.mxu0 0
        %1489 = vmatpush2.bf16.msra.mxu0 0
        %1490 = vmatprep.subr.bf16.mxu0 0
        %1491 = vmatpush2.bf16.msra.mxu0 0
        %1492 = vmatprep.subr.bf16.mxu0 0
        %1493 = vmatpush2.bf16.msra.mxu0 0
        %1494 = vmatprep.subr.bf16.mxu0 0
        %1495 = vmatpush2.bf16.msra.mxu0 0
        %1496 = vmatprep.mubr.bf16.mxu0 0
        %1497 = vmatmul.mubr.bf16.gmra.mxu0 %v1458
        %v1498 = vpop.f32.mrf.mxu0
        %v1499 = vadd.f32 0.0, %v1498
        %v1500 = vpop.f32.mrf.mxu0
        %v1501 = vpop.f32.mrf.mxu0
        %v1502 = vpop.f32.mrf.mxu0
        %1503 = vdwg.mxu0
        %1505 = vrot.lane.b32.xlu0 %v1269, 120
        %v1506 = vpop.permute.xlu0 %1505
        %1508 = vrot.lane.b32.xlu0 %v1333, 120
        %v1509 = vpop.permute.xlu0 %1508
        %v1511 = vsel %vm1398, %v1506, 0
        %v1514 = vsel %vm1398, %v1509, 0
        %1516 = vmatprep.subr.bf16.mxu0 0
        %1517 = vmatpush1.bf16.xpose.msra.mxu0 0
        %1518 = vmatprep.subr.bf16.mxu0 0
        %1519 = vmatpush1.bf16.xpose.msra.mxu0 0
        %1520 = vmatprep.subr.bf16.mxu0 0
        %1521 = vmatpush1.bf16.xpose.msra.mxu0 0
        %1522 = vmatprep.subr.bf16.mxu0 0
        %1523 = vmatpush1.bf16.xpose.msra.mxu0 0
        %1524 = vmatprep.subr.bf16.mxu0 0
        %1525 = vmatpush1.bf16.xpose.msra.mxu0 0
        %1526 = vmatprep.subr.bf16.mxu0 0
        %1527 = vmatpush1.bf16.xpose.msra.mxu0 0
        %1528 = vmatprep.subr.bf16.mxu0 0
        %1529 = vmatpush1.bf16.xpose.msra.mxu0 0
        %1530 = vmatprep.subr.bf16.mxu0 0
        %1531 = vmatpush1.bf16.xpose.msra.mxu0 %v1514
        %1532 = vmatprep.subr.bf16.mxu0 0
        %1533 = vmatpush2.bf16.xpose.msra.mxu0 0
        %1534 = vmatprep.subr.bf16.mxu0 0
        %1535 = vmatpush2.bf16.xpose.msra.mxu0 0
        %1536 = vmatprep.subr.bf16.mxu0 0
        %1537 = vmatpush2.bf16.xpose.msra.mxu0 0
        %1538 = vmatprep.subr.bf16.mxu0 0
        %1539 = vmatpush2.bf16.xpose.msra.mxu0 0
        %1540 = vmatprep.subr.bf16.mxu0 0
        %1541 = vmatpush2.bf16.xpose.msra.mxu0 0
        %1542 = vmatprep.subr.bf16.mxu0 0
        %1543 = vmatpush2.bf16.xpose.msra.mxu0 0
        %1544 = vmatprep.subr.bf16.mxu0 0
        %1545 = vmatpush2.bf16.xpose.msra.mxu0 0
        %1546 = vmatprep.subr.bf16.mxu0 0
        %1547 = vmatpush2.bf16.xpose.msra.mxu0 0
        %1548 = vmatprep.mubr.bf16.mxu0 0
        %1549 = vmatmul.mubr.bf16.gmra.mxu0 %v1511
        %v1550 = vpop.f32.mrf.mxu0
        %v1551 = vadd.f32 0.0, %v1550
        %v1552 = vpop.f32.mrf.mxu0
        %v1553 = vpop.f32.mrf.mxu0
        %v1554 = vpop.f32.mrf.mxu0
        %1555 = vdwg.mxu0
        %v1556 = vsel %vm1398, %v1551, -inf
        %1557 = vmax.xlane.f32.xlu0 %v1556
        %v1558 = vpop.xlane.xlu0 %1557
        %v1559 = vsub.f32 %v1551, %v1558
        %v1560 = vmul.f32 %v1559, 1.442695
        %v1561 = vpow.pop %v1560
        %v1562 = vsel %vm1398, %v1561, 0.0
        %1563 = vadd.xlane.f32.xlu0 %v1562
        %v1564 = vpop.xlane.xlu0 %1563
        %v1565 = vrcp.pop %v1564
        %v1566 = vmul.f32 %v1561, %v1565
        %v1567 = vpack.c.bf16 %v1566, %v1566
        %1569 = vrot.lane.b32.xlu0 %v1397, 120
        %v1570 = vpop.permute.xlu0 %1569
        %v1572 = vsel %vm1398, %v1567, 0
        %v1575 = vsel %vm1460, %v1570, 0
        %1577 = vmatprep.subr.bf16.mxu0 0
        %1578 = vmatpush1.bf16.msra.mxu0 0
        %1579 = vmatprep.subr.bf16.mxu0 0
        %1580 = vmatpush1.bf16.msra.mxu0 0
        %1581 = vmatprep.subr.bf16.mxu0 0
        %1582 = vmatpush1.bf16.msra.mxu0 0
        %1583 = vmatprep.subr.bf16.mxu0 0
        %1584 = vmatpush1.bf16.msra.mxu0 0
        %1585 = vmatprep.subr.bf16.mxu0 0
        %1586 = vmatpush1.bf16.msra.mxu0 0
        %1587 = vmatprep.subr.bf16.mxu0 0
        %1588 = vmatpush1.bf16.msra.mxu0 0
        %1589 = vmatprep.subr.bf16.mxu0 0
        %1590 = vmatpush1.bf16.msra.mxu0 0
        %1591 = vmatprep.subr.bf16.mxu0 0
        %1592 = vmatpush1.bf16.msra.mxu0 %v1575
        %1593 = vmatprep.subr.bf16.mxu0 0
        %1594 = vmatpush2.bf16.msra.mxu0 0
        %1595 = vmatprep.subr.bf16.mxu0 0
        %1596 = vmatpush2.bf16.msra.mxu0 0
        %1597 = vmatprep.subr.bf16.mxu0 0
        %1598 = vmatpush2.bf16.msra.mxu0 0
        %1599 = vmatprep.subr.bf16.mxu0 0
        %1600 = vmatpush2.bf16.msra.mxu0 0
        %1601 = vmatprep.subr.bf16.mxu0 0
        %1602 = vmatpush2.bf16.msra.mxu0 0
        %1603 = vmatprep.subr.bf16.mxu0 0
        %1604 = vmatpush2.bf16.msra.mxu0 0
        %1605 = vmatprep.subr.bf16.mxu0 0
        %1606 = vmatpush2.bf16.msra.mxu0 0
        %1607 = vmatprep.subr.bf16.mxu0 0
        %1608 = vmatpush2.bf16.msra.mxu0 0
        %1609 = vmatprep.mubr.bf16.mxu0 0
        %1610 = vmatmul.mubr.bf16.gmra.mxu0 %v1572
        %v1611 = vpop.f32.mrf.mxu0
        %v1612 = vadd.f32 0.0, %v1611
        %v1613 = vpop.f32.mrf.mxu0
        %v1614 = vpop.f32.mrf.mxu0
        %v1615 = vpop.f32.mrf.mxu0
        %1616 = vdwg.mxu0
        %1617 = vrot.lane.b32.xlu0 %v1269, 112
        %v1618 = vpop.permute.xlu0 %1617
        %1619 = vrot.lane.b32.xlu0 %v1333, 112
        %v1620 = vpop.permute.xlu0 %1619
        %v1622 = vsel %vm1398, %v1618, 0
        %v1625 = vsel %vm1398, %v1620, 0
        %1627 = vmatprep.subr.bf16.mxu0 0
        %1628 = vmatpush1.bf16.xpose.msra.mxu0 0
        %1629 = vmatprep.subr.bf16.mxu0 0
        %1630 = vmatpush1.bf16.xpose.msra.mxu0 0
        %1631 = vmatprep.subr.bf16.mxu0 0
        %1632 = vmatpush1.bf16.xpose.msra.mxu0 0
        %1633 = vmatprep.subr.bf16.mxu0 0
        %1634 = vmatpush1.bf16.xpose.msra.mxu0 0
        %1635 = vmatprep.subr.bf16.mxu0 0
        %1636 = vmatpush1.bf16.xpose.msra.mxu0 0
        %1637 = vmatprep.subr.bf16.mxu0 0
        %1638 = vmatpush1.bf16.xpose.msra.mxu0 0
        %1639 = vmatprep.subr.bf16.mxu0 0
        %1640 = vmatpush1.bf16.xpose.msra.mxu0 0
        %1641 = vmatprep.subr.bf16.mxu0 0
        %1642 = vmatpush1.bf16.xpose.msra.mxu0 %v1625
        %1643 = vmatprep.subr.bf16.mxu0 0
        %1644 = vmatpush2.bf16.xpose.msra.mxu0 0
        %1645 = vmatprep.subr.bf16.mxu0 0
        %1646 = vmatpush2.bf16.xpose.msra.mxu0 0
        %1647 = vmatprep.subr.bf16.mxu0 0
        %1648 = vmatpush2.bf16.xpose.msra.mxu0 0
        %1649 = vmatprep.subr.bf16.mxu0 0
        %1650 = vmatpush2.bf16.xpose.msra.mxu0 0
        %1651 = vmatprep.subr.bf16.mxu0 0
        %1652 = vmatpush2.bf16.xpose.msra.mxu0 0
        %1653 = vmatprep.subr.bf16.mxu0 0
        %1654 = vmatpush2.bf16.xpose.msra.mxu0 0
        %1655 = vmatprep.subr.bf16.mxu0 0
        %1656 = vmatpush2.bf16.xpose.msra.mxu0 0
        %1657 = vmatprep.subr.bf16.mxu0 0
        %1658 = vmatpush2.bf16.xpose.msra.mxu0 0
        %1659 = vmatprep.mubr.bf16.mxu0 0
        %1660 = vmatmul.mubr.bf16.gmra.mxu0 %v1622
        %v1661 = vpop.f32.mrf.mxu0
        %v1662 = vadd.f32 0.0, %v1661
        %v1663 = vpop.f32.mrf.mxu0
        %v1664 = vpop.f32.mrf.mxu0
        %v1665 = vpop.f32.mrf.mxu0
        %1666 = vdwg.mxu0
        %v1667 = vsel %vm1398, %v1662, -inf
        %1668 = vmax.xlane.f32.xlu0 %v1667
        %v1669 = vpop.xlane.xlu0 %1668
        %v1670 = vsub.f32 %v1662, %v1669
        %v1671 = vmul.f32 %v1670, 1.442695
        %v1672 = vpow.pop %v1671
        %v1673 = vsel %vm1398, %v1672, 0.0
        %1674 = vadd.xlane.f32.xlu0 %v1673
        %v1675 = vpop.xlane.xlu0 %1674
        %v1676 = vrcp.pop %v1675
        %v1677 = vmul.f32 %v1672, %v1676
        %v1678 = vpack.c.bf16 %v1677, %v1677
        %1679 = vrot.lane.b32.xlu0 %v1397, 112
        %v1680 = vpop.permute.xlu0 %1679
        %v1682 = vsel %vm1398, %v1678, 0
        %v1685 = vsel %vm1460, %v1680, 0
        %1687 = vmatprep.subr.bf16.mxu0 0
        %1688 = vmatpush1.bf16.msra.mxu0 0
        %1689 = vmatprep.subr.bf16.mxu0 0
        %1690 = vmatpush1.bf16.msra.mxu0 0
        %1691 = vmatprep.subr.bf16.mxu0 0
        %1692 = vmatpush1.bf16.msra.mxu0 0
        %1693 = vmatprep.subr.bf16.mxu0 0
        %1694 = vmatpush1.bf16.msra.mxu0 0
        %1695 = vmatprep.subr.bf16.mxu0 0
        %1696 = vmatpush1.bf16.msra.mxu0 0
        %1697 = vmatprep.subr.bf16.mxu0 0
        %1698 = vmatpush1.bf16.msra.mxu0 0
        %1699 = vmatprep.subr.bf16.mxu0 0
        %1700 = vmatpush1.bf16.msra.mxu0 0
        %1701 = vmatprep.subr.bf16.mxu0 0
        %1702 = vmatpush1.bf16.msra.mxu0 %v1685
        %1703 = vmatprep.subr.bf16.mxu0 0
        %1704 = vmatpush2.bf16.msra.mxu0 0
        %1705 = vmatprep.subr.bf16.mxu0 0
        %1706 = vmatpush2.bf16.msra.mxu0 0
        %1707 = vmatprep.subr.bf16.mxu0 0
        %1708 = vmatpush2.bf16.msra.mxu0 0
        %1709 = vmatprep.subr.bf16.mxu0 0
        %1710 = vmatpush2.bf16.msra.mxu0 0
        %1711 = vmatprep.subr.bf16.mxu0 0
        %1712 = vmatpush2.bf16.msra.mxu0 0
        %1713 = vmatprep.subr.bf16.mxu0 0
        %1714 = vmatpush2.bf16.msra.mxu0 0
        %1715 = vmatprep.subr.bf16.mxu0 0
        %1716 = vmatpush2.bf16.msra.mxu0 0
        %1717 = vmatprep.subr.bf16.mxu0 0
        %1718 = vmatpush2.bf16.msra.mxu0 0
        %1719 = vmatprep.mubr.bf16.mxu0 0
        %1720 = vmatmul.mubr.bf16.gmra.mxu0 %v1682
        %v1721 = vpop.f32.mrf.mxu0
        %v1722 = vadd.f32 0.0, %v1721
        %v1723 = vpop.f32.mrf.mxu0
        %v1724 = vpop.f32.mrf.mxu0
        %v1725 = vpop.f32.mrf.mxu0
        %1726 = vdwg.mxu0
        %1727 = vrot.lane.b32.xlu0 %v1269, 104
        %v1728 = vpop.permute.xlu0 %1727
        %1729 = vrot.lane.b32.xlu0 %v1333, 104
        %v1730 = vpop.permute.xlu0 %1729
        %v1732 = vsel %vm1398, %v1728, 0
        %v1735 = vsel %vm1398, %v1730, 0
        %1737 = vmatprep.subr.bf16.mxu0 0
        %1738 = vmatpush1.bf16.xpose.msra.mxu0 0
        %1739 = vmatprep.subr.bf16.mxu0 0
        %1740 = vmatpush1.bf16.xpose.msra.mxu0 0
        %1741 = vmatprep.subr.bf16.mxu0 0
        %1742 = vmatpush1.bf16.xpose.msra.mxu0 0
        %1743 = vmatprep.subr.bf16.mxu0 0
        %1744 = vmatpush1.bf16.xpose.msra.mxu0 0
        %1745 = vmatprep.subr.bf16.mxu0 0
        %1746 = vmatpush1.bf16.xpose.msra.mxu0 0
        %1747 = vmatprep.subr.bf16.mxu0 0
        %1748 = vmatpush1.bf16.xpose.msra.mxu0 0
        %1749 = vmatprep.subr.bf16.mxu0 0
        %1750 = vmatpush1.bf16.xpose.msra.mxu0 0
        %1751 = vmatprep.subr.bf16.mxu0 0
        %1752 = vmatpush1.bf16.xpose.msra.mxu0 %v1735
        %1753 = vmatprep.subr.bf16.mxu0 0
        %1754 = vmatpush2.bf16.xpose.msra.mxu0 0
        %1755 = vmatprep.subr.bf16.mxu0 0
        %1756 = vmatpush2.bf16.xpose.msra.mxu0 0
        %1757 = vmatprep.subr.bf16.mxu0 0
        %1758 = vmatpush2.bf16.xpose.msra.mxu0 0
        %1759 = vmatprep.subr.bf16.mxu0 0
        %1760 = vmatpush2.bf16.xpose.msra.mxu0 0
        %1761 = vmatprep.subr.bf16.mxu0 0
        %1762 = vmatpush2.bf16.xpose.msra.mxu0 0
        %1763 = vmatprep.subr.bf16.mxu0 0
        %1764 = vmatpush2.bf16.xpose.msra.mxu0 0
        %1765 = vmatprep.subr.bf16.mxu0 0
        %1766 = vmatpush2.bf16.xpose.msra.mxu0 0
        %1767 = vmatprep.subr.bf16.mxu0 0
        %1768 = vmatpush2.bf16.xpose.msra.mxu0 0
        %1769 = vmatprep.mubr.bf16.mxu0 0
        %1770 = vmatmul.mubr.bf16.gmra.mxu0 %v1732
        %v1771 = vpop.f32.mrf.mxu0
        %v1772 = vadd.f32 0.0, %v1771
        %v1773 = vpop.f32.mrf.mxu0
        %v1774 = vpop.f32.mrf.mxu0
        %v1775 = vpop.f32.mrf.mxu0
        %1776 = vdwg.mxu0
        %v1777 = vsel %vm1398, %v1772, -inf
        %1778 = vmax.xlane.f32.xlu0 %v1777
        %v1779 = vpop.xlane.xlu0 %1778
        %v1780 = vsub.f32 %v1772, %v1779
        %v1781 = vmul.f32 %v1780, 1.442695
        %v1782 = vpow.pop %v1781
        %v1783 = vsel %vm1398, %v1782, 0.0
        %1784 = vadd.xlane.f32.xlu0 %v1783
        %v1785 = vpop.xlane.xlu0 %1784
        %v1786 = vrcp.pop %v1785
        %v1787 = vmul.f32 %v1782, %v1786
        %v1788 = vpack.c.bf16 %v1787, %v1787
        %1789 = vrot.lane.b32.xlu0 %v1397, 104
        %v1790 = vpop.permute.xlu0 %1789
        %v1792 = vsel %vm1398, %v1788, 0
        %v1795 = vsel %vm1460, %v1790, 0
        %1797 = vmatprep.subr.bf16.mxu0 0
        %1798 = vmatpush1.bf16.msra.mxu0 0
        %1799 = vmatprep.subr.bf16.mxu0 0
        %1800 = vmatpush1.bf16.msra.mxu0 0
        %1801 = vmatprep.subr.bf16.mxu0 0
        %1802 = vmatpush1.bf16.msra.mxu0 0
        %1803 = vmatprep.subr.bf16.mxu0 0
        %1804 = vmatpush1.bf16.msra.mxu0 0
        %1805 = vmatprep.subr.bf16.mxu0 0
        %1806 = vmatpush1.bf16.msra.mxu0 0
        %1807 = vmatprep.subr.bf16.mxu0 0
        %1808 = vmatpush1.bf16.msra.mxu0 0
        %1809 = vmatprep.subr.bf16.mxu0 0
        %1810 = vmatpush1.bf16.msra.mxu0 0
        %1811 = vmatprep.subr.bf16.mxu0 0
        %1812 = vmatpush1.bf16.msra.mxu0 %v1795
        %1813 = vmatprep.subr.bf16.mxu0 0
        %1814 = vmatpush2.bf16.msra.mxu0 0
        %1815 = vmatprep.subr.bf16.mxu0 0
        %1816 = vmatpush2.bf16.msra.mxu0 0
        %1817 = vmatprep.subr.bf16.mxu0 0
        %1818 = vmatpush2.bf16.msra.mxu0 0
        %1819 = vmatprep.subr.bf16.mxu0 0
        %1820 = vmatpush2.bf16.msra.mxu0 0
        %1821 = vmatprep.subr.bf16.mxu0 0
        %1822 = vmatpush2.bf16.msra.mxu0 0
        %1823 = vmatprep.subr.bf16.mxu0 0
        %1824 = vmatpush2.bf16.msra.mxu0 0
        %1825 = vmatprep.subr.bf16.mxu0 0
        %1826 = vmatpush2.bf16.msra.mxu0 0
        %1827 = vmatprep.subr.bf16.mxu0 0
        %1828 = vmatpush2.bf16.msra.mxu0 0
        %1829 = vmatprep.mubr.bf16.mxu0 0
        %1830 = vmatmul.mubr.bf16.gmra.mxu0 %v1792
        %v1831 = vpop.f32.mrf.mxu0
        %v1832 = vadd.f32 0.0, %v1831
        %v1833 = vpop.f32.mrf.mxu0
        %v1834 = vpop.f32.mrf.mxu0
        %v1835 = vpop.f32.mrf.mxu0
        %1836 = vdwg.mxu0
        %1838 = vrot.lane.b32.xlu0 %v1612, 8
        %v1839 = vpop.permute.xlu0 %1838
        %1842 = vrot.lane.b32.xlu0 %v1722, 16
        %v1843 = vpop.permute.xlu0 %1842
        %1846 = vrot.lane.b32.xlu0 %v1832, 24
        %v1847 = vpop.permute.xlu0 %1846
        %v1849 = vsel %vm1398, %v1499, %v1839
        %vm1850 = vcmask 130048
        %v1851 = vsel %vm1850, %v1849, %v1843
        %vm1852 = vcmask 195584
        %v1853 = vsel %vm1852, %v1851, %v1847
        %v1854 = vpack.c.bf16 %v1853, %v1853
        %v1855 = vld [vmem:[#allocation14] sm:$0xf]
        %v1856 = vld [vmem:[#allocation14 + $0x4] sm:$0xf]
        %v1857 = vld [vmem:[#allocation14 + $0x8] sm:$0xf]
        %v1858 = vld [vmem:[#allocation14 + $0xc] sm:$0xf]
        %v1859 = vld [vmem:[#allocation16] sm:$0x1]
        %v1861 = vlaneseq
        %v1862 = vshrl.u32 %v1861, 7
        %v1863 = vsub.s32 0, %v1862
        %v1864 = vrot.slane %v1859, %v1863
        %v1870 = vunpack.c.l.b16 %v1855
        %v1871 = vunpack.c.l.b16 %v1856
        %v1872 = vunpack.c.l.b16 %v1857
        %v1873 = vunpack.c.l.b16 %v1858
        %v1874 = vpack.c.b16 %v1871, %v1870
        %v1875 = vpack.c.b16 %v1873, %v1872
        %v1879 = vsel %vm1173, %v1854, 0
        %1881 = vmatprep.subr.bf16.mxu0 0
        %1882 = vmatpush1.bf16.msra.mxu0 0
        %1883 = vmatprep.subr.bf16.mxu0 0
        %1884 = vmatpush1.bf16.msra.mxu0 0
        %1885 = vmatprep.subr.bf16.mxu0 0
        %1886 = vmatpush1.bf16.msra.mxu0 0
        %1887 = vmatprep.subr.bf16.mxu0 0
        %1888 = vmatpush1.bf16.msra.mxu0 0
        %1889 = vmatprep.subr.bf16.mxu0 0
        %1890 = vmatpush1.bf16.msra.mxu0 0
        %1891 = vmatprep.subr.bf16.mxu0 0
        %1892 = vmatpush1.bf16.msra.mxu0 0
        %1893 = vmatprep.subr.bf16.mxu0 0
        %1894 = vmatpush1.bf16.msra.mxu0 %v1875
        %1895 = vmatprep.subr.bf16.mxu0 0
        %1896 = vmatpush1.bf16.msra.mxu0 %v1874
        %1897 = vmatprep.subr.bf16.mxu0 0
        %1898 = vmatpush2.bf16.msra.mxu0 0
        %1899 = vmatprep.subr.bf16.mxu0 0
        %1900 = vmatpush2.bf16.msra.mxu0 0
        %1901 = vmatprep.subr.bf16.mxu0 0
        %1902 = vmatpush2.bf16.msra.mxu0 0
        %1903 = vmatprep.subr.bf16.mxu0 0
        %1904 = vmatpush2.bf16.msra.mxu0 0
        %1905 = vmatprep.subr.bf16.mxu0 0
        %1906 = vmatpush2.bf16.msra.mxu0 0
        %1907 = vmatprep.subr.bf16.mxu0 0
        %1908 = vmatpush2.bf16.msra.mxu0 0
        %1909 = vmatprep.subr.bf16.mxu0 0
        %1910 = vmatpush2.bf16.msra.mxu0 0
        %1911 = vmatprep.subr.bf16.mxu0 0
        %1912 = vmatpush2.bf16.msra.mxu0 0
        %1913 = vmatprep.mubr.bf16.mxu0 0
        %1914 = vmatmul.mubr.bf16.gmra.mxu0 %v1879
        %v1915 = vpop.f32.mrf.mxu0
        %v1916 = vadd.f32 %v1864, %v1915
        %v1917 = vpop.f32.mrf.mxu0
        %v1918 = vpop.f32.mrf.mxu0
        %v1919 = vpop.f32.mrf.mxu0
        %1920 = vdwg.mxu0
        %v1921 = vadd.f32 %v1170, %v1916
        %v1922 = vld [vmem:[#allocation17] sm:$0x1]
        %v1923 = vld [vmem:[#allocation19] sm:$0x1]
        %v1924 = vsel %vm1173, %v1921, 0.0
        %1925 = vadd.xlane.f32.xlu0 %v1924
        %v1926 = vpop.xlane.xlu0 %1925
        %v1927 = vmul.f32 %v1926, %v1177
        %v1928 = vsub.f32 %v1921, %v1927
        %v1929 = vmul.f32 %v1928, %v1928
        %v1930 = vsel %vm1173, %v1929, 0.0
        %1931 = vadd.xlane.f32.xlu0 %v1930
        %v1932 = vpop.xlane.xlu0 %1931
        %v1933 = vmul.f32 %v1932, %v1177
        %v1934 = vadd.f32 %v1933, 1e-05
        %v1935 = vrsqrt.pop %v1934
        %v1936 = vmul.f32 %v1928, %v1935
        %v1938 = vlaneseq
        %v1939 = vshrl.u32 %v1938, 7
        %v1940 = vsub.s32 0, %v1939
        %v1941 = vrot.slane %v1922, %v1940
        %v1943 = vmul.f32 %v1936, %v1941
        %v1945 = vlaneseq
        %v1946 = vshrl.u32 %v1945, 7
        %v1947 = vsub.s32 0, %v1946
        %v1948 = vrot.slane %v1923, %v1947
        %v1950 = vadd.f32 %v1943, %v1948
        %v1951 = vpack.c.bf16 %v1950, %v1950
        %v1952 = vld [vmem:[#allocation20] sm:$0xf]
        %v1953 = vld [vmem:[#allocation20 + $0x4] sm:$0xf]
        %v1954 = vld [vmem:[#allocation20 + $0x8] sm:$0xf]
        %v1955 = vld [vmem:[#allocation20 + $0xc] sm:$0xf]
        %v1956 = vld [vmem:[#allocation22] sm:$0x1]
        %v1958 = vlaneseq
        %v1959 = vshrl.u32 %v1958, 7
        %v1960 = vsub.s32 0, %v1959
        %v1961 = vrot.slane %v1956, %v1960
        %v1967 = vunpack.c.l.b16 %v1952
        %v1968 = vunpack.c.l.b16 %v1953
        %v1969 = vunpack.c.l.b16 %v1954
        %v1970 = vunpack.c.l.b16 %v1955
        %v1971 = vpack.c.b16 %v1968, %v1967
        %v1972 = vpack.c.b16 %v1970, %v1969
        %v1976 = vsel %vm1173, %v1951, 0
        %1978 = vmatprep.subr.bf16.mxu0 0
        %1979 = vmatpush1.bf16.msra.mxu0 0
        %1980 = vmatprep.subr.bf16.mxu0 0
        %1981 = vmatpush1.bf16.msra.mxu0 0
        %1982 = vmatprep.subr.bf16.mxu0 0
        %1983 = vmatpush1.bf16.msra.mxu0 0
        %1984 = vmatprep.subr.bf16.mxu0 0
        %1985 = vmatpush1.bf16.msra.mxu0 0
        %1986 = vmatprep.subr.bf16.mxu0 0
        %1987 = vmatpush1.bf16.msra.mxu0 0
        %1988 = vmatprep.subr.bf16.mxu0 0
        %1989 = vmatpush1.bf16.msra.mxu0 0
        %1990 = vmatprep.subr.bf16.mxu0 0
        %1991 = vmatpush1.bf16.msra.mxu0 %v1972
        %1992 = vmatprep.subr.bf16.mxu0 0
        %1993 = vmatpush1.bf16.msra.mxu0 %v1971
        %1994 = vmatprep.subr.bf16.mxu0 0
        %1995 = vmatpush2.bf16.msra.mxu0 0
        %1996 = vmatprep.subr.bf16.mxu0 0
        %1997 = vmatpush2.bf16.msra.mxu0 0
        %1998 = vmatprep.subr.bf16.mxu0 0
        %1999 = vmatpush2.bf16.msra.mxu0 0
        %2000 = vmatprep.subr.bf16.mxu0 0
        %2001 = vmatpush2.bf16.msra.mxu0 0
        %2002 = vmatprep.subr.bf16.mxu0 0
        %2003 = vmatpush2.bf16.msra.mxu0 0
        %2004 = vmatprep.subr.bf16.mxu0 0
        %2005 = vmatpush2.bf16.msra.mxu0 0
        %2006 = vmatprep.subr.bf16.mxu0 0
        %2007 = vmatpush2.bf16.msra.mxu0 0
        %2008 = vmatprep.subr.bf16.mxu0 0
        %2009 = vmatpush2.bf16.msra.mxu0 0
        %2010 = vmatprep.mubr.bf16.mxu0 0
        %2011 = vmatmul.mubr.bf16.gmra.mxu0 %v1976
        %v2012 = vpop.f32.mrf.mxu0
        %v2013 = vadd.f32 %v1961, %v2012
        %v2014 = vpop.f32.mrf.mxu0
        %v2015 = vpop.f32.mrf.mxu0
        %v2016 = vpop.f32.mrf.mxu0
        %2017 = vdwg.mxu0
        %v2018 = vld [vmem:[#allocation23] sm:$0x1]
        %v2019 = vld [vmem:[#allocation25] sm:$0x1]
        %vm2020 = vcmask 523264
        %v2021 = vsel %vm2020, %v2013, 0.0
        %2022 = vadd.xlane.f32.xlu0 %v2021
        %v2023 = vpop.xlane.xlu0 %2022
        %v2024 = vrcp.pop 64.0
        %v2025 = vmul.f32 %v2023, %v2024
        %v2026 = vsub.f32 %v2013, %v2025
        %v2027 = vmul.f32 %v2026, %v2026
        %v2028 = vsel %vm2020, %v2027, 0.0
        %2029 = vadd.xlane.f32.xlu0 %v2028
        %v2030 = vpop.xlane.xlu0 %2029
        %v2031 = vmul.f32 %v2030, %v2024
        %v2032 = vadd.f32 %v2031, 1e-05
        %v2033 = vrsqrt.pop %v2032
        %v2034 = vmul.f32 %v2026, %v2033
        %v2036 = vlaneseq
        %v2037 = vshrl.u32 %v2036, 7
        %v2038 = vsub.s32 0, %v2037
        %v2039 = vrot.slane %v2018, %v2038
        %v2041 = vmul.f32 %v2034, %v2039
        %v2043 = vlaneseq
        %v2044 = vshrl.u32 %v2043, 7
        %v2045 = vsub.s32 0, %v2044
        %v2046 = vrot.slane %v2019, %v2045
        %v2048 = vadd.f32 %v2041, %v2046
        %v2049 = vmul.f32 %v2048, 0.5
        %v2050 = vmul.f32 %v2048, 0.70710677
        %v2051 = verf.f32.pop %v2050
        %v2052 = vadd.f32 %v2051, 1.0
        %v2053 = vmul.f32 %v2049, %v2052
        %v2054 = vpack.c.bf16 %v2053, %v2053
        %v2055 = vld [vmem:[%s35] sm:$0xf]
        %v2056 = vld [vmem:[%s35 + $0x4] sm:$0xf]
        %v2057 = vld [vmem:[%s35 + $0x8] sm:$0xf]
        %v2058 = vld [vmem:[%s35 + $0xc] sm:$0xf]
        %v2059 = vld [vmem:[%s35 + $0x10] sm:$0xf]
        %v2060 = vld [vmem:[%s35 + $0x14] sm:$0xf]
        %v2061 = vld [vmem:[%s35 + $0x18] sm:$0xf]
        %v2062 = vld [vmem:[%s35 + $0x1c] sm:$0xf]
        %v2063 = vld [vmem:[#allocation26] sm:$0x1]
        %v2065 = vlaneseq
        %v2066 = vshrl.u32 %v2065, 7
        %v2067 = vsub.s32 0, %v2066
        %v2068 = vrot.slane %v2063, %v2067
        %v2078 = vunpack.c.l.b16 %v2055
        %v2079 = vunpack.c.l.b16 %v2056
        %v2080 = vunpack.c.l.b16 %v2057
        %v2081 = vunpack.c.l.b16 %v2058
        %v2082 = vunpack.c.l.b16 %v2059
        %v2083 = vunpack.c.l.b16 %v2060
        %v2084 = vunpack.c.l.b16 %v2061
        %v2085 = vunpack.c.l.b16 %v2062
        %v2086 = vpack.c.b16 %v2079, %v2078
        %v2087 = vpack.c.b16 %v2081, %v2080
        %v2088 = vpack.c.b16 %v2083, %v2082
        %v2089 = vpack.c.b16 %v2085, %v2084
        %v2095 = vsel %vm2020, %v2054, 0
        %2097 = vmatprep.subr.bf16.mxu0 0
        %2098 = vmatpush1.bf16.msra.mxu0 0
        %2099 = vmatprep.subr.bf16.mxu0 0
        %2100 = vmatpush1.bf16.msra.mxu0 0
        %2101 = vmatprep.subr.bf16.mxu0 0
        %2102 = vmatpush1.bf16.msra.mxu0 0
        %2103 = vmatprep.subr.bf16.mxu0 0
        %2104 = vmatpush1.bf16.msra.mxu0 0
        %2105 = vmatprep.subr.bf16.mxu0 0
        %2106 = vmatpush1.bf16.msra.mxu0 %v2089
        %2107 = vmatprep.subr.bf16.mxu0 0
        %2108 = vmatpush1.bf16.msra.mxu0 %v2088
        %2109 = vmatprep.subr.bf16.mxu0 0
        %2110 = vmatpush1.bf16.msra.mxu0 %v2087
        %2111 = vmatprep.subr.bf16.mxu0 0
        %2112 = vmatpush1.bf16.msra.mxu0 %v2086
        %2113 = vmatprep.subr.bf16.mxu0 0
        %2114 = vmatpush2.bf16.msra.mxu0 0
        %2115 = vmatprep.subr.bf16.mxu0 0
        %2116 = vmatpush2.bf16.msra.mxu0 0
        %2117 = vmatprep.subr.bf16.mxu0 0
        %2118 = vmatpush2.bf16.msra.mxu0 0
        %2119 = vmatprep.subr.bf16.mxu0 0
        %2120 = vmatpush2.bf16.msra.mxu0 0
        %2121 = vmatprep.subr.bf16.mxu0 0
        %2122 = vmatpush2.bf16.msra.mxu0 0
        %2123 = vmatprep.subr.bf16.mxu0 0
        %2124 = vmatpush2.bf16.msra.mxu0 0
        %2125 = vmatprep.subr.bf16.mxu0 0
        %2126 = vmatpush2.bf16.msra.mxu0 0
        %2127 = vmatprep.subr.bf16.mxu0 0
        %2128 = vmatpush2.bf16.msra.mxu0 0
        %2129 = vmatprep.mubr.bf16.mxu0 0
        %2130 = vmatmul.mubr.bf16.gmra.mxu0 %v2095
        %v2131 = vpop.f32.mrf.mxu0
        %v2132 = vadd.f32 %v2068, %v2131
        %v2133 = vpop.f32.mrf.mxu0
        %v2134 = vpop.f32.mrf.mxu0
        %v2135 = vpop.f32.mrf.mxu0
        %2136 = vdwg.mxu0
        %v2137 = vld [vmem:[%s39] sm:$0x1]
        %v2138 = vld [vmem:[#allocation28] sm:$0x1]
        %v2139 = vsel %vm2020, %v2132, 0.0
        %2140 = vadd.xlane.f32.xlu0 %v2139
        %v2141 = vpop.xlane.xlu0 %2140
        %v2142 = vmul.f32 %v2141, %v2024
        %v2143 = vsub.f32 %v2132, %v2142
        %v2144 = vmul.f32 %v2143, %v2143
        %v2145 = vsel %vm2020, %v2144, 0.0
        %2146 = vadd.xlane.f32.xlu0 %v2145
        %v2147 = vpop.xlane.xlu0 %2146
        %v2148 = vmul.f32 %v2147, %v2024
        %v2149 = vadd.f32 %v2148, 1e-05
        %v2150 = vrsqrt.pop %v2149
        %v2151 = vmul.f32 %v2143, %v2150
        %v2153 = vlaneseq
        %v2154 = vshrl.u32 %v2153, 7
        %v2155 = vsub.s32 0, %v2154
        %v2156 = vrot.slane %v2137, %v2155
        %v2158 = vmul.f32 %v2151, %v2156
        %v2160 = vlaneseq
        %v2161 = vshrl.u32 %v2160, 7
        %v2162 = vsub.s32 0, %v2161
        %v2163 = vrot.slane %v2138, %v2162
        %v2165 = vadd.f32 %v2158, %v2163
        %v2166 = vmul.f32 %v2165, 0.5
        %v2167 = vmul.f32 %v2165, 0.70710677
        %v2168 = verf.f32.pop %v2167
        %v2169 = vadd.f32 %v2168, 1.0
        %v2170 = vmul.f32 %v2166, %v2169
        %v2171 = vpack.c.bf16 %v2170, %v2170
        %v2172 = vld [vmem:[%s43] sm:$0xf]
        %v2173 = vld [vmem:[%s43 + $0x4] sm:$0xf]
        %v2174 = vld [vmem:[%s43 + $0x8] sm:$0xf]
        %v2175 = vld [vmem:[%s43 + $0xc] sm:$0xf]
        %v2176 = vld [vmem:[%s43 + $0x10] sm:$0xf]
        %v2177 = vld [vmem:[%s43 + $0x14] sm:$0xf]
        %v2178 = vld [vmem:[%s43 + $0x18] sm:$0xf]
        %v2179 = vld [vmem:[%s43 + $0x1c] sm:$0xf]
        %v2180 = vld [vmem:[#allocation29] sm:$0x1]
        %v2182 = vlaneseq
        %v2183 = vshrl.u32 %v2182, 7
        %v2184 = vsub.s32 0, %v2183
        %v2185 = vrot.slane %v2180, %v2184
        %v2195 = vunpack.c.l.b16 %v2172
        %v2196 = vunpack.c.l.b16 %v2173
        %v2197 = vunpack.c.l.b16 %v2174
        %v2198 = vunpack.c.l.b16 %v2175
        %v2199 = vunpack.c.l.b16 %v2176
        %v2200 = vunpack.c.l.b16 %v2177
        %v2201 = vunpack.c.l.b16 %v2178
        %v2202 = vunpack.c.l.b16 %v2179
        %v2203 = vpack.c.b16 %v2196, %v2195
        %v2204 = vpack.c.b16 %v2198, %v2197
        %v2205 = vpack.c.b16 %v2200, %v2199
        %v2206 = vpack.c.b16 %v2202, %v2201
        %v2212 = vsel %vm2020, %v2171, 0
        %2214 = vmatprep.subr.bf16.mxu0 0
        %2215 = vmatpush1.bf16.msra.mxu0 0
        %2216 = vmatprep.subr.bf16.mxu0 0
        %2217 = vmatpush1.bf16.msra.mxu0 0
        %2218 = vmatprep.subr.bf16.mxu0 0
        %2219 = vmatpush1.bf16.msra.mxu0 0
        %2220 = vmatprep.subr.bf16.mxu0 0
        %2221 = vmatpush1.bf16.msra.mxu0 0
        %2222 = vmatprep.subr.bf16.mxu0 0
        %2223 = vmatpush1.bf16.msra.mxu0 %v2206
        %2224 = vmatprep.subr.bf16.mxu0 0
        %2225 = vmatpush1.bf16.msra.mxu0 %v2205
        %2226 = vmatprep.subr.bf16.mxu0 0
        %2227 = vmatpush1.bf16.msra.mxu0 %v2204
        %2228 = vmatprep.subr.bf16.mxu0 0
        %2229 = vmatpush1.bf16.msra.mxu0 %v2203
        %2230 = vmatprep.subr.bf16.mxu0 0
        %2231 = vmatpush2.bf16.msra.mxu0 0
        %2232 = vmatprep.subr.bf16.mxu0 0
        %2233 = vmatpush2.bf16.msra.mxu0 0
        %2234 = vmatprep.subr.bf16.mxu0 0
        %2235 = vmatpush2.bf16.msra.mxu0 0
        %2236 = vmatprep.subr.bf16.mxu0 0
        %2237 = vmatpush2.bf16.msra.mxu0 0
        %2238 = vmatprep.subr.bf16.mxu0 0
        %2239 = vmatpush2.bf16.msra.mxu0 0
        %2240 = vmatprep.subr.bf16.mxu0 0
        %2241 = vmatpush2.bf16.msra.mxu0 0
        %2242 = vmatprep.subr.bf16.mxu0 0
        %2243 = vmatpush2.bf16.msra.mxu0 0
        %2244 = vmatprep.subr.bf16.mxu0 0
        %2245 = vmatpush2.bf16.msra.mxu0 0
        %2246 = vmatprep.mubr.bf16.mxu0 0
        %2247 = vmatmul.mubr.bf16.gmra.mxu0 %v2212
        %v2248 = vpop.f32.mrf.mxu0
        %v2249 = vadd.f32 %v2185, %v2248
        %v2250 = vpop.f32.mrf.mxu0
        %v2251 = vpop.f32.mrf.mxu0
        %v2252 = vpop.f32.mrf.mxu0
        %2253 = vdwg.mxu0
        %v2254 = vadd.f32 %v1921, %v2249
        %v2255 = vld [vmem:[#allocation31] sm:$0x1]
        %v2256 = vld [vmem:[#allocation32] sm:$0x1]
        %v2257 = vsel %vm1173, %v2254, 0.0
        %2258 = vadd.xlane.f32.xlu0 %v2257
        %v2259 = vpop.xlane.xlu0 %2258
        %v2260 = vmul.f32 %v2259, %v1177
        %v2261 = vsub.f32 %v2254, %v2260
        %v2262 = vmul.f32 %v2261, %v2261
        %v2263 = vsel %vm1173, %v2262, 0.0
        %2264 = vadd.xlane.f32.xlu0 %v2263
        %v2265 = vpop.xlane.xlu0 %2264
        %v2266 = vmul.f32 %v2265, %v1177
        %v2267 = vadd.f32 %v2266, 1e-05
        %v2268 = vrsqrt.pop %v2267
        %v2269 = vmul.f32 %v2261, %v2268
        %v2271 = vlaneseq
        %v2272 = vshrl.u32 %v2271, 7
        %v2273 = vsub.s32 0, %v2272
        %v2274 = vrot.slane %v2255, %v2273
        %v2276 = vmul.f32 %v2269, %v2274
        %v2278 = vlaneseq
        %v2279 = vshrl.u32 %v2278, 7
        %v2280 = vsub.s32 0, %v2279
        %v2281 = vrot.slane %v2256, %v2280
        %v2283 = vadd.f32 %v2276, %v2281
        %v2284 = vpack.c.bf16 %v2283, %v2283
        %v2285 = vld [vmem:[%s51] sm:$0xf]
        %v2286 = vld [vmem:[%s51 + $0x4] sm:$0xf]
        %v2287 = vld [vmem:[%s51 + $0x8] sm:$0xf]
        %v2288 = vld [vmem:[%s51 + $0xc] sm:$0xf]
        %v2289 = vld [vmem:[#allocation34] sm:$0x1]
        %v2291 = vlaneseq
        %v2292 = vshrl.u32 %v2291, 7
        %v2293 = vsub.s32 0, %v2292
        %v2294 = vrot.slane %v2289, %v2293
        %v2300 = vunpack.c.l.b16 %v2285
        %v2301 = vunpack.c.l.b16 %v2286
        %v2302 = vunpack.c.l.b16 %v2287
        %v2303 = vunpack.c.l.b16 %v2288
        %v2304 = vpack.c.b16 %v2301, %v2300
        %v2305 = vpack.c.b16 %v2303, %v2302
        %v2309 = vsel %vm1173, %v2284, 0
        %2311 = vmatprep.subr.bf16.mxu0 0
        %2312 = vmatpush1.bf16.msra.mxu0 0
        %2313 = vmatprep.subr.bf16.mxu0 0
        %2314 = vmatpush1.bf16.msra.mxu0 0
        %2315 = vmatprep.subr.bf16.mxu0 0
        %2316 = vmatpush1.bf16.msra.mxu0 0
        %2317 = vmatprep.subr.bf16.mxu0 0
        %2318 = vmatpush1.bf16.msra.mxu0 0
        %2319 = vmatprep.subr.bf16.mxu0 0
        %2320 = vmatpush1.bf16.msra.mxu0 0
        %2321 = vmatprep.subr.bf16.mxu0 0
        %2322 = vmatpush1.bf16.msra.mxu0 0
        %2323 = vmatprep.subr.bf16.mxu0 0
        %2324 = vmatpush1.bf16.msra.mxu0 %v2305
        %2325 = vmatprep.subr.bf16.mxu0 0
        %2326 = vmatpush1.bf16.msra.mxu0 %v2304
        %2327 = vmatprep.subr.bf16.mxu0 0
        %2328 = vmatpush2.bf16.msra.mxu0 0
        %2329 = vmatprep.subr.bf16.mxu0 0
        %2330 = vmatpush2.bf16.msra.mxu0 0
        %2331 = vmatprep.subr.bf16.mxu0 0
        %2332 = vmatpush2.bf16.msra.mxu0 0
        %2333 = vmatprep.subr.bf16.mxu0 0
        %2334 = vmatpush2.bf16.msra.mxu0 0
        %2335 = vmatprep.subr.bf16.mxu0 0
        %2336 = vmatpush2.bf16.msra.mxu0 0
        %2337 = vmatprep.subr.bf16.mxu0 0
        %2338 = vmatpush2.bf16.msra.mxu0 0
        %2339 = vmatprep.subr.bf16.mxu0 0
        %2340 = vmatpush2.bf16.msra.mxu0 0
        %2341 = vmatprep.subr.bf16.mxu0 0
        %2342 = vmatpush2.bf16.msra.mxu0 0
        %2343 = vmatprep.mubr.bf16.mxu0 0
        %2344 = vmatmul.mubr.bf16.gmra.mxu0 %v2309
        %v2345 = vpop.f32.mrf.mxu0
        %v2346 = vadd.f32 %v2294, %v2345
        %v2347 = vpop.f32.mrf.mxu0
        %v2348 = vpop.f32.mrf.mxu0
        %v2349 = vpop.f32.mrf.mxu0
        %2350 = vdwg.mxu0
        %v2351 = vld [vmem:[%s55] sm:$0xf]
        %v2352 = vld [vmem:[%s55 + $0x4] sm:$0xf]
        %v2353 = vld [vmem:[%s55 + $0x8] sm:$0xf]
        %v2354 = vld [vmem:[%s55 + $0xc] sm:$0xf]
        %v2355 = vld [vmem:[%s57] sm:$0x1]
        %v2357 = vlaneseq
        %v2358 = vshrl.u32 %v2357, 7
        %v2359 = vsub.s32 0, %v2358
        %v2360 = vrot.slane %v2355, %v2359
        %v2366 = vunpack.c.l.b16 %v2351
        %v2367 = vunpack.c.l.b16 %v2352
        %v2368 = vunpack.c.l.b16 %v2353
        %v2369 = vunpack.c.l.b16 %v2354
        %v2370 = vpack.c.b16 %v2367, %v2366
        %v2371 = vpack.c.b16 %v2369, %v2368
        %2374 = vmatprep.subr.bf16.mxu0 0
        %2375 = vmatpush1.bf16.msra.mxu0 0
        %2376 = vmatprep.subr.bf16.mxu0 0
        %2377 = vmatpush1.bf16.msra.mxu0 0
        %2378 = vmatprep.subr.bf16.mxu0 0
        %2379 = vmatpush1.bf16.msra.mxu0 0
        %2380 = vmatprep.subr.bf16.mxu0 0
        %2381 = vmatpush1.bf16.msra.mxu0 0
        %2382 = vmatprep.subr.bf16.mxu0 0
        %2383 = vmatpush1.bf16.msra.mxu0 0
        %2384 = vmatprep.subr.bf16.mxu0 0
        %2385 = vmatpush1.bf16.msra.mxu0 0
        %2386 = vmatprep.subr.bf16.mxu0 0
        %2387 = vmatpush1.bf16.msra.mxu0 %v2371
        %2388 = vmatprep.subr.bf16.mxu0 0
        %2389 = vmatpush1.bf16.msra.mxu0 %v2370
        %2390 = vmatprep.subr.bf16.mxu0 0
        %2391 = vmatpush2.bf16.msra.mxu0 0
        %2392 = vmatprep.subr.bf16.mxu0 0
        %2393 = vmatpush2.bf16.msra.mxu0 0
        %2394 = vmatprep.subr.bf16.mxu0 0
        %2395 = vmatpush2.bf16.msra.mxu0 0
        %2396 = vmatprep.subr.bf16.mxu0 0
        %2397 = vmatpush2.bf16.msra.mxu0 0
        %2398 = vmatprep.subr.bf16.mxu0 0
        %2399 = vmatpush2.bf16.msra.mxu0 0
        %2400 = vmatprep.subr.bf16.mxu0 0
        %2401 = vmatpush2.bf16.msra.mxu0 0
        %2402 = vmatprep.subr.bf16.mxu0 0
        %2403 = vmatpush2.bf16.msra.mxu0 0
        %2404 = vmatprep.subr.bf16.mxu0 0
        %2405 = vmatpush2.bf16.msra.mxu0 0
        %2406 = vmatprep.mubr.bf16.mxu0 0
        %2407 = vmatmul.mubr.bf16.gmra.mxu0 %v2309
        %v2408 = vpop.f32.mrf.mxu0
        %v2409 = vadd.f32 %v2360, %v2408
        %v2410 = vpop.f32.mrf.mxu0
        %v2411 = vpop.f32.mrf.mxu0
        %v2412 = vpop.f32.mrf.mxu0
        %2413 = vdwg.mxu0
        %v2414 = vxor.u32 %v2409, 2147483648
        %v2415 = vmul.f32 %v2414, 1.442695
        %v2416 = vpow.pop %v2415
        %v2417 = vadd.f32 %v2416, 1.0
        %v2418 = vrcp.pop %v2417
        %v2419 = vmul.f32 1.0, %v2418
        %v2420 = vmul.f32 %v2346, %v2419
        %v2421 = vadd.f32 %v2254, %v2420
        %2422 = vst.msk [vmem:[%s1164] sm:$0xff] %vm1173, %v2421
        %s2423 = sand.u32 %s706, 1
        %s2424 = scalar_lea.sflag [#allocation4], %s2423
        %s2425 = sand.u32 %s706, 1
        %s2426 = smul.addr %s2425, 8
        %s2427 = scalar_lea.vmem [#allocation35], %s2426
        // Predicated region
        $region221: #{tpu_custom_call.1} parent=135 // pred_check
          %p2428 = pneg %p716
        $region222: #{tpu_custom_call.1} parent=135 // pred_check_branch
          %2430 = sbr.rel (%p2428) target = $region224
        $region223: #{tpu_custom_call.1} parent=135 // pred_region
          %s2432 = ssub.s32 128, 128
          %2433 = vsyncadd %s2424, %s2432
          %s2434 = smul.addr %s84, 128
          %s2435 = scalar_lea.hbm %s59, %s2434
          %s2437 = sshll.u32 %s2427, 4
          %s2438 = int_to_ptr.vmem [resolvable:$true] %s2437
          %2440 = dma.vmem_to_hbm [thread:$0]  %s2438, 128, %s2435, %s2424
        $region224: #{tpu_custom_call.1} parent=135 // pred_fallthru
          _
      $region136: #{tpu_custom_call.1} parent=5 // pred_fallthru
        _
      %p2441 = scmp.le.s32.totalorder 2, %s79
      // Predicated region
      $region225: #{tpu_custom_call.1} parent=5 // pred_check
        %p2442 = pneg %p2441
      $region226: #{tpu_custom_call.1} parent=5 // pred_check_branch
        %2444 = sbr.rel (%p2442) target = $region228
      $region227: #{tpu_custom_call.1} parent=5 // pred_region
        %s2445 = ssub.s32 %s79, 2
        // Predicated region
        $region229: #{tpu_custom_call.1} parent=227 // pred_check
          %p2446 = pneg %p722
        $region230: #{tpu_custom_call.1} parent=227 // pred_check_branch
          %2448 = sbr.rel (%p2446) target = $region232
        $region231: #{tpu_custom_call.1} parent=227 // pred_region
          %s2449 = sand.u32 %s707, 1
          %s2450 = scalar_lea.sflag [#allocation4], %s2449
          %s2451 = sand.u32 %s707, 1
          %s2452 = smul.addr %s2451, 8
          %s2453 = scalar_lea.vmem [#allocation35], %s2452
          %2454 = dma.done %s2450, 128
        $region232: #{tpu_custom_call.1} parent=227 // pred_fallthru
          _
      $region228: #{tpu_custom_call.1} parent=5 // pred_fallthru
        _
    $region6: #{tpu_custom_call.1} parent=1 // loop_footer
      %s83 = sadd.s32 1, %s79
    $region7: #{tpu_custom_call.1} parent=1 // loop_footer_branch
      %78 = sbr.rel target = $region3
    $region8: #{tpu_custom_call.1} parent=1 // loop_exit
      _
    %2455 = vsyncpa [#allocation3], 1
    %s2456 = scalar_lea.sflag [#allocation3], 1
    %2457 = vsyncpa %s2456, 1
    %2458 = vsyncpa [#allocation6], 1
    %2459 = vsyncpa [#allocation9], 1
    %2460 = vsyncpa [#allocation12], 1
    %2461 = vsyncpa [#allocation15], 1
    %2462 = vsyncpa [#allocation18], 1
    %2463 = vsyncpa [#allocation21], 1
    %2464 = vsyncpa [#allocation24], 1
    %2465 = vsyncpa [#allocation27], 1
    %2466 = vsyncpa [#allocation30], 1
    %2467 = vsyncpa [#allocation33], 1
    %2468 = vsyncpa [#allocation4], 1
    %s2469 = scalar_lea.sflag [#allocation4], 1
    %2470 = vsyncpa %s2469, 1

</llo_original>
